<compile_context>
chip_gen: v7x
topology: tpu7x:2x2x1
jax: 0.10.0
libtpu: 0.0.40
codegen_flags: <defaults>
</compile_context>

<pallas_src>
import jax
import jax.numpy as jnp
import numpy as np
from jax.experimental import pallas as pl
from jax.experimental.pallas import tpu as pltpu


# ---------------------------------------------------------------------------
# Fused TinyVGG forward (single pallas_call)
# ---------------------------------------------------------------------------

def tinyvgg_forward(x_nchw, params):
    """x_nchw: (N, Cin, H, W) f32  ->  (N, O) f32 logits."""
    N, Cin, H, W = x_nchw.shape
    Hid = params["b1"].shape[0]
    O = params["bl"].shape[0]
    P = H * W

    # --- stage schedule on the flattened, W-stride canvas -------------------
    # A stage with pixel spacing `step` has its valid pixel (i, j) stored at
    # column step*(i*W + j).  Conv taps shift by step*(kh*W+kw); pool taps by
    # step*(dh*W+dw) and the spacing doubles afterwards.
    def conv_out_len(l_in, step):      # largest column any tap may read == l_in-1
        return l_in - 2 * step * (W + 1)

    def pool_out_len(l_in, step):
        return l_in - step * (W + 1)

    L1 = conv_out_len(P, 1)            # conv1   (step 1, valid H-2  x W-2)
    L2 = conv_out_len(L1, 1)           # conv2   (step 1, valid H-4  x W-4)
    L3 = pool_out_len(L2, 1)           # pool1   (step 1 -> 2)
    L4 = conv_out_len(L3, 2)           # conv3   (step 2)
    L5 = conv_out_len(L4, 2)           # conv4   (step 2)
    L6 = pool_out_len(L5, 2)           # pool2   (step 2 -> 4)

    Hf = ((H - 4) // 2 - 4) // 2       # same flatten-size computation as the module
    Wf = ((W - 4) // 2 - 4) // 2
    assert Hf >= 1 and Wf >= 1
    assert L6 >= 4 * ((Hf - 1) * W + (Wf - 1)) + 1   # classifier reads stay in bounds

    # --- parameter re-layout (trace-time glue on tiny tensors) --------------
    def conv_w(w):       # (3,3,Cin_l,Cout) -> (9, Cout, Cin_l) bf16 (MXU operand)
        cout, cin = w.shape[3], w.shape[2]
        return jnp.transpose(w, (0, 1, 3, 2)).reshape(9, cout, cin).astype(jnp.bfloat16)

    def conv_b(b):       # (Cout,) -> (Cout, 1): broadcasts along the lane axis
        return b.reshape(-1, 1).astype(jnp.float32)

    # Fold NCHW flatten + final stride-4 gather into the Linear weight:
    #   wlf[c, o, 4*(i*W + j)] = wl[c*Hf*Wf + i*Wf + j, o]
    phys = np.asarray([4 * (i * W + j) for i in range(Hf) for j in range(Wf)], np.int32)
    wl3 = params["wl"].reshape(Hid, Hf * Wf, O).transpose(0, 2, 1)        # (Hid, O, Hf*Wf)
    wlf = jnp.zeros((Hid, O, L6), jnp.float32).at[:, :, phys].set(wl3)    # lane-dense
    blc = params["bl"].reshape(O, 1).astype(jnp.float32)

    x_flat = x_nchw.reshape(N, Cin, P)    # NCHW flattens to the canvas for free

    taps = [(kh, kw) for kh in range(3) for kw in range(3)]

    # --- the fused kernel ----------------------------------------------------
    def kernel(x_ref, w1_ref, b1_ref, w2_ref, b2_ref, w3_ref, b3_ref,
               w4_ref, b4_ref, wlf_ref, bl_ref, o_ref):

        def conv3x3_relu(a, w_ref, b_ref, step, l_out):
            # a: (cin, l_in) f32.  out[:, p] = relu(b + sum_t W_t @ a[:, p + off_t])
            a_bf = a.astype(jnp.bfloat16)
            w = w_ref[...]                                   # (9, cout, cin) bf16
            acc = None
            for t, (kh, kw) in enumerate(taps):
                off = step * (kh * W + kw)
                part = jnp.dot(w[t], a_bf[:, off:off + l_out],
                               preferred_element_type=jnp.float32)
                acc = part if acc is None else acc + part
            return jnp.maximum(acc + b_ref[...], 0.0)

        def maxpool2x2(a, step, l_out):
            v = [a[:, step * (dh * W + dw): step * (dh * W + dw) + l_out]
                 for dh in (0, 1) for dw in (0, 1)]
            return jnp.maximum(jnp.maximum(v[0], v[1]), jnp.maximum(v[2], v[3]))

        a = x_ref[0]                                         # (Cin, P) f32
        # conv_block_1
        a = conv3x3_relu(a, w1_ref, b1_ref, 1, L1)
        a = conv3x3_relu(a, w2_ref, b2_ref, 1, L2)
        a = maxpool2x2(a, 1, L3)                             # spacing 1 -> 2
        # conv_block_2
        a = conv3x3_relu(a, w3_ref, b3_ref, 2, L4)
        a = conv3x3_relu(a, w4_ref, b4_ref, 2, L5)
        a = maxpool2x2(a, 2, L6)                             # spacing 2 -> 4; (Hid, L6)

        # classifier: logits[o] = bl[o] + sum_{c,p} a[c, p] * wlf[c, o, p]
        # (garbage columns contribute 0 because wlf is 0 there)
        wlf_v = wlf_ref[...]                                 # (Hid, O, L6) f32
        contrib = a[0:1, :] * wlf_v[0]
        for c in range(1, Hid):
            contrib = contrib + a[c:c + 1, :] * wlf_v[c]     # (O, L6)
        o_ref[0] = jnp.sum(contrib, axis=1, keepdims=True) + bl_ref[...]

    out = pl.pallas_call(
        kernel,
        out_shape=jax.ShapeDtypeStruct((N, O, 1), jnp.float32),
        grid=(N,),
        in_specs=[
            pl.BlockSpec((1, Cin, P), lambda n: (n, 0, 0)),       # image
            pl.BlockSpec((9, Hid, Cin), lambda n: (0, 0, 0)),     # conv1 w
            pl.BlockSpec((Hid, 1), lambda n: (0, 0)),             # conv1 b
            pl.BlockSpec((9, Hid, Hid), lambda n: (0, 0, 0)),     # conv2 w
            pl.BlockSpec((Hid, 1), lambda n: (0, 0)),             # conv2 b
            pl.BlockSpec((9, Hid, Hid), lambda n: (0, 0, 0)),     # conv3 w
            pl.BlockSpec((Hid, 1), lambda n: (0, 0)),             # conv3 b
            pl.BlockSpec((9, Hid, Hid), lambda n: (0, 0, 0)),     # conv4 w
            pl.BlockSpec((Hid, 1), lambda n: (0, 0)),             # conv4 b
            pl.BlockSpec((Hid, O, L6), lambda n: (0, 0, 0)),      # folded linear w
            pl.BlockSpec((O, 1), lambda n: (0, 0)),               # linear b
        ],
        out_specs=pl.BlockSpec((1, O, 1), lambda n: (n, 0, 0)),
        compiler_params=pltpu.CompilerParams(
            dimension_semantics=("parallel",)),  # batch across TCs on v7x megacore
    )(x_flat,
      conv_w(params["w1"]), conv_b(params["b1"]),
      conv_w(params["w2"]), conv_b(params["b2"]),
      conv_w(params["w3"]), conv_b(params["b3"]),
      conv_w(params["w4"]), conv_b(params["b4"]),
      wlf, blc)

    return out.reshape(N, O)


# ---------------------------------------------------------------------------
# Pure-JAX reference (matches the PyTorch module semantics)
# ---------------------------------------------------------------------------

def tinyvgg_reference(x, params):
    def conv(y, w, b):
        y = jax.lax.conv_general_dilated(
            y, w, (1, 1), "VALID", dimension_numbers=("NCHW", "HWIO", "NCHW"))
        return jax.nn.relu(y + b[None, :, None, None])

    def pool(y):
        return jax.lax.reduce_window(y, -jnp.inf, jax.lax.max,
                                     (1, 1, 2, 2), (1, 1, 2, 2), "VALID")

    y = conv(x, params["w1"], params["b1"])
    y = conv(y, params["w2"], params["b2"])
    y = pool(y)
    y = conv(y, params["w3"], params["b3"])
    y = conv(y, params["w4"], params["b4"])
    y = pool(y)
    return y.reshape(y.shape[0], -1) @ params["wl"] + params["bl"]   # NCHW flatten


# ---------------------------------------------------------------------------
# Deterministic parameter init (PyTorch-default-style uniform bounds)
# ---------------------------------------------------------------------------

def init_params(key, input_shape, hidden_units, output_shape, img_size):
    ks = jax.random.split(key, 10)

    def conv_init(kw, kb, cin, cout):
        bound = 1.0 / (cin * 9) ** 0.5
        w = jax.random.uniform(kw, (3, 3, cin, cout), jnp.float32, -bound, bound)
        b = jax.random.uniform(kb, (cout,), jnp.float32, -bound, bound)
        return w, b

    w1, b1 = conv_init(ks[0], ks[1], input_shape, hidden_units)
    w2, b2 = conv_init(ks[2], ks[3], hidden_units, hidden_units)
    w3, b3 = conv_init(ks[4], ks[5], hidden_units, hidden_units)
    w4, b4 = conv_init(ks[6], ks[7], hidden_units, hidden_units)

    s = ((img_size - 4) // 2 - 4) // 2
    flatten_size = hidden_units * s * s
    bound = 1.0 / flatten_size ** 0.5
    wl = jax.random.uniform(ks[8], (flatten_size, output_shape), jnp.float32, -bound, bound)
    bl = jax.random.uniform(ks[9], (output_shape,), jnp.float32, -bound, bound)

    return dict(w1=w1, b1=b1, w2=w2, b2=b2, w3=w3, b3=b3, w4=w4, b4=b4,
                wl=wl, bl=bl)


if __name__ == "__main__":
    batch = 2
    input_shape = 3      # input channels
    hidden_units = 8
    output_shape = 3     # classes
    img_size = 32

    key = jax.random.PRNGKey(0)
    k_params, k_x = jax.random.split(key)
    params = init_params(k_params, input_shape, hidden_units, output_shape, img_size)
    x = jax.random.normal(k_x, (batch, input_shape, img_size, img_size), jnp.float32)

    fwd = jax.jit(tinyvgg_forward)
    out = fwd(x, params)
    jax.block_until_ready(out)

    assert out.shape == (batch, output_shape), out.shape
    assert bool(jnp.all(jnp.isfinite(out)))

    # Correctness vs a plain-JAX reference (loose tol: bf16 MXU operands).
    ref = tinyvgg_reference(x, params)
    assert bool(jnp.allclose(out, ref, atol=5e-2, rtol=5e-2)), \
        float(jnp.max(jnp.abs(out - ref)))

    print("KERNEL_OK")
</pallas_src>

<mosaic_0001>
module attributes {stable_mosaic.version = 11 : i64} {
  func.func @kernel(%arg0: i32, %arg1: memref<1x3x1024xf32, #tpu.memory_space<vmem>>, %arg2: memref<9x8x3xbf16, #tpu.memory_space<vmem>>, %arg3: memref<8x1xf32, #tpu.memory_space<vmem>>, %arg4: memref<9x8x8xbf16, #tpu.memory_space<vmem>>, %arg5: memref<8x1xf32, #tpu.memory_space<vmem>>, %arg6: memref<9x8x8xbf16, #tpu.memory_space<vmem>>, %arg7: memref<8x1xf32, #tpu.memory_space<vmem>>, %arg8: memref<9x8x8xbf16, #tpu.memory_space<vmem>>, %arg9: memref<8x1xf32, #tpu.memory_space<vmem>>, %arg10: memref<8x3x529xf32, #tpu.memory_space<vmem>>, %arg11: memref<3x1xf32, #tpu.memory_space<vmem>>, %arg12: memref<1x3x1xf32, #tpu.memory_space<vmem>>) attributes {dimension_semantics = [#tpu.dimension_semantics<parallel>], iteration_bounds = array<i64: 2>, scalar_prefetch = 0 : i64, scratch_operands = 0 : i64, tpu.core_type = #tpu.core_type<tc>, window_params = [{transform_indices = @transform_0, window_bounds = array<i64: 1, 3, 1024>}, {pipeline_mode = #tpu.pipeline_mode<synchronous>, transform_indices = @transform_1, window_bounds = array<i64: 9, 8, 3>}, {pipeline_mode = #tpu.pipeline_mode<synchronous>, transform_indices = @transform_2, window_bounds = array<i64: 8, 1>}, {pipeline_mode = #tpu.pipeline_mode<synchronous>, transform_indices = @transform_3, window_bounds = array<i64: 9, 8, 8>}, {pipeline_mode = #tpu.pipeline_mode<synchronous>, transform_indices = @transform_4, window_bounds = array<i64: 8, 1>}, {pipeline_mode = #tpu.pipeline_mode<synchronous>, transform_indices = @transform_5, window_bounds = array<i64: 9, 8, 8>}, {pipeline_mode = #tpu.pipeline_mode<synchronous>, transform_indices = @transform_6, window_bounds = array<i64: 8, 1>}, {pipeline_mode = #tpu.pipeline_mode<synchronous>, transform_indices = @transform_7, window_bounds = array<i64: 9, 8, 8>}, {pipeline_mode = #tpu.pipeline_mode<synchronous>, transform_indices = @transform_8, window_bounds = array<i64: 8, 1>}, {pipeline_mode = #tpu.pipeline_mode<synchronous>, transform_indices = @transform_9, window_bounds = array<i64: 8, 3, 529>}, {pipeline_mode = #tpu.pipeline_mode<synchronous>, transform_indices = @transform_10, window_bounds = array<i64: 3, 1>}, {transform_indices = @transform_11, window_bounds = array<i64: 1, 3, 1>}]} {
    %c0 = arith.constant 0 : index
    %c0_0 = arith.constant 0 : index
    %c0_1 = arith.constant 0 : index
    %0 = vector.load %arg1[%c0, %c0_0, %c0_1] : memref<1x3x1024xf32, #tpu.memory_space<vmem>>, vector<1x3x1024xf32>
    %1 = vector.shape_cast %0 : vector<1x3x1024xf32> to vector<3x1024xf32>
    %2 = arith.truncf %1 : vector<3x1024xf32> to vector<3x1024xbf16>
    %c0_2 = arith.constant 0 : index
    %c0_3 = arith.constant 0 : index
    %c0_4 = arith.constant 0 : index
    %3 = vector.load %arg2[%c0_2, %c0_3, %c0_4] : memref<9x8x3xbf16, #tpu.memory_space<vmem>>, vector<9x8x3xbf16>
    %4 = vector.extract_strided_slice %3 {offsets = [0, 0, 0], sizes = [1, 8, 3], strides = [1, 1, 1]} : vector<9x8x3xbf16> to vector<1x8x3xbf16>
    %5 = vector.shape_cast %4 : vector<1x8x3xbf16> to vector<8x3xbf16>
    %6 = vector.extract_strided_slice %2 {offsets = [0, 0], sizes = [3, 958], strides = [1, 1]} : vector<3x1024xbf16> to vector<3x958xbf16>
    %cst = arith.constant dense<0.000000e+00> : vector<8x958xf32>
    %7 = tpu.matmul %5, %6, %cst {dimension_numbers = #tpu.dot_dimension_numbers<[1], [0], [0], [1], [0, 0, 1, 1], [], []>} : vector<8x3xbf16>, vector<3x958xbf16>, vector<8x958xf32> -> vector<8x958xf32>
    %8 = vector.extract_strided_slice %3 {offsets = [1, 0, 0], sizes = [1, 8, 3], strides = [1, 1, 1]} : vector<9x8x3xbf16> to vector<1x8x3xbf16>
    %9 = vector.shape_cast %8 : vector<1x8x3xbf16> to vector<8x3xbf16>
    %10 = vector.extract_strided_slice %2 {offsets = [0, 1], sizes = [3, 958], strides = [1, 1]} : vector<3x1024xbf16> to vector<3x958xbf16>
    %cst_5 = arith.constant dense<0.000000e+00> : vector<8x958xf32>
    %11 = tpu.matmul %9, %10, %cst_5 {dimension_numbers = #tpu.dot_dimension_numbers<[1], [0], [0], [1], [0, 0, 1, 1], [], []>} : vector<8x3xbf16>, vector<3x958xbf16>, vector<8x958xf32> -> vector<8x958xf32>
    %12 = arith.addf %7, %11 : vector<8x958xf32>
    %13 = vector.extract_strided_slice %3 {offsets = [2, 0, 0], sizes = [1, 8, 3], strides = [1, 1, 1]} : vector<9x8x3xbf16> to vector<1x8x3xbf16>
    %14 = vector.shape_cast %13 : vector<1x8x3xbf16> to vector<8x3xbf16>
    %15 = vector.extract_strided_slice %2 {offsets = [0, 2], sizes = [3, 958], strides = [1, 1]} : vector<3x1024xbf16> to vector<3x958xbf16>
    %cst_6 = arith.constant dense<0.000000e+00> : vector<8x958xf32>
    %16 = tpu.matmul %14, %15, %cst_6 {dimension_numbers = #tpu.dot_dimension_numbers<[1], [0], [0], [1], [0, 0, 1, 1], [], []>} : vector<8x3xbf16>, vector<3x958xbf16>, vector<8x958xf32> -> vector<8x958xf32>
    %17 = arith.addf %12, %16 : vector<8x958xf32>
    %18 = vector.extract_strided_slice %3 {offsets = [3, 0, 0], sizes = [1, 8, 3], strides = [1, 1, 1]} : vector<9x8x3xbf16> to vector<1x8x3xbf16>
    %19 = vector.shape_cast %18 : vector<1x8x3xbf16> to vector<8x3xbf16>
    %20 = vector.extract_strided_slice %2 {offsets = [0, 32], sizes = [3, 958], strides = [1, 1]} : vector<3x1024xbf16> to vector<3x958xbf16>
    %cst_7 = arith.constant dense<0.000000e+00> : vector<8x958xf32>
    %21 = tpu.matmul %19, %20, %cst_7 {dimension_numbers = #tpu.dot_dimension_numbers<[1], [0], [0], [1], [0, 0, 1, 1], [], []>} : vector<8x3xbf16>, vector<3x958xbf16>, vector<8x958xf32> -> vector<8x958xf32>
    %22 = arith.addf %17, %21 : vector<8x958xf32>
    %23 = vector.extract_strided_slice %3 {offsets = [4, 0, 0], sizes = [1, 8, 3], strides = [1, 1, 1]} : vector<9x8x3xbf16> to vector<1x8x3xbf16>
    %24 = vector.shape_cast %23 : vector<1x8x3xbf16> to vector<8x3xbf16>
    %25 = vector.extract_strided_slice %2 {offsets = [0, 33], sizes = [3, 958], strides = [1, 1]} : vector<3x1024xbf16> to vector<3x958xbf16>
    %cst_8 = arith.constant dense<0.000000e+00> : vector<8x958xf32>
    %26 = tpu.matmul %24, %25, %cst_8 {dimension_numbers = #tpu.dot_dimension_numbers<[1], [0], [0], [1], [0, 0, 1, 1], [], []>} : vector<8x3xbf16>, vector<3x958xbf16>, vector<8x958xf32> -> vector<8x958xf32>
    %27 = arith.addf %22, %26 : vector<8x958xf32>
    %28 = vector.extract_strided_slice %3 {offsets = [5, 0, 0], sizes = [1, 8, 3], strides = [1, 1, 1]} : vector<9x8x3xbf16> to vector<1x8x3xbf16>
    %29 = vector.shape_cast %28 : vector<1x8x3xbf16> to vector<8x3xbf16>
    %30 = vector.extract_strided_slice %2 {offsets = [0, 34], sizes = [3, 958], strides = [1, 1]} : vector<3x1024xbf16> to vector<3x958xbf16>
    %cst_9 = arith.constant dense<0.000000e+00> : vector<8x958xf32>
    %31 = tpu.matmul %29, %30, %cst_9 {dimension_numbers = #tpu.dot_dimension_numbers<[1], [0], [0], [1], [0, 0, 1, 1], [], []>} : vector<8x3xbf16>, vector<3x958xbf16>, vector<8x958xf32> -> vector<8x958xf32>
    %32 = arith.addf %27, %31 : vector<8x958xf32>
    %33 = vector.extract_strided_slice %3 {offsets = [6, 0, 0], sizes = [1, 8, 3], strides = [1, 1, 1]} : vector<9x8x3xbf16> to vector<1x8x3xbf16>
    %34 = vector.shape_cast %33 : vector<1x8x3xbf16> to vector<8x3xbf16>
    %35 = vector.extract_strided_slice %2 {offsets = [0, 64], sizes = [3, 958], strides = [1, 1]} : vector<3x1024xbf16> to vector<3x958xbf16>
    %cst_10 = arith.constant dense<0.000000e+00> : vector<8x958xf32>
    %36 = tpu.matmul %34, %35, %cst_10 {dimension_numbers = #tpu.dot_dimension_numbers<[1], [0], [0], [1], [0, 0, 1, 1], [], []>} : vector<8x3xbf16>, vector<3x958xbf16>, vector<8x958xf32> -> vector<8x958xf32>
    %37 = arith.addf %32, %36 : vector<8x958xf32>
    %38 = vector.extract_strided_slice %3 {offsets = [7, 0, 0], sizes = [1, 8, 3], strides = [1, 1, 1]} : vector<9x8x3xbf16> to vector<1x8x3xbf16>
    %39 = vector.shape_cast %38 : vector<1x8x3xbf16> to vector<8x3xbf16>
    %40 = vector.extract_strided_slice %2 {offsets = [0, 65], sizes = [3, 958], strides = [1, 1]} : vector<3x1024xbf16> to vector<3x958xbf16>
    %cst_11 = arith.constant dense<0.000000e+00> : vector<8x958xf32>
    %41 = tpu.matmul %39, %40, %cst_11 {dimension_numbers = #tpu.dot_dimension_numbers<[1], [0], [0], [1], [0, 0, 1, 1], [], []>} : vector<8x3xbf16>, vector<3x958xbf16>, vector<8x958xf32> -> vector<8x958xf32>
    %42 = arith.addf %37, %41 : vector<8x958xf32>
    %43 = vector.extract_strided_slice %3 {offsets = [8, 0, 0], sizes = [1, 8, 3], strides = [1, 1, 1]} : vector<9x8x3xbf16> to vector<1x8x3xbf16>
    %44 = vector.shape_cast %43 : vector<1x8x3xbf16> to vector<8x3xbf16>
    %45 = vector.extract_strided_slice %2 {offsets = [0, 66], sizes = [3, 958], strides = [1, 1]} : vector<3x1024xbf16> to vector<3x958xbf16>
    %cst_12 = arith.constant dense<0.000000e+00> : vector<8x958xf32>
    %46 = tpu.matmul %44, %45, %cst_12 {dimension_numbers = #tpu.dot_dimension_numbers<[1], [0], [0], [1], [0, 0, 1, 1], [], []>} : vector<8x3xbf16>, vector<3x958xbf16>, vector<8x958xf32> -> vector<8x958xf32>
    %47 = arith.addf %42, %46 : vector<8x958xf32>
    %c0_13 = arith.constant 0 : index
    %c0_14 = arith.constant 0 : index
    %48 = vector.load %arg3[%c0_13, %c0_14] : memref<8x1xf32, #tpu.memory_space<vmem>>, vector<8x1xf32>
    %49 = vector.broadcast %48 : vector<8x1xf32> to vector<8x958xf32>
    %50 = arith.addf %47, %49 : vector<8x958xf32>
    %cst_15 = arith.constant 0.000000e+00 : f32
    %51 = vector.broadcast %cst_15 : f32 to vector<8x958xf32>
    %52 = arith.maximumf %50, %51 : vector<8x958xf32>
    %53 = arith.truncf %52 : vector<8x958xf32> to vector<8x958xbf16>
    %c0_16 = arith.constant 0 : index
    %c0_17 = arith.constant 0 : index
    %c0_18 = arith.constant 0 : index
    %54 = vector.load %arg4[%c0_16, %c0_17, %c0_18] : memref<9x8x8xbf16, #tpu.memory_space<vmem>>, vector<9x8x8xbf16>
    %55 = vector.extract_strided_slice %54 {offsets = [0, 0, 0], sizes = [1, 8, 8], strides = [1, 1, 1]} : vector<9x8x8xbf16> to vector<1x8x8xbf16>
    %56 = vector.shape_cast %55 : vector<1x8x8xbf16> to vector<8x8xbf16>
    %57 = vector.extract_strided_slice %53 {offsets = [0, 0], sizes = [8, 892], strides = [1, 1]} : vector<8x958xbf16> to vector<8x892xbf16>
    %cst_19 = arith.constant dense<0.000000e+00> : vector<8x892xf32>
    %58 = tpu.matmul %56, %57, %cst_19 {dimension_numbers = #tpu.dot_dimension_numbers<[1], [0], [0], [1], [0, 0, 1, 1], [], []>} : vector<8x8xbf16>, vector<8x892xbf16>, vector<8x892xf32> -> vector<8x892xf32>
    %59 = vector.extract_strided_slice %54 {offsets = [1, 0, 0], sizes = [1, 8, 8], strides = [1, 1, 1]} : vector<9x8x8xbf16> to vector<1x8x8xbf16>
    %60 = vector.shape_cast %59 : vector<1x8x8xbf16> to vector<8x8xbf16>
    %61 = vector.extract_strided_slice %53 {offsets = [0, 1], sizes = [8, 892], strides = [1, 1]} : vector<8x958xbf16> to vector<8x892xbf16>
    %cst_20 = arith.constant dense<0.000000e+00> : vector<8x892xf32>
    %62 = tpu.matmul %60, %61, %cst_20 {dimension_numbers = #tpu.dot_dimension_numbers<[1], [0], [0], [1], [0, 0, 1, 1], [], []>} : vector<8x8xbf16>, vector<8x892xbf16>, vector<8x892xf32> -> vector<8x892xf32>
    %63 = arith.addf %58, %62 : vector<8x892xf32>
    %64 = vector.extract_strided_slice %54 {offsets = [2, 0, 0], sizes = [1, 8, 8], strides = [1, 1, 1]} : vector<9x8x8xbf16> to vector<1x8x8xbf16>
    %65 = vector.shape_cast %64 : vector<1x8x8xbf16> to vector<8x8xbf16>
    %66 = vector.extract_strided_slice %53 {offsets = [0, 2], sizes = [8, 892], strides = [1, 1]} : vector<8x958xbf16> to vector<8x892xbf16>
    %cst_21 = arith.constant dense<0.000000e+00> : vector<8x892xf32>
    %67 = tpu.matmul %65, %66, %cst_21 {dimension_numbers = #tpu.dot_dimension_numbers<[1], [0], [0], [1], [0, 0, 1, 1], [], []>} : vector<8x8xbf16>, vector<8x892xbf16>, vector<8x892xf32> -> vector<8x892xf32>
    %68 = arith.addf %63, %67 : vector<8x892xf32>
    %69 = vector.extract_strided_slice %54 {offsets = [3, 0, 0], sizes = [1, 8, 8], strides = [1, 1, 1]} : vector<9x8x8xbf16> to vector<1x8x8xbf16>
    %70 = vector.shape_cast %69 : vector<1x8x8xbf16> to vector<8x8xbf16>
    %71 = vector.extract_strided_slice %53 {offsets = [0, 32], sizes = [8, 892], strides = [1, 1]} : vector<8x958xbf16> to vector<8x892xbf16>
    %cst_22 = arith.constant dense<0.000000e+00> : vector<8x892xf32>
    %72 = tpu.matmul %70, %71, %cst_22 {dimension_numbers = #tpu.dot_dimension_numbers<[1], [0], [0], [1], [0, 0, 1, 1], [], []>} : vector<8x8xbf16>, vector<8x892xbf16>, vector<8x892xf32> -> vector<8x892xf32>
    %73 = arith.addf %68, %72 : vector<8x892xf32>
    %74 = vector.extract_strided_slice %54 {offsets = [4, 0, 0], sizes = [1, 8, 8], strides = [1, 1, 1]} : vector<9x8x8xbf16> to vector<1x8x8xbf16>
    %75 = vector.shape_cast %74 : vector<1x8x8xbf16> to vector<8x8xbf16>
    %76 = vector.extract_strided_slice %53 {offsets = [0, 33], sizes = [8, 892], strides = [1, 1]} : vector<8x958xbf16> to vector<8x892xbf16>
    %cst_23 = arith.constant dense<0.000000e+00> : vector<8x892xf32>
    %77 = tpu.matmul %75, %76, %cst_23 {dimension_numbers = #tpu.dot_dimension_numbers<[1], [0], [0], [1], [0, 0, 1, 1], [], []>} : vector<8x8xbf16>, vector<8x892xbf16>, vector<8x892xf32> -> vector<8x892xf32>
    %78 = arith.addf %73, %77 : vector<8x892xf32>
    %79 = vector.extract_strided_slice %54 {offsets = [5, 0, 0], sizes = [1, 8, 8], strides = [1, 1, 1]} : vector<9x8x8xbf16> to vector<1x8x8xbf16>
    %80 = vector.shape_cast %79 : vector<1x8x8xbf16> to vector<8x8xbf16>
    %81 = vector.extract_strided_slice %53 {offsets = [0, 34], sizes = [8, 892], strides = [1, 1]} : vector<8x958xbf16> to vector<8x892xbf16>
    %cst_24 = arith.constant dense<0.000000e+00> : vector<8x892xf32>
    %82 = tpu.matmul %80, %81, %cst_24 {dimension_numbers = #tpu.dot_dimension_numbers<[1], [0], [0], [1], [0, 0, 1, 1], [], []>} : vector<8x8xbf16>, vector<8x892xbf16>, vector<8x892xf32> -> vector<8x892xf32>
    %83 = arith.addf %78, %82 : vector<8x892xf32>
    %84 = vector.extract_strided_slice %54 {offsets = [6, 0, 0], sizes = [1, 8, 8], strides = [1, 1, 1]} : vector<9x8x8xbf16> to vector<1x8x8xbf16>
    %85 = vector.shape_cast %84 : vector<1x8x8xbf16> to vector<8x8xbf16>
    %86 = vector.extract_strided_slice %53 {offsets = [0, 64], sizes = [8, 892], strides = [1, 1]} : vector<8x958xbf16> to vector<8x892xbf16>
    %cst_25 = arith.constant dense<0.000000e+00> : vector<8x892xf32>
    %87 = tpu.matmul %85, %86, %cst_25 {dimension_numbers = #tpu.dot_dimension_numbers<[1], [0], [0], [1], [0, 0, 1, 1], [], []>} : vector<8x8xbf16>, vector<8x892xbf16>, vector<8x892xf32> -> vector<8x892xf32>
    %88 = arith.addf %83, %87 : vector<8x892xf32>
    %89 = vector.extract_strided_slice %54 {offsets = [7, 0, 0], sizes = [1, 8, 8], strides = [1, 1, 1]} : vector<9x8x8xbf16> to vector<1x8x8xbf16>
    %90 = vector.shape_cast %89 : vector<1x8x8xbf16> to vector<8x8xbf16>
    %91 = vector.extract_strided_slice %53 {offsets = [0, 65], sizes = [8, 892], strides = [1, 1]} : vector<8x958xbf16> to vector<8x892xbf16>
    %cst_26 = arith.constant dense<0.000000e+00> : vector<8x892xf32>
    %92 = tpu.matmul %90, %91, %cst_26 {dimension_numbers = #tpu.dot_dimension_numbers<[1], [0], [0], [1], [0, 0, 1, 1], [], []>} : vector<8x8xbf16>, vector<8x892xbf16>, vector<8x892xf32> -> vector<8x892xf32>
    %93 = arith.addf %88, %92 : vector<8x892xf32>
    %94 = vector.extract_strided_slice %54 {offsets = [8, 0, 0], sizes = [1, 8, 8], strides = [1, 1, 1]} : vector<9x8x8xbf16> to vector<1x8x8xbf16>
    %95 = vector.shape_cast %94 : vector<1x8x8xbf16> to vector<8x8xbf16>
    %96 = vector.extract_strided_slice %53 {offsets = [0, 66], sizes = [8, 892], strides = [1, 1]} : vector<8x958xbf16> to vector<8x892xbf16>
    %cst_27 = arith.constant dense<0.000000e+00> : vector<8x892xf32>
    %97 = tpu.matmul %95, %96, %cst_27 {dimension_numbers = #tpu.dot_dimension_numbers<[1], [0], [0], [1], [0, 0, 1, 1], [], []>} : vector<8x8xbf16>, vector<8x892xbf16>, vector<8x892xf32> -> vector<8x892xf32>
    %98 = arith.addf %93, %97 : vector<8x892xf32>
    %c0_28 = arith.constant 0 : index
    %c0_29 = arith.constant 0 : index
    %99 = vector.load %arg5[%c0_28, %c0_29] : memref<8x1xf32, #tpu.memory_space<vmem>>, vector<8x1xf32>
    %100 = vector.broadcast %99 : vector<8x1xf32> to vector<8x892xf32>
    %101 = arith.addf %98, %100 : vector<8x892xf32>
    %cst_30 = arith.constant 0.000000e+00 : f32
    %102 = vector.broadcast %cst_30 : f32 to vector<8x892xf32>
    %103 = arith.maximumf %101, %102 : vector<8x892xf32>
    %104 = vector.extract_strided_slice %103 {offsets = [0, 0], sizes = [8, 859], strides = [1, 1]} : vector<8x892xf32> to vector<8x859xf32>
    %105 = vector.extract_strided_slice %103 {offsets = [0, 1], sizes = [8, 859], strides = [1, 1]} : vector<8x892xf32> to vector<8x859xf32>
    %106 = vector.extract_strided_slice %103 {offsets = [0, 32], sizes = [8, 859], strides = [1, 1]} : vector<8x892xf32> to vector<8x859xf32>
    %107 = vector.extract_strided_slice %103 {offsets = [0, 33], sizes = [8, 859], strides = [1, 1]} : vector<8x892xf32> to vector<8x859xf32>
    %108 = arith.maximumf %104, %105 : vector<8x859xf32>
    %109 = arith.maximumf %106, %107 : vector<8x859xf32>
    %110 = arith.maximumf %108, %109 : vector<8x859xf32>
    %111 = arith.truncf %110 : vector<8x859xf32> to vector<8x859xbf16>
    %c0_31 = arith.constant 0 : index
    %c0_32 = arith.constant 0 : index
    %c0_33 = arith.constant 0 : index
    %112 = vector.load %arg6[%c0_31, %c0_32, %c0_33] : memref<9x8x8xbf16, #tpu.memory_space<vmem>>, vector<9x8x8xbf16>
    %113 = vector.extract_strided_slice %112 {offsets = [0, 0, 0], sizes = [1, 8, 8], strides = [1, 1, 1]} : vector<9x8x8xbf16> to vector<1x8x8xbf16>
    %114 = vector.shape_cast %113 : vector<1x8x8xbf16> to vector<8x8xbf16>
    %115 = vector.extract_strided_slice %111 {offsets = [0, 0], sizes = [8, 727], strides = [1, 1]} : vector<8x859xbf16> to vector<8x727xbf16>
    %cst_34 = arith.constant dense<0.000000e+00> : vector<8x727xf32>
    %116 = tpu.matmul %114, %115, %cst_34 {dimension_numbers = #tpu.dot_dimension_numbers<[1], [0], [0], [1], [0, 0, 1, 1], [], []>} : vector<8x8xbf16>, vector<8x727xbf16>, vector<8x727xf32> -> vector<8x727xf32>
    %117 = vector.extract_strided_slice %112 {offsets = [1, 0, 0], sizes = [1, 8, 8], strides = [1, 1, 1]} : vector<9x8x8xbf16> to vector<1x8x8xbf16>
    %118 = vector.shape_cast %117 : vector<1x8x8xbf16> to vector<8x8xbf16>
    %119 = vector.extract_strided_slice %111 {offsets = [0, 2], sizes = [8, 727], strides = [1, 1]} : vector<8x859xbf16> to vector<8x727xbf16>
    %cst_35 = arith.constant dense<0.000000e+00> : vector<8x727xf32>
    %120 = tpu.matmul %118, %119, %cst_35 {dimension_numbers = #tpu.dot_dimension_numbers<[1], [0], [0], [1], [0, 0, 1, 1], [], []>} : vector<8x8xbf16>, vector<8x727xbf16>, vector<8x727xf32> -> vector<8x727xf32>
    %121 = arith.addf %116, %120 : vector<8x727xf32>
    %122 = vector.extract_strided_slice %112 {offsets = [2, 0, 0], sizes = [1, 8, 8], strides = [1, 1, 1]} : vector<9x8x8xbf16> to vector<1x8x8xbf16>
    %123 = vector.shape_cast %122 : vector<1x8x8xbf16> to vector<8x8xbf16>
    %124 = vector.extract_strided_slice %111 {offsets = [0, 4], sizes = [8, 727], strides = [1, 1]} : vector<8x859xbf16> to vector<8x727xbf16>
    %cst_36 = arith.constant dense<0.000000e+00> : vector<8x727xf32>
    %125 = tpu.matmul %123, %124, %cst_36 {dimension_numbers = #tpu.dot_dimension_numbers<[1], [0], [0], [1], [0, 0, 1, 1], [], []>} : vector<8x8xbf16>, vector<8x727xbf16>, vector<8x727xf32> -> vector<8x727xf32>
    %126 = arith.addf %121, %125 : vector<8x727xf32>
    %127 = vector.extract_strided_slice %112 {offsets = [3, 0, 0], sizes = [1, 8, 8], strides = [1, 1, 1]} : vector<9x8x8xbf16> to vector<1x8x8xbf16>
    %128 = vector.shape_cast %127 : vector<1x8x8xbf16> to vector<8x8xbf16>
    %129 = vector.extract_strided_slice %111 {offsets = [0, 64], sizes = [8, 727], strides = [1, 1]} : vector<8x859xbf16> to vector<8x727xbf16>
    %cst_37 = arith.constant dense<0.000000e+00> : vector<8x727xf32>
    %130 = tpu.matmul %128, %129, %cst_37 {dimension_numbers = #tpu.dot_dimension_numbers<[1], [0], [0], [1], [0, 0, 1, 1], [], []>} : vector<8x8xbf16>, vector<8x727xbf16>, vector<8x727xf32> -> vector<8x727xf32>
    %131 = arith.addf %126, %130 : vector<8x727xf32>
    %132 = vector.extract_strided_slice %112 {offsets = [4, 0, 0], sizes = [1, 8, 8], strides = [1, 1, 1]} : vector<9x8x8xbf16> to vector<1x8x8xbf16>
    %133 = vector.shape_cast %132 : vector<1x8x8xbf16> to vector<8x8xbf16>
    %134 = vector.extract_strided_slice %111 {offsets = [0, 66], sizes = [8, 727], strides = [1, 1]} : vector<8x859xbf16> to vector<8x727xbf16>
    %cst_38 = arith.constant dense<0.000000e+00> : vector<8x727xf32>
    %135 = tpu.matmul %133, %134, %cst_38 {dimension_numbers = #tpu.dot_dimension_numbers<[1], [0], [0], [1], [0, 0, 1, 1], [], []>} : vector<8x8xbf16>, vector<8x727xbf16>, vector<8x727xf32> -> vector<8x727xf32>
    %136 = arith.addf %131, %135 : vector<8x727xf32>
    %137 = vector.extract_strided_slice %112 {offsets = [5, 0, 0], sizes = [1, 8, 8], strides = [1, 1, 1]} : vector<9x8x8xbf16> to vector<1x8x8xbf16>
    %138 = vector.shape_cast %137 : vector<1x8x8xbf16> to vector<8x8xbf16>
    %139 = vector.extract_strided_slice %111 {offsets = [0, 68], sizes = [8, 727], strides = [1, 1]} : vector<8x859xbf16> to vector<8x727xbf16>
    %cst_39 = arith.constant dense<0.000000e+00> : vector<8x727xf32>
    %140 = tpu.matmul %138, %139, %cst_39 {dimension_numbers = #tpu.dot_dimension_numbers<[1], [0], [0], [1], [0, 0, 1, 1], [], []>} : vector<8x8xbf16>, vector<8x727xbf16>, vector<8x727xf32> -> vector<8x727xf32>
    %141 = arith.addf %136, %140 : vector<8x727xf32>
    %142 = vector.extract_strided_slice %112 {offsets = [6, 0, 0], sizes = [1, 8, 8], strides = [1, 1, 1]} : vector<9x8x8xbf16> to vector<1x8x8xbf16>
    %143 = vector.shape_cast %142 : vector<1x8x8xbf16> to vector<8x8xbf16>
    %144 = vector.extract_strided_slice %111 {offsets = [0, 128], sizes = [8, 727], strides = [1, 1]} : vector<8x859xbf16> to vector<8x727xbf16>
    %cst_40 = arith.constant dense<0.000000e+00> : vector<8x727xf32>
    %145 = tpu.matmul %143, %144, %cst_40 {dimension_numbers = #tpu.dot_dimension_numbers<[1], [0], [0], [1], [0, 0, 1, 1], [], []>} : vector<8x8xbf16>, vector<8x727xbf16>, vector<8x727xf32> -> vector<8x727xf32>
    %146 = arith.addf %141, %145 : vector<8x727xf32>
    %147 = vector.extract_strided_slice %112 {offsets = [7, 0, 0], sizes = [1, 8, 8], strides = [1, 1, 1]} : vector<9x8x8xbf16> to vector<1x8x8xbf16>
    %148 = vector.shape_cast %147 : vector<1x8x8xbf16> to vector<8x8xbf16>
    %149 = vector.extract_strided_slice %111 {offsets = [0, 130], sizes = [8, 727], strides = [1, 1]} : vector<8x859xbf16> to vector<8x727xbf16>
    %cst_41 = arith.constant dense<0.000000e+00> : vector<8x727xf32>
    %150 = tpu.matmul %148, %149, %cst_41 {dimension_numbers = #tpu.dot_dimension_numbers<[1], [0], [0], [1], [0, 0, 1, 1], [], []>} : vector<8x8xbf16>, vector<8x727xbf16>, vector<8x727xf32> -> vector<8x727xf32>
    %151 = arith.addf %146, %150 : vector<8x727xf32>
    %152 = vector.extract_strided_slice %112 {offsets = [8, 0, 0], sizes = [1, 8, 8], strides = [1, 1, 1]} : vector<9x8x8xbf16> to vector<1x8x8xbf16>
    %153 = vector.shape_cast %152 : vector<1x8x8xbf16> to vector<8x8xbf16>
    %154 = vector.extract_strided_slice %111 {offsets = [0, 132], sizes = [8, 727], strides = [1, 1]} : vector<8x859xbf16> to vector<8x727xbf16>
    %cst_42 = arith.constant dense<0.000000e+00> : vector<8x727xf32>
    %155 = tpu.matmul %153, %154, %cst_42 {dimension_numbers = #tpu.dot_dimension_numbers<[1], [0], [0], [1], [0, 0, 1, 1], [], []>} : vector<8x8xbf16>, vector<8x727xbf16>, vector<8x727xf32> -> vector<8x727xf32>
    %156 = arith.addf %151, %155 : vector<8x727xf32>
    %c0_43 = arith.constant 0 : index
    %c0_44 = arith.constant 0 : index
    %157 = vector.load %arg7[%c0_43, %c0_44] : memref<8x1xf32, #tpu.memory_space<vmem>>, vector<8x1xf32>
    %158 = vector.broadcast %157 : vector<8x1xf32> to vector<8x727xf32>
    %159 = arith.addf %156, %158 : vector<8x727xf32>
    %cst_45 = arith.constant 0.000000e+00 : f32
    %160 = vector.broadcast %cst_45 : f32 to vector<8x727xf32>
    %161 = arith.maximumf %159, %160 : vector<8x727xf32>
    %162 = arith.truncf %161 : vector<8x727xf32> to vector<8x727xbf16>
    %c0_46 = arith.constant 0 : index
    %c0_47 = arith.constant 0 : index
    %c0_48 = arith.constant 0 : index
    %163 = vector.load %arg8[%c0_46, %c0_47, %c0_48] : memref<9x8x8xbf16, #tpu.memory_space<vmem>>, vector<9x8x8xbf16>
    %164 = vector.extract_strided_slice %163 {offsets = [0, 0, 0], sizes = [1, 8, 8], strides = [1, 1, 1]} : vector<9x8x8xbf16> to vector<1x8x8xbf16>
    %165 = vector.shape_cast %164 : vector<1x8x8xbf16> to vector<8x8xbf16>
    %166 = vector.extract_strided_slice %162 {offsets = [0, 0], sizes = [8, 595], strides = [1, 1]} : vector<8x727xbf16> to vector<8x595xbf16>
    %cst_49 = arith.constant dense<0.000000e+00> : vector<8x595xf32>
    %167 = tpu.matmul %165, %166, %cst_49 {dimension_numbers = #tpu.dot_dimension_numbers<[1], [0], [0], [1], [0, 0, 1, 1], [], []>} : vector<8x8xbf16>, vector<8x595xbf16>, vector<8x595xf32> -> vector<8x595xf32>
    %168 = vector.extract_strided_slice %163 {offsets = [1, 0, 0], sizes = [1, 8, 8], strides = [1, 1, 1]} : vector<9x8x8xbf16> to vector<1x8x8xbf16>
    %169 = vector.shape_cast %168 : vector<1x8x8xbf16> to vector<8x8xbf16>
    %170 = vector.extract_strided_slice %162 {offsets = [0, 2], sizes = [8, 595], strides = [1, 1]} : vector<8x727xbf16> to vector<8x595xbf16>
    %cst_50 = arith.constant dense<0.000000e+00> : vector<8x595xf32>
    %171 = tpu.matmul %169, %170, %cst_50 {dimension_numbers = #tpu.dot_dimension_numbers<[1], [0], [0], [1], [0, 0, 1, 1], [], []>} : vector<8x8xbf16>, vector<8x595xbf16>, vector<8x595xf32> -> vector<8x595xf32>
    %172 = arith.addf %167, %171 : vector<8x595xf32>
    %173 = vector.extract_strided_slice %163 {offsets = [2, 0, 0], sizes = [1, 8, 8], strides = [1, 1, 1]} : vector<9x8x8xbf16> to vector<1x8x8xbf16>
    %174 = vector.shape_cast %173 : vector<1x8x8xbf16> to vector<8x8xbf16>
    %175 = vector.extract_strided_slice %162 {offsets = [0, 4], sizes = [8, 595], strides = [1, 1]} : vector<8x727xbf16> to vector<8x595xbf16>
    %cst_51 = arith.constant dense<0.000000e+00> : vector<8x595xf32>
    %176 = tpu.matmul %174, %175, %cst_51 {dimension_numbers = #tpu.dot_dimension_numbers<[1], [0], [0], [1], [0, 0, 1, 1], [], []>} : vector<8x8xbf16>, vector<8x595xbf16>, vector<8x595xf32> -> vector<8x595xf32>
    %177 = arith.addf %172, %176 : vector<8x595xf32>
    %178 = vector.extract_strided_slice %163 {offsets = [3, 0, 0], sizes = [1, 8, 8], strides = [1, 1, 1]} : vector<9x8x8xbf16> to vector<1x8x8xbf16>
    %179 = vector.shape_cast %178 : vector<1x8x8xbf16> to vector<8x8xbf16>
    %180 = vector.extract_strided_slice %162 {offsets = [0, 64], sizes = [8, 595], strides = [1, 1]} : vector<8x727xbf16> to vector<8x595xbf16>
    %cst_52 = arith.constant dense<0.000000e+00> : vector<8x595xf32>
    %181 = tpu.matmul %179, %180, %cst_52 {dimension_numbers = #tpu.dot_dimension_numbers<[1], [0], [0], [1], [0, 0, 1, 1], [], []>} : vector<8x8xbf16>, vector<8x595xbf16>, vector<8x595xf32> -> vector<8x595xf32>
    %182 = arith.addf %177, %181 : vector<8x595xf32>
    %183 = vector.extract_strided_slice %163 {offsets = [4, 0, 0], sizes = [1, 8, 8], strides = [1, 1, 1]} : vector<9x8x8xbf16> to vector<1x8x8xbf16>
    %184 = vector.shape_cast %183 : vector<1x8x8xbf16> to vector<8x8xbf16>
    %185 = vector.extract_strided_slice %162 {offsets = [0, 66], sizes = [8, 595], strides = [1, 1]} : vector<8x727xbf16> to vector<8x595xbf16>
    %cst_53 = arith.constant dense<0.000000e+00> : vector<8x595xf32>
    %186 = tpu.matmul %184, %185, %cst_53 {dimension_numbers = #tpu.dot_dimension_numbers<[1], [0], [0], [1], [0, 0, 1, 1], [], []>} : vector<8x8xbf16>, vector<8x595xbf16>, vector<8x595xf32> -> vector<8x595xf32>
    %187 = arith.addf %182, %186 : vector<8x595xf32>
    %188 = vector.extract_strided_slice %163 {offsets = [5, 0, 0], sizes = [1, 8, 8], strides = [1, 1, 1]} : vector<9x8x8xbf16> to vector<1x8x8xbf16>
    %189 = vector.shape_cast %188 : vector<1x8x8xbf16> to vector<8x8xbf16>
    %190 = vector.extract_strided_slice %162 {offsets = [0, 68], sizes = [8, 595], strides = [1, 1]} : vector<8x727xbf16> to vector<8x595xbf16>
    %cst_54 = arith.constant dense<0.000000e+00> : vector<8x595xf32>
    %191 = tpu.matmul %189, %190, %cst_54 {dimension_numbers = #tpu.dot_dimension_numbers<[1], [0], [0], [1], [0, 0, 1, 1], [], []>} : vector<8x8xbf16>, vector<8x595xbf16>, vector<8x595xf32> -> vector<8x595xf32>
    %192 = arith.addf %187, %191 : vector<8x595xf32>
    %193 = vector.extract_strided_slice %163 {offsets = [6, 0, 0], sizes = [1, 8, 8], strides = [1, 1, 1]} : vector<9x8x8xbf16> to vector<1x8x8xbf16>
    %194 = vector.shape_cast %193 : vector<1x8x8xbf16> to vector<8x8xbf16>
    %195 = vector.extract_strided_slice %162 {offsets = [0, 128], sizes = [8, 595], strides = [1, 1]} : vector<8x727xbf16> to vector<8x595xbf16>
    %cst_55 = arith.constant dense<0.000000e+00> : vector<8x595xf32>
    %196 = tpu.matmul %194, %195, %cst_55 {dimension_numbers = #tpu.dot_dimension_numbers<[1], [0], [0], [1], [0, 0, 1, 1], [], []>} : vector<8x8xbf16>, vector<8x595xbf16>, vector<8x595xf32> -> vector<8x595xf32>
    %197 = arith.addf %192, %196 : vector<8x595xf32>
    %198 = vector.extract_strided_slice %163 {offsets = [7, 0, 0], sizes = [1, 8, 8], strides = [1, 1, 1]} : vector<9x8x8xbf16> to vector<1x8x8xbf16>
    %199 = vector.shape_cast %198 : vector<1x8x8xbf16> to vector<8x8xbf16>
    %200 = vector.extract_strided_slice %162 {offsets = [0, 130], sizes = [8, 595], strides = [1, 1]} : vector<8x727xbf16> to vector<8x595xbf16>
    %cst_56 = arith.constant dense<0.000000e+00> : vector<8x595xf32>
    %201 = tpu.matmul %199, %200, %cst_56 {dimension_numbers = #tpu.dot_dimension_numbers<[1], [0], [0], [1], [0, 0, 1, 1], [], []>} : vector<8x8xbf16>, vector<8x595xbf16>, vector<8x595xf32> -> vector<8x595xf32>
    %202 = arith.addf %197, %201 : vector<8x595xf32>
    %203 = vector.extract_strided_slice %163 {offsets = [8, 0, 0], sizes = [1, 8, 8], strides = [1, 1, 1]} : vector<9x8x8xbf16> to vector<1x8x8xbf16>
    %204 = vector.shape_cast %203 : vector<1x8x8xbf16> to vector<8x8xbf16>
    %205 = vector.extract_strided_slice %162 {offsets = [0, 132], sizes = [8, 595], strides = [1, 1]} : vector<8x727xbf16> to vector<8x595xbf16>
    %cst_57 = arith.constant dense<0.000000e+00> : vector<8x595xf32>
    %206 = tpu.matmul %204, %205, %cst_57 {dimension_numbers = #tpu.dot_dimension_numbers<[1], [0], [0], [1], [0, 0, 1, 1], [], []>} : vector<8x8xbf16>, vector<8x595xbf16>, vector<8x595xf32> -> vector<8x595xf32>
    %207 = arith.addf %202, %206 : vector<8x595xf32>
    %c0_58 = arith.constant 0 : index
    %c0_59 = arith.constant 0 : index
    %208 = vector.load %arg9[%c0_58, %c0_59] : memref<8x1xf32, #tpu.memory_space<vmem>>, vector<8x1xf32>
    %209 = vector.broadcast %208 : vector<8x1xf32> to vector<8x595xf32>
    %210 = arith.addf %207, %209 : vector<8x595xf32>
    %cst_60 = arith.constant 0.000000e+00 : f32
    %211 = vector.broadcast %cst_60 : f32 to vector<8x595xf32>
    %212 = arith.maximumf %210, %211 : vector<8x595xf32>
    %213 = vector.extract_strided_slice %212 {offsets = [0, 0], sizes = [8, 529], strides = [1, 1]} : vector<8x595xf32> to vector<8x529xf32>
    %214 = vector.extract_strided_slice %212 {offsets = [0, 2], sizes = [8, 529], strides = [1, 1]} : vector<8x595xf32> to vector<8x529xf32>
    %215 = vector.extract_strided_slice %212 {offsets = [0, 64], sizes = [8, 529], strides = [1, 1]} : vector<8x595xf32> to vector<8x529xf32>
    %216 = vector.extract_strided_slice %212 {offsets = [0, 66], sizes = [8, 529], strides = [1, 1]} : vector<8x595xf32> to vector<8x529xf32>
    %217 = arith.maximumf %213, %214 : vector<8x529xf32>
    %218 = arith.maximumf %215, %216 : vector<8x529xf32>
    %219 = arith.maximumf %217, %218 : vector<8x529xf32>
    %c0_61 = arith.constant 0 : index
    %c0_62 = arith.constant 0 : index
    %c0_63 = arith.constant 0 : index
    %220 = vector.load %arg10[%c0_61, %c0_62, %c0_63] : memref<8x3x529xf32, #tpu.memory_space<vmem>>, vector<8x3x529xf32>
    %221 = vector.extract_strided_slice %219 {offsets = [0, 0], sizes = [1, 529], strides = [1, 1]} : vector<8x529xf32> to vector<1x529xf32>
    %222 = vector.extract_strided_slice %220 {offsets = [0, 0, 0], sizes = [1, 3, 529], strides = [1, 1, 1]} : vector<8x3x529xf32> to vector<1x3x529xf32>
    %223 = vector.shape_cast %222 : vector<1x3x529xf32> to vector<3x529xf32>
    %224 = vector.broadcast %221 : vector<1x529xf32> to vector<3x529xf32>
    %225 = arith.mulf %224, %223 : vector<3x529xf32>
    %226 = vector.extract_strided_slice %219 {offsets = [1, 0], sizes = [1, 529], strides = [1, 1]} : vector<8x529xf32> to vector<1x529xf32>
    %227 = vector.extract_strided_slice %220 {offsets = [1, 0, 0], sizes = [1, 3, 529], strides = [1, 1, 1]} : vector<8x3x529xf32> to vector<1x3x529xf32>
    %228 = vector.shape_cast %227 : vector<1x3x529xf32> to vector<3x529xf32>
    %229 = vector.broadcast %226 : vector<1x529xf32> to vector<3x529xf32>
    %230 = arith.mulf %229, %228 : vector<3x529xf32>
    %231 = arith.addf %225, %230 : vector<3x529xf32>
    %232 = vector.extract_strided_slice %219 {offsets = [2, 0], sizes = [1, 529], strides = [1, 1]} : vector<8x529xf32> to vector<1x529xf32>
    %233 = vector.extract_strided_slice %220 {offsets = [2, 0, 0], sizes = [1, 3, 529], strides = [1, 1, 1]} : vector<8x3x529xf32> to vector<1x3x529xf32>
    %234 = vector.shape_cast %233 : vector<1x3x529xf32> to vector<3x529xf32>
    %235 = vector.broadcast %232 : vector<1x529xf32> to vector<3x529xf32>
    %236 = arith.mulf %235, %234 : vector<3x529xf32>
    %237 = arith.addf %231, %236 : vector<3x529xf32>
    %238 = vector.extract_strided_slice %219 {offsets = [3, 0], sizes = [1, 529], strides = [1, 1]} : vector<8x529xf32> to vector<1x529xf32>
    %239 = vector.extract_strided_slice %220 {offsets = [3, 0, 0], sizes = [1, 3, 529], strides = [1, 1, 1]} : vector<8x3x529xf32> to vector<1x3x529xf32>
    %240 = vector.shape_cast %239 : vector<1x3x529xf32> to vector<3x529xf32>
    %241 = vector.broadcast %238 : vector<1x529xf32> to vector<3x529xf32>
    %242 = arith.mulf %241, %240 : vector<3x529xf32>
    %243 = arith.addf %237, %242 : vector<3x529xf32>
    %244 = vector.extract_strided_slice %219 {offsets = [4, 0], sizes = [1, 529], strides = [1, 1]} : vector<8x529xf32> to vector<1x529xf32>
    %245 = vector.extract_strided_slice %220 {offsets = [4, 0, 0], sizes = [1, 3, 529], strides = [1, 1, 1]} : vector<8x3x529xf32> to vector<1x3x529xf32>
    %246 = vector.shape_cast %245 : vector<1x3x529xf32> to vector<3x529xf32>
    %247 = vector.broadcast %244 : vector<1x529xf32> to vector<3x529xf32>
    %248 = arith.mulf %247, %246 : vector<3x529xf32>
    %249 = arith.addf %243, %248 : vector<3x529xf32>
    %250 = vector.extract_strided_slice %219 {offsets = [5, 0], sizes = [1, 529], strides = [1, 1]} : vector<8x529xf32> to vector<1x529xf32>
    %251 = vector.extract_strided_slice %220 {offsets = [5, 0, 0], sizes = [1, 3, 529], strides = [1, 1, 1]} : vector<8x3x529xf32> to vector<1x3x529xf32>
    %252 = vector.shape_cast %251 : vector<1x3x529xf32> to vector<3x529xf32>
    %253 = vector.broadcast %250 : vector<1x529xf32> to vector<3x529xf32>
    %254 = arith.mulf %253, %252 : vector<3x529xf32>
    %255 = arith.addf %249, %254 : vector<3x529xf32>
    %256 = vector.extract_strided_slice %219 {offsets = [6, 0], sizes = [1, 529], strides = [1, 1]} : vector<8x529xf32> to vector<1x529xf32>
    %257 = vector.extract_strided_slice %220 {offsets = [6, 0, 0], sizes = [1, 3, 529], strides = [1, 1, 1]} : vector<8x3x529xf32> to vector<1x3x529xf32>
    %258 = vector.shape_cast %257 : vector<1x3x529xf32> to vector<3x529xf32>
    %259 = vector.broadcast %256 : vector<1x529xf32> to vector<3x529xf32>
    %260 = arith.mulf %259, %258 : vector<3x529xf32>
    %261 = arith.addf %255, %260 : vector<3x529xf32>
    %262 = vector.extract_strided_slice %219 {offsets = [7, 0], sizes = [1, 529], strides = [1, 1]} : vector<8x529xf32> to vector<1x529xf32>
    %263 = vector.extract_strided_slice %220 {offsets = [7, 0, 0], sizes = [1, 3, 529], strides = [1, 1, 1]} : vector<8x3x529xf32> to vector<1x3x529xf32>
    %264 = vector.shape_cast %263 : vector<1x3x529xf32> to vector<3x529xf32>
    %265 = vector.broadcast %262 : vector<1x529xf32> to vector<3x529xf32>
    %266 = arith.mulf %265, %264 : vector<3x529xf32>
    %267 = arith.addf %261, %266 : vector<3x529xf32>
    %cst_64 = arith.constant dense<0.000000e+00> : vector<3xf32>
    %268 = vector.multi_reduction <add>, %267, %cst_64 [1] : vector<3x529xf32> to vector<3xf32>
    %269 = vector.shape_cast %268 : vector<3xf32> to vector<3x1xf32>
    %c0_65 = arith.constant 0 : index
    %c0_66 = arith.constant 0 : index
    %270 = vector.load %arg11[%c0_65, %c0_66] : memref<3x1xf32, #tpu.memory_space<vmem>>, vector<3x1xf32>
    %271 = arith.addf %269, %270 : vector<3x1xf32>
    %c0_67 = arith.constant 0 : index
    %c0_68 = arith.constant 0 : index
    %c0_69 = arith.constant 0 : index
    %272 = vector.load %arg12[%c0_67, %c0_68, %c0_69] : memref<1x3x1xf32, #tpu.memory_space<vmem>>, vector<1x3x1xf32>
    %273 = vector.shape_cast %272 : vector<1x3x1xf32> to vector<3x1xf32>
    %274 = vector.shape_cast %271 : vector<3x1xf32> to vector<1x3x1xf32>
    tpu.vector_store %arg12[%c0_67, %c0_68, %c0_69], %274 {strides = array<i32>} : memref<1x3x1xf32, #tpu.memory_space<vmem>>, vector<1x3x1xf32>,
    return
  }
  func.func @transform_0(%arg0: i32) -> (i32, i32, i32) {
    %c0_i32 = arith.constant 0 : i32
    %c0_i32_0 = arith.constant 0 : i32
    %c0_i32_1 = arith.constant 0 : i32
    return %arg0, %c0_i32, %c0_i32_0 : i32, i32, i32
  }
  func.func @transform_1(%arg0: i32) -> (i32, i32, i32) {
    %c0_i32 = arith.constant 0 : i32
    %c0_i32_0 = arith.constant 0 : i32
    %c0_i32_1 = arith.constant 0 : i32
    %c0_i32_2 = arith.constant 0 : i32
    return %c0_i32, %c0_i32_0, %c0_i32_1 : i32, i32, i32
  }
  func.func @transform_2(%arg0: i32) -> (i32, i32) {
    %c0_i32 = arith.constant 0 : i32
    %c0_i32_0 = arith.constant 0 : i32
    %c0_i32_1 = arith.constant 0 : i32
    return %c0_i32, %c0_i32_0 : i32, i32
  }
  func.func @transform_3(%arg0: i32) -> (i32, i32, i32) {
    %c0_i32 = arith.constant 0 : i32
    %c0_i32_0 = arith.constant 0 : i32
    %c0_i32_1 = arith.constant 0 : i32
    %c0_i32_2 = arith.constant 0 : i32
    return %c0_i32, %c0_i32_0, %c0_i32_1 : i32, i32, i32
  }
  func.func @transform_4(%arg0: i32) -> (i32, i32) {
    %c0_i32 = arith.constant 0 : i32
    %c0_i32_0 = arith.constant 0 : i32
    %c0_i32_1 = arith.constant 0 : i32
    return %c0_i32, %c0_i32_0 : i32, i32
  }
  func.func @transform_5(%arg0: i32) -> (i32, i32, i32) {
    %c0_i32 = arith.constant 0 : i32
    %c0_i32_0 = arith.constant 0 : i32
    %c0_i32_1 = arith.constant 0 : i32
    %c0_i32_2 = arith.constant 0 : i32
    return %c0_i32, %c0_i32_0, %c0_i32_1 : i32, i32, i32
  }
  func.func @transform_6(%arg0: i32) -> (i32, i32) {
    %c0_i32 = arith.constant 0 : i32
    %c0_i32_0 = arith.constant 0 : i32
    %c0_i32_1 = arith.constant 0 : i32
    return %c0_i32, %c0_i32_0 : i32, i32
  }
  func.func @transform_7(%arg0: i32) -> (i32, i32, i32) {
    %c0_i32 = arith.constant 0 : i32
    %c0_i32_0 = arith.constant 0 : i32
    %c0_i32_1 = arith.constant 0 : i32
    %c0_i32_2 = arith.constant 0 : i32
    return %c0_i32, %c0_i32_0, %c0_i32_1 : i32, i32, i32
  }
  func.func @transform_8(%arg0: i32) -> (i32, i32) {
    %c0_i32 = arith.constant 0 : i32
    %c0_i32_0 = arith.constant 0 : i32
    %c0_i32_1 = arith.constant 0 : i32
    return %c0_i32, %c0_i32_0 : i32, i32
  }
  func.func @transform_9(%arg0: i32) -> (i32, i32, i32) {
    %c0_i32 = arith.constant 0 : i32
    %c0_i32_0 = arith.constant 0 : i32
    %c0_i32_1 = arith.constant 0 : i32
    %c0_i32_2 = arith.constant 0 : i32
    return %c0_i32, %c0_i32_0, %c0_i32_1 : i32, i32, i32
  }
  func.func @transform_10(%arg0: i32) -> (i32, i32) {
    %c0_i32 = arith.constant 0 : i32
    %c0_i32_0 = arith.constant 0 : i32
    %c0_i32_1 = arith.constant 0 : i32
    return %c0_i32, %c0_i32_0 : i32, i32
  }
  func.func @transform_11(%arg0: i32) -> (i32, i32, i32) {
    %c0_i32 = arith.constant 0 : i32
    %c0_i32_0 = arith.constant 0 : i32
    %c0_i32_1 = arith.constant 0 : i32
    return %arg0, %c0_i32, %c0_i32_0 : i32, i32, i32
  }
}

</mosaic_0001>

<llo_original>
// kernel: tinyvgg_forward.1
$region0: #{tinyvgg_forward.1}
  #allocation0 [shape = 'u32[]', space=smem, size = 0x4, offset = 0x4, fixed_abs, tag = 'smem constant byte address 0x4 - core index']
  #allocation1 [shape = 'u32[144,128]{1,0:T(1,128)}', space=vmem, size = 0x12000, scoped, tag = 'internal scratch']
  %s0 = inlined_call_operand.vmem [shape: f32[2,3,1024], index: 0, kind: input, shape index: {}]
  %s1 = inlined_call_operand.vmem [shape: bf16[9,8,3], index: 1, kind: input, shape index: {}]
  %s2 = inlined_call_operand.vmem [shape: f32[8,1], index: 2, kind: input, shape index: {}]
  %s3 = inlined_call_operand.vmem [shape: bf16[9,8,8], index: 3, kind: input, shape index: {}]
  %s4 = inlined_call_operand.vmem [shape: f32[8,1], index: 4, kind: input, shape index: {}]
  %s5 = inlined_call_operand.vmem [shape: bf16[9,8,8], index: 5, kind: input, shape index: {}]
  %s6 = inlined_call_operand.vmem [shape: f32[8,1], index: 6, kind: input, shape index: {}]
  %s7 = inlined_call_operand.vmem [shape: bf16[9,8,8], index: 7, kind: input, shape index: {}]
  %s8 = inlined_call_operand.vmem [shape: f32[8,1], index: 8, kind: input, shape index: {}]
  %s9 = inlined_call_operand.vmem [shape: f32[8,3,529], index: 9, kind: input, shape index: {}]
  %s10 = inlined_call_operand.vmem [shape: f32[3,1], index: 10, kind: input, shape index: {}]
  %s11 = inlined_call_operand.vmem [shape: f32[2,3,1], index: 11, kind: output, shape index: {}]
  %s12 = sld [smem:[#allocation0]]
  $region77: #{tinyvgg_forward.1} parent=0
    _
  %s14 = ssub.s32 1, %s12
  %s15 = scalar_select 0, %s14, %s12
  loop: start=0, step=1, limit=4
  $region2: #{tinyvgg_forward.1} parent=0 // loop_pre_header
    _
  $region3: #{tinyvgg_forward.1} parent=0 // loop_header
    %s17 = sphi 0, %s21
    %p18 = scmp.ge.s32.totalorder %s17, 4
    %s27 = sphi 0, %s29
    %s30 = sphi 0, %s27
    %s31 = sphi 0, %s30
    %s47 = sphi 0, %s31
    %s51 = sphi 0, %s51
    %s53 = sphi 0, %s51
    %s54 = sphi 0, %s53
    %s68 = sphi 0, %s54
    %s72 = sphi 0, %s72
    %s74 = sphi 0, %s72
    %s75 = sphi 0, %s74
    %s89 = sphi 0, %s75
    %s93 = sphi 0, %s93
    %s95 = sphi 0, %s93
    %s96 = sphi 0, %s95
    %s110 = sphi 0, %s96
    %s114 = sphi 0, %s114
    %s116 = sphi 0, %s114
    %s117 = sphi 0, %s116
    %s131 = sphi 0, %s117
    %s135 = sphi 0, %s135
    %s137 = sphi 0, %s135
    %s138 = sphi 0, %s137
    %s152 = sphi 0, %s138
    %s156 = sphi 0, %s156
    %s158 = sphi 0, %s156
    %s159 = sphi 0, %s158
    %s173 = sphi 0, %s159
    %s177 = sphi 0, %s177
    %s179 = sphi 0, %s177
    %s180 = sphi 0, %s179
    %s194 = sphi 0, %s180
    %s198 = sphi 0, %s198
    %s200 = sphi 0, %s198
    %s201 = sphi 0, %s200
    %s215 = sphi 0, %s201
    %s219 = sphi 0, %s219
    %s221 = sphi 0, %s219
    %s222 = sphi 0, %s221
    %s236 = sphi 0, %s222
    %s240 = sphi 0, %s240
    %s242 = sphi 0, %s240
    %s243 = sphi 0, %s242
    %s257 = sphi 0, %s243
    %s263 = sphi 0, %s265
    %s266 = sphi 0, %s263
    %s267 = sphi 0, %s266
    %s283 = sphi 0, %s267
  $region4: #{tinyvgg_forward.1} parent=0 // loop_header_branch
    %20 = sbr.rel (%p18) target = $region8
  $region5: #{tinyvgg_forward.1} parent=0 // loop_body
    %s22 = ssub.s32 %s17, 1
    %s23 = ssub.s32 %s17, 2
    %s24 = sadd.s32 %s17, 1
    %s25 = ssub.s32 %s17, %s24
    %p26 = scmp.eq.s32.totalorder %s25, 0
    %s28 = sadd.s32 %s27, 1
    %s29 = scalar_select %p26, %s27, %s28
    %p32 = pneg %p26
    %p33 = scmp.eq.s32.totalorder %s17, 1
    %p34 = por %p32, %p33
    %p35 = scmp.ne.s32.totalorder %s27, %s30
    %p36 = scmp.eq.s32.totalorder %s17, 0
    %p37 = por %p35, %p36
    %p38 = scmp.ne.s32.totalorder %s27, %s30
    %p39 = scmp.eq.s32.totalorder %s22, 1
    %p40 = por %p38, %p39
    %p41 = scmp.ne.s32.totalorder %s30, %s31
    %p42 = scmp.eq.s32.totalorder %s22, 0
    %p43 = por %p41, %p42
    %p44 = scmp.ne.s32.totalorder %s30, %s31
    %p45 = scmp.eq.s32.totalorder %s23, 1
    %p46 = por %p44, %p45
    %p48 = scmp.ne.s32.totalorder %s31, %s47
    %p49 = scmp.eq.s32.totalorder %s23, 0
    %p50 = por %p48, %p49
    %s52 = sadd.s32 %s51, 1
    %p55 = scmp.eq.s32.totalorder %s17, 1
    %p56 = scmp.ne.s32.totalorder %s51, %s53
    %p57 = scmp.eq.s32.totalorder %s17, 0
    %p58 = por %p56, %p57
    %p59 = scmp.ne.s32.totalorder %s51, %s53
    %p60 = scmp.eq.s32.totalorder %s22, 1
    %p61 = por %p59, %p60
    %p62 = scmp.ne.s32.totalorder %s53, %s54
    %p63 = scmp.eq.s32.totalorder %s22, 0
    %p64 = por %p62, %p63
    %p65 = scmp.ne.s32.totalorder %s53, %s54
    %p66 = scmp.eq.s32.totalorder %s23, 1
    %p67 = por %p65, %p66
    %p69 = scmp.ne.s32.totalorder %s54, %s68
    %p70 = scmp.eq.s32.totalorder %s23, 0
    %p71 = por %p69, %p70
    %s73 = sadd.s32 %s72, 1
    %p76 = scmp.eq.s32.totalorder %s17, 1
    %p77 = scmp.ne.s32.totalorder %s72, %s74
    %p78 = scmp.eq.s32.totalorder %s17, 0
    %p79 = por %p77, %p78
    %p80 = scmp.ne.s32.totalorder %s72, %s74
    %p81 = scmp.eq.s32.totalorder %s22, 1
    %p82 = por %p80, %p81
    %p83 = scmp.ne.s32.totalorder %s74, %s75
    %p84 = scmp.eq.s32.totalorder %s22, 0
    %p85 = por %p83, %p84
    %p86 = scmp.ne.s32.totalorder %s74, %s75
    %p87 = scmp.eq.s32.totalorder %s23, 1
    %p88 = por %p86, %p87
    %p90 = scmp.ne.s32.totalorder %s75, %s89
    %p91 = scmp.eq.s32.totalorder %s23, 0
    %p92 = por %p90, %p91
    %s94 = sadd.s32 %s93, 1
    %p97 = scmp.eq.s32.totalorder %s17, 1
    %p98 = scmp.ne.s32.totalorder %s93, %s95
    %p99 = scmp.eq.s32.totalorder %s17, 0
    %p100 = por %p98, %p99
    %p101 = scmp.ne.s32.totalorder %s93, %s95
    %p102 = scmp.eq.s32.totalorder %s22, 1
    %p103 = por %p101, %p102
    %p104 = scmp.ne.s32.totalorder %s95, %s96
    %p105 = scmp.eq.s32.totalorder %s22, 0
    %p106 = por %p104, %p105
    %p107 = scmp.ne.s32.totalorder %s95, %s96
    %p108 = scmp.eq.s32.totalorder %s23, 1
    %p109 = por %p107, %p108
    %p111 = scmp.ne.s32.totalorder %s96, %s110
    %p112 = scmp.eq.s32.totalorder %s23, 0
    %p113 = por %p111, %p112
    %s115 = sadd.s32 %s114, 1
    %p118 = scmp.eq.s32.totalorder %s17, 1
    %p119 = scmp.ne.s32.totalorder %s114, %s116
    %p120 = scmp.eq.s32.totalorder %s17, 0
    %p121 = por %p119, %p120
    %p122 = scmp.ne.s32.totalorder %s114, %s116
    %p123 = scmp.eq.s32.totalorder %s22, 1
    %p124 = por %p122, %p123
    %p125 = scmp.ne.s32.totalorder %s116, %s117
    %p126 = scmp.eq.s32.totalorder %s22, 0
    %p127 = por %p125, %p126
    %p128 = scmp.ne.s32.totalorder %s116, %s117
    %p129 = scmp.eq.s32.totalorder %s23, 1
    %p130 = por %p128, %p129
    %p132 = scmp.ne.s32.totalorder %s117, %s131
    %p133 = scmp.eq.s32.totalorder %s23, 0
    %p134 = por %p132, %p133
    %s136 = sadd.s32 %s135, 1
    %p139 = scmp.eq.s32.totalorder %s17, 1
    %p140 = scmp.ne.s32.totalorder %s135, %s137
    %p141 = scmp.eq.s32.totalorder %s17, 0
    %p142 = por %p140, %p141
    %p143 = scmp.ne.s32.totalorder %s135, %s137
    %p144 = scmp.eq.s32.totalorder %s22, 1
    %p145 = por %p143, %p144
    %p146 = scmp.ne.s32.totalorder %s137, %s138
    %p147 = scmp.eq.s32.totalorder %s22, 0
    %p148 = por %p146, %p147
    %p149 = scmp.ne.s32.totalorder %s137, %s138
    %p150 = scmp.eq.s32.totalorder %s23, 1
    %p151 = por %p149, %p150
    %p153 = scmp.ne.s32.totalorder %s138, %s152
    %p154 = scmp.eq.s32.totalorder %s23, 0
    %p155 = por %p153, %p154
    %s157 = sadd.s32 %s156, 1
    %p160 = scmp.eq.s32.totalorder %s17, 1
    %p161 = scmp.ne.s32.totalorder %s156, %s158
    %p162 = scmp.eq.s32.totalorder %s17, 0
    %p163 = por %p161, %p162
    %p164 = scmp.ne.s32.totalorder %s156, %s158
    %p165 = scmp.eq.s32.totalorder %s22, 1
    %p166 = por %p164, %p165
    %p167 = scmp.ne.s32.totalorder %s158, %s159
    %p168 = scmp.eq.s32.totalorder %s22, 0
    %p169 = por %p167, %p168
    %p170 = scmp.ne.s32.totalorder %s158, %s159
    %p171 = scmp.eq.s32.totalorder %s23, 1
    %p172 = por %p170, %p171
    %p174 = scmp.ne.s32.totalorder %s159, %s173
    %p175 = scmp.eq.s32.totalorder %s23, 0
    %p176 = por %p174, %p175
    %s178 = sadd.s32 %s177, 1
    %p181 = scmp.eq.s32.totalorder %s17, 1
    %p182 = scmp.ne.s32.totalorder %s177, %s179
    %p183 = scmp.eq.s32.totalorder %s17, 0
    %p184 = por %p182, %p183
    %p185 = scmp.ne.s32.totalorder %s177, %s179
    %p186 = scmp.eq.s32.totalorder %s22, 1
    %p187 = por %p185, %p186
    %p188 = scmp.ne.s32.totalorder %s179, %s180
    %p189 = scmp.eq.s32.totalorder %s22, 0
    %p190 = por %p188, %p189
    %p191 = scmp.ne.s32.totalorder %s179, %s180
    %p192 = scmp.eq.s32.totalorder %s23, 1
    %p193 = por %p191, %p192
    %p195 = scmp.ne.s32.totalorder %s180, %s194
    %p196 = scmp.eq.s32.totalorder %s23, 0
    %p197 = por %p195, %p196
    %s199 = sadd.s32 %s198, 1
    %p202 = scmp.eq.s32.totalorder %s17, 1
    %p203 = scmp.ne.s32.totalorder %s198, %s200
    %p204 = scmp.eq.s32.totalorder %s17, 0
    %p205 = por %p203, %p204
    %p206 = scmp.ne.s32.totalorder %s198, %s200
    %p207 = scmp.eq.s32.totalorder %s22, 1
    %p208 = por %p206, %p207
    %p209 = scmp.ne.s32.totalorder %s200, %s201
    %p210 = scmp.eq.s32.totalorder %s22, 0
    %p211 = por %p209, %p210
    %p212 = scmp.ne.s32.totalorder %s200, %s201
    %p213 = scmp.eq.s32.totalorder %s23, 1
    %p214 = por %p212, %p213
    %p216 = scmp.ne.s32.totalorder %s201, %s215
    %p217 = scmp.eq.s32.totalorder %s23, 0
    %p218 = por %p216, %p217
    %s220 = sadd.s32 %s219, 1
    %p223 = scmp.eq.s32.totalorder %s17, 1
    %p224 = scmp.ne.s32.totalorder %s219, %s221
    %p225 = scmp.eq.s32.totalorder %s17, 0
    %p226 = por %p224, %p225
    %p227 = scmp.ne.s32.totalorder %s219, %s221
    %p228 = scmp.eq.s32.totalorder %s22, 1
    %p229 = por %p227, %p228
    %p230 = scmp.ne.s32.totalorder %s221, %s222
    %p231 = scmp.eq.s32.totalorder %s22, 0
    %p232 = por %p230, %p231
    %p233 = scmp.ne.s32.totalorder %s221, %s222
    %p234 = scmp.eq.s32.totalorder %s23, 1
    %p235 = por %p233, %p234
    %p237 = scmp.ne.s32.totalorder %s222, %s236
    %p238 = scmp.eq.s32.totalorder %s23, 0
    %p239 = por %p237, %p238
    %s241 = sadd.s32 %s240, 1
    %p244 = scmp.eq.s32.totalorder %s17, 1
    %p245 = scmp.ne.s32.totalorder %s240, %s242
    %p246 = scmp.eq.s32.totalorder %s17, 0
    %p247 = por %p245, %p246
    %p248 = scmp.ne.s32.totalorder %s240, %s242
    %p249 = scmp.eq.s32.totalorder %s22, 1
    %p250 = por %p248, %p249
    %p251 = scmp.ne.s32.totalorder %s242, %s243
    %p252 = scmp.eq.s32.totalorder %s22, 0
    %p253 = por %p251, %p252
    %p254 = scmp.ne.s32.totalorder %s242, %s243
    %p255 = scmp.eq.s32.totalorder %s23, 1
    %p256 = por %p254, %p255
    %p258 = scmp.ne.s32.totalorder %s243, %s257
    %p259 = scmp.eq.s32.totalorder %s23, 0
    %p260 = por %p258, %p259
    %s261 = ssub.s32 %s17, %s24
    %p262 = scmp.eq.s32.totalorder %s261, 0
    %s264 = sadd.s32 %s263, 1
    %s265 = scalar_select %p262, %s263, %s264
    %p268 = pneg %p262
    %p269 = scmp.eq.s32.totalorder %s17, 1
    %p270 = por %p268, %p269
    %p271 = scmp.ne.s32.totalorder %s263, %s266
    %p272 = scmp.eq.s32.totalorder %s17, 0
    %p273 = por %p271, %p272
    %p274 = scmp.ne.s32.totalorder %s263, %s266
    %p275 = scmp.eq.s32.totalorder %s22, 1
    %p276 = por %p274, %p275
    %p277 = scmp.ne.s32.totalorder %s266, %s267
    %p278 = scmp.eq.s32.totalorder %s22, 0
    %p279 = por %p277, %p278
    %p280 = scmp.ne.s32.totalorder %s266, %s267
    %p281 = scmp.eq.s32.totalorder %s23, 1
    %p282 = por %p280, %p281
    %p284 = scmp.ne.s32.totalorder %s267, %s283
    %p285 = scmp.eq.s32.totalorder %s23, 0
    %p286 = por %p284, %p285
    %p287 = scmp.le.s32.totalorder 1, %s17
    %p288 = scmp.lt.s32.totalorder %s17, 3
    %p289 = pnand %p287, %p288
    %p290 = pneg %p289
    // Predicated region
    $region9: #{tinyvgg_forward.1} parent=5 // pred_check
      _
    $region10: #{tinyvgg_forward.1} parent=5 // pred_check_branch
      %292 = sbr.rel (%p289) target = $region12
    $region11: #{tinyvgg_forward.1} parent=5 // pred_region
      %s293 = ssub.s32 %s17, 1
      // Predicated region
      $region13: #{tinyvgg_forward.1} parent=11 // pred_check
        %p294 = pneg %p64
      $region14: #{tinyvgg_forward.1} parent=11 // pred_check_branch
        %296 = sbr.rel (%p294) target = $region16
      $region15: #{tinyvgg_forward.1} parent=11 // pred_region
        _
      $region16: #{tinyvgg_forward.1} parent=11 // pred_fallthru
        _
      // Predicated region
      $region17: #{tinyvgg_forward.1} parent=11 // pred_check
        %p297 = pneg %p85
      $region18: #{tinyvgg_forward.1} parent=11 // pred_check_branch
        %299 = sbr.rel (%p297) target = $region20
      $region19: #{tinyvgg_forward.1} parent=11 // pred_region
        _
      $region20: #{tinyvgg_forward.1} parent=11 // pred_fallthru
        _
      // Predicated region
      $region21: #{tinyvgg_forward.1} parent=11 // pred_check
        %p300 = pneg %p106
      $region22: #{tinyvgg_forward.1} parent=11 // pred_check_branch
        %302 = sbr.rel (%p300) target = $region24
      $region23: #{tinyvgg_forward.1} parent=11 // pred_region
        _
      $region24: #{tinyvgg_forward.1} parent=11 // pred_fallthru
        _
      // Predicated region
      $region25: #{tinyvgg_forward.1} parent=11 // pred_check
        %p303 = pneg %p127
      $region26: #{tinyvgg_forward.1} parent=11 // pred_check_branch
        %305 = sbr.rel (%p303) target = $region28
      $region27: #{tinyvgg_forward.1} parent=11 // pred_region
        _
      $region28: #{tinyvgg_forward.1} parent=11 // pred_fallthru
        _
      // Predicated region
      $region29: #{tinyvgg_forward.1} parent=11 // pred_check
        %p306 = pneg %p148
      $region30: #{tinyvgg_forward.1} parent=11 // pred_check_branch
        %308 = sbr.rel (%p306) target = $region32
      $region31: #{tinyvgg_forward.1} parent=11 // pred_region
        _
      $region32: #{tinyvgg_forward.1} parent=11 // pred_fallthru
        _
      // Predicated region
      $region33: #{tinyvgg_forward.1} parent=11 // pred_check
        %p309 = pneg %p169
      $region34: #{tinyvgg_forward.1} parent=11 // pred_check_branch
        %311 = sbr.rel (%p309) target = $region36
      $region35: #{tinyvgg_forward.1} parent=11 // pred_region
        _
      $region36: #{tinyvgg_forward.1} parent=11 // pred_fallthru
        _
      // Predicated region
      $region37: #{tinyvgg_forward.1} parent=11 // pred_check
        %p312 = pneg %p190
      $region38: #{tinyvgg_forward.1} parent=11 // pred_check_branch
        %314 = sbr.rel (%p312) target = $region40
      $region39: #{tinyvgg_forward.1} parent=11 // pred_region
        _
      $region40: #{tinyvgg_forward.1} parent=11 // pred_fallthru
        _
      // Predicated region
      $region41: #{tinyvgg_forward.1} parent=11 // pred_check
        %p315 = pneg %p211
      $region42: #{tinyvgg_forward.1} parent=11 // pred_check_branch
        %317 = sbr.rel (%p315) target = $region44
      $region43: #{tinyvgg_forward.1} parent=11 // pred_region
        _
      $region44: #{tinyvgg_forward.1} parent=11 // pred_fallthru
        _
      // Predicated region
      $region45: #{tinyvgg_forward.1} parent=11 // pred_check
        %p318 = pneg %p232
      $region46: #{tinyvgg_forward.1} parent=11 // pred_check_branch
        %320 = sbr.rel (%p318) target = $region48
      $region47: #{tinyvgg_forward.1} parent=11 // pred_region
        _
      $region48: #{tinyvgg_forward.1} parent=11 // pred_fallthru
        _
      // Predicated region
      $region49: #{tinyvgg_forward.1} parent=11 // pred_check
        %p321 = pneg %p253
      $region50: #{tinyvgg_forward.1} parent=11 // pred_check_branch
        %323 = sbr.rel (%p321) target = $region52
      $region51: #{tinyvgg_forward.1} parent=11 // pred_region
        _
      $region52: #{tinyvgg_forward.1} parent=11 // pred_fallthru
        _
    $region12: #{tinyvgg_forward.1} parent=5 // pred_fallthru
      _
    %p324 = scmp.lt.s32.totalorder %s17, 2
    // Predicated region
    $region53: #{tinyvgg_forward.1} parent=5 // pred_check
      %p325 = pneg %p324
    $region54: #{tinyvgg_forward.1} parent=5 // pred_check_branch
      %327 = sbr.rel (%p325) target = $region56
    $region55: #{tinyvgg_forward.1} parent=5 // pred_region
      // Predicated region
      $region57: #{tinyvgg_forward.1} parent=55 // pred_check
        %p328 = pneg %p37
      $region58: #{tinyvgg_forward.1} parent=55 // pred_check_branch
        %330 = sbr.rel (%p328) target = $region60
      $region59: #{tinyvgg_forward.1} parent=55 // pred_region
        %p331 = scmp.lt.s32.totalorder %s17, 1
        %s332 = scalar_select %p331, %s17, 1
        %s333 = smul.addr %s332, 8
        %s334 = smul.addr %s333, 4
        %s335 = scalar_lea.vmem %s0, %s334
      $region60: #{tinyvgg_forward.1} parent=55 // pred_fallthru
        _
    $region56: #{tinyvgg_forward.1} parent=5 // pred_fallthru
      _
    %p336 = scmp.le.s32.totalorder 1, %s17
    %p337 = scmp.lt.s32.totalorder %s17, 3
    %p338 = pnand %p336, %p337
    %p339 = pneg %p338
    // Predicated region
    $region61: #{tinyvgg_forward.1} parent=5 // pred_check
      _
    $region62: #{tinyvgg_forward.1} parent=5 // pred_check_branch
      %341 = sbr.rel (%p338) target = $region64
    $region63: #{tinyvgg_forward.1} parent=5 // pred_region
      %s342 = ssub.s32 %s17, 1
      %p343 = scmp.lt.s32.totalorder %s22, 1
      %s344 = scalar_select %p343, %s22, 1
      %s345 = smul.addr %s344, 8
      %s346 = smul.addr %s345, 4
      %s347 = scalar_lea.vmem %s0, %s346
      %p348 = pneg %p43
      %p349 = pneg %p40
      %p350 = pneg %p64
      %p351 = pneg %p61
      %p352 = pneg %p85
      %p353 = pneg %p82
      %p354 = pneg %p106
      %p355 = pneg %p103
      %p356 = pneg %p127
      %p357 = pneg %p124
      %p358 = pneg %p148
      %p359 = pneg %p145
      %p360 = pneg %p169
      %p361 = pneg %p166
      %p362 = pneg %p190
      %p363 = pneg %p187
      %p364 = pneg %p211
      %p365 = pneg %p208
      %p366 = pneg %p232
      %p367 = pneg %p229
      %p368 = pneg %p253
      %p369 = pneg %p250
      %p370 = pneg %p279
      %p371 = pneg %p276
      %p372 = scmp.lt.s32.totalorder %s22, 1
      %s373 = scalar_select %p372, %s22, 1
      %s374 = smul.addr %s373, 4
      %s375 = scalar_lea.vmem %s11, %s374
      %p376 = scmp.lt.s32.totalorder %s22, 1
      %s377 = scalar_select %p376, %s22, 1
      %s378 = smul.addr %s377, 8
      %s379 = smul.addr %s378, 4
      %s380 = scalar_lea.vmem %s0, %s379
      %p381 = scmp.lt.s32.totalorder %s22, 1
      %s382 = scalar_select %p381, %s22, 1
      %s383 = smul.addr %s382, 4
      %s384 = scalar_lea.vmem %s11, %s383
      %v386 = vld [vmem:[%s380] sm:$0x77]
      %v387 = vld [vmem:[%s380 + $0x8] sm:$0x77]
      %v388 = vld [vmem:[%s380 + $0x10] sm:$0x77]
      %v389 = vld [vmem:[%s380 + $0x18] sm:$0x77]
      %v394 = vcombine.high %v386, %v386
      %v395 = vcombine.high %v387, %v387
      %v396 = vcombine.high %v388, %v388
      %v397 = vcombine.high %v389, %v389
      %v402 = vpack.c.bf16 %v386, %v386
      %v403 = vpack.c.bf16 %v394, %v394
      %v404 = vpack.c.bf16 %v387, %v387
      %v405 = vpack.c.bf16 %v395, %v395
      %v406 = vpack.c.bf16 %v388, %v388
      %v407 = vpack.c.bf16 %v396, %v396
      %v408 = vpack.c.bf16 %v389, %v389
      %v409 = vpack.c.bf16 %v397, %v397
      %v410 = vld [vmem:[%s1] sm:$0xf]
      %v411 = vld [vmem:[%s1 + $0x4] sm:$0xf]
      %v412 = vld [vmem:[%s1 + $0x8] sm:$0xf]
      %v413 = vld [vmem:[%s1 + $0xc] sm:$0xf]
      %v414 = vld [vmem:[%s1 + $0x10] sm:$0xf]
      %v415 = vld [vmem:[%s1 + $0x14] sm:$0xf]
      %v416 = vld [vmem:[%s1 + $0x18] sm:$0xf]
      %v417 = vld [vmem:[%s1 + $0x1c] sm:$0xf]
      %v418 = vld [vmem:[%s1 + $0x20] sm:$0xf]
      %427 = vrot.lane.b32.xlu0 %v402, 127
      %v428 = vpop.permute.xlu0 %427
      %429 = vrot.lane.b32.xlu0 %v403, 127
      %v430 = vpop.permute.xlu0 %429
      %431 = vrot.lane.b32.xlu0 %v404, 127
      %v432 = vpop.permute.xlu0 %431
      %433 = vrot.lane.b32.xlu0 %v405, 127
      %v434 = vpop.permute.xlu0 %433
      %435 = vrot.lane.b32.xlu0 %v406, 127
      %v436 = vpop.permute.xlu0 %435
      %437 = vrot.lane.b32.xlu0 %v407, 127
      %v438 = vpop.permute.xlu0 %437
      %439 = vrot.lane.b32.xlu0 %v408, 127
      %v440 = vpop.permute.xlu0 %439
      %441 = vrot.lane.b32.xlu0 %v409, 127
      %v442 = vpop.permute.xlu0 %441
      %vm443 = vcmask 1039360
      %v444 = vsel %vm443, %v428, %v430
      %v445 = vsel %vm443, %v430, %v432
      %v446 = vsel %vm443, %v432, %v434
      %v447 = vsel %vm443, %v434, %v436
      %v448 = vsel %vm443, %v436, %v438
      %v449 = vsel %vm443, %v438, %v440
      %v450 = vsel %vm443, %v440, %v442
      %vm451 = vcmask 23552
      %v453 = vsel %vm451, %v411, 0
      %vm455 = vcmask 1040384
      %vm456 = vcmask 1041408
      %v457 = vsel %vm455, 4294967295, 65535
      %v458 = vsel %vm456, %v457, 0
      %v460 = vand.u32 %v444, %v458
      %v463 = vand.u32 %v445, %v458
      %v466 = vand.u32 %v446, %v458
      %v469 = vand.u32 %v447, %v458
      %v472 = vand.u32 %v448, %v458
      %v475 = vand.u32 %v449, %v458
      %v478 = vand.u32 %v450, %v458
      %v481 = vand.u32 %v442, %v458
      %483 = vmatprep.subr.bf16.mxu0 %v463
      %484 = vmatpush1.bf16.msra.mxu0 %v460
      %485 = vmatprep.subr.bf16.mxu0 0
      %486 = vmatpush1.bf16.msra.mxu0 0
      %487 = vmatprep.subr.bf16.mxu0 0
      %488 = vmatpush1.bf16.msra.mxu0 0
      %489 = vmatprep.subr.bf16.mxu0 0
      %490 = vmatpush1.bf16.msra.mxu0 0
      %491 = vmatprep.subr.bf16.mxu0 0
      %492 = vmatpush1.bf16.msra.mxu0 0
      %493 = vmatprep.subr.bf16.mxu0 0
      %494 = vmatpush1.bf16.msra.mxu0 0
      %495 = vmatprep.subr.bf16.mxu0 0
      %496 = vmatpush1.bf16.msra.mxu0 0
      %497 = vmatprep.subr.bf16.mxu0 0
      %498 = vmatpush1.bf16.msra.mxu0 0
      %499 = vmatprep.subr.bf16.mxu0 0
      %500 = vmatpush1.bf16.msra.mxu0 0
      %501 = vmatprep.subr.bf16.mxu0 0
      %502 = vmatpush1.bf16.msra.mxu0 0
      %503 = vmatprep.subr.bf16.mxu0 0
      %504 = vmatpush1.bf16.msra.mxu0 0
      %505 = vmatprep.subr.bf16.mxu0 0
      %506 = vmatpush1.bf16.msra.mxu0 0
      %507 = vmatprep.subr.bf16.mxu0 0
      %508 = vmatpush1.bf16.msra.mxu0 0
      %509 = vmatprep.subr.bf16.mxu0 0
      %510 = vmatpush1.bf16.msra.mxu0 0
      %511 = vmatprep.subr.bf16.mxu0 0
      %512 = vmatpush1.bf16.msra.mxu0 0
      %513 = vmatprep.subr.bf16.mxu0 0
      %514 = vmatpush1.bf16.msra.mxu0 0
      %515 = vmatprep.mubr.bf16.mxu0 0
      %516 = vmatmul.mubr.bf16.gmra.mrb[0].mxu0 %v453
      %v517 = vpop.f32.mrb[0].mxu0
      %v518 = vadd.f32 0.0, %v517
      %v519 = vpop.f32.mrb[0].mxu0
      %v520 = vadd.f32 0.0, %v519
      %v521 = vpop.f32.mrb[0].mxu0
      %v522 = vpop.f32.mrb[0].mxu0
      %523 = vdwg.mxu0
      %524 = vmatprep.subr.bf16.mxu0 %v469
      %525 = vmatpush1.bf16.msra.mxu0 %v466
      %526 = vmatprep.subr.bf16.mxu0 0
      %527 = vmatpush1.bf16.msra.mxu0 0
      %528 = vmatprep.subr.bf16.mxu0 0
      %529 = vmatpush1.bf16.msra.mxu0 0
      %530 = vmatprep.subr.bf16.mxu0 0
      %531 = vmatpush1.bf16.msra.mxu0 0
      %532 = vmatprep.subr.bf16.mxu0 0
      %533 = vmatpush1.bf16.msra.mxu0 0
      %534 = vmatprep.subr.bf16.mxu0 0
      %535 = vmatpush1.bf16.msra.mxu0 0
      %536 = vmatprep.subr.bf16.mxu0 0
      %537 = vmatpush1.bf16.msra.mxu0 0
      %538 = vmatprep.subr.bf16.mxu0 0
      %539 = vmatpush1.bf16.msra.mxu0 0
      %540 = vmatprep.subr.bf16.mxu0 0
      %541 = vmatpush1.bf16.msra.mxu0 0
      %542 = vmatprep.subr.bf16.mxu0 0
      %543 = vmatpush1.bf16.msra.mxu0 0
      %544 = vmatprep.subr.bf16.mxu0 0
      %545 = vmatpush1.bf16.msra.mxu0 0
      %546 = vmatprep.subr.bf16.mxu0 0
      %547 = vmatpush1.bf16.msra.mxu0 0
      %548 = vmatprep.subr.bf16.mxu0 0
      %549 = vmatpush1.bf16.msra.mxu0 0
      %550 = vmatprep.subr.bf16.mxu0 0
      %551 = vmatpush1.bf16.msra.mxu0 0
      %552 = vmatprep.subr.bf16.mxu0 0
      %553 = vmatpush1.bf16.msra.mxu0 0
      %554 = vmatprep.subr.bf16.mxu0 0
      %555 = vmatpush1.bf16.msra.mxu0 0
      %556 = vmatprep.mubr.bf16.mxu0 0
      %557 = vmatmul.mubr.bf16.gmra.mrb[0].mxu0 %v453
      %v558 = vpop.f32.mrb[0].mxu0
      %v559 = vadd.f32 0.0, %v558
      %v560 = vpop.f32.mrb[0].mxu0
      %v561 = vadd.f32 0.0, %v560
      %v562 = vpop.f32.mrb[0].mxu0
      %v563 = vpop.f32.mrb[0].mxu0
      %564 = vdwg.mxu0
      %565 = vmatprep.subr.bf16.mxu0 %v475
      %566 = vmatpush1.bf16.msra.mxu0 %v472
      %567 = vmatprep.subr.bf16.mxu0 0
      %568 = vmatpush1.bf16.msra.mxu0 0
      %569 = vmatprep.subr.bf16.mxu0 0
      %570 = vmatpush1.bf16.msra.mxu0 0
      %571 = vmatprep.subr.bf16.mxu0 0
      %572 = vmatpush1.bf16.msra.mxu0 0
      %573 = vmatprep.subr.bf16.mxu0 0
      %574 = vmatpush1.bf16.msra.mxu0 0
      %575 = vmatprep.subr.bf16.mxu0 0
      %576 = vmatpush1.bf16.msra.mxu0 0
      %577 = vmatprep.subr.bf16.mxu0 0
      %578 = vmatpush1.bf16.msra.mxu0 0
      %579 = vmatprep.subr.bf16.mxu0 0
      %580 = vmatpush1.bf16.msra.mxu0 0
      %581 = vmatprep.subr.bf16.mxu0 0
      %582 = vmatpush1.bf16.msra.mxu0 0
      %583 = vmatprep.subr.bf16.mxu0 0
      %584 = vmatpush1.bf16.msra.mxu0 0
      %585 = vmatprep.subr.bf16.mxu0 0
      %586 = vmatpush1.bf16.msra.mxu0 0
      %587 = vmatprep.subr.bf16.mxu0 0
      %588 = vmatpush1.bf16.msra.mxu0 0
      %589 = vmatprep.subr.bf16.mxu0 0
      %590 = vmatpush1.bf16.msra.mxu0 0
      %591 = vmatprep.subr.bf16.mxu0 0
      %592 = vmatpush1.bf16.msra.mxu0 0
      %593 = vmatprep.subr.bf16.mxu0 0
      %594 = vmatpush1.bf16.msra.mxu0 0
      %595 = vmatprep.subr.bf16.mxu0 0
      %596 = vmatpush1.bf16.msra.mxu0 0
      %597 = vmatprep.mubr.bf16.mxu0 0
      %598 = vmatmul.mubr.bf16.gmra.mrb[0].mxu0 %v453
      %v599 = vpop.f32.mrb[0].mxu0
      %v600 = vadd.f32 0.0, %v599
      %v601 = vpop.f32.mrb[0].mxu0
      %v602 = vadd.f32 0.0, %v601
      %v603 = vpop.f32.mrb[0].mxu0
      %v604 = vpop.f32.mrb[0].mxu0
      %605 = vdwg.mxu0
      %606 = vmatprep.subr.bf16.mxu0 %v481
      %607 = vmatpush1.bf16.msra.mxu0 %v478
      %608 = vmatprep.subr.bf16.mxu0 0
      %609 = vmatpush1.bf16.msra.mxu0 0
      %610 = vmatprep.subr.bf16.mxu0 0
      %611 = vmatpush1.bf16.msra.mxu0 0
      %612 = vmatprep.subr.bf16.mxu0 0
      %613 = vmatpush1.bf16.msra.mxu0 0
      %614 = vmatprep.subr.bf16.mxu0 0
      %615 = vmatpush1.bf16.msra.mxu0 0
      %616 = vmatprep.subr.bf16.mxu0 0
      %617 = vmatpush1.bf16.msra.mxu0 0
      %618 = vmatprep.subr.bf16.mxu0 0
      %619 = vmatpush1.bf16.msra.mxu0 0
      %620 = vmatprep.subr.bf16.mxu0 0
      %621 = vmatpush1.bf16.msra.mxu0 0
      %622 = vmatprep.subr.bf16.mxu0 0
      %623 = vmatpush1.bf16.msra.mxu0 0
      %624 = vmatprep.subr.bf16.mxu0 0
      %625 = vmatpush1.bf16.msra.mxu0 0
      %626 = vmatprep.subr.bf16.mxu0 0
      %627 = vmatpush1.bf16.msra.mxu0 0
      %628 = vmatprep.subr.bf16.mxu0 0
      %629 = vmatpush1.bf16.msra.mxu0 0
      %630 = vmatprep.subr.bf16.mxu0 0
      %631 = vmatpush1.bf16.msra.mxu0 0
      %632 = vmatprep.subr.bf16.mxu0 0
      %633 = vmatpush1.bf16.msra.mxu0 0
      %634 = vmatprep.subr.bf16.mxu0 0
      %635 = vmatpush1.bf16.msra.mxu0 0
      %636 = vmatprep.subr.bf16.mxu0 0
      %637 = vmatpush1.bf16.msra.mxu0 0
      %638 = vmatprep.mubr.bf16.mxu0 0
      %639 = vmatmul.mubr.bf16.gmra.mrb[0].mxu0 %v453
      %v640 = vpop.f32.mrb[0].mxu0
      %v641 = vadd.f32 0.0, %v640
      %v642 = vpop.f32.mrb[0].mxu0
      %v643 = vadd.f32 0.0, %v642
      %v644 = vpop.f32.mrb[0].mxu0
      %v645 = vpop.f32.mrb[0].mxu0
      %646 = vdwg.mxu0
      %v648 = vsel %vm451, %v410, 0
      %v651 = vand.u32 %v402, %v458
      %v654 = vand.u32 %v403, %v458
      %v657 = vand.u32 %v404, %v458
      %v660 = vand.u32 %v405, %v458
      %v663 = vand.u32 %v406, %v458
      %v666 = vand.u32 %v407, %v458
      %v669 = vand.u32 %v408, %v458
      %v672 = vand.u32 %v409, %v458
      %674 = vmatprep.subr.bf16.mxu0 %v654
      %675 = vmatpush1.bf16.msra.mxu0 %v651
      %676 = vmatprep.subr.bf16.mxu0 0
      %677 = vmatpush1.bf16.msra.mxu0 0
      %678 = vmatprep.subr.bf16.mxu0 0
      %679 = vmatpush1.bf16.msra.mxu0 0
      %680 = vmatprep.subr.bf16.mxu0 0
      %681 = vmatpush1.bf16.msra.mxu0 0
      %682 = vmatprep.subr.bf16.mxu0 0
      %683 = vmatpush1.bf16.msra.mxu0 0
      %684 = vmatprep.subr.bf16.mxu0 0
      %685 = vmatpush1.bf16.msra.mxu0 0
      %686 = vmatprep.subr.bf16.mxu0 0
      %687 = vmatpush1.bf16.msra.mxu0 0
      %688 = vmatprep.subr.bf16.mxu0 0
      %689 = vmatpush1.bf16.msra.mxu0 0
      %690 = vmatprep.subr.bf16.mxu0 0
      %691 = vmatpush1.bf16.msra.mxu0 0
      %692 = vmatprep.subr.bf16.mxu0 0
      %693 = vmatpush1.bf16.msra.mxu0 0
      %694 = vmatprep.subr.bf16.mxu0 0
      %695 = vmatpush1.bf16.msra.mxu0 0
      %696 = vmatprep.subr.bf16.mxu0 0
      %697 = vmatpush1.bf16.msra.mxu0 0
      %698 = vmatprep.subr.bf16.mxu0 0
      %699 = vmatpush1.bf16.msra.mxu0 0
      %700 = vmatprep.subr.bf16.mxu0 0
      %701 = vmatpush1.bf16.msra.mxu0 0
      %702 = vmatprep.subr.bf16.mxu0 0
      %703 = vmatpush1.bf16.msra.mxu0 0
      %704 = vmatprep.subr.bf16.mxu0 0
      %705 = vmatpush1.bf16.msra.mxu0 0
      %706 = vmatprep.mubr.bf16.mxu0 0
      %707 = vmatmul.mubr.bf16.gmra.mrb[0].mxu0 %v648
      %v708 = vpop.f32.mrb[0].mxu0
      %v709 = vadd.f32 %v518, %v708
      %v710 = vpop.f32.mrb[0].mxu0
      %v711 = vadd.f32 %v520, %v710
      %v712 = vpop.f32.mrb[0].mxu0
      %v713 = vpop.f32.mrb[0].mxu0
      %714 = vdwg.mxu0
      %715 = vmatprep.subr.bf16.mxu0 %v660
      %716 = vmatpush1.bf16.msra.mxu0 %v657
      %717 = vmatprep.subr.bf16.mxu0 0
      %718 = vmatpush1.bf16.msra.mxu0 0
      %719 = vmatprep.subr.bf16.mxu0 0
      %720 = vmatpush1.bf16.msra.mxu0 0
      %721 = vmatprep.subr.bf16.mxu0 0
      %722 = vmatpush1.bf16.msra.mxu0 0
      %723 = vmatprep.subr.bf16.mxu0 0
      %724 = vmatpush1.bf16.msra.mxu0 0
      %725 = vmatprep.subr.bf16.mxu0 0
      %726 = vmatpush1.bf16.msra.mxu0 0
      %727 = vmatprep.subr.bf16.mxu0 0
      %728 = vmatpush1.bf16.msra.mxu0 0
      %729 = vmatprep.subr.bf16.mxu0 0
      %730 = vmatpush1.bf16.msra.mxu0 0
      %731 = vmatprep.subr.bf16.mxu0 0
      %732 = vmatpush1.bf16.msra.mxu0 0
      %733 = vmatprep.subr.bf16.mxu0 0
      %734 = vmatpush1.bf16.msra.mxu0 0
      %735 = vmatprep.subr.bf16.mxu0 0
      %736 = vmatpush1.bf16.msra.mxu0 0
      %737 = vmatprep.subr.bf16.mxu0 0
      %738 = vmatpush1.bf16.msra.mxu0 0
      %739 = vmatprep.subr.bf16.mxu0 0
      %740 = vmatpush1.bf16.msra.mxu0 0
      %741 = vmatprep.subr.bf16.mxu0 0
      %742 = vmatpush1.bf16.msra.mxu0 0
      %743 = vmatprep.subr.bf16.mxu0 0
      %744 = vmatpush1.bf16.msra.mxu0 0
      %745 = vmatprep.subr.bf16.mxu0 0
      %746 = vmatpush1.bf16.msra.mxu0 0
      %747 = vmatprep.mubr.bf16.mxu0 0
      %748 = vmatmul.mubr.bf16.gmra.mrb[0].mxu0 %v648
      %v749 = vpop.f32.mrb[0].mxu0
      %v750 = vadd.f32 %v559, %v749
      %v751 = vpop.f32.mrb[0].mxu0
      %v752 = vadd.f32 %v561, %v751
      %v753 = vpop.f32.mrb[0].mxu0
      %v754 = vpop.f32.mrb[0].mxu0
      %755 = vdwg.mxu0
      %756 = vmatprep.subr.bf16.mxu0 %v666
      %757 = vmatpush1.bf16.msra.mxu0 %v663
      %758 = vmatprep.subr.bf16.mxu0 0
      %759 = vmatpush1.bf16.msra.mxu0 0
      %760 = vmatprep.subr.bf16.mxu0 0
      %761 = vmatpush1.bf16.msra.mxu0 0
      %762 = vmatprep.subr.bf16.mxu0 0
      %763 = vmatpush1.bf16.msra.mxu0 0
      %764 = vmatprep.subr.bf16.mxu0 0
      %765 = vmatpush1.bf16.msra.mxu0 0
      %766 = vmatprep.subr.bf16.mxu0 0
      %767 = vmatpush1.bf16.msra.mxu0 0
      %768 = vmatprep.subr.bf16.mxu0 0
      %769 = vmatpush1.bf16.msra.mxu0 0
      %770 = vmatprep.subr.bf16.mxu0 0
      %771 = vmatpush1.bf16.msra.mxu0 0
      %772 = vmatprep.subr.bf16.mxu0 0
      %773 = vmatpush1.bf16.msra.mxu0 0
      %774 = vmatprep.subr.bf16.mxu0 0
      %775 = vmatpush1.bf16.msra.mxu0 0
      %776 = vmatprep.subr.bf16.mxu0 0
      %777 = vmatpush1.bf16.msra.mxu0 0
      %778 = vmatprep.subr.bf16.mxu0 0
      %779 = vmatpush1.bf16.msra.mxu0 0
      %780 = vmatprep.subr.bf16.mxu0 0
      %781 = vmatpush1.bf16.msra.mxu0 0
      %782 = vmatprep.subr.bf16.mxu0 0
      %783 = vmatpush1.bf16.msra.mxu0 0
      %784 = vmatprep.subr.bf16.mxu0 0
      %785 = vmatpush1.bf16.msra.mxu0 0
      %786 = vmatprep.subr.bf16.mxu0 0
      %787 = vmatpush1.bf16.msra.mxu0 0
      %788 = vmatprep.mubr.bf16.mxu0 0
      %789 = vmatmul.mubr.bf16.gmra.mrb[0].mxu0 %v648
      %v790 = vpop.f32.mrb[0].mxu0
      %v791 = vadd.f32 %v600, %v790
      %v792 = vpop.f32.mrb[0].mxu0
      %v793 = vadd.f32 %v602, %v792
      %v794 = vpop.f32.mrb[0].mxu0
      %v795 = vpop.f32.mrb[0].mxu0
      %796 = vdwg.mxu0
      %797 = vmatprep.subr.bf16.mxu0 %v672
      %798 = vmatpush1.bf16.msra.mxu0 %v669
      %799 = vmatprep.subr.bf16.mxu0 0
      %800 = vmatpush1.bf16.msra.mxu0 0
      %801 = vmatprep.subr.bf16.mxu0 0
      %802 = vmatpush1.bf16.msra.mxu0 0
      %803 = vmatprep.subr.bf16.mxu0 0
      %804 = vmatpush1.bf16.msra.mxu0 0
      %805 = vmatprep.subr.bf16.mxu0 0
      %806 = vmatpush1.bf16.msra.mxu0 0
      %807 = vmatprep.subr.bf16.mxu0 0
      %808 = vmatpush1.bf16.msra.mxu0 0
      %809 = vmatprep.subr.bf16.mxu0 0
      %810 = vmatpush1.bf16.msra.mxu0 0
      %811 = vmatprep.subr.bf16.mxu0 0
      %812 = vmatpush1.bf16.msra.mxu0 0
      %813 = vmatprep.subr.bf16.mxu0 0
      %814 = vmatpush1.bf16.msra.mxu0 0
      %815 = vmatprep.subr.bf16.mxu0 0
      %816 = vmatpush1.bf16.msra.mxu0 0
      %817 = vmatprep.subr.bf16.mxu0 0
      %818 = vmatpush1.bf16.msra.mxu0 0
      %819 = vmatprep.subr.bf16.mxu0 0
      %820 = vmatpush1.bf16.msra.mxu0 0
      %821 = vmatprep.subr.bf16.mxu0 0
      %822 = vmatpush1.bf16.msra.mxu0 0
      %823 = vmatprep.subr.bf16.mxu0 0
      %824 = vmatpush1.bf16.msra.mxu0 0
      %825 = vmatprep.subr.bf16.mxu0 0
      %826 = vmatpush1.bf16.msra.mxu0 0
      %827 = vmatprep.subr.bf16.mxu0 0
      %828 = vmatpush1.bf16.msra.mxu0 0
      %829 = vmatprep.mubr.bf16.mxu0 0
      %830 = vmatmul.mubr.bf16.gmra.mrb[0].mxu0 %v648
      %v831 = vpop.f32.mrb[0].mxu0
      %v832 = vadd.f32 %v641, %v831
      %v833 = vpop.f32.mrb[0].mxu0
      %v834 = vadd.f32 %v643, %v833
      %v835 = vpop.f32.mrb[0].mxu0
      %v836 = vpop.f32.mrb[0].mxu0
      %837 = vdwg.mxu0
      %838 = vrot.lane.b32.xlu0 %v402, 126
      %v839 = vpop.permute.xlu0 %838
      %840 = vrot.lane.b32.xlu0 %v403, 126
      %v841 = vpop.permute.xlu0 %840
      %842 = vrot.lane.b32.xlu0 %v404, 126
      %v843 = vpop.permute.xlu0 %842
      %844 = vrot.lane.b32.xlu0 %v405, 126
      %v845 = vpop.permute.xlu0 %844
      %846 = vrot.lane.b32.xlu0 %v406, 126
      %v847 = vpop.permute.xlu0 %846
      %848 = vrot.lane.b32.xlu0 %v407, 126
      %v849 = vpop.permute.xlu0 %848
      %850 = vrot.lane.b32.xlu0 %v408, 126
      %v851 = vpop.permute.xlu0 %850
      %852 = vrot.lane.b32.xlu0 %v409, 126
      %v853 = vpop.permute.xlu0 %852
      %vm854 = vcmask 1031168
      %v855 = vsel %vm854, %v839, %v841
      %v856 = vsel %vm854, %v841, %v843
      %v857 = vsel %vm854, %v843, %v845
      %v858 = vsel %vm854, %v845, %v847
      %v859 = vsel %vm854, %v847, %v849
      %v860 = vsel %vm854, %v849, %v851
      %v861 = vsel %vm854, %v851, %v853
      %v863 = vsel %vm451, %v412, 0
      %v866 = vand.u32 %v855, %v458
      %v869 = vand.u32 %v856, %v458
      %v872 = vand.u32 %v857, %v458
      %v875 = vand.u32 %v858, %v458
      %v878 = vand.u32 %v859, %v458
      %v881 = vand.u32 %v860, %v458
      %v884 = vand.u32 %v861, %v458
      %v887 = vand.u32 %v853, %v458
      %889 = vmatprep.subr.bf16.mxu0 %v869
      %890 = vmatpush1.bf16.msra.mxu0 %v866
      %891 = vmatprep.subr.bf16.mxu0 0
      %892 = vmatpush1.bf16.msra.mxu0 0
      %893 = vmatprep.subr.bf16.mxu0 0
      %894 = vmatpush1.bf16.msra.mxu0 0
      %895 = vmatprep.subr.bf16.mxu0 0
      %896 = vmatpush1.bf16.msra.mxu0 0
      %897 = vmatprep.subr.bf16.mxu0 0
      %898 = vmatpush1.bf16.msra.mxu0 0
      %899 = vmatprep.subr.bf16.mxu0 0
      %900 = vmatpush1.bf16.msra.mxu0 0
      %901 = vmatprep.subr.bf16.mxu0 0
      %902 = vmatpush1.bf16.msra.mxu0 0
      %903 = vmatprep.subr.bf16.mxu0 0
      %904 = vmatpush1.bf16.msra.mxu0 0
      %905 = vmatprep.subr.bf16.mxu0 0
      %906 = vmatpush1.bf16.msra.mxu0 0
      %907 = vmatprep.subr.bf16.mxu0 0
      %908 = vmatpush1.bf16.msra.mxu0 0
      %909 = vmatprep.subr.bf16.mxu0 0
      %910 = vmatpush1.bf16.msra.mxu0 0
      %911 = vmatprep.subr.bf16.mxu0 0
      %912 = vmatpush1.bf16.msra.mxu0 0
      %913 = vmatprep.subr.bf16.mxu0 0
      %914 = vmatpush1.bf16.msra.mxu0 0
      %915 = vmatprep.subr.bf16.mxu0 0
      %916 = vmatpush1.bf16.msra.mxu0 0
      %917 = vmatprep.subr.bf16.mxu0 0
      %918 = vmatpush1.bf16.msra.mxu0 0
      %919 = vmatprep.subr.bf16.mxu0 0
      %920 = vmatpush1.bf16.msra.mxu0 0
      %921 = vmatprep.mubr.bf16.mxu0 0
      %922 = vmatmul.mubr.bf16.gmra.mrb[0].mxu0 %v863
      %v923 = vpop.f32.mrb[0].mxu0
      %v924 = vadd.f32 0.0, %v923
      %v925 = vpop.f32.mrb[0].mxu0
      %v926 = vadd.f32 0.0, %v925
      %v927 = vpop.f32.mrb[0].mxu0
      %v928 = vpop.f32.mrb[0].mxu0
      %929 = vdwg.mxu0
      %930 = vmatprep.subr.bf16.mxu0 %v875
      %931 = vmatpush1.bf16.msra.mxu0 %v872
      %932 = vmatprep.subr.bf16.mxu0 0
      %933 = vmatpush1.bf16.msra.mxu0 0
      %934 = vmatprep.subr.bf16.mxu0 0
      %935 = vmatpush1.bf16.msra.mxu0 0
      %936 = vmatprep.subr.bf16.mxu0 0
      %937 = vmatpush1.bf16.msra.mxu0 0
      %938 = vmatprep.subr.bf16.mxu0 0
      %939 = vmatpush1.bf16.msra.mxu0 0
      %940 = vmatprep.subr.bf16.mxu0 0
      %941 = vmatpush1.bf16.msra.mxu0 0
      %942 = vmatprep.subr.bf16.mxu0 0
      %943 = vmatpush1.bf16.msra.mxu0 0
      %944 = vmatprep.subr.bf16.mxu0 0
      %945 = vmatpush1.bf16.msra.mxu0 0
      %946 = vmatprep.subr.bf16.mxu0 0
      %947 = vmatpush1.bf16.msra.mxu0 0
      %948 = vmatprep.subr.bf16.mxu0 0
      %949 = vmatpush1.bf16.msra.mxu0 0
      %950 = vmatprep.subr.bf16.mxu0 0
      %951 = vmatpush1.bf16.msra.mxu0 0
      %952 = vmatprep.subr.bf16.mxu0 0
      %953 = vmatpush1.bf16.msra.mxu0 0
      %954 = vmatprep.subr.bf16.mxu0 0
      %955 = vmatpush1.bf16.msra.mxu0 0
      %956 = vmatprep.subr.bf16.mxu0 0
      %957 = vmatpush1.bf16.msra.mxu0 0
      %958 = vmatprep.subr.bf16.mxu0 0
      %959 = vmatpush1.bf16.msra.mxu0 0
      %960 = vmatprep.subr.bf16.mxu0 0
      %961 = vmatpush1.bf16.msra.mxu0 0
      %962 = vmatprep.mubr.bf16.mxu0 0
      %963 = vmatmul.mubr.bf16.gmra.mrb[0].mxu0 %v863
      %v964 = vpop.f32.mrb[0].mxu0
      %v965 = vadd.f32 0.0, %v964
      %v966 = vpop.f32.mrb[0].mxu0
      %v967 = vadd.f32 0.0, %v966
      %v968 = vpop.f32.mrb[0].mxu0
      %v969 = vpop.f32.mrb[0].mxu0
      %970 = vdwg.mxu0
      %971 = vmatprep.subr.bf16.mxu0 %v881
      %972 = vmatpush1.bf16.msra.mxu0 %v878
      %973 = vmatprep.subr.bf16.mxu0 0
      %974 = vmatpush1.bf16.msra.mxu0 0
      %975 = vmatprep.subr.bf16.mxu0 0
      %976 = vmatpush1.bf16.msra.mxu0 0
      %977 = vmatprep.subr.bf16.mxu0 0
      %978 = vmatpush1.bf16.msra.mxu0 0
      %979 = vmatprep.subr.bf16.mxu0 0
      %980 = vmatpush1.bf16.msra.mxu0 0
      %981 = vmatprep.subr.bf16.mxu0 0
      %982 = vmatpush1.bf16.msra.mxu0 0
      %983 = vmatprep.subr.bf16.mxu0 0
      %984 = vmatpush1.bf16.msra.mxu0 0
      %985 = vmatprep.subr.bf16.mxu0 0
      %986 = vmatpush1.bf16.msra.mxu0 0
      %987 = vmatprep.subr.bf16.mxu0 0
      %988 = vmatpush1.bf16.msra.mxu0 0
      %989 = vmatprep.subr.bf16.mxu0 0
      %990 = vmatpush1.bf16.msra.mxu0 0
      %991 = vmatprep.subr.bf16.mxu0 0
      %992 = vmatpush1.bf16.msra.mxu0 0
      %993 = vmatprep.subr.bf16.mxu0 0
      %994 = vmatpush1.bf16.msra.mxu0 0
      %995 = vmatprep.subr.bf16.mxu0 0
      %996 = vmatpush1.bf16.msra.mxu0 0
      %997 = vmatprep.subr.bf16.mxu0 0
      %998 = vmatpush1.bf16.msra.mxu0 0
      %999 = vmatprep.subr.bf16.mxu0 0
      %1000 = vmatpush1.bf16.msra.mxu0 0
      %1001 = vmatprep.subr.bf16.mxu0 0
      %1002 = vmatpush1.bf16.msra.mxu0 0
      %1003 = vmatprep.mubr.bf16.mxu0 0
      %1004 = vmatmul.mubr.bf16.gmra.mrb[0].mxu0 %v863
      %v1005 = vpop.f32.mrb[0].mxu0
      %v1006 = vadd.f32 0.0, %v1005
      %v1007 = vpop.f32.mrb[0].mxu0
      %v1008 = vadd.f32 0.0, %v1007
      %v1009 = vpop.f32.mrb[0].mxu0
      %v1010 = vpop.f32.mrb[0].mxu0
      %1011 = vdwg.mxu0
      %1012 = vmatprep.subr.bf16.mxu0 %v887
      %1013 = vmatpush1.bf16.msra.mxu0 %v884
      %1014 = vmatprep.subr.bf16.mxu0 0
      %1015 = vmatpush1.bf16.msra.mxu0 0
      %1016 = vmatprep.subr.bf16.mxu0 0
      %1017 = vmatpush1.bf16.msra.mxu0 0
      %1018 = vmatprep.subr.bf16.mxu0 0
      %1019 = vmatpush1.bf16.msra.mxu0 0
      %1020 = vmatprep.subr.bf16.mxu0 0
      %1021 = vmatpush1.bf16.msra.mxu0 0
      %1022 = vmatprep.subr.bf16.mxu0 0
      %1023 = vmatpush1.bf16.msra.mxu0 0
      %1024 = vmatprep.subr.bf16.mxu0 0
      %1025 = vmatpush1.bf16.msra.mxu0 0
      %1026 = vmatprep.subr.bf16.mxu0 0
      %1027 = vmatpush1.bf16.msra.mxu0 0
      %1028 = vmatprep.subr.bf16.mxu0 0
      %1029 = vmatpush1.bf16.msra.mxu0 0
      %1030 = vmatprep.subr.bf16.mxu0 0
      %1031 = vmatpush1.bf16.msra.mxu0 0
      %1032 = vmatprep.subr.bf16.mxu0 0
      %1033 = vmatpush1.bf16.msra.mxu0 0
      %1034 = vmatprep.subr.bf16.mxu0 0
      %1035 = vmatpush1.bf16.msra.mxu0 0
      %1036 = vmatprep.subr.bf16.mxu0 0
      %1037 = vmatpush1.bf16.msra.mxu0 0
      %1038 = vmatprep.subr.bf16.mxu0 0
      %1039 = vmatpush1.bf16.msra.mxu0 0
      %1040 = vmatprep.subr.bf16.mxu0 0
      %1041 = vmatpush1.bf16.msra.mxu0 0
      %1042 = vmatprep.subr.bf16.mxu0 0
      %1043 = vmatpush1.bf16.msra.mxu0 0
      %1044 = vmatprep.mubr.bf16.mxu0 0
      %1045 = vmatmul.mubr.bf16.gmra.mrb[0].mxu0 %v863
      %v1046 = vpop.f32.mrb[0].mxu0
      %v1047 = vadd.f32 0.0, %v1046
      %v1048 = vpop.f32.mrb[0].mxu0
      %v1049 = vadd.f32 0.0, %v1048
      %v1050 = vpop.f32.mrb[0].mxu0
      %v1051 = vpop.f32.mrb[0].mxu0
      %1052 = vdwg.mxu0
      %v1053 = vadd.f32 %v709, %v924
      %v1054 = vadd.f32 %v711, %v926
      %v1055 = vadd.f32 %v750, %v965
      %v1056 = vadd.f32 %v752, %v967
      %v1057 = vadd.f32 %v791, %v1006
      %v1058 = vadd.f32 %v793, %v1008
      %v1059 = vadd.f32 %v832, %v1047
      %v1060 = vadd.f32 %v834, %v1049
      %1061 = vrot.lane.b32.xlu0 %v402, 96
      %v1062 = vpop.permute.xlu0 %1061
      %1063 = vrot.lane.b32.xlu0 %v403, 96
      %v1064 = vpop.permute.xlu0 %1063
      %1065 = vrot.lane.b32.xlu0 %v404, 96
      %v1066 = vpop.permute.xlu0 %1065
      %1067 = vrot.lane.b32.xlu0 %v405, 96
      %v1068 = vpop.permute.xlu0 %1067
      %1069 = vrot.lane.b32.xlu0 %v406, 96
      %v1070 = vpop.permute.xlu0 %1069
      %1071 = vrot.lane.b32.xlu0 %v407, 96
      %v1072 = vpop.permute.xlu0 %1071
      %1073 = vrot.lane.b32.xlu0 %v408, 96
      %v1074 = vpop.permute.xlu0 %1073
      %1075 = vrot.lane.b32.xlu0 %v409, 96
      %v1076 = vpop.permute.xlu0 %1075
      %vm1077 = vcmask 785408
      %v1078 = vsel %vm1077, %v1062, %v1064
      %v1079 = vsel %vm1077, %v1064, %v1066
      %v1080 = vsel %vm1077, %v1066, %v1068
      %v1081 = vsel %vm1077, %v1068, %v1070
      %v1082 = vsel %vm1077, %v1070, %v1072
      %v1083 = vsel %vm1077, %v1072, %v1074
      %v1084 = vsel %vm1077, %v1074, %v1076
      %v1086 = vsel %vm451, %v413, 0
      %v1089 = vand.u32 %v1078, %v458
      %v1092 = vand.u32 %v1079, %v458
      %v1095 = vand.u32 %v1080, %v458
      %v1098 = vand.u32 %v1081, %v458
      %v1101 = vand.u32 %v1082, %v458
      %v1104 = vand.u32 %v1083, %v458
      %v1107 = vand.u32 %v1084, %v458
      %v1110 = vand.u32 %v1076, %v458
      %1112 = vmatprep.subr.bf16.mxu0 %v1092
      %1113 = vmatpush1.bf16.msra.mxu0 %v1089
      %1114 = vmatprep.subr.bf16.mxu0 0
      %1115 = vmatpush1.bf16.msra.mxu0 0
      %1116 = vmatprep.subr.bf16.mxu0 0
      %1117 = vmatpush1.bf16.msra.mxu0 0
      %1118 = vmatprep.subr.bf16.mxu0 0
      %1119 = vmatpush1.bf16.msra.mxu0 0
      %1120 = vmatprep.subr.bf16.mxu0 0
      %1121 = vmatpush1.bf16.msra.mxu0 0
      %1122 = vmatprep.subr.bf16.mxu0 0
      %1123 = vmatpush1.bf16.msra.mxu0 0
      %1124 = vmatprep.subr.bf16.mxu0 0
      %1125 = vmatpush1.bf16.msra.mxu0 0
      %1126 = vmatprep.subr.bf16.mxu0 0
      %1127 = vmatpush1.bf16.msra.mxu0 0
      %1128 = vmatprep.subr.bf16.mxu0 0
      %1129 = vmatpush1.bf16.msra.mxu0 0
      %1130 = vmatprep.subr.bf16.mxu0 0
      %1131 = vmatpush1.bf16.msra.mxu0 0
      %1132 = vmatprep.subr.bf16.mxu0 0
      %1133 = vmatpush1.bf16.msra.mxu0 0
      %1134 = vmatprep.subr.bf16.mxu0 0
      %1135 = vmatpush1.bf16.msra.mxu0 0
      %1136 = vmatprep.subr.bf16.mxu0 0
      %1137 = vmatpush1.bf16.msra.mxu0 0
      %1138 = vmatprep.subr.bf16.mxu0 0
      %1139 = vmatpush1.bf16.msra.mxu0 0
      %1140 = vmatprep.subr.bf16.mxu0 0
      %1141 = vmatpush1.bf16.msra.mxu0 0
      %1142 = vmatprep.subr.bf16.mxu0 0
      %1143 = vmatpush1.bf16.msra.mxu0 0
      %1144 = vmatprep.mubr.bf16.mxu0 0
      %1145 = vmatmul.mubr.bf16.gmra.mrb[0].mxu0 %v1086
      %v1146 = vpop.f32.mrb[0].mxu0
      %v1147 = vadd.f32 0.0, %v1146
      %v1148 = vpop.f32.mrb[0].mxu0
      %v1149 = vadd.f32 0.0, %v1148
      %v1150 = vpop.f32.mrb[0].mxu0
      %v1151 = vpop.f32.mrb[0].mxu0
      %1152 = vdwg.mxu0
      %1153 = vmatprep.subr.bf16.mxu0 %v1098
      %1154 = vmatpush1.bf16.msra.mxu0 %v1095
      %1155 = vmatprep.subr.bf16.mxu0 0
      %1156 = vmatpush1.bf16.msra.mxu0 0
      %1157 = vmatprep.subr.bf16.mxu0 0
      %1158 = vmatpush1.bf16.msra.mxu0 0
      %1159 = vmatprep.subr.bf16.mxu0 0
      %1160 = vmatpush1.bf16.msra.mxu0 0
      %1161 = vmatprep.subr.bf16.mxu0 0
      %1162 = vmatpush1.bf16.msra.mxu0 0
      %1163 = vmatprep.subr.bf16.mxu0 0
      %1164 = vmatpush1.bf16.msra.mxu0 0
      %1165 = vmatprep.subr.bf16.mxu0 0
      %1166 = vmatpush1.bf16.msra.mxu0 0
      %1167 = vmatprep.subr.bf16.mxu0 0
      %1168 = vmatpush1.bf16.msra.mxu0 0
      %1169 = vmatprep.subr.bf16.mxu0 0
      %1170 = vmatpush1.bf16.msra.mxu0 0
      %1171 = vmatprep.subr.bf16.mxu0 0
      %1172 = vmatpush1.bf16.msra.mxu0 0
      %1173 = vmatprep.subr.bf16.mxu0 0
      %1174 = vmatpush1.bf16.msra.mxu0 0
      %1175 = vmatprep.subr.bf16.mxu0 0
      %1176 = vmatpush1.bf16.msra.mxu0 0
      %1177 = vmatprep.subr.bf16.mxu0 0
      %1178 = vmatpush1.bf16.msra.mxu0 0
      %1179 = vmatprep.subr.bf16.mxu0 0
      %1180 = vmatpush1.bf16.msra.mxu0 0
      %1181 = vmatprep.subr.bf16.mxu0 0
      %1182 = vmatpush1.bf16.msra.mxu0 0
      %1183 = vmatprep.subr.bf16.mxu0 0
      %1184 = vmatpush1.bf16.msra.mxu0 0
      %1185 = vmatprep.mubr.bf16.mxu0 0
      %1186 = vmatmul.mubr.bf16.gmra.mrb[0].mxu0 %v1086
      %v1187 = vpop.f32.mrb[0].mxu0
      %v1188 = vadd.f32 0.0, %v1187
      %v1189 = vpop.f32.mrb[0].mxu0
      %v1190 = vadd.f32 0.0, %v1189
      %v1191 = vpop.f32.mrb[0].mxu0
      %v1192 = vpop.f32.mrb[0].mxu0
      %1193 = vdwg.mxu0
      %1194 = vmatprep.subr.bf16.mxu0 %v1104
      %1195 = vmatpush1.bf16.msra.mxu0 %v1101
      %1196 = vmatprep.subr.bf16.mxu0 0
      %1197 = vmatpush1.bf16.msra.mxu0 0
      %1198 = vmatprep.subr.bf16.mxu0 0
      %1199 = vmatpush1.bf16.msra.mxu0 0
      %1200 = vmatprep.subr.bf16.mxu0 0
      %1201 = vmatpush1.bf16.msra.mxu0 0
      %1202 = vmatprep.subr.bf16.mxu0 0
      %1203 = vmatpush1.bf16.msra.mxu0 0
      %1204 = vmatprep.subr.bf16.mxu0 0
      %1205 = vmatpush1.bf16.msra.mxu0 0
      %1206 = vmatprep.subr.bf16.mxu0 0
      %1207 = vmatpush1.bf16.msra.mxu0 0
      %1208 = vmatprep.subr.bf16.mxu0 0
      %1209 = vmatpush1.bf16.msra.mxu0 0
      %1210 = vmatprep.subr.bf16.mxu0 0
      %1211 = vmatpush1.bf16.msra.mxu0 0
      %1212 = vmatprep.subr.bf16.mxu0 0
      %1213 = vmatpush1.bf16.msra.mxu0 0
      %1214 = vmatprep.subr.bf16.mxu0 0
      %1215 = vmatpush1.bf16.msra.mxu0 0
      %1216 = vmatprep.subr.bf16.mxu0 0
      %1217 = vmatpush1.bf16.msra.mxu0 0
      %1218 = vmatprep.subr.bf16.mxu0 0
      %1219 = vmatpush1.bf16.msra.mxu0 0
      %1220 = vmatprep.subr.bf16.mxu0 0
      %1221 = vmatpush1.bf16.msra.mxu0 0
      %1222 = vmatprep.subr.bf16.mxu0 0
      %1223 = vmatpush1.bf16.msra.mxu0 0
      %1224 = vmatprep.subr.bf16.mxu0 0
      %1225 = vmatpush1.bf16.msra.mxu0 0
      %1226 = vmatprep.mubr.bf16.mxu0 0
      %1227 = vmatmul.mubr.bf16.gmra.mrb[0].mxu0 %v1086
      %v1228 = vpop.f32.mrb[0].mxu0
      %v1229 = vadd.f32 0.0, %v1228
      %v1230 = vpop.f32.mrb[0].mxu0
      %v1231 = vadd.f32 0.0, %v1230
      %v1232 = vpop.f32.mrb[0].mxu0
      %v1233 = vpop.f32.mrb[0].mxu0
      %1234 = vdwg.mxu0
      %1235 = vmatprep.subr.bf16.mxu0 %v1110
      %1236 = vmatpush1.bf16.msra.mxu0 %v1107
      %1237 = vmatprep.subr.bf16.mxu0 0
      %1238 = vmatpush1.bf16.msra.mxu0 0
      %1239 = vmatprep.subr.bf16.mxu0 0
      %1240 = vmatpush1.bf16.msra.mxu0 0
      %1241 = vmatprep.subr.bf16.mxu0 0
      %1242 = vmatpush1.bf16.msra.mxu0 0
      %1243 = vmatprep.subr.bf16.mxu0 0
      %1244 = vmatpush1.bf16.msra.mxu0 0
      %1245 = vmatprep.subr.bf16.mxu0 0
      %1246 = vmatpush1.bf16.msra.mxu0 0
      %1247 = vmatprep.subr.bf16.mxu0 0
      %1248 = vmatpush1.bf16.msra.mxu0 0
      %1249 = vmatprep.subr.bf16.mxu0 0
      %1250 = vmatpush1.bf16.msra.mxu0 0
      %1251 = vmatprep.subr.bf16.mxu0 0
      %1252 = vmatpush1.bf16.msra.mxu0 0
      %1253 = vmatprep.subr.bf16.mxu0 0
      %1254 = vmatpush1.bf16.msra.mxu0 0
      %1255 = vmatprep.subr.bf16.mxu0 0
      %1256 = vmatpush1.bf16.msra.mxu0 0
      %1257 = vmatprep.subr.bf16.mxu0 0
      %1258 = vmatpush1.bf16.msra.mxu0 0
      %1259 = vmatprep.subr.bf16.mxu0 0
      %1260 = vmatpush1.bf16.msra.mxu0 0
      %1261 = vmatprep.subr.bf16.mxu0 0
      %1262 = vmatpush1.bf16.msra.mxu0 0
      %1263 = vmatprep.subr.bf16.mxu0 0
      %1264 = vmatpush1.bf16.msra.mxu0 0
      %1265 = vmatprep.subr.bf16.mxu0 0
      %1266 = vmatpush1.bf16.msra.mxu0 0
      %1267 = vmatprep.mubr.bf16.mxu0 0
      %1268 = vmatmul.mubr.bf16.gmra.mrb[0].mxu0 %v1086
      %v1269 = vpop.f32.mrb[0].mxu0
      %v1270 = vadd.f32 0.0, %v1269
      %v1271 = vpop.f32.mrb[0].mxu0
      %v1272 = vadd.f32 0.0, %v1271
      %v1273 = vpop.f32.mrb[0].mxu0
      %v1274 = vpop.f32.mrb[0].mxu0
      %1275 = vdwg.mxu0
      %v1276 = vadd.f32 %v1053, %v1147
      %v1277 = vadd.f32 %v1054, %v1149
      %v1278 = vadd.f32 %v1055, %v1188
      %v1279 = vadd.f32 %v1056, %v1190
      %v1280 = vadd.f32 %v1057, %v1229
      %v1281 = vadd.f32 %v1058, %v1231
      %v1282 = vadd.f32 %v1059, %v1270
      %v1283 = vadd.f32 %v1060, %v1272
      %1284 = vrot.lane.b32.xlu0 %v402, 95
      %v1285 = vpop.permute.xlu0 %1284
      %1286 = vrot.lane.b32.xlu0 %v403, 95
      %v1287 = vpop.permute.xlu0 %1286
      %1288 = vrot.lane.b32.xlu0 %v404, 95
      %v1289 = vpop.permute.xlu0 %1288
      %1290 = vrot.lane.b32.xlu0 %v405, 95
      %v1291 = vpop.permute.xlu0 %1290
      %1292 = vrot.lane.b32.xlu0 %v406, 95
      %v1293 = vpop.permute.xlu0 %1292
      %1294 = vrot.lane.b32.xlu0 %v407, 95
      %v1295 = vpop.permute.xlu0 %1294
      %1296 = vrot.lane.b32.xlu0 %v408, 95
      %v1297 = vpop.permute.xlu0 %1296
      %1298 = vrot.lane.b32.xlu0 %v409, 95
      %v1299 = vpop.permute.xlu0 %1298
      %vm1300 = vcmask 777216
      %v1301 = vsel %vm1300, %v1285, %v1287
      %v1302 = vsel %vm1300, %v1287, %v1289
      %v1303 = vsel %vm1300, %v1289, %v1291
      %v1304 = vsel %vm1300, %v1291, %v1293
      %v1305 = vsel %vm1300, %v1293, %v1295
      %v1306 = vsel %vm1300, %v1295, %v1297
      %v1307 = vsel %vm1300, %v1297, %v1299
      %v1309 = vsel %vm451, %v414, 0
      %v1312 = vand.u32 %v1301, %v458
      %v1315 = vand.u32 %v1302, %v458
      %v1318 = vand.u32 %v1303, %v458
      %v1321 = vand.u32 %v1304, %v458
      %v1324 = vand.u32 %v1305, %v458
      %v1327 = vand.u32 %v1306, %v458
      %v1330 = vand.u32 %v1307, %v458
      %v1333 = vand.u32 %v1299, %v458
      %1335 = vmatprep.subr.bf16.mxu0 %v1315
      %1336 = vmatpush1.bf16.msra.mxu0 %v1312
      %1337 = vmatprep.subr.bf16.mxu0 0
      %1338 = vmatpush1.bf16.msra.mxu0 0
      %1339 = vmatprep.subr.bf16.mxu0 0
      %1340 = vmatpush1.bf16.msra.mxu0 0
      %1341 = vmatprep.subr.bf16.mxu0 0
      %1342 = vmatpush1.bf16.msra.mxu0 0
      %1343 = vmatprep.subr.bf16.mxu0 0
      %1344 = vmatpush1.bf16.msra.mxu0 0
      %1345 = vmatprep.subr.bf16.mxu0 0
      %1346 = vmatpush1.bf16.msra.mxu0 0
      %1347 = vmatprep.subr.bf16.mxu0 0
      %1348 = vmatpush1.bf16.msra.mxu0 0
      %1349 = vmatprep.subr.bf16.mxu0 0
      %1350 = vmatpush1.bf16.msra.mxu0 0
      %1351 = vmatprep.subr.bf16.mxu0 0
      %1352 = vmatpush1.bf16.msra.mxu0 0
      %1353 = vmatprep.subr.bf16.mxu0 0
      %1354 = vmatpush1.bf16.msra.mxu0 0
      %1355 = vmatprep.subr.bf16.mxu0 0
      %1356 = vmatpush1.bf16.msra.mxu0 0
      %1357 = vmatprep.subr.bf16.mxu0 0
      %1358 = vmatpush1.bf16.msra.mxu0 0
      %1359 = vmatprep.subr.bf16.mxu0 0
      %1360 = vmatpush1.bf16.msra.mxu0 0
      %1361 = vmatprep.subr.bf16.mxu0 0
      %1362 = vmatpush1.bf16.msra.mxu0 0
      %1363 = vmatprep.subr.bf16.mxu0 0
      %1364 = vmatpush1.bf16.msra.mxu0 0
      %1365 = vmatprep.subr.bf16.mxu0 0
      %1366 = vmatpush1.bf16.msra.mxu0 0
      %1367 = vmatprep.mubr.bf16.mxu0 0
      %1368 = vmatmul.mubr.bf16.gmra.mrb[0].mxu0 %v1309
      %v1369 = vpop.f32.mrb[0].mxu0
      %v1370 = vadd.f32 0.0, %v1369
      %v1371 = vpop.f32.mrb[0].mxu0
      %v1372 = vadd.f32 0.0, %v1371
      %v1373 = vpop.f32.mrb[0].mxu0
      %v1374 = vpop.f32.mrb[0].mxu0
      %1375 = vdwg.mxu0
      %1376 = vmatprep.subr.bf16.mxu0 %v1321
      %1377 = vmatpush1.bf16.msra.mxu0 %v1318
      %1378 = vmatprep.subr.bf16.mxu0 0
      %1379 = vmatpush1.bf16.msra.mxu0 0
      %1380 = vmatprep.subr.bf16.mxu0 0
      %1381 = vmatpush1.bf16.msra.mxu0 0
      %1382 = vmatprep.subr.bf16.mxu0 0
      %1383 = vmatpush1.bf16.msra.mxu0 0
      %1384 = vmatprep.subr.bf16.mxu0 0
      %1385 = vmatpush1.bf16.msra.mxu0 0
      %1386 = vmatprep.subr.bf16.mxu0 0
      %1387 = vmatpush1.bf16.msra.mxu0 0
      %1388 = vmatprep.subr.bf16.mxu0 0
      %1389 = vmatpush1.bf16.msra.mxu0 0
      %1390 = vmatprep.subr.bf16.mxu0 0
      %1391 = vmatpush1.bf16.msra.mxu0 0
      %1392 = vmatprep.subr.bf16.mxu0 0
      %1393 = vmatpush1.bf16.msra.mxu0 0
      %1394 = vmatprep.subr.bf16.mxu0 0
      %1395 = vmatpush1.bf16.msra.mxu0 0
      %1396 = vmatprep.subr.bf16.mxu0 0
      %1397 = vmatpush1.bf16.msra.mxu0 0
      %1398 = vmatprep.subr.bf16.mxu0 0
      %1399 = vmatpush1.bf16.msra.mxu0 0
      %1400 = vmatprep.subr.bf16.mxu0 0
      %1401 = vmatpush1.bf16.msra.mxu0 0
      %1402 = vmatprep.subr.bf16.mxu0 0
      %1403 = vmatpush1.bf16.msra.mxu0 0
      %1404 = vmatprep.subr.bf16.mxu0 0
      %1405 = vmatpush1.bf16.msra.mxu0 0
      %1406 = vmatprep.subr.bf16.mxu0 0
      %1407 = vmatpush1.bf16.msra.mxu0 0
      %1408 = vmatprep.mubr.bf16.mxu0 0
      %1409 = vmatmul.mubr.bf16.gmra.mrb[0].mxu0 %v1309
      %v1410 = vpop.f32.mrb[0].mxu0
      %v1411 = vadd.f32 0.0, %v1410
      %v1412 = vpop.f32.mrb[0].mxu0
      %v1413 = vadd.f32 0.0, %v1412
      %v1414 = vpop.f32.mrb[0].mxu0
      %v1415 = vpop.f32.mrb[0].mxu0
      %1416 = vdwg.mxu0
      %1417 = vmatprep.subr.bf16.mxu0 %v1327
      %1418 = vmatpush1.bf16.msra.mxu0 %v1324
      %1419 = vmatprep.subr.bf16.mxu0 0
      %1420 = vmatpush1.bf16.msra.mxu0 0
      %1421 = vmatprep.subr.bf16.mxu0 0
      %1422 = vmatpush1.bf16.msra.mxu0 0
      %1423 = vmatprep.subr.bf16.mxu0 0
      %1424 = vmatpush1.bf16.msra.mxu0 0
      %1425 = vmatprep.subr.bf16.mxu0 0
      %1426 = vmatpush1.bf16.msra.mxu0 0
      %1427 = vmatprep.subr.bf16.mxu0 0
      %1428 = vmatpush1.bf16.msra.mxu0 0
      %1429 = vmatprep.subr.bf16.mxu0 0
      %1430 = vmatpush1.bf16.msra.mxu0 0
      %1431 = vmatprep.subr.bf16.mxu0 0
      %1432 = vmatpush1.bf16.msra.mxu0 0
      %1433 = vmatprep.subr.bf16.mxu0 0
      %1434 = vmatpush1.bf16.msra.mxu0 0
      %1435 = vmatprep.subr.bf16.mxu0 0
      %1436 = vmatpush1.bf16.msra.mxu0 0
      %1437 = vmatprep.subr.bf16.mxu0 0
      %1438 = vmatpush1.bf16.msra.mxu0 0
      %1439 = vmatprep.subr.bf16.mxu0 0
      %1440 = vmatpush1.bf16.msra.mxu0 0
      %1441 = vmatprep.subr.bf16.mxu0 0
      %1442 = vmatpush1.bf16.msra.mxu0 0
      %1443 = vmatprep.subr.bf16.mxu0 0
      %1444 = vmatpush1.bf16.msra.mxu0 0
      %1445 = vmatprep.subr.bf16.mxu0 0
      %1446 = vmatpush1.bf16.msra.mxu0 0
      %1447 = vmatprep.subr.bf16.mxu0 0
      %1448 = vmatpush1.bf16.msra.mxu0 0
      %1449 = vmatprep.mubr.bf16.mxu0 0
      %1450 = vmatmul.mubr.bf16.gmra.mrb[0].mxu0 %v1309
      %v1451 = vpop.f32.mrb[0].mxu0
      %v1452 = vadd.f32 0.0, %v1451
      %v1453 = vpop.f32.mrb[0].mxu0
      %v1454 = vadd.f32 0.0, %v1453
      %v1455 = vpop.f32.mrb[0].mxu0
      %v1456 = vpop.f32.mrb[0].mxu0
      %1457 = vdwg.mxu0
      %1458 = vmatprep.subr.bf16.mxu0 %v1333
      %1459 = vmatpush1.bf16.msra.mxu0 %v1330
      %1460 = vmatprep.subr.bf16.mxu0 0
      %1461 = vmatpush1.bf16.msra.mxu0 0
      %1462 = vmatprep.subr.bf16.mxu0 0
      %1463 = vmatpush1.bf16.msra.mxu0 0
      %1464 = vmatprep.subr.bf16.mxu0 0
      %1465 = vmatpush1.bf16.msra.mxu0 0
      %1466 = vmatprep.subr.bf16.mxu0 0
      %1467 = vmatpush1.bf16.msra.mxu0 0
      %1468 = vmatprep.subr.bf16.mxu0 0
      %1469 = vmatpush1.bf16.msra.mxu0 0
      %1470 = vmatprep.subr.bf16.mxu0 0
      %1471 = vmatpush1.bf16.msra.mxu0 0
      %1472 = vmatprep.subr.bf16.mxu0 0
      %1473 = vmatpush1.bf16.msra.mxu0 0
      %1474 = vmatprep.subr.bf16.mxu0 0
      %1475 = vmatpush1.bf16.msra.mxu0 0
      %1476 = vmatprep.subr.bf16.mxu0 0
      %1477 = vmatpush1.bf16.msra.mxu0 0
      %1478 = vmatprep.subr.bf16.mxu0 0
      %1479 = vmatpush1.bf16.msra.mxu0 0
      %1480 = vmatprep.subr.bf16.mxu0 0
      %1481 = vmatpush1.bf16.msra.mxu0 0
      %1482 = vmatprep.subr.bf16.mxu0 0
      %1483 = vmatpush1.bf16.msra.mxu0 0
      %1484 = vmatprep.subr.bf16.mxu0 0
      %1485 = vmatpush1.bf16.msra.mxu0 0
      %1486 = vmatprep.subr.bf16.mxu0 0
      %1487 = vmatpush1.bf16.msra.mxu0 0
      %1488 = vmatprep.subr.bf16.mxu0 0
      %1489 = vmatpush1.bf16.msra.mxu0 0
      %1490 = vmatprep.mubr.bf16.mxu0 0
      %1491 = vmatmul.mubr.bf16.gmra.mrb[0].mxu0 %v1309
      %v1492 = vpop.f32.mrb[0].mxu0
      %v1493 = vadd.f32 0.0, %v1492
      %v1494 = vpop.f32.mrb[0].mxu0
      %v1495 = vadd.f32 0.0, %v1494
      %v1496 = vpop.f32.mrb[0].mxu0
      %v1497 = vpop.f32.mrb[0].mxu0
      %1498 = vdwg.mxu0
      %v1499 = vadd.f32 %v1276, %v1370
      %v1500 = vadd.f32 %v1277, %v1372
      %v1501 = vadd.f32 %v1278, %v1411
      %v1502 = vadd.f32 %v1279, %v1413
      %v1503 = vadd.f32 %v1280, %v1452
      %v1504 = vadd.f32 %v1281, %v1454
      %v1505 = vadd.f32 %v1282, %v1493
      %v1506 = vadd.f32 %v1283, %v1495
      %1507 = vrot.lane.b32.xlu0 %v402, 94
      %v1508 = vpop.permute.xlu0 %1507
      %1509 = vrot.lane.b32.xlu0 %v403, 94
      %v1510 = vpop.permute.xlu0 %1509
      %1511 = vrot.lane.b32.xlu0 %v404, 94
      %v1512 = vpop.permute.xlu0 %1511
      %1513 = vrot.lane.b32.xlu0 %v405, 94
      %v1514 = vpop.permute.xlu0 %1513
      %1515 = vrot.lane.b32.xlu0 %v406, 94
      %v1516 = vpop.permute.xlu0 %1515
      %1517 = vrot.lane.b32.xlu0 %v407, 94
      %v1518 = vpop.permute.xlu0 %1517
      %1519 = vrot.lane.b32.xlu0 %v408, 94
      %v1520 = vpop.permute.xlu0 %1519
      %1521 = vrot.lane.b32.xlu0 %v409, 94
      %v1522 = vpop.permute.xlu0 %1521
      %vm1523 = vcmask 769024
      %v1524 = vsel %vm1523, %v1508, %v1510
      %v1525 = vsel %vm1523, %v1510, %v1512
      %v1526 = vsel %vm1523, %v1512, %v1514
      %v1527 = vsel %vm1523, %v1514, %v1516
      %v1528 = vsel %vm1523, %v1516, %v1518
      %v1529 = vsel %vm1523, %v1518, %v1520
      %v1530 = vsel %vm1523, %v1520, %v1522
      %v1532 = vsel %vm451, %v415, 0
      %v1535 = vand.u32 %v1524, %v458
      %v1538 = vand.u32 %v1525, %v458
      %v1541 = vand.u32 %v1526, %v458
      %v1544 = vand.u32 %v1527, %v458
      %v1547 = vand.u32 %v1528, %v458
      %v1550 = vand.u32 %v1529, %v458
      %v1553 = vand.u32 %v1530, %v458
      %v1556 = vand.u32 %v1522, %v458
      %1558 = vmatprep.subr.bf16.mxu0 %v1538
      %1559 = vmatpush1.bf16.msra.mxu0 %v1535
      %1560 = vmatprep.subr.bf16.mxu0 0
      %1561 = vmatpush1.bf16.msra.mxu0 0
      %1562 = vmatprep.subr.bf16.mxu0 0
      %1563 = vmatpush1.bf16.msra.mxu0 0
      %1564 = vmatprep.subr.bf16.mxu0 0
      %1565 = vmatpush1.bf16.msra.mxu0 0
      %1566 = vmatprep.subr.bf16.mxu0 0
      %1567 = vmatpush1.bf16.msra.mxu0 0
      %1568 = vmatprep.subr.bf16.mxu0 0
      %1569 = vmatpush1.bf16.msra.mxu0 0
      %1570 = vmatprep.subr.bf16.mxu0 0
      %1571 = vmatpush1.bf16.msra.mxu0 0
      %1572 = vmatprep.subr.bf16.mxu0 0
      %1573 = vmatpush1.bf16.msra.mxu0 0
      %1574 = vmatprep.subr.bf16.mxu0 0
      %1575 = vmatpush1.bf16.msra.mxu0 0
      %1576 = vmatprep.subr.bf16.mxu0 0
      %1577 = vmatpush1.bf16.msra.mxu0 0
      %1578 = vmatprep.subr.bf16.mxu0 0
      %1579 = vmatpush1.bf16.msra.mxu0 0
      %1580 = vmatprep.subr.bf16.mxu0 0
      %1581 = vmatpush1.bf16.msra.mxu0 0
      %1582 = vmatprep.subr.bf16.mxu0 0
      %1583 = vmatpush1.bf16.msra.mxu0 0
      %1584 = vmatprep.subr.bf16.mxu0 0
      %1585 = vmatpush1.bf16.msra.mxu0 0
      %1586 = vmatprep.subr.bf16.mxu0 0
      %1587 = vmatpush1.bf16.msra.mxu0 0
      %1588 = vmatprep.subr.bf16.mxu0 0
      %1589 = vmatpush1.bf16.msra.mxu0 0
      %1590 = vmatprep.mubr.bf16.mxu0 0
      %1591 = vmatmul.mubr.bf16.gmra.mrb[0].mxu0 %v1532
      %v1592 = vpop.f32.mrb[0].mxu0
      %v1593 = vadd.f32 0.0, %v1592
      %v1594 = vpop.f32.mrb[0].mxu0
      %v1595 = vadd.f32 0.0, %v1594
      %v1596 = vpop.f32.mrb[0].mxu0
      %v1597 = vpop.f32.mrb[0].mxu0
      %1598 = vdwg.mxu0
      %1599 = vmatprep.subr.bf16.mxu0 %v1544
      %1600 = vmatpush1.bf16.msra.mxu0 %v1541
      %1601 = vmatprep.subr.bf16.mxu0 0
      %1602 = vmatpush1.bf16.msra.mxu0 0
      %1603 = vmatprep.subr.bf16.mxu0 0
      %1604 = vmatpush1.bf16.msra.mxu0 0
      %1605 = vmatprep.subr.bf16.mxu0 0
      %1606 = vmatpush1.bf16.msra.mxu0 0
      %1607 = vmatprep.subr.bf16.mxu0 0
      %1608 = vmatpush1.bf16.msra.mxu0 0
      %1609 = vmatprep.subr.bf16.mxu0 0
      %1610 = vmatpush1.bf16.msra.mxu0 0
      %1611 = vmatprep.subr.bf16.mxu0 0
      %1612 = vmatpush1.bf16.msra.mxu0 0
      %1613 = vmatprep.subr.bf16.mxu0 0
      %1614 = vmatpush1.bf16.msra.mxu0 0
      %1615 = vmatprep.subr.bf16.mxu0 0
      %1616 = vmatpush1.bf16.msra.mxu0 0
      %1617 = vmatprep.subr.bf16.mxu0 0
      %1618 = vmatpush1.bf16.msra.mxu0 0
      %1619 = vmatprep.subr.bf16.mxu0 0
      %1620 = vmatpush1.bf16.msra.mxu0 0
      %1621 = vmatprep.subr.bf16.mxu0 0
      %1622 = vmatpush1.bf16.msra.mxu0 0
      %1623 = vmatprep.subr.bf16.mxu0 0
      %1624 = vmatpush1.bf16.msra.mxu0 0
      %1625 = vmatprep.subr.bf16.mxu0 0
      %1626 = vmatpush1.bf16.msra.mxu0 0
      %1627 = vmatprep.subr.bf16.mxu0 0
      %1628 = vmatpush1.bf16.msra.mxu0 0
      %1629 = vmatprep.subr.bf16.mxu0 0
      %1630 = vmatpush1.bf16.msra.mxu0 0
      %1631 = vmatprep.mubr.bf16.mxu0 0
      %1632 = vmatmul.mubr.bf16.gmra.mrb[0].mxu0 %v1532
      %v1633 = vpop.f32.mrb[0].mxu0
      %v1634 = vadd.f32 0.0, %v1633
      %v1635 = vpop.f32.mrb[0].mxu0
      %v1636 = vadd.f32 0.0, %v1635
      %v1637 = vpop.f32.mrb[0].mxu0
      %v1638 = vpop.f32.mrb[0].mxu0
      %1639 = vdwg.mxu0
      %1640 = vmatprep.subr.bf16.mxu0 %v1550
      %1641 = vmatpush1.bf16.msra.mxu0 %v1547
      %1642 = vmatprep.subr.bf16.mxu0 0
      %1643 = vmatpush1.bf16.msra.mxu0 0
      %1644 = vmatprep.subr.bf16.mxu0 0
      %1645 = vmatpush1.bf16.msra.mxu0 0
      %1646 = vmatprep.subr.bf16.mxu0 0
      %1647 = vmatpush1.bf16.msra.mxu0 0
      %1648 = vmatprep.subr.bf16.mxu0 0
      %1649 = vmatpush1.bf16.msra.mxu0 0
      %1650 = vmatprep.subr.bf16.mxu0 0
      %1651 = vmatpush1.bf16.msra.mxu0 0
      %1652 = vmatprep.subr.bf16.mxu0 0
      %1653 = vmatpush1.bf16.msra.mxu0 0
      %1654 = vmatprep.subr.bf16.mxu0 0
      %1655 = vmatpush1.bf16.msra.mxu0 0
      %1656 = vmatprep.subr.bf16.mxu0 0
      %1657 = vmatpush1.bf16.msra.mxu0 0
      %1658 = vmatprep.subr.bf16.mxu0 0
      %1659 = vmatpush1.bf16.msra.mxu0 0
      %1660 = vmatprep.subr.bf16.mxu0 0
      %1661 = vmatpush1.bf16.msra.mxu0 0
      %1662 = vmatprep.subr.bf16.mxu0 0
      %1663 = vmatpush1.bf16.msra.mxu0 0
      %1664 = vmatprep.subr.bf16.mxu0 0
      %1665 = vmatpush1.bf16.msra.mxu0 0
      %1666 = vmatprep.subr.bf16.mxu0 0
      %1667 = vmatpush1.bf16.msra.mxu0 0
      %1668 = vmatprep.subr.bf16.mxu0 0
      %1669 = vmatpush1.bf16.msra.mxu0 0
      %1670 = vmatprep.subr.bf16.mxu0 0
      %1671 = vmatpush1.bf16.msra.mxu0 0
      %1672 = vmatprep.mubr.bf16.mxu0 0
      %1673 = vmatmul.mubr.bf16.gmra.mrb[0].mxu0 %v1532
      %v1674 = vpop.f32.mrb[0].mxu0
      %v1675 = vadd.f32 0.0, %v1674
      %v1676 = vpop.f32.mrb[0].mxu0
      %v1677 = vadd.f32 0.0, %v1676
      %v1678 = vpop.f32.mrb[0].mxu0
      %v1679 = vpop.f32.mrb[0].mxu0
      %1680 = vdwg.mxu0
      %1681 = vmatprep.subr.bf16.mxu0 %v1556
      %1682 = vmatpush1.bf16.msra.mxu0 %v1553
      %1683 = vmatprep.subr.bf16.mxu0 0
      %1684 = vmatpush1.bf16.msra.mxu0 0
      %1685 = vmatprep.subr.bf16.mxu0 0
      %1686 = vmatpush1.bf16.msra.mxu0 0
      %1687 = vmatprep.subr.bf16.mxu0 0
      %1688 = vmatpush1.bf16.msra.mxu0 0
      %1689 = vmatprep.subr.bf16.mxu0 0
      %1690 = vmatpush1.bf16.msra.mxu0 0
      %1691 = vmatprep.subr.bf16.mxu0 0
      %1692 = vmatpush1.bf16.msra.mxu0 0
      %1693 = vmatprep.subr.bf16.mxu0 0
      %1694 = vmatpush1.bf16.msra.mxu0 0
      %1695 = vmatprep.subr.bf16.mxu0 0
      %1696 = vmatpush1.bf16.msra.mxu0 0
      %1697 = vmatprep.subr.bf16.mxu0 0
      %1698 = vmatpush1.bf16.msra.mxu0 0
      %1699 = vmatprep.subr.bf16.mxu0 0
      %1700 = vmatpush1.bf16.msra.mxu0 0
      %1701 = vmatprep.subr.bf16.mxu0 0
      %1702 = vmatpush1.bf16.msra.mxu0 0
      %1703 = vmatprep.subr.bf16.mxu0 0
      %1704 = vmatpush1.bf16.msra.mxu0 0
      %1705 = vmatprep.subr.bf16.mxu0 0
      %1706 = vmatpush1.bf16.msra.mxu0 0
      %1707 = vmatprep.subr.bf16.mxu0 0
      %1708 = vmatpush1.bf16.msra.mxu0 0
      %1709 = vmatprep.subr.bf16.mxu0 0
      %1710 = vmatpush1.bf16.msra.mxu0 0
      %1711 = vmatprep.subr.bf16.mxu0 0
      %1712 = vmatpush1.bf16.msra.mxu0 0
      %1713 = vmatprep.mubr.bf16.mxu0 0
      %1714 = vmatmul.mubr.bf16.gmra.mrb[0].mxu0 %v1532
      %v1715 = vpop.f32.mrb[0].mxu0
      %v1716 = vadd.f32 0.0, %v1715
      %v1717 = vpop.f32.mrb[0].mxu0
      %v1718 = vadd.f32 0.0, %v1717
      %v1719 = vpop.f32.mrb[0].mxu0
      %v1720 = vpop.f32.mrb[0].mxu0
      %1721 = vdwg.mxu0
      %v1722 = vadd.f32 %v1499, %v1593
      %v1723 = vadd.f32 %v1500, %v1595
      %v1724 = vadd.f32 %v1501, %v1634
      %v1725 = vadd.f32 %v1502, %v1636
      %v1726 = vadd.f32 %v1503, %v1675
      %v1727 = vadd.f32 %v1504, %v1677
      %v1728 = vadd.f32 %v1505, %v1716
      %v1729 = vadd.f32 %v1506, %v1718
      %1730 = vrot.lane.b32.xlu0 %v402, 64
      %v1731 = vpop.permute.xlu0 %1730
      %1732 = vrot.lane.b32.xlu0 %v403, 64
      %v1733 = vpop.permute.xlu0 %1732
      %1734 = vrot.lane.b32.xlu0 %v404, 64
      %v1735 = vpop.permute.xlu0 %1734
      %1736 = vrot.lane.b32.xlu0 %v405, 64
      %v1737 = vpop.permute.xlu0 %1736
      %1738 = vrot.lane.b32.xlu0 %v406, 64
      %v1739 = vpop.permute.xlu0 %1738
      %1740 = vrot.lane.b32.xlu0 %v407, 64
      %v1741 = vpop.permute.xlu0 %1740
      %1742 = vrot.lane.b32.xlu0 %v408, 64
      %v1743 = vpop.permute.xlu0 %1742
      %1744 = vrot.lane.b32.xlu0 %v409, 64
      %v1745 = vpop.permute.xlu0 %1744
      %vm1746 = vcmask 523264
      %v1747 = vsel %vm1746, %v1731, %v1733
      %v1748 = vsel %vm1746, %v1733, %v1735
      %v1749 = vsel %vm1746, %v1735, %v1737
      %v1750 = vsel %vm1746, %v1737, %v1739
      %v1751 = vsel %vm1746, %v1739, %v1741
      %v1752 = vsel %vm1746, %v1741, %v1743
      %v1753 = vsel %vm1746, %v1743, %v1745
      %v1755 = vsel %vm451, %v416, 0
      %v1758 = vand.u32 %v1747, %v458
      %v1761 = vand.u32 %v1748, %v458
      %v1764 = vand.u32 %v1749, %v458
      %v1767 = vand.u32 %v1750, %v458
      %v1770 = vand.u32 %v1751, %v458
      %v1773 = vand.u32 %v1752, %v458
      %v1776 = vand.u32 %v1753, %v458
      %v1779 = vand.u32 %v1745, %v458
      %1781 = vmatprep.subr.bf16.mxu0 %v1761
      %1782 = vmatpush1.bf16.msra.mxu0 %v1758
      %1783 = vmatprep.subr.bf16.mxu0 0
      %1784 = vmatpush1.bf16.msra.mxu0 0
      %1785 = vmatprep.subr.bf16.mxu0 0
      %1786 = vmatpush1.bf16.msra.mxu0 0
      %1787 = vmatprep.subr.bf16.mxu0 0
      %1788 = vmatpush1.bf16.msra.mxu0 0
      %1789 = vmatprep.subr.bf16.mxu0 0
      %1790 = vmatpush1.bf16.msra.mxu0 0
      %1791 = vmatprep.subr.bf16.mxu0 0
      %1792 = vmatpush1.bf16.msra.mxu0 0
      %1793 = vmatprep.subr.bf16.mxu0 0
      %1794 = vmatpush1.bf16.msra.mxu0 0
      %1795 = vmatprep.subr.bf16.mxu0 0
      %1796 = vmatpush1.bf16.msra.mxu0 0
      %1797 = vmatprep.subr.bf16.mxu0 0
      %1798 = vmatpush1.bf16.msra.mxu0 0
      %1799 = vmatprep.subr.bf16.mxu0 0
      %1800 = vmatpush1.bf16.msra.mxu0 0
      %1801 = vmatprep.subr.bf16.mxu0 0
      %1802 = vmatpush1.bf16.msra.mxu0 0
      %1803 = vmatprep.subr.bf16.mxu0 0
      %1804 = vmatpush1.bf16.msra.mxu0 0
      %1805 = vmatprep.subr.bf16.mxu0 0
      %1806 = vmatpush1.bf16.msra.mxu0 0
      %1807 = vmatprep.subr.bf16.mxu0 0
      %1808 = vmatpush1.bf16.msra.mxu0 0
      %1809 = vmatprep.subr.bf16.mxu0 0
      %1810 = vmatpush1.bf16.msra.mxu0 0
      %1811 = vmatprep.subr.bf16.mxu0 0
      %1812 = vmatpush1.bf16.msra.mxu0 0
      %1813 = vmatprep.mubr.bf16.mxu0 0
      %1814 = vmatmul.mubr.bf16.gmra.mrb[0].mxu0 %v1755
      %v1815 = vpop.f32.mrb[0].mxu0
      %v1816 = vadd.f32 0.0, %v1815
      %v1817 = vpop.f32.mrb[0].mxu0
      %v1818 = vadd.f32 0.0, %v1817
      %v1819 = vpop.f32.mrb[0].mxu0
      %v1820 = vpop.f32.mrb[0].mxu0
      %1821 = vdwg.mxu0
      %1822 = vmatprep.subr.bf16.mxu0 %v1767
      %1823 = vmatpush1.bf16.msra.mxu0 %v1764
      %1824 = vmatprep.subr.bf16.mxu0 0
      %1825 = vmatpush1.bf16.msra.mxu0 0
      %1826 = vmatprep.subr.bf16.mxu0 0
      %1827 = vmatpush1.bf16.msra.mxu0 0
      %1828 = vmatprep.subr.bf16.mxu0 0
      %1829 = vmatpush1.bf16.msra.mxu0 0
      %1830 = vmatprep.subr.bf16.mxu0 0
      %1831 = vmatpush1.bf16.msra.mxu0 0
      %1832 = vmatprep.subr.bf16.mxu0 0
      %1833 = vmatpush1.bf16.msra.mxu0 0
      %1834 = vmatprep.subr.bf16.mxu0 0
      %1835 = vmatpush1.bf16.msra.mxu0 0
      %1836 = vmatprep.subr.bf16.mxu0 0
      %1837 = vmatpush1.bf16.msra.mxu0 0
      %1838 = vmatprep.subr.bf16.mxu0 0
      %1839 = vmatpush1.bf16.msra.mxu0 0
      %1840 = vmatprep.subr.bf16.mxu0 0
      %1841 = vmatpush1.bf16.msra.mxu0 0
      %1842 = vmatprep.subr.bf16.mxu0 0
      %1843 = vmatpush1.bf16.msra.mxu0 0
      %1844 = vmatprep.subr.bf16.mxu0 0
      %1845 = vmatpush1.bf16.msra.mxu0 0
      %1846 = vmatprep.subr.bf16.mxu0 0
      %1847 = vmatpush1.bf16.msra.mxu0 0
      %1848 = vmatprep.subr.bf16.mxu0 0
      %1849 = vmatpush1.bf16.msra.mxu0 0
      %1850 = vmatprep.subr.bf16.mxu0 0
      %1851 = vmatpush1.bf16.msra.mxu0 0
      %1852 = vmatprep.subr.bf16.mxu0 0
      %1853 = vmatpush1.bf16.msra.mxu0 0
      %1854 = vmatprep.mubr.bf16.mxu0 0
      %1855 = vmatmul.mubr.bf16.gmra.mrb[0].mxu0 %v1755
      %v1856 = vpop.f32.mrb[0].mxu0
      %v1857 = vadd.f32 0.0, %v1856
      %v1858 = vpop.f32.mrb[0].mxu0
      %v1859 = vadd.f32 0.0, %v1858
      %v1860 = vpop.f32.mrb[0].mxu0
      %v1861 = vpop.f32.mrb[0].mxu0
      %1862 = vdwg.mxu0
      %1863 = vmatprep.subr.bf16.mxu0 %v1773
      %1864 = vmatpush1.bf16.msra.mxu0 %v1770
      %1865 = vmatprep.subr.bf16.mxu0 0
      %1866 = vmatpush1.bf16.msra.mxu0 0
      %1867 = vmatprep.subr.bf16.mxu0 0
      %1868 = vmatpush1.bf16.msra.mxu0 0
      %1869 = vmatprep.subr.bf16.mxu0 0
      %1870 = vmatpush1.bf16.msra.mxu0 0
      %1871 = vmatprep.subr.bf16.mxu0 0
      %1872 = vmatpush1.bf16.msra.mxu0 0
      %1873 = vmatprep.subr.bf16.mxu0 0
      %1874 = vmatpush1.bf16.msra.mxu0 0
      %1875 = vmatprep.subr.bf16.mxu0 0
      %1876 = vmatpush1.bf16.msra.mxu0 0
      %1877 = vmatprep.subr.bf16.mxu0 0
      %1878 = vmatpush1.bf16.msra.mxu0 0
      %1879 = vmatprep.subr.bf16.mxu0 0
      %1880 = vmatpush1.bf16.msra.mxu0 0
      %1881 = vmatprep.subr.bf16.mxu0 0
      %1882 = vmatpush1.bf16.msra.mxu0 0
      %1883 = vmatprep.subr.bf16.mxu0 0
      %1884 = vmatpush1.bf16.msra.mxu0 0
      %1885 = vmatprep.subr.bf16.mxu0 0
      %1886 = vmatpush1.bf16.msra.mxu0 0
      %1887 = vmatprep.subr.bf16.mxu0 0
      %1888 = vmatpush1.bf16.msra.mxu0 0
      %1889 = vmatprep.subr.bf16.mxu0 0
      %1890 = vmatpush1.bf16.msra.mxu0 0
      %1891 = vmatprep.subr.bf16.mxu0 0
      %1892 = vmatpush1.bf16.msra.mxu0 0
      %1893 = vmatprep.subr.bf16.mxu0 0
      %1894 = vmatpush1.bf16.msra.mxu0 0
      %1895 = vmatprep.mubr.bf16.mxu0 0
      %1896 = vmatmul.mubr.bf16.gmra.mrb[0].mxu0 %v1755
      %v1897 = vpop.f32.mrb[0].mxu0
      %v1898 = vadd.f32 0.0, %v1897
      %v1899 = vpop.f32.mrb[0].mxu0
      %v1900 = vadd.f32 0.0, %v1899
      %v1901 = vpop.f32.mrb[0].mxu0
      %v1902 = vpop.f32.mrb[0].mxu0
      %1903 = vdwg.mxu0
      %1904 = vmatprep.subr.bf16.mxu0 %v1779
      %1905 = vmatpush1.bf16.msra.mxu0 %v1776
      %1906 = vmatprep.subr.bf16.mxu0 0
      %1907 = vmatpush1.bf16.msra.mxu0 0
      %1908 = vmatprep.subr.bf16.mxu0 0
      %1909 = vmatpush1.bf16.msra.mxu0 0
      %1910 = vmatprep.subr.bf16.mxu0 0
      %1911 = vmatpush1.bf16.msra.mxu0 0
      %1912 = vmatprep.subr.bf16.mxu0 0
      %1913 = vmatpush1.bf16.msra.mxu0 0
      %1914 = vmatprep.subr.bf16.mxu0 0
      %1915 = vmatpush1.bf16.msra.mxu0 0
      %1916 = vmatprep.subr.bf16.mxu0 0
      %1917 = vmatpush1.bf16.msra.mxu0 0
      %1918 = vmatprep.subr.bf16.mxu0 0
      %1919 = vmatpush1.bf16.msra.mxu0 0
      %1920 = vmatprep.subr.bf16.mxu0 0
      %1921 = vmatpush1.bf16.msra.mxu0 0
      %1922 = vmatprep.subr.bf16.mxu0 0
      %1923 = vmatpush1.bf16.msra.mxu0 0
      %1924 = vmatprep.subr.bf16.mxu0 0
      %1925 = vmatpush1.bf16.msra.mxu0 0
      %1926 = vmatprep.subr.bf16.mxu0 0
      %1927 = vmatpush1.bf16.msra.mxu0 0
      %1928 = vmatprep.subr.bf16.mxu0 0
      %1929 = vmatpush1.bf16.msra.mxu0 0
      %1930 = vmatprep.subr.bf16.mxu0 0
      %1931 = vmatpush1.bf16.msra.mxu0 0
      %1932 = vmatprep.subr.bf16.mxu0 0
      %1933 = vmatpush1.bf16.msra.mxu0 0
      %1934 = vmatprep.subr.bf16.mxu0 0
      %1935 = vmatpush1.bf16.msra.mxu0 0
      %1936 = vmatprep.mubr.bf16.mxu0 0
      %1937 = vmatmul.mubr.bf16.gmra.mrb[0].mxu0 %v1755
      %v1938 = vpop.f32.mrb[0].mxu0
      %v1939 = vadd.f32 0.0, %v1938
      %v1940 = vpop.f32.mrb[0].mxu0
      %v1941 = vadd.f32 0.0, %v1940
      %v1942 = vpop.f32.mrb[0].mxu0
      %v1943 = vpop.f32.mrb[0].mxu0
      %1944 = vdwg.mxu0
      %v1945 = vadd.f32 %v1722, %v1816
      %v1946 = vadd.f32 %v1723, %v1818
      %v1947 = vadd.f32 %v1724, %v1857
      %v1948 = vadd.f32 %v1725, %v1859
      %v1949 = vadd.f32 %v1726, %v1898
      %v1950 = vadd.f32 %v1727, %v1900
      %v1951 = vadd.f32 %v1728, %v1939
      %v1952 = vadd.f32 %v1729, %v1941
      %1953 = vrot.lane.b32.xlu0 %v402, 63
      %v1954 = vpop.permute.xlu0 %1953
      %1955 = vrot.lane.b32.xlu0 %v403, 63
      %v1956 = vpop.permute.xlu0 %1955
      %1957 = vrot.lane.b32.xlu0 %v404, 63
      %v1958 = vpop.permute.xlu0 %1957
      %1959 = vrot.lane.b32.xlu0 %v405, 63
      %v1960 = vpop.permute.xlu0 %1959
      %1961 = vrot.lane.b32.xlu0 %v406, 63
      %v1962 = vpop.permute.xlu0 %1961
      %1963 = vrot.lane.b32.xlu0 %v407, 63
      %v1964 = vpop.permute.xlu0 %1963
      %1965 = vrot.lane.b32.xlu0 %v408, 63
      %v1966 = vpop.permute.xlu0 %1965
      %1967 = vrot.lane.b32.xlu0 %v409, 63
      %v1968 = vpop.permute.xlu0 %1967
      %vm1969 = vcmask 515072
      %v1970 = vsel %vm1969, %v1954, %v1956
      %v1971 = vsel %vm1969, %v1956, %v1958
      %v1972 = vsel %vm1969, %v1958, %v1960
      %v1973 = vsel %vm1969, %v1960, %v1962
      %v1974 = vsel %vm1969, %v1962, %v1964
      %v1975 = vsel %vm1969, %v1964, %v1966
      %v1976 = vsel %vm1969, %v1966, %v1968
      %v1978 = vsel %vm451, %v417, 0
      %v1981 = vand.u32 %v1970, %v458
      %v1984 = vand.u32 %v1971, %v458
      %v1987 = vand.u32 %v1972, %v458
      %v1990 = vand.u32 %v1973, %v458
      %v1993 = vand.u32 %v1974, %v458
      %v1996 = vand.u32 %v1975, %v458
      %v1999 = vand.u32 %v1976, %v458
      %v2002 = vand.u32 %v1968, %v458
      %2004 = vmatprep.subr.bf16.mxu0 %v1984
      %2005 = vmatpush1.bf16.msra.mxu0 %v1981
      %2006 = vmatprep.subr.bf16.mxu0 0
      %2007 = vmatpush1.bf16.msra.mxu0 0
      %2008 = vmatprep.subr.bf16.mxu0 0
      %2009 = vmatpush1.bf16.msra.mxu0 0
      %2010 = vmatprep.subr.bf16.mxu0 0
      %2011 = vmatpush1.bf16.msra.mxu0 0
      %2012 = vmatprep.subr.bf16.mxu0 0
      %2013 = vmatpush1.bf16.msra.mxu0 0
      %2014 = vmatprep.subr.bf16.mxu0 0
      %2015 = vmatpush1.bf16.msra.mxu0 0
      %2016 = vmatprep.subr.bf16.mxu0 0
      %2017 = vmatpush1.bf16.msra.mxu0 0
      %2018 = vmatprep.subr.bf16.mxu0 0
      %2019 = vmatpush1.bf16.msra.mxu0 0
      %2020 = vmatprep.subr.bf16.mxu0 0
      %2021 = vmatpush1.bf16.msra.mxu0 0
      %2022 = vmatprep.subr.bf16.mxu0 0
      %2023 = vmatpush1.bf16.msra.mxu0 0
      %2024 = vmatprep.subr.bf16.mxu0 0
      %2025 = vmatpush1.bf16.msra.mxu0 0
      %2026 = vmatprep.subr.bf16.mxu0 0
      %2027 = vmatpush1.bf16.msra.mxu0 0
      %2028 = vmatprep.subr.bf16.mxu0 0
      %2029 = vmatpush1.bf16.msra.mxu0 0
      %2030 = vmatprep.subr.bf16.mxu0 0
      %2031 = vmatpush1.bf16.msra.mxu0 0
      %2032 = vmatprep.subr.bf16.mxu0 0
      %2033 = vmatpush1.bf16.msra.mxu0 0
      %2034 = vmatprep.subr.bf16.mxu0 0
      %2035 = vmatpush1.bf16.msra.mxu0 0
      %2036 = vmatprep.mubr.bf16.mxu0 0
      %2037 = vmatmul.mubr.bf16.gmra.mrb[0].mxu0 %v1978
      %v2038 = vpop.f32.mrb[0].mxu0
      %v2039 = vadd.f32 0.0, %v2038
      %v2040 = vpop.f32.mrb[0].mxu0
      %v2041 = vadd.f32 0.0, %v2040
      %v2042 = vpop.f32.mrb[0].mxu0
      %v2043 = vpop.f32.mrb[0].mxu0
      %2044 = vdwg.mxu0
      %2045 = vmatprep.subr.bf16.mxu0 %v1990
      %2046 = vmatpush1.bf16.msra.mxu0 %v1987
      %2047 = vmatprep.subr.bf16.mxu0 0
      %2048 = vmatpush1.bf16.msra.mxu0 0
      %2049 = vmatprep.subr.bf16.mxu0 0
      %2050 = vmatpush1.bf16.msra.mxu0 0
      %2051 = vmatprep.subr.bf16.mxu0 0
      %2052 = vmatpush1.bf16.msra.mxu0 0
      %2053 = vmatprep.subr.bf16.mxu0 0
      %2054 = vmatpush1.bf16.msra.mxu0 0
      %2055 = vmatprep.subr.bf16.mxu0 0
      %2056 = vmatpush1.bf16.msra.mxu0 0
      %2057 = vmatprep.subr.bf16.mxu0 0
      %2058 = vmatpush1.bf16.msra.mxu0 0
      %2059 = vmatprep.subr.bf16.mxu0 0
      %2060 = vmatpush1.bf16.msra.mxu0 0
      %2061 = vmatprep.subr.bf16.mxu0 0
      %2062 = vmatpush1.bf16.msra.mxu0 0
      %2063 = vmatprep.subr.bf16.mxu0 0
      %2064 = vmatpush1.bf16.msra.mxu0 0
      %2065 = vmatprep.subr.bf16.mxu0 0
      %2066 = vmatpush1.bf16.msra.mxu0 0
      %2067 = vmatprep.subr.bf16.mxu0 0
      %2068 = vmatpush1.bf16.msra.mxu0 0
      %2069 = vmatprep.subr.bf16.mxu0 0
      %2070 = vmatpush1.bf16.msra.mxu0 0
      %2071 = vmatprep.subr.bf16.mxu0 0
      %2072 = vmatpush1.bf16.msra.mxu0 0
      %2073 = vmatprep.subr.bf16.mxu0 0
      %2074 = vmatpush1.bf16.msra.mxu0 0
      %2075 = vmatprep.subr.bf16.mxu0 0
      %2076 = vmatpush1.bf16.msra.mxu0 0
      %2077 = vmatprep.mubr.bf16.mxu0 0
      %2078 = vmatmul.mubr.bf16.gmra.mrb[0].mxu0 %v1978
      %v2079 = vpop.f32.mrb[0].mxu0
      %v2080 = vadd.f32 0.0, %v2079
      %v2081 = vpop.f32.mrb[0].mxu0
      %v2082 = vadd.f32 0.0, %v2081
      %v2083 = vpop.f32.mrb[0].mxu0
      %v2084 = vpop.f32.mrb[0].mxu0
      %2085 = vdwg.mxu0
      %2086 = vmatprep.subr.bf16.mxu0 %v1996
      %2087 = vmatpush1.bf16.msra.mxu0 %v1993
      %2088 = vmatprep.subr.bf16.mxu0 0
      %2089 = vmatpush1.bf16.msra.mxu0 0
      %2090 = vmatprep.subr.bf16.mxu0 0
      %2091 = vmatpush1.bf16.msra.mxu0 0
      %2092 = vmatprep.subr.bf16.mxu0 0
      %2093 = vmatpush1.bf16.msra.mxu0 0
      %2094 = vmatprep.subr.bf16.mxu0 0
      %2095 = vmatpush1.bf16.msra.mxu0 0
      %2096 = vmatprep.subr.bf16.mxu0 0
      %2097 = vmatpush1.bf16.msra.mxu0 0
      %2098 = vmatprep.subr.bf16.mxu0 0
      %2099 = vmatpush1.bf16.msra.mxu0 0
      %2100 = vmatprep.subr.bf16.mxu0 0
      %2101 = vmatpush1.bf16.msra.mxu0 0
      %2102 = vmatprep.subr.bf16.mxu0 0
      %2103 = vmatpush1.bf16.msra.mxu0 0
      %2104 = vmatprep.subr.bf16.mxu0 0
      %2105 = vmatpush1.bf16.msra.mxu0 0
      %2106 = vmatprep.subr.bf16.mxu0 0
      %2107 = vmatpush1.bf16.msra.mxu0 0
      %2108 = vmatprep.subr.bf16.mxu0 0
      %2109 = vmatpush1.bf16.msra.mxu0 0
      %2110 = vmatprep.subr.bf16.mxu0 0
      %2111 = vmatpush1.bf16.msra.mxu0 0
      %2112 = vmatprep.subr.bf16.mxu0 0
      %2113 = vmatpush1.bf16.msra.mxu0 0
      %2114 = vmatprep.subr.bf16.mxu0 0
      %2115 = vmatpush1.bf16.msra.mxu0 0
      %2116 = vmatprep.subr.bf16.mxu0 0
      %2117 = vmatpush1.bf16.msra.mxu0 0
      %2118 = vmatprep.mubr.bf16.mxu0 0
      %2119 = vmatmul.mubr.bf16.gmra.mrb[0].mxu0 %v1978
      %v2120 = vpop.f32.mrb[0].mxu0
      %v2121 = vadd.f32 0.0, %v2120
      %v2122 = vpop.f32.mrb[0].mxu0
      %v2123 = vadd.f32 0.0, %v2122
      %v2124 = vpop.f32.mrb[0].mxu0
      %v2125 = vpop.f32.mrb[0].mxu0
      %2126 = vdwg.mxu0
      %2127 = vmatprep.subr.bf16.mxu0 %v2002
      %2128 = vmatpush1.bf16.msra.mxu0 %v1999
      %2129 = vmatprep.subr.bf16.mxu0 0
      %2130 = vmatpush1.bf16.msra.mxu0 0
      %2131 = vmatprep.subr.bf16.mxu0 0
      %2132 = vmatpush1.bf16.msra.mxu0 0
      %2133 = vmatprep.subr.bf16.mxu0 0
      %2134 = vmatpush1.bf16.msra.mxu0 0
      %2135 = vmatprep.subr.bf16.mxu0 0
      %2136 = vmatpush1.bf16.msra.mxu0 0
      %2137 = vmatprep.subr.bf16.mxu0 0
      %2138 = vmatpush1.bf16.msra.mxu0 0
      %2139 = vmatprep.subr.bf16.mxu0 0
      %2140 = vmatpush1.bf16.msra.mxu0 0
      %2141 = vmatprep.subr.bf16.mxu0 0
      %2142 = vmatpush1.bf16.msra.mxu0 0
      %2143 = vmatprep.subr.bf16.mxu0 0
      %2144 = vmatpush1.bf16.msra.mxu0 0
      %2145 = vmatprep.subr.bf16.mxu0 0
      %2146 = vmatpush1.bf16.msra.mxu0 0
      %2147 = vmatprep.subr.bf16.mxu0 0
      %2148 = vmatpush1.bf16.msra.mxu0 0
      %2149 = vmatprep.subr.bf16.mxu0 0
      %2150 = vmatpush1.bf16.msra.mxu0 0
      %2151 = vmatprep.subr.bf16.mxu0 0
      %2152 = vmatpush1.bf16.msra.mxu0 0
      %2153 = vmatprep.subr.bf16.mxu0 0
      %2154 = vmatpush1.bf16.msra.mxu0 0
      %2155 = vmatprep.subr.bf16.mxu0 0
      %2156 = vmatpush1.bf16.msra.mxu0 0
      %2157 = vmatprep.subr.bf16.mxu0 0
      %2158 = vmatpush1.bf16.msra.mxu0 0
      %2159 = vmatprep.mubr.bf16.mxu0 0
      %2160 = vmatmul.mubr.bf16.gmra.mrb[0].mxu0 %v1978
      %v2161 = vpop.f32.mrb[0].mxu0
      %v2162 = vadd.f32 0.0, %v2161
      %v2163 = vpop.f32.mrb[0].mxu0
      %v2164 = vadd.f32 0.0, %v2163
      %v2165 = vpop.f32.mrb[0].mxu0
      %v2166 = vpop.f32.mrb[0].mxu0
      %2167 = vdwg.mxu0
      %v2168 = vadd.f32 %v1945, %v2039
      %v2169 = vadd.f32 %v1946, %v2041
      %v2170 = vadd.f32 %v1947, %v2080
      %v2171 = vadd.f32 %v1948, %v2082
      %v2172 = vadd.f32 %v1949, %v2121
      %v2173 = vadd.f32 %v1950, %v2123
      %v2174 = vadd.f32 %v1951, %v2162
      %v2175 = vadd.f32 %v1952, %v2164
      %2176 = vrot.lane.b32.xlu0 %v402, 62
      %v2177 = vpop.permute.xlu0 %2176
      %2178 = vrot.lane.b32.xlu0 %v403, 62
      %v2179 = vpop.permute.xlu0 %2178
      %2180 = vrot.lane.b32.xlu0 %v404, 62
      %v2181 = vpop.permute.xlu0 %2180
      %2182 = vrot.lane.b32.xlu0 %v405, 62
      %v2183 = vpop.permute.xlu0 %2182
      %2184 = vrot.lane.b32.xlu0 %v406, 62
      %v2185 = vpop.permute.xlu0 %2184
      %2186 = vrot.lane.b32.xlu0 %v407, 62
      %v2187 = vpop.permute.xlu0 %2186
      %2188 = vrot.lane.b32.xlu0 %v408, 62
      %v2189 = vpop.permute.xlu0 %2188
      %2190 = vrot.lane.b32.xlu0 %v409, 62
      %v2191 = vpop.permute.xlu0 %2190
      %vm2192 = vcmask 506880
      %v2193 = vsel %vm2192, %v2177, %v2179
      %v2194 = vsel %vm2192, %v2179, %v2181
      %v2195 = vsel %vm2192, %v2181, %v2183
      %v2196 = vsel %vm2192, %v2183, %v2185
      %v2197 = vsel %vm2192, %v2185, %v2187
      %v2198 = vsel %vm2192, %v2187, %v2189
      %v2199 = vsel %vm2192, %v2189, %v2191
      %v2201 = vsel %vm451, %v418, 0
      %v2204 = vand.u32 %v2193, %v458
      %v2207 = vand.u32 %v2194, %v458
      %v2210 = vand.u32 %v2195, %v458
      %v2213 = vand.u32 %v2196, %v458
      %v2216 = vand.u32 %v2197, %v458
      %v2219 = vand.u32 %v2198, %v458
      %v2222 = vand.u32 %v2199, %v458
      %v2225 = vand.u32 %v2191, %v458
      %2227 = vmatprep.subr.bf16.mxu0 %v2207
      %2228 = vmatpush1.bf16.msra.mxu0 %v2204
      %2229 = vmatprep.subr.bf16.mxu0 0
      %2230 = vmatpush1.bf16.msra.mxu0 0
      %2231 = vmatprep.subr.bf16.mxu0 0
      %2232 = vmatpush1.bf16.msra.mxu0 0
      %2233 = vmatprep.subr.bf16.mxu0 0
      %2234 = vmatpush1.bf16.msra.mxu0 0
      %2235 = vmatprep.subr.bf16.mxu0 0
      %2236 = vmatpush1.bf16.msra.mxu0 0
      %2237 = vmatprep.subr.bf16.mxu0 0
      %2238 = vmatpush1.bf16.msra.mxu0 0
      %2239 = vmatprep.subr.bf16.mxu0 0
      %2240 = vmatpush1.bf16.msra.mxu0 0
      %2241 = vmatprep.subr.bf16.mxu0 0
      %2242 = vmatpush1.bf16.msra.mxu0 0
      %2243 = vmatprep.subr.bf16.mxu0 0
      %2244 = vmatpush1.bf16.msra.mxu0 0
      %2245 = vmatprep.subr.bf16.mxu0 0
      %2246 = vmatpush1.bf16.msra.mxu0 0
      %2247 = vmatprep.subr.bf16.mxu0 0
      %2248 = vmatpush1.bf16.msra.mxu0 0
      %2249 = vmatprep.subr.bf16.mxu0 0
      %2250 = vmatpush1.bf16.msra.mxu0 0
      %2251 = vmatprep.subr.bf16.mxu0 0
      %2252 = vmatpush1.bf16.msra.mxu0 0
      %2253 = vmatprep.subr.bf16.mxu0 0
      %2254 = vmatpush1.bf16.msra.mxu0 0
      %2255 = vmatprep.subr.bf16.mxu0 0
      %2256 = vmatpush1.bf16.msra.mxu0 0
      %2257 = vmatprep.subr.bf16.mxu0 0
      %2258 = vmatpush1.bf16.msra.mxu0 0
      %2259 = vmatprep.mubr.bf16.mxu0 0
      %2260 = vmatmul.mubr.bf16.gmra.mrb[0].mxu0 %v2201
      %v2261 = vpop.f32.mrb[0].mxu0
      %v2262 = vadd.f32 0.0, %v2261
      %v2263 = vpop.f32.mrb[0].mxu0
      %v2264 = vadd.f32 0.0, %v2263
      %v2265 = vpop.f32.mrb[0].mxu0
      %v2266 = vpop.f32.mrb[0].mxu0
      %2267 = vdwg.mxu0
      %2268 = vmatprep.subr.bf16.mxu0 %v2213
      %2269 = vmatpush1.bf16.msra.mxu0 %v2210
      %2270 = vmatprep.subr.bf16.mxu0 0
      %2271 = vmatpush1.bf16.msra.mxu0 0
      %2272 = vmatprep.subr.bf16.mxu0 0
      %2273 = vmatpush1.bf16.msra.mxu0 0
      %2274 = vmatprep.subr.bf16.mxu0 0
      %2275 = vmatpush1.bf16.msra.mxu0 0
      %2276 = vmatprep.subr.bf16.mxu0 0
      %2277 = vmatpush1.bf16.msra.mxu0 0
      %2278 = vmatprep.subr.bf16.mxu0 0
      %2279 = vmatpush1.bf16.msra.mxu0 0
      %2280 = vmatprep.subr.bf16.mxu0 0
      %2281 = vmatpush1.bf16.msra.mxu0 0
      %2282 = vmatprep.subr.bf16.mxu0 0
      %2283 = vmatpush1.bf16.msra.mxu0 0
      %2284 = vmatprep.subr.bf16.mxu0 0
      %2285 = vmatpush1.bf16.msra.mxu0 0
      %2286 = vmatprep.subr.bf16.mxu0 0
      %2287 = vmatpush1.bf16.msra.mxu0 0
      %2288 = vmatprep.subr.bf16.mxu0 0
      %2289 = vmatpush1.bf16.msra.mxu0 0
      %2290 = vmatprep.subr.bf16.mxu0 0
      %2291 = vmatpush1.bf16.msra.mxu0 0
      %2292 = vmatprep.subr.bf16.mxu0 0
      %2293 = vmatpush1.bf16.msra.mxu0 0
      %2294 = vmatprep.subr.bf16.mxu0 0
      %2295 = vmatpush1.bf16.msra.mxu0 0
      %2296 = vmatprep.subr.bf16.mxu0 0
      %2297 = vmatpush1.bf16.msra.mxu0 0
      %2298 = vmatprep.subr.bf16.mxu0 0
      %2299 = vmatpush1.bf16.msra.mxu0 0
      %2300 = vmatprep.mubr.bf16.mxu0 0
      %2301 = vmatmul.mubr.bf16.gmra.mrb[0].mxu0 %v2201
      %v2302 = vpop.f32.mrb[0].mxu0
      %v2303 = vadd.f32 0.0, %v2302
      %v2304 = vpop.f32.mrb[0].mxu0
      %v2305 = vadd.f32 0.0, %v2304
      %v2306 = vpop.f32.mrb[0].mxu0
      %v2307 = vpop.f32.mrb[0].mxu0
      %2308 = vdwg.mxu0
      %2309 = vmatprep.subr.bf16.mxu0 %v2219
      %2310 = vmatpush1.bf16.msra.mxu0 %v2216
      %2311 = vmatprep.subr.bf16.mxu0 0
      %2312 = vmatpush1.bf16.msra.mxu0 0
      %2313 = vmatprep.subr.bf16.mxu0 0
      %2314 = vmatpush1.bf16.msra.mxu0 0
      %2315 = vmatprep.subr.bf16.mxu0 0
      %2316 = vmatpush1.bf16.msra.mxu0 0
      %2317 = vmatprep.subr.bf16.mxu0 0
      %2318 = vmatpush1.bf16.msra.mxu0 0
      %2319 = vmatprep.subr.bf16.mxu0 0
      %2320 = vmatpush1.bf16.msra.mxu0 0
      %2321 = vmatprep.subr.bf16.mxu0 0
      %2322 = vmatpush1.bf16.msra.mxu0 0
      %2323 = vmatprep.subr.bf16.mxu0 0
      %2324 = vmatpush1.bf16.msra.mxu0 0
      %2325 = vmatprep.subr.bf16.mxu0 0
      %2326 = vmatpush1.bf16.msra.mxu0 0
      %2327 = vmatprep.subr.bf16.mxu0 0
      %2328 = vmatpush1.bf16.msra.mxu0 0
      %2329 = vmatprep.subr.bf16.mxu0 0
      %2330 = vmatpush1.bf16.msra.mxu0 0
      %2331 = vmatprep.subr.bf16.mxu0 0
      %2332 = vmatpush1.bf16.msra.mxu0 0
      %2333 = vmatprep.subr.bf16.mxu0 0
      %2334 = vmatpush1.bf16.msra.mxu0 0
      %2335 = vmatprep.subr.bf16.mxu0 0
      %2336 = vmatpush1.bf16.msra.mxu0 0
      %2337 = vmatprep.subr.bf16.mxu0 0
      %2338 = vmatpush1.bf16.msra.mxu0 0
      %2339 = vmatprep.subr.bf16.mxu0 0
      %2340 = vmatpush1.bf16.msra.mxu0 0
      %2341 = vmatprep.mubr.bf16.mxu0 0
      %2342 = vmatmul.mubr.bf16.gmra.mrb[0].mxu0 %v2201
      %v2343 = vpop.f32.mrb[0].mxu0
      %v2344 = vadd.f32 0.0, %v2343
      %v2345 = vpop.f32.mrb[0].mxu0
      %v2346 = vadd.f32 0.0, %v2345
      %v2347 = vpop.f32.mrb[0].mxu0
      %v2348 = vpop.f32.mrb[0].mxu0
      %2349 = vdwg.mxu0
      %2350 = vmatprep.subr.bf16.mxu0 %v2225
      %2351 = vmatpush1.bf16.msra.mxu0 %v2222
      %2352 = vmatprep.subr.bf16.mxu0 0
      %2353 = vmatpush1.bf16.msra.mxu0 0
      %2354 = vmatprep.subr.bf16.mxu0 0
      %2355 = vmatpush1.bf16.msra.mxu0 0
      %2356 = vmatprep.subr.bf16.mxu0 0
      %2357 = vmatpush1.bf16.msra.mxu0 0
      %2358 = vmatprep.subr.bf16.mxu0 0
      %2359 = vmatpush1.bf16.msra.mxu0 0
      %2360 = vmatprep.subr.bf16.mxu0 0
      %2361 = vmatpush1.bf16.msra.mxu0 0
      %2362 = vmatprep.subr.bf16.mxu0 0
      %2363 = vmatpush1.bf16.msra.mxu0 0
      %2364 = vmatprep.subr.bf16.mxu0 0
      %2365 = vmatpush1.bf16.msra.mxu0 0
      %2366 = vmatprep.subr.bf16.mxu0 0
      %2367 = vmatpush1.bf16.msra.mxu0 0
      %2368 = vmatprep.subr.bf16.mxu0 0
      %2369 = vmatpush1.bf16.msra.mxu0 0
      %2370 = vmatprep.subr.bf16.mxu0 0
      %2371 = vmatpush1.bf16.msra.mxu0 0
      %2372 = vmatprep.subr.bf16.mxu0 0
      %2373 = vmatpush1.bf16.msra.mxu0 0
      %2374 = vmatprep.subr.bf16.mxu0 0
      %2375 = vmatpush1.bf16.msra.mxu0 0
      %2376 = vmatprep.subr.bf16.mxu0 0
      %2377 = vmatpush1.bf16.msra.mxu0 0
      %2378 = vmatprep.subr.bf16.mxu0 0
      %2379 = vmatpush1.bf16.msra.mxu0 0
      %2380 = vmatprep.subr.bf16.mxu0 0
      %2381 = vmatpush1.bf16.msra.mxu0 0
      %2382 = vmatprep.mubr.bf16.mxu0 0
      %2383 = vmatmul.mubr.bf16.gmra.mrb[0].mxu0 %v2201
      %v2384 = vpop.f32.mrb[0].mxu0
      %v2385 = vadd.f32 0.0, %v2384
      %v2386 = vpop.f32.mrb[0].mxu0
      %v2387 = vadd.f32 0.0, %v2386
      %v2388 = vpop.f32.mrb[0].mxu0
      %v2389 = vpop.f32.mrb[0].mxu0
      %2390 = vdwg.mxu0
      %v2391 = vadd.f32 %v2168, %v2262
      %v2392 = vadd.f32 %v2169, %v2264
      %v2393 = vadd.f32 %v2170, %v2303
      %v2394 = vadd.f32 %v2171, %v2305
      %v2395 = vadd.f32 %v2172, %v2344
      %v2396 = vadd.f32 %v2173, %v2346
      %v2397 = vadd.f32 %v2174, %v2385
      %v2398 = vadd.f32 %v2175, %v2387
      %v2399 = vld [vmem:[%s2] sm:$0xff]
      %2401 = vset.pattern.permute.xlu0 0
      %2402 = vperm.xlu0 %2401, %v2399
      %v2403 = vpop.permute.xlu0 %2402
      %v2405 = vadd.f32 %v2391, %v2403
      %v2406 = vadd.f32 %v2392, %v2403
      %v2407 = vadd.f32 %v2393, %v2403
      %v2408 = vadd.f32 %v2394, %v2403
      %v2409 = vadd.f32 %v2395, %v2403
      %v2410 = vadd.f32 %v2396, %v2403
      %v2411 = vadd.f32 %v2397, %v2403
      %v2412 = vadd.f32 %v2398, %v2403
      %v2413 = vmax.f32 %v2405, 0.0
      %v2414 = vmax.f32 %v2406, 0.0
      %v2415 = vmax.f32 %v2407, 0.0
      %v2416 = vmax.f32 %v2408, 0.0
      %v2417 = vmax.f32 %v2409, 0.0
      %v2418 = vmax.f32 %v2410, 0.0
      %v2419 = vmax.f32 %v2411, 0.0
      %v2420 = vmax.f32 %v2412, 0.0
      %v2421 = vpack.c.bf16 %v2413, %v2413
      %v2422 = vpack.c.bf16 %v2414, %v2414
      %v2423 = vpack.c.bf16 %v2415, %v2415
      %v2424 = vpack.c.bf16 %v2416, %v2416
      %v2425 = vpack.c.bf16 %v2417, %v2417
      %v2426 = vpack.c.bf16 %v2418, %v2418
      %v2427 = vpack.c.bf16 %v2419, %v2419
      %v2428 = vpack.c.bf16 %v2420, %v2420
      %v2429 = vld [vmem:[%s3] sm:$0xf]
      %v2430 = vld [vmem:[%s3 + $0x4] sm:$0xf]
      %v2431 = vld [vmem:[%s3 + $0x8] sm:$0xf]
      %v2432 = vld [vmem:[%s3 + $0xc] sm:$0xf]
      %v2433 = vld [vmem:[%s3 + $0x10] sm:$0xf]
      %v2434 = vld [vmem:[%s3 + $0x14] sm:$0xf]
      %v2435 = vld [vmem:[%s3 + $0x18] sm:$0xf]
      %v2436 = vld [vmem:[%s3 + $0x1c] sm:$0xf]
      %v2437 = vld [vmem:[%s3 + $0x20] sm:$0xf]
      %2445 = vrot.lane.b32.xlu0 %v2421, 127
      %v2446 = vpop.permute.xlu0 %2445
      %2447 = vrot.lane.b32.xlu0 %v2422, 127
      %v2448 = vpop.permute.xlu0 %2447
      %2449 = vrot.lane.b32.xlu0 %v2423, 127
      %v2450 = vpop.permute.xlu0 %2449
      %2451 = vrot.lane.b32.xlu0 %v2424, 127
      %v2452 = vpop.permute.xlu0 %2451
      %2453 = vrot.lane.b32.xlu0 %v2425, 127
      %v2454 = vpop.permute.xlu0 %2453
      %2455 = vrot.lane.b32.xlu0 %v2426, 127
      %v2456 = vpop.permute.xlu0 %2455
      %2457 = vrot.lane.b32.xlu0 %v2427, 127
      %v2458 = vpop.permute.xlu0 %2457
      %v2459 = vsel %vm443, %v2446, %v2448
      %v2460 = vsel %vm443, %v2448, %v2450
      %v2461 = vsel %vm443, %v2450, %v2452
      %v2462 = vsel %vm443, %v2452, %v2454
      %v2463 = vsel %vm443, %v2454, %v2456
      %v2464 = vsel %vm443, %v2456, %v2458
      %vm2465 = vcmask 64512
      %v2467 = vsel %vm2465, %v2430, 0
      %vm2469 = vcmask 1043456
      %v2471 = vsel %vm2469, %v2459, 0
      %v2474 = vsel %vm2469, %v2460, 0
      %v2477 = vsel %vm2469, %v2461, 0
      %v2480 = vsel %vm2469, %v2462, 0
      %v2483 = vsel %vm2469, %v2463, 0
      %v2486 = vsel %vm2469, %v2464, 0
      %v2489 = vsel %vm2469, %v2458, 0
      %2491 = vmatprep.subr.bf16.mxu0 %v2474
      %2492 = vmatpush1.bf16.msra.mxu0 %v2471
      %2493 = vmatprep.subr.bf16.mxu0 0
      %2494 = vmatpush1.bf16.msra.mxu0 0
      %2495 = vmatprep.subr.bf16.mxu0 0
      %2496 = vmatpush1.bf16.msra.mxu0 0
      %2497 = vmatprep.subr.bf16.mxu0 0
      %2498 = vmatpush1.bf16.msra.mxu0 0
      %2499 = vmatprep.subr.bf16.mxu0 0
      %2500 = vmatpush1.bf16.msra.mxu0 0
      %2501 = vmatprep.subr.bf16.mxu0 0
      %2502 = vmatpush1.bf16.msra.mxu0 0
      %2503 = vmatprep.subr.bf16.mxu0 0
      %2504 = vmatpush1.bf16.msra.mxu0 0
      %2505 = vmatprep.subr.bf16.mxu0 0
      %2506 = vmatpush1.bf16.msra.mxu0 0
      %2507 = vmatprep.subr.bf16.mxu0 0
      %2508 = vmatpush1.bf16.msra.mxu0 0
      %2509 = vmatprep.subr.bf16.mxu0 0
      %2510 = vmatpush1.bf16.msra.mxu0 0
      %2511 = vmatprep.subr.bf16.mxu0 0
      %2512 = vmatpush1.bf16.msra.mxu0 0
      %2513 = vmatprep.subr.bf16.mxu0 0
      %2514 = vmatpush1.bf16.msra.mxu0 0
      %2515 = vmatprep.subr.bf16.mxu0 0
      %2516 = vmatpush1.bf16.msra.mxu0 0
      %2517 = vmatprep.subr.bf16.mxu0 0
      %2518 = vmatpush1.bf16.msra.mxu0 0
      %2519 = vmatprep.subr.bf16.mxu0 0
      %2520 = vmatpush1.bf16.msra.mxu0 0
      %2521 = vmatprep.subr.bf16.mxu0 0
      %2522 = vmatpush1.bf16.msra.mxu0 0
      %2523 = vmatprep.mubr.bf16.mxu0 0
      %2524 = vmatmul.mubr.bf16.gmra.mrb[0].mxu0 %v2467
      %v2525 = vpop.f32.mrb[0].mxu0
      %v2526 = vadd.f32 0.0, %v2525
      %v2527 = vpop.f32.mrb[0].mxu0
      %v2528 = vadd.f32 0.0, %v2527
      %v2529 = vpop.f32.mrb[0].mxu0
      %v2530 = vpop.f32.mrb[0].mxu0
      %2531 = vdwg.mxu0
      %2532 = vmatprep.subr.bf16.mxu0 %v2480
      %2533 = vmatpush1.bf16.msra.mxu0 %v2477
      %2534 = vmatprep.subr.bf16.mxu0 0
      %2535 = vmatpush1.bf16.msra.mxu0 0
      %2536 = vmatprep.subr.bf16.mxu0 0
      %2537 = vmatpush1.bf16.msra.mxu0 0
      %2538 = vmatprep.subr.bf16.mxu0 0
      %2539 = vmatpush1.bf16.msra.mxu0 0
      %2540 = vmatprep.subr.bf16.mxu0 0
      %2541 = vmatpush1.bf16.msra.mxu0 0
      %2542 = vmatprep.subr.bf16.mxu0 0
      %2543 = vmatpush1.bf16.msra.mxu0 0
      %2544 = vmatprep.subr.bf16.mxu0 0
      %2545 = vmatpush1.bf16.msra.mxu0 0
      %2546 = vmatprep.subr.bf16.mxu0 0
      %2547 = vmatpush1.bf16.msra.mxu0 0
      %2548 = vmatprep.subr.bf16.mxu0 0
      %2549 = vmatpush1.bf16.msra.mxu0 0
      %2550 = vmatprep.subr.bf16.mxu0 0
      %2551 = vmatpush1.bf16.msra.mxu0 0
      %2552 = vmatprep.subr.bf16.mxu0 0
      %2553 = vmatpush1.bf16.msra.mxu0 0
      %2554 = vmatprep.subr.bf16.mxu0 0
      %2555 = vmatpush1.bf16.msra.mxu0 0
      %2556 = vmatprep.subr.bf16.mxu0 0
      %2557 = vmatpush1.bf16.msra.mxu0 0
      %2558 = vmatprep.subr.bf16.mxu0 0
      %2559 = vmatpush1.bf16.msra.mxu0 0
      %2560 = vmatprep.subr.bf16.mxu0 0
      %2561 = vmatpush1.bf16.msra.mxu0 0
      %2562 = vmatprep.subr.bf16.mxu0 0
      %2563 = vmatpush1.bf16.msra.mxu0 0
      %2564 = vmatprep.mubr.bf16.mxu0 0
      %2565 = vmatmul.mubr.bf16.gmra.mrb[0].mxu0 %v2467
      %v2566 = vpop.f32.mrb[0].mxu0
      %v2567 = vadd.f32 0.0, %v2566
      %v2568 = vpop.f32.mrb[0].mxu0
      %v2569 = vadd.f32 0.0, %v2568
      %v2570 = vpop.f32.mrb[0].mxu0
      %v2571 = vpop.f32.mrb[0].mxu0
      %2572 = vdwg.mxu0
      %2573 = vmatprep.subr.bf16.mxu0 %v2486
      %2574 = vmatpush1.bf16.msra.mxu0 %v2483
      %2575 = vmatprep.subr.bf16.mxu0 0
      %2576 = vmatpush1.bf16.msra.mxu0 0
      %2577 = vmatprep.subr.bf16.mxu0 0
      %2578 = vmatpush1.bf16.msra.mxu0 0
      %2579 = vmatprep.subr.bf16.mxu0 0
      %2580 = vmatpush1.bf16.msra.mxu0 0
      %2581 = vmatprep.subr.bf16.mxu0 0
      %2582 = vmatpush1.bf16.msra.mxu0 0
      %2583 = vmatprep.subr.bf16.mxu0 0
      %2584 = vmatpush1.bf16.msra.mxu0 0
      %2585 = vmatprep.subr.bf16.mxu0 0
      %2586 = vmatpush1.bf16.msra.mxu0 0
      %2587 = vmatprep.subr.bf16.mxu0 0
      %2588 = vmatpush1.bf16.msra.mxu0 0
      %2589 = vmatprep.subr.bf16.mxu0 0
      %2590 = vmatpush1.bf16.msra.mxu0 0
      %2591 = vmatprep.subr.bf16.mxu0 0
      %2592 = vmatpush1.bf16.msra.mxu0 0
      %2593 = vmatprep.subr.bf16.mxu0 0
      %2594 = vmatpush1.bf16.msra.mxu0 0
      %2595 = vmatprep.subr.bf16.mxu0 0
      %2596 = vmatpush1.bf16.msra.mxu0 0
      %2597 = vmatprep.subr.bf16.mxu0 0
      %2598 = vmatpush1.bf16.msra.mxu0 0
      %2599 = vmatprep.subr.bf16.mxu0 0
      %2600 = vmatpush1.bf16.msra.mxu0 0
      %2601 = vmatprep.subr.bf16.mxu0 0
      %2602 = vmatpush1.bf16.msra.mxu0 0
      %2603 = vmatprep.subr.bf16.mxu0 0
      %2604 = vmatpush1.bf16.msra.mxu0 0
      %2605 = vmatprep.mubr.bf16.mxu0 0
      %2606 = vmatmul.mubr.bf16.gmra.mrb[0].mxu0 %v2467
      %v2607 = vpop.f32.mrb[0].mxu0
      %v2608 = vadd.f32 0.0, %v2607
      %v2609 = vpop.f32.mrb[0].mxu0
      %v2610 = vadd.f32 0.0, %v2609
      %v2611 = vpop.f32.mrb[0].mxu0
      %v2612 = vpop.f32.mrb[0].mxu0
      %2613 = vdwg.mxu0
      %2614 = vmatprep.subr.bf16.mxu0 0
      %2615 = vmatpush1.bf16.msra.mxu0 %v2489
      %2616 = vmatprep.subr.bf16.mxu0 0
      %2617 = vmatpush1.bf16.msra.mxu0 0
      %2618 = vmatprep.subr.bf16.mxu0 0
      %2619 = vmatpush1.bf16.msra.mxu0 0
      %2620 = vmatprep.subr.bf16.mxu0 0
      %2621 = vmatpush1.bf16.msra.mxu0 0
      %2622 = vmatprep.subr.bf16.mxu0 0
      %2623 = vmatpush1.bf16.msra.mxu0 0
      %2624 = vmatprep.subr.bf16.mxu0 0
      %2625 = vmatpush1.bf16.msra.mxu0 0
      %2626 = vmatprep.subr.bf16.mxu0 0
      %2627 = vmatpush1.bf16.msra.mxu0 0
      %2628 = vmatprep.subr.bf16.mxu0 0
      %2629 = vmatpush1.bf16.msra.mxu0 0
      %2630 = vmatprep.subr.bf16.mxu0 0
      %2631 = vmatpush1.bf16.msra.mxu0 0
      %2632 = vmatprep.subr.bf16.mxu0 0
      %2633 = vmatpush1.bf16.msra.mxu0 0
      %2634 = vmatprep.subr.bf16.mxu0 0
      %2635 = vmatpush1.bf16.msra.mxu0 0
      %2636 = vmatprep.subr.bf16.mxu0 0
      %2637 = vmatpush1.bf16.msra.mxu0 0
      %2638 = vmatprep.subr.bf16.mxu0 0
      %2639 = vmatpush1.bf16.msra.mxu0 0
      %2640 = vmatprep.subr.bf16.mxu0 0
      %2641 = vmatpush1.bf16.msra.mxu0 0
      %2642 = vmatprep.subr.bf16.mxu0 0
      %2643 = vmatpush1.bf16.msra.mxu0 0
      %2644 = vmatprep.subr.bf16.mxu0 0
      %2645 = vmatpush1.bf16.msra.mxu0 0
      %2646 = vmatprep.mubr.bf16.mxu0 0
      %2647 = vmatmul.mubr.bf16.gmra.mrb[0].mxu0 %v2467
      %v2648 = vpop.f32.mrb[0].mxu0
      %v2649 = vadd.f32 0.0, %v2648
      %v2650 = vpop.f32.mrb[0].mxu0
      %v2651 = vpop.f32.mrb[0].mxu0
      %v2652 = vpop.f32.mrb[0].mxu0
      %2653 = vdwg.mxu0
      %v2655 = vsel %vm2465, %v2429, 0
      %v2658 = vsel %vm2469, %v2421, 0
      %v2661 = vsel %vm2469, %v2422, 0
      %v2664 = vsel %vm2469, %v2423, 0
      %v2667 = vsel %vm2469, %v2424, 0
      %v2670 = vsel %vm2469, %v2425, 0
      %v2673 = vsel %vm2469, %v2426, 0
      %v2676 = vsel %vm2469, %v2427, 0
      %2678 = vmatprep.subr.bf16.mxu0 %v2661
      %2679 = vmatpush1.bf16.msra.mxu0 %v2658
      %2680 = vmatprep.subr.bf16.mxu0 0
      %2681 = vmatpush1.bf16.msra.mxu0 0
      %2682 = vmatprep.subr.bf16.mxu0 0
      %2683 = vmatpush1.bf16.msra.mxu0 0
      %2684 = vmatprep.subr.bf16.mxu0 0
      %2685 = vmatpush1.bf16.msra.mxu0 0
      %2686 = vmatprep.subr.bf16.mxu0 0
      %2687 = vmatpush1.bf16.msra.mxu0 0
      %2688 = vmatprep.subr.bf16.mxu0 0
      %2689 = vmatpush1.bf16.msra.mxu0 0
      %2690 = vmatprep.subr.bf16.mxu0 0
      %2691 = vmatpush1.bf16.msra.mxu0 0
      %2692 = vmatprep.subr.bf16.mxu0 0
      %2693 = vmatpush1.bf16.msra.mxu0 0
      %2694 = vmatprep.subr.bf16.mxu0 0
      %2695 = vmatpush1.bf16.msra.mxu0 0
      %2696 = vmatprep.subr.bf16.mxu0 0
      %2697 = vmatpush1.bf16.msra.mxu0 0
      %2698 = vmatprep.subr.bf16.mxu0 0
      %2699 = vmatpush1.bf16.msra.mxu0 0
      %2700 = vmatprep.subr.bf16.mxu0 0
      %2701 = vmatpush1.bf16.msra.mxu0 0
      %2702 = vmatprep.subr.bf16.mxu0 0
      %2703 = vmatpush1.bf16.msra.mxu0 0
      %2704 = vmatprep.subr.bf16.mxu0 0
      %2705 = vmatpush1.bf16.msra.mxu0 0
      %2706 = vmatprep.subr.bf16.mxu0 0
      %2707 = vmatpush1.bf16.msra.mxu0 0
      %2708 = vmatprep.subr.bf16.mxu0 0
      %2709 = vmatpush1.bf16.msra.mxu0 0
      %2710 = vmatprep.mubr.bf16.mxu0 0
      %2711 = vmatmul.mubr.bf16.gmra.mrb[0].mxu0 %v2655
      %v2712 = vpop.f32.mrb[0].mxu0
      %v2713 = vadd.f32 %v2526, %v2712
      %v2714 = vpop.f32.mrb[0].mxu0
      %v2715 = vadd.f32 %v2528, %v2714
      %v2716 = vpop.f32.mrb[0].mxu0
      %v2717 = vpop.f32.mrb[0].mxu0
      %2718 = vdwg.mxu0
      %2719 = vmatprep.subr.bf16.mxu0 %v2667
      %2720 = vmatpush1.bf16.msra.mxu0 %v2664
      %2721 = vmatprep.subr.bf16.mxu0 0
      %2722 = vmatpush1.bf16.msra.mxu0 0
      %2723 = vmatprep.subr.bf16.mxu0 0
      %2724 = vmatpush1.bf16.msra.mxu0 0
      %2725 = vmatprep.subr.bf16.mxu0 0
      %2726 = vmatpush1.bf16.msra.mxu0 0
      %2727 = vmatprep.subr.bf16.mxu0 0
      %2728 = vmatpush1.bf16.msra.mxu0 0
      %2729 = vmatprep.subr.bf16.mxu0 0
      %2730 = vmatpush1.bf16.msra.mxu0 0
      %2731 = vmatprep.subr.bf16.mxu0 0
      %2732 = vmatpush1.bf16.msra.mxu0 0
      %2733 = vmatprep.subr.bf16.mxu0 0
      %2734 = vmatpush1.bf16.msra.mxu0 0
      %2735 = vmatprep.subr.bf16.mxu0 0
      %2736 = vmatpush1.bf16.msra.mxu0 0
      %2737 = vmatprep.subr.bf16.mxu0 0
      %2738 = vmatpush1.bf16.msra.mxu0 0
      %2739 = vmatprep.subr.bf16.mxu0 0
      %2740 = vmatpush1.bf16.msra.mxu0 0
      %2741 = vmatprep.subr.bf16.mxu0 0
      %2742 = vmatpush1.bf16.msra.mxu0 0
      %2743 = vmatprep.subr.bf16.mxu0 0
      %2744 = vmatpush1.bf16.msra.mxu0 0
      %2745 = vmatprep.subr.bf16.mxu0 0
      %2746 = vmatpush1.bf16.msra.mxu0 0
      %2747 = vmatprep.subr.bf16.mxu0 0
      %2748 = vmatpush1.bf16.msra.mxu0 0
      %2749 = vmatprep.subr.bf16.mxu0 0
      %2750 = vmatpush1.bf16.msra.mxu0 0
      %2751 = vmatprep.mubr.bf16.mxu0 0
      %2752 = vmatmul.mubr.bf16.gmra.mrb[0].mxu0 %v2655
      %v2753 = vpop.f32.mrb[0].mxu0
      %v2754 = vadd.f32 %v2567, %v2753
      %v2755 = vpop.f32.mrb[0].mxu0
      %v2756 = vadd.f32 %v2569, %v2755
      %v2757 = vpop.f32.mrb[0].mxu0
      %v2758 = vpop.f32.mrb[0].mxu0
      %2759 = vdwg.mxu0
      %2760 = vmatprep.subr.bf16.mxu0 %v2673
      %2761 = vmatpush1.bf16.msra.mxu0 %v2670
      %2762 = vmatprep.subr.bf16.mxu0 0
      %2763 = vmatpush1.bf16.msra.mxu0 0
      %2764 = vmatprep.subr.bf16.mxu0 0
      %2765 = vmatpush1.bf16.msra.mxu0 0
      %2766 = vmatprep.subr.bf16.mxu0 0
      %2767 = vmatpush1.bf16.msra.mxu0 0
      %2768 = vmatprep.subr.bf16.mxu0 0
      %2769 = vmatpush1.bf16.msra.mxu0 0
      %2770 = vmatprep.subr.bf16.mxu0 0
      %2771 = vmatpush1.bf16.msra.mxu0 0
      %2772 = vmatprep.subr.bf16.mxu0 0
      %2773 = vmatpush1.bf16.msra.mxu0 0
      %2774 = vmatprep.subr.bf16.mxu0 0
      %2775 = vmatpush1.bf16.msra.mxu0 0
      %2776 = vmatprep.subr.bf16.mxu0 0
      %2777 = vmatpush1.bf16.msra.mxu0 0
      %2778 = vmatprep.subr.bf16.mxu0 0
      %2779 = vmatpush1.bf16.msra.mxu0 0
      %2780 = vmatprep.subr.bf16.mxu0 0
      %2781 = vmatpush1.bf16.msra.mxu0 0
      %2782 = vmatprep.subr.bf16.mxu0 0
      %2783 = vmatpush1.bf16.msra.mxu0 0
      %2784 = vmatprep.subr.bf16.mxu0 0
      %2785 = vmatpush1.bf16.msra.mxu0 0
      %2786 = vmatprep.subr.bf16.mxu0 0
      %2787 = vmatpush1.bf16.msra.mxu0 0
      %2788 = vmatprep.subr.bf16.mxu0 0
      %2789 = vmatpush1.bf16.msra.mxu0 0
      %2790 = vmatprep.subr.bf16.mxu0 0
      %2791 = vmatpush1.bf16.msra.mxu0 0
      %2792 = vmatprep.mubr.bf16.mxu0 0
      %2793 = vmatmul.mubr.bf16.gmra.mrb[0].mxu0 %v2655
      %v2794 = vpop.f32.mrb[0].mxu0
      %v2795 = vadd.f32 %v2608, %v2794
      %v2796 = vpop.f32.mrb[0].mxu0
      %v2797 = vadd.f32 %v2610, %v2796
      %v2798 = vpop.f32.mrb[0].mxu0
      %v2799 = vpop.f32.mrb[0].mxu0
      %2800 = vdwg.mxu0
      %2801 = vmatprep.subr.bf16.mxu0 0
      %2802 = vmatpush1.bf16.msra.mxu0 %v2676
      %2803 = vmatprep.subr.bf16.mxu0 0
      %2804 = vmatpush1.bf16.msra.mxu0 0
      %2805 = vmatprep.subr.bf16.mxu0 0
      %2806 = vmatpush1.bf16.msra.mxu0 0
      %2807 = vmatprep.subr.bf16.mxu0 0
      %2808 = vmatpush1.bf16.msra.mxu0 0
      %2809 = vmatprep.subr.bf16.mxu0 0
      %2810 = vmatpush1.bf16.msra.mxu0 0
      %2811 = vmatprep.subr.bf16.mxu0 0
      %2812 = vmatpush1.bf16.msra.mxu0 0
      %2813 = vmatprep.subr.bf16.mxu0 0
      %2814 = vmatpush1.bf16.msra.mxu0 0
      %2815 = vmatprep.subr.bf16.mxu0 0
      %2816 = vmatpush1.bf16.msra.mxu0 0
      %2817 = vmatprep.subr.bf16.mxu0 0
      %2818 = vmatpush1.bf16.msra.mxu0 0
      %2819 = vmatprep.subr.bf16.mxu0 0
      %2820 = vmatpush1.bf16.msra.mxu0 0
      %2821 = vmatprep.subr.bf16.mxu0 0
      %2822 = vmatpush1.bf16.msra.mxu0 0
      %2823 = vmatprep.subr.bf16.mxu0 0
      %2824 = vmatpush1.bf16.msra.mxu0 0
      %2825 = vmatprep.subr.bf16.mxu0 0
      %2826 = vmatpush1.bf16.msra.mxu0 0
      %2827 = vmatprep.subr.bf16.mxu0 0
      %2828 = vmatpush1.bf16.msra.mxu0 0
      %2829 = vmatprep.subr.bf16.mxu0 0
      %2830 = vmatpush1.bf16.msra.mxu0 0
      %2831 = vmatprep.subr.bf16.mxu0 0
      %2832 = vmatpush1.bf16.msra.mxu0 0
      %2833 = vmatprep.mubr.bf16.mxu0 0
      %2834 = vmatmul.mubr.bf16.gmra.mrb[0].mxu0 %v2655
      %v2835 = vpop.f32.mrb[0].mxu0
      %v2836 = vadd.f32 %v2649, %v2835
      %v2837 = vpop.f32.mrb[0].mxu0
      %v2838 = vpop.f32.mrb[0].mxu0
      %v2839 = vpop.f32.mrb[0].mxu0
      %2840 = vdwg.mxu0
      %2841 = vrot.lane.b32.xlu0 %v2421, 126
      %v2842 = vpop.permute.xlu0 %2841
      %2843 = vrot.lane.b32.xlu0 %v2422, 126
      %v2844 = vpop.permute.xlu0 %2843
      %2845 = vrot.lane.b32.xlu0 %v2423, 126
      %v2846 = vpop.permute.xlu0 %2845
      %2847 = vrot.lane.b32.xlu0 %v2424, 126
      %v2848 = vpop.permute.xlu0 %2847
      %2849 = vrot.lane.b32.xlu0 %v2425, 126
      %v2850 = vpop.permute.xlu0 %2849
      %2851 = vrot.lane.b32.xlu0 %v2426, 126
      %v2852 = vpop.permute.xlu0 %2851
      %2853 = vrot.lane.b32.xlu0 %v2427, 126
      %v2854 = vpop.permute.xlu0 %2853
      %v2855 = vsel %vm854, %v2842, %v2844
      %v2856 = vsel %vm854, %v2844, %v2846
      %v2857 = vsel %vm854, %v2846, %v2848
      %v2858 = vsel %vm854, %v2848, %v2850
      %v2859 = vsel %vm854, %v2850, %v2852
      %v2860 = vsel %vm854, %v2852, %v2854
      %v2862 = vsel %vm2465, %v2431, 0
      %v2865 = vsel %vm2469, %v2855, 0
      %v2868 = vsel %vm2469, %v2856, 0
      %v2871 = vsel %vm2469, %v2857, 0
      %v2874 = vsel %vm2469, %v2858, 0
      %v2877 = vsel %vm2469, %v2859, 0
      %v2880 = vsel %vm2469, %v2860, 0
      %v2883 = vsel %vm2469, %v2854, 0
      %2885 = vmatprep.subr.bf16.mxu0 %v2868
      %2886 = vmatpush1.bf16.msra.mxu0 %v2865
      %2887 = vmatprep.subr.bf16.mxu0 0
      %2888 = vmatpush1.bf16.msra.mxu0 0
      %2889 = vmatprep.subr.bf16.mxu0 0
      %2890 = vmatpush1.bf16.msra.mxu0 0
      %2891 = vmatprep.subr.bf16.mxu0 0
      %2892 = vmatpush1.bf16.msra.mxu0 0
      %2893 = vmatprep.subr.bf16.mxu0 0
      %2894 = vmatpush1.bf16.msra.mxu0 0
      %2895 = vmatprep.subr.bf16.mxu0 0
      %2896 = vmatpush1.bf16.msra.mxu0 0
      %2897 = vmatprep.subr.bf16.mxu0 0
      %2898 = vmatpush1.bf16.msra.mxu0 0
      %2899 = vmatprep.subr.bf16.mxu0 0
      %2900 = vmatpush1.bf16.msra.mxu0 0
      %2901 = vmatprep.subr.bf16.mxu0 0
      %2902 = vmatpush1.bf16.msra.mxu0 0
      %2903 = vmatprep.subr.bf16.mxu0 0
      %2904 = vmatpush1.bf16.msra.mxu0 0
      %2905 = vmatprep.subr.bf16.mxu0 0
      %2906 = vmatpush1.bf16.msra.mxu0 0
      %2907 = vmatprep.subr.bf16.mxu0 0
      %2908 = vmatpush1.bf16.msra.mxu0 0
      %2909 = vmatprep.subr.bf16.mxu0 0
      %2910 = vmatpush1.bf16.msra.mxu0 0
      %2911 = vmatprep.subr.bf16.mxu0 0
      %2912 = vmatpush1.bf16.msra.mxu0 0
      %2913 = vmatprep.subr.bf16.mxu0 0
      %2914 = vmatpush1.bf16.msra.mxu0 0
      %2915 = vmatprep.subr.bf16.mxu0 0
      %2916 = vmatpush1.bf16.msra.mxu0 0
      %2917 = vmatprep.mubr.bf16.mxu0 0
      %2918 = vmatmul.mubr.bf16.gmra.mrb[0].mxu0 %v2862
      %v2919 = vpop.f32.mrb[0].mxu0
      %v2920 = vadd.f32 0.0, %v2919
      %v2921 = vpop.f32.mrb[0].mxu0
      %v2922 = vadd.f32 0.0, %v2921
      %v2923 = vpop.f32.mrb[0].mxu0
      %v2924 = vpop.f32.mrb[0].mxu0
      %2925 = vdwg.mxu0
      %2926 = vmatprep.subr.bf16.mxu0 %v2874
      %2927 = vmatpush1.bf16.msra.mxu0 %v2871
      %2928 = vmatprep.subr.bf16.mxu0 0
      %2929 = vmatpush1.bf16.msra.mxu0 0
      %2930 = vmatprep.subr.bf16.mxu0 0
      %2931 = vmatpush1.bf16.msra.mxu0 0
      %2932 = vmatprep.subr.bf16.mxu0 0
      %2933 = vmatpush1.bf16.msra.mxu0 0
      %2934 = vmatprep.subr.bf16.mxu0 0
      %2935 = vmatpush1.bf16.msra.mxu0 0
      %2936 = vmatprep.subr.bf16.mxu0 0
      %2937 = vmatpush1.bf16.msra.mxu0 0
      %2938 = vmatprep.subr.bf16.mxu0 0
      %2939 = vmatpush1.bf16.msra.mxu0 0
      %2940 = vmatprep.subr.bf16.mxu0 0
      %2941 = vmatpush1.bf16.msra.mxu0 0
      %2942 = vmatprep.subr.bf16.mxu0 0
      %2943 = vmatpush1.bf16.msra.mxu0 0
      %2944 = vmatprep.subr.bf16.mxu0 0
      %2945 = vmatpush1.bf16.msra.mxu0 0
      %2946 = vmatprep.subr.bf16.mxu0 0
      %2947 = vmatpush1.bf16.msra.mxu0 0
      %2948 = vmatprep.subr.bf16.mxu0 0
      %2949 = vmatpush1.bf16.msra.mxu0 0
      %2950 = vmatprep.subr.bf16.mxu0 0
      %2951 = vmatpush1.bf16.msra.mxu0 0
      %2952 = vmatprep.subr.bf16.mxu0 0
      %2953 = vmatpush1.bf16.msra.mxu0 0
      %2954 = vmatprep.subr.bf16.mxu0 0
      %2955 = vmatpush1.bf16.msra.mxu0 0
      %2956 = vmatprep.subr.bf16.mxu0 0
      %2957 = vmatpush1.bf16.msra.mxu0 0
      %2958 = vmatprep.mubr.bf16.mxu0 0
      %2959 = vmatmul.mubr.bf16.gmra.mrb[0].mxu0 %v2862
      %v2960 = vpop.f32.mrb[0].mxu0
      %v2961 = vadd.f32 0.0, %v2960
      %v2962 = vpop.f32.mrb[0].mxu0
      %v2963 = vadd.f32 0.0, %v2962
      %v2964 = vpop.f32.mrb[0].mxu0
      %v2965 = vpop.f32.mrb[0].mxu0
      %2966 = vdwg.mxu0
      %2967 = vmatprep.subr.bf16.mxu0 %v2880
      %2968 = vmatpush1.bf16.msra.mxu0 %v2877
      %2969 = vmatprep.subr.bf16.mxu0 0
      %2970 = vmatpush1.bf16.msra.mxu0 0
      %2971 = vmatprep.subr.bf16.mxu0 0
      %2972 = vmatpush1.bf16.msra.mxu0 0
      %2973 = vmatprep.subr.bf16.mxu0 0
      %2974 = vmatpush1.bf16.msra.mxu0 0
      %2975 = vmatprep.subr.bf16.mxu0 0
      %2976 = vmatpush1.bf16.msra.mxu0 0
      %2977 = vmatprep.subr.bf16.mxu0 0
      %2978 = vmatpush1.bf16.msra.mxu0 0
      %2979 = vmatprep.subr.bf16.mxu0 0
      %2980 = vmatpush1.bf16.msra.mxu0 0
      %2981 = vmatprep.subr.bf16.mxu0 0
      %2982 = vmatpush1.bf16.msra.mxu0 0
      %2983 = vmatprep.subr.bf16.mxu0 0
      %2984 = vmatpush1.bf16.msra.mxu0 0
      %2985 = vmatprep.subr.bf16.mxu0 0
      %2986 = vmatpush1.bf16.msra.mxu0 0
      %2987 = vmatprep.subr.bf16.mxu0 0
      %2988 = vmatpush1.bf16.msra.mxu0 0
      %2989 = vmatprep.subr.bf16.mxu0 0
      %2990 = vmatpush1.bf16.msra.mxu0 0
      %2991 = vmatprep.subr.bf16.mxu0 0
      %2992 = vmatpush1.bf16.msra.mxu0 0
      %2993 = vmatprep.subr.bf16.mxu0 0
      %2994 = vmatpush1.bf16.msra.mxu0 0
      %2995 = vmatprep.subr.bf16.mxu0 0
      %2996 = vmatpush1.bf16.msra.mxu0 0
      %2997 = vmatprep.subr.bf16.mxu0 0
      %2998 = vmatpush1.bf16.msra.mxu0 0
      %2999 = vmatprep.mubr.bf16.mxu0 0
      %3000 = vmatmul.mubr.bf16.gmra.mrb[0].mxu0 %v2862
      %v3001 = vpop.f32.mrb[0].mxu0
      %v3002 = vadd.f32 0.0, %v3001
      %v3003 = vpop.f32.mrb[0].mxu0
      %v3004 = vadd.f32 0.0, %v3003
      %v3005 = vpop.f32.mrb[0].mxu0
      %v3006 = vpop.f32.mrb[0].mxu0
      %3007 = vdwg.mxu0
      %3008 = vmatprep.subr.bf16.mxu0 0
      %3009 = vmatpush1.bf16.msra.mxu0 %v2883
      %3010 = vmatprep.subr.bf16.mxu0 0
      %3011 = vmatpush1.bf16.msra.mxu0 0
      %3012 = vmatprep.subr.bf16.mxu0 0
      %3013 = vmatpush1.bf16.msra.mxu0 0
      %3014 = vmatprep.subr.bf16.mxu0 0
      %3015 = vmatpush1.bf16.msra.mxu0 0
      %3016 = vmatprep.subr.bf16.mxu0 0
      %3017 = vmatpush1.bf16.msra.mxu0 0
      %3018 = vmatprep.subr.bf16.mxu0 0
      %3019 = vmatpush1.bf16.msra.mxu0 0
      %3020 = vmatprep.subr.bf16.mxu0 0
      %3021 = vmatpush1.bf16.msra.mxu0 0
      %3022 = vmatprep.subr.bf16.mxu0 0
      %3023 = vmatpush1.bf16.msra.mxu0 0
      %3024 = vmatprep.subr.bf16.mxu0 0
      %3025 = vmatpush1.bf16.msra.mxu0 0
      %3026 = vmatprep.subr.bf16.mxu0 0
      %3027 = vmatpush1.bf16.msra.mxu0 0
      %3028 = vmatprep.subr.bf16.mxu0 0
      %3029 = vmatpush1.bf16.msra.mxu0 0
      %3030 = vmatprep.subr.bf16.mxu0 0
      %3031 = vmatpush1.bf16.msra.mxu0 0
      %3032 = vmatprep.subr.bf16.mxu0 0
      %3033 = vmatpush1.bf16.msra.mxu0 0
      %3034 = vmatprep.subr.bf16.mxu0 0
      %3035 = vmatpush1.bf16.msra.mxu0 0
      %3036 = vmatprep.subr.bf16.mxu0 0
      %3037 = vmatpush1.bf16.msra.mxu0 0
      %3038 = vmatprep.subr.bf16.mxu0 0
      %3039 = vmatpush1.bf16.msra.mxu0 0
      %3040 = vmatprep.mubr.bf16.mxu0 0
      %3041 = vmatmul.mubr.bf16.gmra.mrb[0].mxu0 %v2862
      %v3042 = vpop.f32.mrb[0].mxu0
      %v3043 = vadd.f32 0.0, %v3042
      %v3044 = vpop.f32.mrb[0].mxu0
      %v3045 = vpop.f32.mrb[0].mxu0
      %v3046 = vpop.f32.mrb[0].mxu0
      %3047 = vdwg.mxu0
      %v3048 = vadd.f32 %v2713, %v2920
      %v3049 = vadd.f32 %v2715, %v2922
      %v3050 = vadd.f32 %v2754, %v2961
      %v3051 = vadd.f32 %v2756, %v2963
      %v3052 = vadd.f32 %v2795, %v3002
      %v3053 = vadd.f32 %v2797, %v3004
      %v3054 = vadd.f32 %v2836, %v3043
      %3056 = vrot.lane.b32.xlu0 %v2421, 96
      %v3057 = vpop.permute.xlu0 %3056
      %3058 = vrot.lane.b32.xlu0 %v2422, 96
      %v3059 = vpop.permute.xlu0 %3058
      %3060 = vrot.lane.b32.xlu0 %v2423, 96
      %v3061 = vpop.permute.xlu0 %3060
      %3062 = vrot.lane.b32.xlu0 %v2424, 96
      %v3063 = vpop.permute.xlu0 %3062
      %3064 = vrot.lane.b32.xlu0 %v2425, 96
      %v3065 = vpop.permute.xlu0 %3064
      %3066 = vrot.lane.b32.xlu0 %v2426, 96
      %v3067 = vpop.permute.xlu0 %3066
      %3068 = vrot.lane.b32.xlu0 %v2427, 96
      %v3069 = vpop.permute.xlu0 %3068
      %3070 = vrot.lane.b32.xlu0 %v2428, 96
      %v3071 = vpop.permute.xlu0 %3070
      %v3072 = vsel %vm1077, %v3057, %v3059
      %v3073 = vsel %vm1077, %v3059, %v3061
      %v3074 = vsel %vm1077, %v3061, %v3063
      %v3075 = vsel %vm1077, %v3063, %v3065
      %v3076 = vsel %vm1077, %v3065, %v3067
      %v3077 = vsel %vm1077, %v3067, %v3069
      %v3078 = vsel %vm1077, %v3069, %v3071
      %v3080 = vsel %vm2465, %v2432, 0
      %v3083 = vsel %vm2469, %v3072, 0
      %v3086 = vsel %vm2469, %v3073, 0
      %v3089 = vsel %vm2469, %v3074, 0
      %v3092 = vsel %vm2469, %v3075, 0
      %v3095 = vsel %vm2469, %v3076, 0
      %v3098 = vsel %vm2469, %v3077, 0
      %v3101 = vsel %vm2469, %v3078, 0
      %3103 = vmatprep.subr.bf16.mxu0 %v3086
      %3104 = vmatpush1.bf16.msra.mxu0 %v3083
      %3105 = vmatprep.subr.bf16.mxu0 0
      %3106 = vmatpush1.bf16.msra.mxu0 0
      %3107 = vmatprep.subr.bf16.mxu0 0
      %3108 = vmatpush1.bf16.msra.mxu0 0
      %3109 = vmatprep.subr.bf16.mxu0 0
      %3110 = vmatpush1.bf16.msra.mxu0 0
      %3111 = vmatprep.subr.bf16.mxu0 0
      %3112 = vmatpush1.bf16.msra.mxu0 0
      %3113 = vmatprep.subr.bf16.mxu0 0
      %3114 = vmatpush1.bf16.msra.mxu0 0
      %3115 = vmatprep.subr.bf16.mxu0 0
      %3116 = vmatpush1.bf16.msra.mxu0 0
      %3117 = vmatprep.subr.bf16.mxu0 0
      %3118 = vmatpush1.bf16.msra.mxu0 0
      %3119 = vmatprep.subr.bf16.mxu0 0
      %3120 = vmatpush1.bf16.msra.mxu0 0
      %3121 = vmatprep.subr.bf16.mxu0 0
      %3122 = vmatpush1.bf16.msra.mxu0 0
      %3123 = vmatprep.subr.bf16.mxu0 0
      %3124 = vmatpush1.bf16.msra.mxu0 0
      %3125 = vmatprep.subr.bf16.mxu0 0
      %3126 = vmatpush1.bf16.msra.mxu0 0
      %3127 = vmatprep.subr.bf16.mxu0 0
      %3128 = vmatpush1.bf16.msra.mxu0 0
      %3129 = vmatprep.subr.bf16.mxu0 0
      %3130 = vmatpush1.bf16.msra.mxu0 0
      %3131 = vmatprep.subr.bf16.mxu0 0
      %3132 = vmatpush1.bf16.msra.mxu0 0
      %3133 = vmatprep.subr.bf16.mxu0 0
      %3134 = vmatpush1.bf16.msra.mxu0 0
      %3135 = vmatprep.mubr.bf16.mxu0 0
      %3136 = vmatmul.mubr.bf16.gmra.mrb[0].mxu0 %v3080
      %v3137 = vpop.f32.mrb[0].mxu0
      %v3138 = vadd.f32 0.0, %v3137
      %v3139 = vpop.f32.mrb[0].mxu0
      %v3140 = vadd.f32 0.0, %v3139
      %v3141 = vpop.f32.mrb[0].mxu0
      %v3142 = vpop.f32.mrb[0].mxu0
      %3143 = vdwg.mxu0
      %3144 = vmatprep.subr.bf16.mxu0 %v3092
      %3145 = vmatpush1.bf16.msra.mxu0 %v3089
      %3146 = vmatprep.subr.bf16.mxu0 0
      %3147 = vmatpush1.bf16.msra.mxu0 0
      %3148 = vmatprep.subr.bf16.mxu0 0
      %3149 = vmatpush1.bf16.msra.mxu0 0
      %3150 = vmatprep.subr.bf16.mxu0 0
      %3151 = vmatpush1.bf16.msra.mxu0 0
      %3152 = vmatprep.subr.bf16.mxu0 0
      %3153 = vmatpush1.bf16.msra.mxu0 0
      %3154 = vmatprep.subr.bf16.mxu0 0
      %3155 = vmatpush1.bf16.msra.mxu0 0
      %3156 = vmatprep.subr.bf16.mxu0 0
      %3157 = vmatpush1.bf16.msra.mxu0 0
      %3158 = vmatprep.subr.bf16.mxu0 0
      %3159 = vmatpush1.bf16.msra.mxu0 0
      %3160 = vmatprep.subr.bf16.mxu0 0
      %3161 = vmatpush1.bf16.msra.mxu0 0
      %3162 = vmatprep.subr.bf16.mxu0 0
      %3163 = vmatpush1.bf16.msra.mxu0 0
      %3164 = vmatprep.subr.bf16.mxu0 0
      %3165 = vmatpush1.bf16.msra.mxu0 0
      %3166 = vmatprep.subr.bf16.mxu0 0
      %3167 = vmatpush1.bf16.msra.mxu0 0
      %3168 = vmatprep.subr.bf16.mxu0 0
      %3169 = vmatpush1.bf16.msra.mxu0 0
      %3170 = vmatprep.subr.bf16.mxu0 0
      %3171 = vmatpush1.bf16.msra.mxu0 0
      %3172 = vmatprep.subr.bf16.mxu0 0
      %3173 = vmatpush1.bf16.msra.mxu0 0
      %3174 = vmatprep.subr.bf16.mxu0 0
      %3175 = vmatpush1.bf16.msra.mxu0 0
      %3176 = vmatprep.mubr.bf16.mxu0 0
      %3177 = vmatmul.mubr.bf16.gmra.mrb[0].mxu0 %v3080
      %v3178 = vpop.f32.mrb[0].mxu0
      %v3179 = vadd.f32 0.0, %v3178
      %v3180 = vpop.f32.mrb[0].mxu0
      %v3181 = vadd.f32 0.0, %v3180
      %v3182 = vpop.f32.mrb[0].mxu0
      %v3183 = vpop.f32.mrb[0].mxu0
      %3184 = vdwg.mxu0
      %3185 = vmatprep.subr.bf16.mxu0 %v3098
      %3186 = vmatpush1.bf16.msra.mxu0 %v3095
      %3187 = vmatprep.subr.bf16.mxu0 0
      %3188 = vmatpush1.bf16.msra.mxu0 0
      %3189 = vmatprep.subr.bf16.mxu0 0
      %3190 = vmatpush1.bf16.msra.mxu0 0
      %3191 = vmatprep.subr.bf16.mxu0 0
      %3192 = vmatpush1.bf16.msra.mxu0 0
      %3193 = vmatprep.subr.bf16.mxu0 0
      %3194 = vmatpush1.bf16.msra.mxu0 0
      %3195 = vmatprep.subr.bf16.mxu0 0
      %3196 = vmatpush1.bf16.msra.mxu0 0
      %3197 = vmatprep.subr.bf16.mxu0 0
      %3198 = vmatpush1.bf16.msra.mxu0 0
      %3199 = vmatprep.subr.bf16.mxu0 0
      %3200 = vmatpush1.bf16.msra.mxu0 0
      %3201 = vmatprep.subr.bf16.mxu0 0
      %3202 = vmatpush1.bf16.msra.mxu0 0
      %3203 = vmatprep.subr.bf16.mxu0 0
      %3204 = vmatpush1.bf16.msra.mxu0 0
      %3205 = vmatprep.subr.bf16.mxu0 0
      %3206 = vmatpush1.bf16.msra.mxu0 0
      %3207 = vmatprep.subr.bf16.mxu0 0
      %3208 = vmatpush1.bf16.msra.mxu0 0
      %3209 = vmatprep.subr.bf16.mxu0 0
      %3210 = vmatpush1.bf16.msra.mxu0 0
      %3211 = vmatprep.subr.bf16.mxu0 0
      %3212 = vmatpush1.bf16.msra.mxu0 0
      %3213 = vmatprep.subr.bf16.mxu0 0
      %3214 = vmatpush1.bf16.msra.mxu0 0
      %3215 = vmatprep.subr.bf16.mxu0 0
      %3216 = vmatpush1.bf16.msra.mxu0 0
      %3217 = vmatprep.mubr.bf16.mxu0 0
      %3218 = vmatmul.mubr.bf16.gmra.mrb[0].mxu0 %v3080
      %v3219 = vpop.f32.mrb[0].mxu0
      %v3220 = vadd.f32 0.0, %v3219
      %v3221 = vpop.f32.mrb[0].mxu0
      %v3222 = vadd.f32 0.0, %v3221
      %v3223 = vpop.f32.mrb[0].mxu0
      %v3224 = vpop.f32.mrb[0].mxu0
      %3225 = vdwg.mxu0
      %3226 = vmatprep.subr.bf16.mxu0 0
      %3227 = vmatpush1.bf16.msra.mxu0 %v3101
      %3228 = vmatprep.subr.bf16.mxu0 0
      %3229 = vmatpush1.bf16.msra.mxu0 0
      %3230 = vmatprep.subr.bf16.mxu0 0
      %3231 = vmatpush1.bf16.msra.mxu0 0
      %3232 = vmatprep.subr.bf16.mxu0 0
      %3233 = vmatpush1.bf16.msra.mxu0 0
      %3234 = vmatprep.subr.bf16.mxu0 0
      %3235 = vmatpush1.bf16.msra.mxu0 0
      %3236 = vmatprep.subr.bf16.mxu0 0
      %3237 = vmatpush1.bf16.msra.mxu0 0
      %3238 = vmatprep.subr.bf16.mxu0 0
      %3239 = vmatpush1.bf16.msra.mxu0 0
      %3240 = vmatprep.subr.bf16.mxu0 0
      %3241 = vmatpush1.bf16.msra.mxu0 0
      %3242 = vmatprep.subr.bf16.mxu0 0
      %3243 = vmatpush1.bf16.msra.mxu0 0
      %3244 = vmatprep.subr.bf16.mxu0 0
      %3245 = vmatpush1.bf16.msra.mxu0 0
      %3246 = vmatprep.subr.bf16.mxu0 0
      %3247 = vmatpush1.bf16.msra.mxu0 0
      %3248 = vmatprep.subr.bf16.mxu0 0
      %3249 = vmatpush1.bf16.msra.mxu0 0
      %3250 = vmatprep.subr.bf16.mxu0 0
      %3251 = vmatpush1.bf16.msra.mxu0 0
      %3252 = vmatprep.subr.bf16.mxu0 0
      %3253 = vmatpush1.bf16.msra.mxu0 0
      %3254 = vmatprep.subr.bf16.mxu0 0
      %3255 = vmatpush1.bf16.msra.mxu0 0
      %3256 = vmatprep.subr.bf16.mxu0 0
      %3257 = vmatpush1.bf16.msra.mxu0 0
      %3258 = vmatprep.mubr.bf16.mxu0 0
      %3259 = vmatmul.mubr.bf16.gmra.mrb[0].mxu0 %v3080
      %v3260 = vpop.f32.mrb[0].mxu0
      %v3261 = vadd.f32 0.0, %v3260
      %v3262 = vpop.f32.mrb[0].mxu0
      %v3263 = vpop.f32.mrb[0].mxu0
      %v3264 = vpop.f32.mrb[0].mxu0
      %3265 = vdwg.mxu0
      %v3266 = vadd.f32 %v3048, %v3138
      %v3267 = vadd.f32 %v3049, %v3140
      %v3268 = vadd.f32 %v3050, %v3179
      %v3269 = vadd.f32 %v3051, %v3181
      %v3270 = vadd.f32 %v3052, %v3220
      %v3271 = vadd.f32 %v3053, %v3222
      %v3272 = vadd.f32 %v3054, %v3261
      %3273 = vrot.lane.b32.xlu0 %v2421, 95
      %v3274 = vpop.permute.xlu0 %3273
      %3275 = vrot.lane.b32.xlu0 %v2422, 95
      %v3276 = vpop.permute.xlu0 %3275
      %3277 = vrot.lane.b32.xlu0 %v2423, 95
      %v3278 = vpop.permute.xlu0 %3277
      %3279 = vrot.lane.b32.xlu0 %v2424, 95
      %v3280 = vpop.permute.xlu0 %3279
      %3281 = vrot.lane.b32.xlu0 %v2425, 95
      %v3282 = vpop.permute.xlu0 %3281
      %3283 = vrot.lane.b32.xlu0 %v2426, 95
      %v3284 = vpop.permute.xlu0 %3283
      %3285 = vrot.lane.b32.xlu0 %v2427, 95
      %v3286 = vpop.permute.xlu0 %3285
      %3287 = vrot.lane.b32.xlu0 %v2428, 95
      %v3288 = vpop.permute.xlu0 %3287
      %v3289 = vsel %vm1300, %v3274, %v3276
      %v3290 = vsel %vm1300, %v3276, %v3278
      %v3291 = vsel %vm1300, %v3278, %v3280
      %v3292 = vsel %vm1300, %v3280, %v3282
      %v3293 = vsel %vm1300, %v3282, %v3284
      %v3294 = vsel %vm1300, %v3284, %v3286
      %v3295 = vsel %vm1300, %v3286, %v3288
      %v3297 = vsel %vm2465, %v2433, 0
      %v3300 = vsel %vm2469, %v3289, 0
      %v3303 = vsel %vm2469, %v3290, 0
      %v3306 = vsel %vm2469, %v3291, 0
      %v3309 = vsel %vm2469, %v3292, 0
      %v3312 = vsel %vm2469, %v3293, 0
      %v3315 = vsel %vm2469, %v3294, 0
      %v3318 = vsel %vm2469, %v3295, 0
      %3320 = vmatprep.subr.bf16.mxu0 %v3303
      %3321 = vmatpush1.bf16.msra.mxu0 %v3300
      %3322 = vmatprep.subr.bf16.mxu0 0
      %3323 = vmatpush1.bf16.msra.mxu0 0
      %3324 = vmatprep.subr.bf16.mxu0 0
      %3325 = vmatpush1.bf16.msra.mxu0 0
      %3326 = vmatprep.subr.bf16.mxu0 0
      %3327 = vmatpush1.bf16.msra.mxu0 0
      %3328 = vmatprep.subr.bf16.mxu0 0
      %3329 = vmatpush1.bf16.msra.mxu0 0
      %3330 = vmatprep.subr.bf16.mxu0 0
      %3331 = vmatpush1.bf16.msra.mxu0 0
      %3332 = vmatprep.subr.bf16.mxu0 0
      %3333 = vmatpush1.bf16.msra.mxu0 0
      %3334 = vmatprep.subr.bf16.mxu0 0
      %3335 = vmatpush1.bf16.msra.mxu0 0
      %3336 = vmatprep.subr.bf16.mxu0 0
      %3337 = vmatpush1.bf16.msra.mxu0 0
      %3338 = vmatprep.subr.bf16.mxu0 0
      %3339 = vmatpush1.bf16.msra.mxu0 0
      %3340 = vmatprep.subr.bf16.mxu0 0
      %3341 = vmatpush1.bf16.msra.mxu0 0
      %3342 = vmatprep.subr.bf16.mxu0 0
      %3343 = vmatpush1.bf16.msra.mxu0 0
      %3344 = vmatprep.subr.bf16.mxu0 0
      %3345 = vmatpush1.bf16.msra.mxu0 0
      %3346 = vmatprep.subr.bf16.mxu0 0
      %3347 = vmatpush1.bf16.msra.mxu0 0
      %3348 = vmatprep.subr.bf16.mxu0 0
      %3349 = vmatpush1.bf16.msra.mxu0 0
      %3350 = vmatprep.subr.bf16.mxu0 0
      %3351 = vmatpush1.bf16.msra.mxu0 0
      %3352 = vmatprep.mubr.bf16.mxu0 0
      %3353 = vmatmul.mubr.bf16.gmra.mrb[0].mxu0 %v3297
      %v3354 = vpop.f32.mrb[0].mxu0
      %v3355 = vadd.f32 0.0, %v3354
      %v3356 = vpop.f32.mrb[0].mxu0
      %v3357 = vadd.f32 0.0, %v3356
      %v3358 = vpop.f32.mrb[0].mxu0
      %v3359 = vpop.f32.mrb[0].mxu0
      %3360 = vdwg.mxu0
      %3361 = vmatprep.subr.bf16.mxu0 %v3309
      %3362 = vmatpush1.bf16.msra.mxu0 %v3306
      %3363 = vmatprep.subr.bf16.mxu0 0
      %3364 = vmatpush1.bf16.msra.mxu0 0
      %3365 = vmatprep.subr.bf16.mxu0 0
      %3366 = vmatpush1.bf16.msra.mxu0 0
      %3367 = vmatprep.subr.bf16.mxu0 0
      %3368 = vmatpush1.bf16.msra.mxu0 0
      %3369 = vmatprep.subr.bf16.mxu0 0
      %3370 = vmatpush1.bf16.msra.mxu0 0
      %3371 = vmatprep.subr.bf16.mxu0 0
      %3372 = vmatpush1.bf16.msra.mxu0 0
      %3373 = vmatprep.subr.bf16.mxu0 0
      %3374 = vmatpush1.bf16.msra.mxu0 0
      %3375 = vmatprep.subr.bf16.mxu0 0
      %3376 = vmatpush1.bf16.msra.mxu0 0
      %3377 = vmatprep.subr.bf16.mxu0 0
      %3378 = vmatpush1.bf16.msra.mxu0 0
      %3379 = vmatprep.subr.bf16.mxu0 0
      %3380 = vmatpush1.bf16.msra.mxu0 0
      %3381 = vmatprep.subr.bf16.mxu0 0
      %3382 = vmatpush1.bf16.msra.mxu0 0
      %3383 = vmatprep.subr.bf16.mxu0 0
      %3384 = vmatpush1.bf16.msra.mxu0 0
      %3385 = vmatprep.subr.bf16.mxu0 0
      %3386 = vmatpush1.bf16.msra.mxu0 0
      %3387 = vmatprep.subr.bf16.mxu0 0
      %3388 = vmatpush1.bf16.msra.mxu0 0
      %3389 = vmatprep.subr.bf16.mxu0 0
      %3390 = vmatpush1.bf16.msra.mxu0 0
      %3391 = vmatprep.subr.bf16.mxu0 0
      %3392 = vmatpush1.bf16.msra.mxu0 0
      %3393 = vmatprep.mubr.bf16.mxu0 0
      %3394 = vmatmul.mubr.bf16.gmra.mrb[0].mxu0 %v3297
      %v3395 = vpop.f32.mrb[0].mxu0
      %v3396 = vadd.f32 0.0, %v3395
      %v3397 = vpop.f32.mrb[0].mxu0
      %v3398 = vadd.f32 0.0, %v3397
      %v3399 = vpop.f32.mrb[0].mxu0
      %v3400 = vpop.f32.mrb[0].mxu0
      %3401 = vdwg.mxu0
      %3402 = vmatprep.subr.bf16.mxu0 %v3315
      %3403 = vmatpush1.bf16.msra.mxu0 %v3312
      %3404 = vmatprep.subr.bf16.mxu0 0
      %3405 = vmatpush1.bf16.msra.mxu0 0
      %3406 = vmatprep.subr.bf16.mxu0 0
      %3407 = vmatpush1.bf16.msra.mxu0 0
      %3408 = vmatprep.subr.bf16.mxu0 0
      %3409 = vmatpush1.bf16.msra.mxu0 0
      %3410 = vmatprep.subr.bf16.mxu0 0
      %3411 = vmatpush1.bf16.msra.mxu0 0
      %3412 = vmatprep.subr.bf16.mxu0 0
      %3413 = vmatpush1.bf16.msra.mxu0 0
      %3414 = vmatprep.subr.bf16.mxu0 0
      %3415 = vmatpush1.bf16.msra.mxu0 0
      %3416 = vmatprep.subr.bf16.mxu0 0
      %3417 = vmatpush1.bf16.msra.mxu0 0
      %3418 = vmatprep.subr.bf16.mxu0 0
      %3419 = vmatpush1.bf16.msra.mxu0 0
      %3420 = vmatprep.subr.bf16.mxu0 0
      %3421 = vmatpush1.bf16.msra.mxu0 0
      %3422 = vmatprep.subr.bf16.mxu0 0
      %3423 = vmatpush1.bf16.msra.mxu0 0
      %3424 = vmatprep.subr.bf16.mxu0 0
      %3425 = vmatpush1.bf16.msra.mxu0 0
      %3426 = vmatprep.subr.bf16.mxu0 0
      %3427 = vmatpush1.bf16.msra.mxu0 0
      %3428 = vmatprep.subr.bf16.mxu0 0
      %3429 = vmatpush1.bf16.msra.mxu0 0
      %3430 = vmatprep.subr.bf16.mxu0 0
      %3431 = vmatpush1.bf16.msra.mxu0 0
      %3432 = vmatprep.subr.bf16.mxu0 0
      %3433 = vmatpush1.bf16.msra.mxu0 0
      %3434 = vmatprep.mubr.bf16.mxu0 0
      %3435 = vmatmul.mubr.bf16.gmra.mrb[0].mxu0 %v3297
      %v3436 = vpop.f32.mrb[0].mxu0
      %v3437 = vadd.f32 0.0, %v3436
      %v3438 = vpop.f32.mrb[0].mxu0
      %v3439 = vadd.f32 0.0, %v3438
      %v3440 = vpop.f32.mrb[0].mxu0
      %v3441 = vpop.f32.mrb[0].mxu0
      %3442 = vdwg.mxu0
      %3443 = vmatprep.subr.bf16.mxu0 0
      %3444 = vmatpush1.bf16.msra.mxu0 %v3318
      %3445 = vmatprep.subr.bf16.mxu0 0
      %3446 = vmatpush1.bf16.msra.mxu0 0
      %3447 = vmatprep.subr.bf16.mxu0 0
      %3448 = vmatpush1.bf16.msra.mxu0 0
      %3449 = vmatprep.subr.bf16.mxu0 0
      %3450 = vmatpush1.bf16.msra.mxu0 0
      %3451 = vmatprep.subr.bf16.mxu0 0
      %3452 = vmatpush1.bf16.msra.mxu0 0
      %3453 = vmatprep.subr.bf16.mxu0 0
      %3454 = vmatpush1.bf16.msra.mxu0 0
      %3455 = vmatprep.subr.bf16.mxu0 0
      %3456 = vmatpush1.bf16.msra.mxu0 0
      %3457 = vmatprep.subr.bf16.mxu0 0
      %3458 = vmatpush1.bf16.msra.mxu0 0
      %3459 = vmatprep.subr.bf16.mxu0 0
      %3460 = vmatpush1.bf16.msra.mxu0 0
      %3461 = vmatprep.subr.bf16.mxu0 0
      %3462 = vmatpush1.bf16.msra.mxu0 0
      %3463 = vmatprep.subr.bf16.mxu0 0
      %3464 = vmatpush1.bf16.msra.mxu0 0
      %3465 = vmatprep.subr.bf16.mxu0 0
      %3466 = vmatpush1.bf16.msra.mxu0 0
      %3467 = vmatprep.subr.bf16.mxu0 0
      %3468 = vmatpush1.bf16.msra.mxu0 0
      %3469 = vmatprep.subr.bf16.mxu0 0
      %3470 = vmatpush1.bf16.msra.mxu0 0
      %3471 = vmatprep.subr.bf16.mxu0 0
      %3472 = vmatpush1.bf16.msra.mxu0 0
      %3473 = vmatprep.subr.bf16.mxu0 0
      %3474 = vmatpush1.bf16.msra.mxu0 0
      %3475 = vmatprep.mubr.bf16.mxu0 0
      %3476 = vmatmul.mubr.bf16.gmra.mrb[0].mxu0 %v3297
      %v3477 = vpop.f32.mrb[0].mxu0
      %v3478 = vadd.f32 0.0, %v3477
      %v3479 = vpop.f32.mrb[0].mxu0
      %v3480 = vpop.f32.mrb[0].mxu0
      %v3481 = vpop.f32.mrb[0].mxu0
      %3482 = vdwg.mxu0
      %v3483 = vadd.f32 %v3266, %v3355
      %v3484 = vadd.f32 %v3267, %v3357
      %v3485 = vadd.f32 %v3268, %v3396
      %v3486 = vadd.f32 %v3269, %v3398
      %v3487 = vadd.f32 %v3270, %v3437
      %v3488 = vadd.f32 %v3271, %v3439
      %v3489 = vadd.f32 %v3272, %v3478
      %3490 = vrot.lane.b32.xlu0 %v2421, 94
      %v3491 = vpop.permute.xlu0 %3490
      %3492 = vrot.lane.b32.xlu0 %v2422, 94
      %v3493 = vpop.permute.xlu0 %3492
      %3494 = vrot.lane.b32.xlu0 %v2423, 94
      %v3495 = vpop.permute.xlu0 %3494
      %3496 = vrot.lane.b32.xlu0 %v2424, 94
      %v3497 = vpop.permute.xlu0 %3496
      %3498 = vrot.lane.b32.xlu0 %v2425, 94
      %v3499 = vpop.permute.xlu0 %3498
      %3500 = vrot.lane.b32.xlu0 %v2426, 94
      %v3501 = vpop.permute.xlu0 %3500
      %3502 = vrot.lane.b32.xlu0 %v2427, 94
      %v3503 = vpop.permute.xlu0 %3502
      %3504 = vrot.lane.b32.xlu0 %v2428, 94
      %v3505 = vpop.permute.xlu0 %3504
      %v3506 = vsel %vm1523, %v3491, %v3493
      %v3507 = vsel %vm1523, %v3493, %v3495
      %v3508 = vsel %vm1523, %v3495, %v3497
      %v3509 = vsel %vm1523, %v3497, %v3499
      %v3510 = vsel %vm1523, %v3499, %v3501
      %v3511 = vsel %vm1523, %v3501, %v3503
      %v3512 = vsel %vm1523, %v3503, %v3505
      %v3514 = vsel %vm2465, %v2434, 0
      %v3517 = vsel %vm2469, %v3506, 0
      %v3520 = vsel %vm2469, %v3507, 0
      %v3523 = vsel %vm2469, %v3508, 0
      %v3526 = vsel %vm2469, %v3509, 0
      %v3529 = vsel %vm2469, %v3510, 0
      %v3532 = vsel %vm2469, %v3511, 0
      %v3535 = vsel %vm2469, %v3512, 0
      %3537 = vmatprep.subr.bf16.mxu0 %v3520
      %3538 = vmatpush1.bf16.msra.mxu0 %v3517
      %3539 = vmatprep.subr.bf16.mxu0 0
      %3540 = vmatpush1.bf16.msra.mxu0 0
      %3541 = vmatprep.subr.bf16.mxu0 0
      %3542 = vmatpush1.bf16.msra.mxu0 0
      %3543 = vmatprep.subr.bf16.mxu0 0
      %3544 = vmatpush1.bf16.msra.mxu0 0
      %3545 = vmatprep.subr.bf16.mxu0 0
      %3546 = vmatpush1.bf16.msra.mxu0 0
      %3547 = vmatprep.subr.bf16.mxu0 0
      %3548 = vmatpush1.bf16.msra.mxu0 0
      %3549 = vmatprep.subr.bf16.mxu0 0
      %3550 = vmatpush1.bf16.msra.mxu0 0
      %3551 = vmatprep.subr.bf16.mxu0 0
      %3552 = vmatpush1.bf16.msra.mxu0 0
      %3553 = vmatprep.subr.bf16.mxu0 0
      %3554 = vmatpush1.bf16.msra.mxu0 0
      %3555 = vmatprep.subr.bf16.mxu0 0
      %3556 = vmatpush1.bf16.msra.mxu0 0
      %3557 = vmatprep.subr.bf16.mxu0 0
      %3558 = vmatpush1.bf16.msra.mxu0 0
      %3559 = vmatprep.subr.bf16.mxu0 0
      %3560 = vmatpush1.bf16.msra.mxu0 0
      %3561 = vmatprep.subr.bf16.mxu0 0
      %3562 = vmatpush1.bf16.msra.mxu0 0
      %3563 = vmatprep.subr.bf16.mxu0 0
      %3564 = vmatpush1.bf16.msra.mxu0 0
      %3565 = vmatprep.subr.bf16.mxu0 0
      %3566 = vmatpush1.bf16.msra.mxu0 0
      %3567 = vmatprep.subr.bf16.mxu0 0
      %3568 = vmatpush1.bf16.msra.mxu0 0
      %3569 = vmatprep.mubr.bf16.mxu0 0
      %3570 = vmatmul.mubr.bf16.gmra.mrb[0].mxu0 %v3514
      %v3571 = vpop.f32.mrb[0].mxu0
      %v3572 = vadd.f32 0.0, %v3571
      %v3573 = vpop.f32.mrb[0].mxu0
      %v3574 = vadd.f32 0.0, %v3573
      %v3575 = vpop.f32.mrb[0].mxu0
      %v3576 = vpop.f32.mrb[0].mxu0
      %3577 = vdwg.mxu0
      %3578 = vmatprep.subr.bf16.mxu0 %v3526
      %3579 = vmatpush1.bf16.msra.mxu0 %v3523
      %3580 = vmatprep.subr.bf16.mxu0 0
      %3581 = vmatpush1.bf16.msra.mxu0 0
      %3582 = vmatprep.subr.bf16.mxu0 0
      %3583 = vmatpush1.bf16.msra.mxu0 0
      %3584 = vmatprep.subr.bf16.mxu0 0
      %3585 = vmatpush1.bf16.msra.mxu0 0
      %3586 = vmatprep.subr.bf16.mxu0 0
      %3587 = vmatpush1.bf16.msra.mxu0 0
      %3588 = vmatprep.subr.bf16.mxu0 0
      %3589 = vmatpush1.bf16.msra.mxu0 0
      %3590 = vmatprep.subr.bf16.mxu0 0
      %3591 = vmatpush1.bf16.msra.mxu0 0
      %3592 = vmatprep.subr.bf16.mxu0 0
      %3593 = vmatpush1.bf16.msra.mxu0 0
      %3594 = vmatprep.subr.bf16.mxu0 0
      %3595 = vmatpush1.bf16.msra.mxu0 0
      %3596 = vmatprep.subr.bf16.mxu0 0
      %3597 = vmatpush1.bf16.msra.mxu0 0
      %3598 = vmatprep.subr.bf16.mxu0 0
      %3599 = vmatpush1.bf16.msra.mxu0 0
      %3600 = vmatprep.subr.bf16.mxu0 0
      %3601 = vmatpush1.bf16.msra.mxu0 0
      %3602 = vmatprep.subr.bf16.mxu0 0
      %3603 = vmatpush1.bf16.msra.mxu0 0
      %3604 = vmatprep.subr.bf16.mxu0 0
      %3605 = vmatpush1.bf16.msra.mxu0 0
      %3606 = vmatprep.subr.bf16.mxu0 0
      %3607 = vmatpush1.bf16.msra.mxu0 0
      %3608 = vmatprep.subr.bf16.mxu0 0
      %3609 = vmatpush1.bf16.msra.mxu0 0
      %3610 = vmatprep.mubr.bf16.mxu0 0
      %3611 = vmatmul.mubr.bf16.gmra.mrb[0].mxu0 %v3514
      %v3612 = vpop.f32.mrb[0].mxu0
      %v3613 = vadd.f32 0.0, %v3612
      %v3614 = vpop.f32.mrb[0].mxu0
      %v3615 = vadd.f32 0.0, %v3614
      %v3616 = vpop.f32.mrb[0].mxu0
      %v3617 = vpop.f32.mrb[0].mxu0
      %3618 = vdwg.mxu0
      %3619 = vmatprep.subr.bf16.mxu0 %v3532
      %3620 = vmatpush1.bf16.msra.mxu0 %v3529
      %3621 = vmatprep.subr.bf16.mxu0 0
      %3622 = vmatpush1.bf16.msra.mxu0 0
      %3623 = vmatprep.subr.bf16.mxu0 0
      %3624 = vmatpush1.bf16.msra.mxu0 0
      %3625 = vmatprep.subr.bf16.mxu0 0
      %3626 = vmatpush1.bf16.msra.mxu0 0
      %3627 = vmatprep.subr.bf16.mxu0 0
      %3628 = vmatpush1.bf16.msra.mxu0 0
      %3629 = vmatprep.subr.bf16.mxu0 0
      %3630 = vmatpush1.bf16.msra.mxu0 0
      %3631 = vmatprep.subr.bf16.mxu0 0
      %3632 = vmatpush1.bf16.msra.mxu0 0
      %3633 = vmatprep.subr.bf16.mxu0 0
      %3634 = vmatpush1.bf16.msra.mxu0 0
      %3635 = vmatprep.subr.bf16.mxu0 0
      %3636 = vmatpush1.bf16.msra.mxu0 0
      %3637 = vmatprep.subr.bf16.mxu0 0
      %3638 = vmatpush1.bf16.msra.mxu0 0
      %3639 = vmatprep.subr.bf16.mxu0 0
      %3640 = vmatpush1.bf16.msra.mxu0 0
      %3641 = vmatprep.subr.bf16.mxu0 0
      %3642 = vmatpush1.bf16.msra.mxu0 0
      %3643 = vmatprep.subr.bf16.mxu0 0
      %3644 = vmatpush1.bf16.msra.mxu0 0
      %3645 = vmatprep.subr.bf16.mxu0 0
      %3646 = vmatpush1.bf16.msra.mxu0 0
      %3647 = vmatprep.subr.bf16.mxu0 0
      %3648 = vmatpush1.bf16.msra.mxu0 0
      %3649 = vmatprep.subr.bf16.mxu0 0
      %3650 = vmatpush1.bf16.msra.mxu0 0
      %3651 = vmatprep.mubr.bf16.mxu0 0
      %3652 = vmatmul.mubr.bf16.gmra.mrb[0].mxu0 %v3514
      %v3653 = vpop.f32.mrb[0].mxu0
      %v3654 = vadd.f32 0.0, %v3653
      %v3655 = vpop.f32.mrb[0].mxu0
      %v3656 = vadd.f32 0.0, %v3655
      %v3657 = vpop.f32.mrb[0].mxu0
      %v3658 = vpop.f32.mrb[0].mxu0
      %3659 = vdwg.mxu0
      %3660 = vmatprep.subr.bf16.mxu0 0
      %3661 = vmatpush1.bf16.msra.mxu0 %v3535
      %3662 = vmatprep.subr.bf16.mxu0 0
      %3663 = vmatpush1.bf16.msra.mxu0 0
      %3664 = vmatprep.subr.bf16.mxu0 0
      %3665 = vmatpush1.bf16.msra.mxu0 0
      %3666 = vmatprep.subr.bf16.mxu0 0
      %3667 = vmatpush1.bf16.msra.mxu0 0
      %3668 = vmatprep.subr.bf16.mxu0 0
      %3669 = vmatpush1.bf16.msra.mxu0 0
      %3670 = vmatprep.subr.bf16.mxu0 0
      %3671 = vmatpush1.bf16.msra.mxu0 0
      %3672 = vmatprep.subr.bf16.mxu0 0
      %3673 = vmatpush1.bf16.msra.mxu0 0
      %3674 = vmatprep.subr.bf16.mxu0 0
      %3675 = vmatpush1.bf16.msra.mxu0 0
      %3676 = vmatprep.subr.bf16.mxu0 0
      %3677 = vmatpush1.bf16.msra.mxu0 0
      %3678 = vmatprep.subr.bf16.mxu0 0
      %3679 = vmatpush1.bf16.msra.mxu0 0
      %3680 = vmatprep.subr.bf16.mxu0 0
      %3681 = vmatpush1.bf16.msra.mxu0 0
      %3682 = vmatprep.subr.bf16.mxu0 0
      %3683 = vmatpush1.bf16.msra.mxu0 0
      %3684 = vmatprep.subr.bf16.mxu0 0
      %3685 = vmatpush1.bf16.msra.mxu0 0
      %3686 = vmatprep.subr.bf16.mxu0 0
      %3687 = vmatpush1.bf16.msra.mxu0 0
      %3688 = vmatprep.subr.bf16.mxu0 0
      %3689 = vmatpush1.bf16.msra.mxu0 0
      %3690 = vmatprep.subr.bf16.mxu0 0
      %3691 = vmatpush1.bf16.msra.mxu0 0
      %3692 = vmatprep.mubr.bf16.mxu0 0
      %3693 = vmatmul.mubr.bf16.gmra.mrb[0].mxu0 %v3514
      %v3694 = vpop.f32.mrb[0].mxu0
      %v3695 = vadd.f32 0.0, %v3694
      %v3696 = vpop.f32.mrb[0].mxu0
      %v3697 = vpop.f32.mrb[0].mxu0
      %v3698 = vpop.f32.mrb[0].mxu0
      %3699 = vdwg.mxu0
      %v3700 = vadd.f32 %v3483, %v3572
      %v3701 = vadd.f32 %v3484, %v3574
      %v3702 = vadd.f32 %v3485, %v3613
      %v3703 = vadd.f32 %v3486, %v3615
      %v3704 = vadd.f32 %v3487, %v3654
      %v3705 = vadd.f32 %v3488, %v3656
      %v3706 = vadd.f32 %v3489, %v3695
      %3707 = vrot.lane.b32.xlu0 %v2421, 64
      %v3708 = vpop.permute.xlu0 %3707
      %3709 = vrot.lane.b32.xlu0 %v2422, 64
      %v3710 = vpop.permute.xlu0 %3709
      %3711 = vrot.lane.b32.xlu0 %v2423, 64
      %v3712 = vpop.permute.xlu0 %3711
      %3713 = vrot.lane.b32.xlu0 %v2424, 64
      %v3714 = vpop.permute.xlu0 %3713
      %3715 = vrot.lane.b32.xlu0 %v2425, 64
      %v3716 = vpop.permute.xlu0 %3715
      %3717 = vrot.lane.b32.xlu0 %v2426, 64
      %v3718 = vpop.permute.xlu0 %3717
      %3719 = vrot.lane.b32.xlu0 %v2427, 64
      %v3720 = vpop.permute.xlu0 %3719
      %3721 = vrot.lane.b32.xlu0 %v2428, 64
      %v3722 = vpop.permute.xlu0 %3721
      %v3723 = vsel %vm1746, %v3708, %v3710
      %v3724 = vsel %vm1746, %v3710, %v3712
      %v3725 = vsel %vm1746, %v3712, %v3714
      %v3726 = vsel %vm1746, %v3714, %v3716
      %v3727 = vsel %vm1746, %v3716, %v3718
      %v3728 = vsel %vm1746, %v3718, %v3720
      %v3729 = vsel %vm1746, %v3720, %v3722
      %v3731 = vsel %vm2465, %v2435, 0
      %v3734 = vsel %vm2469, %v3723, 0
      %v3737 = vsel %vm2469, %v3724, 0
      %v3740 = vsel %vm2469, %v3725, 0
      %v3743 = vsel %vm2469, %v3726, 0
      %v3746 = vsel %vm2469, %v3727, 0
      %v3749 = vsel %vm2469, %v3728, 0
      %v3752 = vsel %vm2469, %v3729, 0
      %3754 = vmatprep.subr.bf16.mxu0 %v3737
      %3755 = vmatpush1.bf16.msra.mxu0 %v3734
      %3756 = vmatprep.subr.bf16.mxu0 0
      %3757 = vmatpush1.bf16.msra.mxu0 0
      %3758 = vmatprep.subr.bf16.mxu0 0
      %3759 = vmatpush1.bf16.msra.mxu0 0
      %3760 = vmatprep.subr.bf16.mxu0 0
      %3761 = vmatpush1.bf16.msra.mxu0 0
      %3762 = vmatprep.subr.bf16.mxu0 0
      %3763 = vmatpush1.bf16.msra.mxu0 0
      %3764 = vmatprep.subr.bf16.mxu0 0
      %3765 = vmatpush1.bf16.msra.mxu0 0
      %3766 = vmatprep.subr.bf16.mxu0 0
      %3767 = vmatpush1.bf16.msra.mxu0 0
      %3768 = vmatprep.subr.bf16.mxu0 0
      %3769 = vmatpush1.bf16.msra.mxu0 0
      %3770 = vmatprep.subr.bf16.mxu0 0
      %3771 = vmatpush1.bf16.msra.mxu0 0
      %3772 = vmatprep.subr.bf16.mxu0 0
      %3773 = vmatpush1.bf16.msra.mxu0 0
      %3774 = vmatprep.subr.bf16.mxu0 0
      %3775 = vmatpush1.bf16.msra.mxu0 0
      %3776 = vmatprep.subr.bf16.mxu0 0
      %3777 = vmatpush1.bf16.msra.mxu0 0
      %3778 = vmatprep.subr.bf16.mxu0 0
      %3779 = vmatpush1.bf16.msra.mxu0 0
      %3780 = vmatprep.subr.bf16.mxu0 0
      %3781 = vmatpush1.bf16.msra.mxu0 0
      %3782 = vmatprep.subr.bf16.mxu0 0
      %3783 = vmatpush1.bf16.msra.mxu0 0
      %3784 = vmatprep.subr.bf16.mxu0 0
      %3785 = vmatpush1.bf16.msra.mxu0 0
      %3786 = vmatprep.mubr.bf16.mxu0 0
      %3787 = vmatmul.mubr.bf16.gmra.mrb[0].mxu0 %v3731
      %v3788 = vpop.f32.mrb[0].mxu0
      %v3789 = vadd.f32 0.0, %v3788
      %v3790 = vpop.f32.mrb[0].mxu0
      %v3791 = vadd.f32 0.0, %v3790
      %v3792 = vpop.f32.mrb[0].mxu0
      %v3793 = vpop.f32.mrb[0].mxu0
      %3794 = vdwg.mxu0
      %3795 = vmatprep.subr.bf16.mxu0 %v3743
      %3796 = vmatpush1.bf16.msra.mxu0 %v3740
      %3797 = vmatprep.subr.bf16.mxu0 0
      %3798 = vmatpush1.bf16.msra.mxu0 0
      %3799 = vmatprep.subr.bf16.mxu0 0
      %3800 = vmatpush1.bf16.msra.mxu0 0
      %3801 = vmatprep.subr.bf16.mxu0 0
      %3802 = vmatpush1.bf16.msra.mxu0 0
      %3803 = vmatprep.subr.bf16.mxu0 0
      %3804 = vmatpush1.bf16.msra.mxu0 0
      %3805 = vmatprep.subr.bf16.mxu0 0
      %3806 = vmatpush1.bf16.msra.mxu0 0
      %3807 = vmatprep.subr.bf16.mxu0 0
      %3808 = vmatpush1.bf16.msra.mxu0 0
      %3809 = vmatprep.subr.bf16.mxu0 0
      %3810 = vmatpush1.bf16.msra.mxu0 0
      %3811 = vmatprep.subr.bf16.mxu0 0
      %3812 = vmatpush1.bf16.msra.mxu0 0
      %3813 = vmatprep.subr.bf16.mxu0 0
      %3814 = vmatpush1.bf16.msra.mxu0 0
      %3815 = vmatprep.subr.bf16.mxu0 0
      %3816 = vmatpush1.bf16.msra.mxu0 0
      %3817 = vmatprep.subr.bf16.mxu0 0
      %3818 = vmatpush1.bf16.msra.mxu0 0
      %3819 = vmatprep.subr.bf16.mxu0 0
      %3820 = vmatpush1.bf16.msra.mxu0 0
      %3821 = vmatprep.subr.bf16.mxu0 0
      %3822 = vmatpush1.bf16.msra.mxu0 0
      %3823 = vmatprep.subr.bf16.mxu0 0
      %3824 = vmatpush1.bf16.msra.mxu0 0
      %3825 = vmatprep.subr.bf16.mxu0 0
      %3826 = vmatpush1.bf16.msra.mxu0 0
      %3827 = vmatprep.mubr.bf16.mxu0 0
      %3828 = vmatmul.mubr.bf16.gmra.mrb[0].mxu0 %v3731
      %v3829 = vpop.f32.mrb[0].mxu0
      %v3830 = vadd.f32 0.0, %v3829
      %v3831 = vpop.f32.mrb[0].mxu0
      %v3832 = vadd.f32 0.0, %v3831
      %v3833 = vpop.f32.mrb[0].mxu0
      %v3834 = vpop.f32.mrb[0].mxu0
      %3835 = vdwg.mxu0
      %3836 = vmatprep.subr.bf16.mxu0 %v3749
      %3837 = vmatpush1.bf16.msra.mxu0 %v3746
      %3838 = vmatprep.subr.bf16.mxu0 0
      %3839 = vmatpush1.bf16.msra.mxu0 0
      %3840 = vmatprep.subr.bf16.mxu0 0
      %3841 = vmatpush1.bf16.msra.mxu0 0
      %3842 = vmatprep.subr.bf16.mxu0 0
      %3843 = vmatpush1.bf16.msra.mxu0 0
      %3844 = vmatprep.subr.bf16.mxu0 0
      %3845 = vmatpush1.bf16.msra.mxu0 0
      %3846 = vmatprep.subr.bf16.mxu0 0
      %3847 = vmatpush1.bf16.msra.mxu0 0
      %3848 = vmatprep.subr.bf16.mxu0 0
      %3849 = vmatpush1.bf16.msra.mxu0 0
      %3850 = vmatprep.subr.bf16.mxu0 0
      %3851 = vmatpush1.bf16.msra.mxu0 0
      %3852 = vmatprep.subr.bf16.mxu0 0
      %3853 = vmatpush1.bf16.msra.mxu0 0
      %3854 = vmatprep.subr.bf16.mxu0 0
      %3855 = vmatpush1.bf16.msra.mxu0 0
      %3856 = vmatprep.subr.bf16.mxu0 0
      %3857 = vmatpush1.bf16.msra.mxu0 0
      %3858 = vmatprep.subr.bf16.mxu0 0
      %3859 = vmatpush1.bf16.msra.mxu0 0
      %3860 = vmatprep.subr.bf16.mxu0 0
      %3861 = vmatpush1.bf16.msra.mxu0 0
      %3862 = vmatprep.subr.bf16.mxu0 0
      %3863 = vmatpush1.bf16.msra.mxu0 0
      %3864 = vmatprep.subr.bf16.mxu0 0
      %3865 = vmatpush1.bf16.msra.mxu0 0
      %3866 = vmatprep.subr.bf16.mxu0 0
      %3867 = vmatpush1.bf16.msra.mxu0 0
      %3868 = vmatprep.mubr.bf16.mxu0 0
      %3869 = vmatmul.mubr.bf16.gmra.mrb[0].mxu0 %v3731
      %v3870 = vpop.f32.mrb[0].mxu0
      %v3871 = vadd.f32 0.0, %v3870
      %v3872 = vpop.f32.mrb[0].mxu0
      %v3873 = vadd.f32 0.0, %v3872
      %v3874 = vpop.f32.mrb[0].mxu0
      %v3875 = vpop.f32.mrb[0].mxu0
      %3876 = vdwg.mxu0
      %3877 = vmatprep.subr.bf16.mxu0 0
      %3878 = vmatpush1.bf16.msra.mxu0 %v3752
      %3879 = vmatprep.subr.bf16.mxu0 0
      %3880 = vmatpush1.bf16.msra.mxu0 0
      %3881 = vmatprep.subr.bf16.mxu0 0
      %3882 = vmatpush1.bf16.msra.mxu0 0
      %3883 = vmatprep.subr.bf16.mxu0 0
      %3884 = vmatpush1.bf16.msra.mxu0 0
      %3885 = vmatprep.subr.bf16.mxu0 0
      %3886 = vmatpush1.bf16.msra.mxu0 0
      %3887 = vmatprep.subr.bf16.mxu0 0
      %3888 = vmatpush1.bf16.msra.mxu0 0
      %3889 = vmatprep.subr.bf16.mxu0 0
      %3890 = vmatpush1.bf16.msra.mxu0 0
      %3891 = vmatprep.subr.bf16.mxu0 0
      %3892 = vmatpush1.bf16.msra.mxu0 0
      %3893 = vmatprep.subr.bf16.mxu0 0
      %3894 = vmatpush1.bf16.msra.mxu0 0
      %3895 = vmatprep.subr.bf16.mxu0 0
      %3896 = vmatpush1.bf16.msra.mxu0 0
      %3897 = vmatprep.subr.bf16.mxu0 0
      %3898 = vmatpush1.bf16.msra.mxu0 0
      %3899 = vmatprep.subr.bf16.mxu0 0
      %3900 = vmatpush1.bf16.msra.mxu0 0
      %3901 = vmatprep.subr.bf16.mxu0 0
      %3902 = vmatpush1.bf16.msra.mxu0 0
      %3903 = vmatprep.subr.bf16.mxu0 0
      %3904 = vmatpush1.bf16.msra.mxu0 0
      %3905 = vmatprep.subr.bf16.mxu0 0
      %3906 = vmatpush1.bf16.msra.mxu0 0
      %3907 = vmatprep.subr.bf16.mxu0 0
      %3908 = vmatpush1.bf16.msra.mxu0 0
      %3909 = vmatprep.mubr.bf16.mxu0 0
      %3910 = vmatmul.mubr.bf16.gmra.mrb[0].mxu0 %v3731
      %v3911 = vpop.f32.mrb[0].mxu0
      %v3912 = vadd.f32 0.0, %v3911
      %v3913 = vpop.f32.mrb[0].mxu0
      %v3914 = vpop.f32.mrb[0].mxu0
      %v3915 = vpop.f32.mrb[0].mxu0
      %3916 = vdwg.mxu0
      %v3917 = vadd.f32 %v3700, %v3789
      %v3918 = vadd.f32 %v3701, %v3791
      %v3919 = vadd.f32 %v3702, %v3830
      %v3920 = vadd.f32 %v3703, %v3832
      %v3921 = vadd.f32 %v3704, %v3871
      %v3922 = vadd.f32 %v3705, %v3873
      %v3923 = vadd.f32 %v3706, %v3912
      %3924 = vrot.lane.b32.xlu0 %v2421, 63
      %v3925 = vpop.permute.xlu0 %3924
      %3926 = vrot.lane.b32.xlu0 %v2422, 63
      %v3927 = vpop.permute.xlu0 %3926
      %3928 = vrot.lane.b32.xlu0 %v2423, 63
      %v3929 = vpop.permute.xlu0 %3928
      %3930 = vrot.lane.b32.xlu0 %v2424, 63
      %v3931 = vpop.permute.xlu0 %3930
      %3932 = vrot.lane.b32.xlu0 %v2425, 63
      %v3933 = vpop.permute.xlu0 %3932
      %3934 = vrot.lane.b32.xlu0 %v2426, 63
      %v3935 = vpop.permute.xlu0 %3934
      %3936 = vrot.lane.b32.xlu0 %v2427, 63
      %v3937 = vpop.permute.xlu0 %3936
      %3938 = vrot.lane.b32.xlu0 %v2428, 63
      %v3939 = vpop.permute.xlu0 %3938
      %v3940 = vsel %vm1969, %v3925, %v3927
      %v3941 = vsel %vm1969, %v3927, %v3929
      %v3942 = vsel %vm1969, %v3929, %v3931
      %v3943 = vsel %vm1969, %v3931, %v3933
      %v3944 = vsel %vm1969, %v3933, %v3935
      %v3945 = vsel %vm1969, %v3935, %v3937
      %v3946 = vsel %vm1969, %v3937, %v3939
      %v3948 = vsel %vm2465, %v2436, 0
      %v3951 = vsel %vm2469, %v3940, 0
      %v3954 = vsel %vm2469, %v3941, 0
      %v3957 = vsel %vm2469, %v3942, 0
      %v3960 = vsel %vm2469, %v3943, 0
      %v3963 = vsel %vm2469, %v3944, 0
      %v3966 = vsel %vm2469, %v3945, 0
      %v3969 = vsel %vm2469, %v3946, 0
      %3971 = vmatprep.subr.bf16.mxu0 %v3954
      %3972 = vmatpush1.bf16.msra.mxu0 %v3951
      %3973 = vmatprep.subr.bf16.mxu0 0
      %3974 = vmatpush1.bf16.msra.mxu0 0
      %3975 = vmatprep.subr.bf16.mxu0 0
      %3976 = vmatpush1.bf16.msra.mxu0 0
      %3977 = vmatprep.subr.bf16.mxu0 0
      %3978 = vmatpush1.bf16.msra.mxu0 0
      %3979 = vmatprep.subr.bf16.mxu0 0
      %3980 = vmatpush1.bf16.msra.mxu0 0
      %3981 = vmatprep.subr.bf16.mxu0 0
      %3982 = vmatpush1.bf16.msra.mxu0 0
      %3983 = vmatprep.subr.bf16.mxu0 0
      %3984 = vmatpush1.bf16.msra.mxu0 0
      %3985 = vmatprep.subr.bf16.mxu0 0
      %3986 = vmatpush1.bf16.msra.mxu0 0
      %3987 = vmatprep.subr.bf16.mxu0 0
      %3988 = vmatpush1.bf16.msra.mxu0 0
      %3989 = vmatprep.subr.bf16.mxu0 0
      %3990 = vmatpush1.bf16.msra.mxu0 0
      %3991 = vmatprep.subr.bf16.mxu0 0
      %3992 = vmatpush1.bf16.msra.mxu0 0
      %3993 = vmatprep.subr.bf16.mxu0 0
      %3994 = vmatpush1.bf16.msra.mxu0 0
      %3995 = vmatprep.subr.bf16.mxu0 0
      %3996 = vmatpush1.bf16.msra.mxu0 0
      %3997 = vmatprep.subr.bf16.mxu0 0
      %3998 = vmatpush1.bf16.msra.mxu0 0
      %3999 = vmatprep.subr.bf16.mxu0 0
      %4000 = vmatpush1.bf16.msra.mxu0 0
      %4001 = vmatprep.subr.bf16.mxu0 0
      %4002 = vmatpush1.bf16.msra.mxu0 0
      %4003 = vmatprep.mubr.bf16.mxu0 0
      %4004 = vmatmul.mubr.bf16.gmra.mrb[0].mxu0 %v3948
      %v4005 = vpop.f32.mrb[0].mxu0
      %v4006 = vadd.f32 0.0, %v4005
      %v4007 = vpop.f32.mrb[0].mxu0
      %v4008 = vadd.f32 0.0, %v4007
      %v4009 = vpop.f32.mrb[0].mxu0
      %v4010 = vpop.f32.mrb[0].mxu0
      %4011 = vdwg.mxu0
      %4012 = vmatprep.subr.bf16.mxu0 %v3960
      %4013 = vmatpush1.bf16.msra.mxu0 %v3957
      %4014 = vmatprep.subr.bf16.mxu0 0
      %4015 = vmatpush1.bf16.msra.mxu0 0
      %4016 = vmatprep.subr.bf16.mxu0 0
      %4017 = vmatpush1.bf16.msra.mxu0 0
      %4018 = vmatprep.subr.bf16.mxu0 0
      %4019 = vmatpush1.bf16.msra.mxu0 0
      %4020 = vmatprep.subr.bf16.mxu0 0
      %4021 = vmatpush1.bf16.msra.mxu0 0
      %4022 = vmatprep.subr.bf16.mxu0 0
      %4023 = vmatpush1.bf16.msra.mxu0 0
      %4024 = vmatprep.subr.bf16.mxu0 0
      %4025 = vmatpush1.bf16.msra.mxu0 0
      %4026 = vmatprep.subr.bf16.mxu0 0
      %4027 = vmatpush1.bf16.msra.mxu0 0
      %4028 = vmatprep.subr.bf16.mxu0 0
      %4029 = vmatpush1.bf16.msra.mxu0 0
      %4030 = vmatprep.subr.bf16.mxu0 0
      %4031 = vmatpush1.bf16.msra.mxu0 0
      %4032 = vmatprep.subr.bf16.mxu0 0
      %4033 = vmatpush1.bf16.msra.mxu0 0
      %4034 = vmatprep.subr.bf16.mxu0 0
      %4035 = vmatpush1.bf16.msra.mxu0 0
      %4036 = vmatprep.subr.bf16.mxu0 0
      %4037 = vmatpush1.bf16.msra.mxu0 0
      %4038 = vmatprep.subr.bf16.mxu0 0
      %4039 = vmatpush1.bf16.msra.mxu0 0
      %4040 = vmatprep.subr.bf16.mxu0 0
      %4041 = vmatpush1.bf16.msra.mxu0 0
      %4042 = vmatprep.subr.bf16.mxu0 0
      %4043 = vmatpush1.bf16.msra.mxu0 0
      %4044 = vmatprep.mubr.bf16.mxu0 0
      %4045 = vmatmul.mubr.bf16.gmra.mrb[0].mxu0 %v3948
      %v4046 = vpop.f32.mrb[0].mxu0
      %v4047 = vadd.f32 0.0, %v4046
      %v4048 = vpop.f32.mrb[0].mxu0
      %v4049 = vadd.f32 0.0, %v4048
      %v4050 = vpop.f32.mrb[0].mxu0
      %v4051 = vpop.f32.mrb[0].mxu0
      %4052 = vdwg.mxu0
      %4053 = vmatprep.subr.bf16.mxu0 %v3966
      %4054 = vmatpush1.bf16.msra.mxu0 %v3963
      %4055 = vmatprep.subr.bf16.mxu0 0
      %4056 = vmatpush1.bf16.msra.mxu0 0
      %4057 = vmatprep.subr.bf16.mxu0 0
      %4058 = vmatpush1.bf16.msra.mxu0 0
      %4059 = vmatprep.subr.bf16.mxu0 0
      %4060 = vmatpush1.bf16.msra.mxu0 0
      %4061 = vmatprep.subr.bf16.mxu0 0
      %4062 = vmatpush1.bf16.msra.mxu0 0
      %4063 = vmatprep.subr.bf16.mxu0 0
      %4064 = vmatpush1.bf16.msra.mxu0 0
      %4065 = vmatprep.subr.bf16.mxu0 0
      %4066 = vmatpush1.bf16.msra.mxu0 0
      %4067 = vmatprep.subr.bf16.mxu0 0
      %4068 = vmatpush1.bf16.msra.mxu0 0
      %4069 = vmatprep.subr.bf16.mxu0 0
      %4070 = vmatpush1.bf16.msra.mxu0 0
      %4071 = vmatprep.subr.bf16.mxu0 0
      %4072 = vmatpush1.bf16.msra.mxu0 0
      %4073 = vmatprep.subr.bf16.mxu0 0
      %4074 = vmatpush1.bf16.msra.mxu0 0
      %4075 = vmatprep.subr.bf16.mxu0 0
      %4076 = vmatpush1.bf16.msra.mxu0 0
      %4077 = vmatprep.subr.bf16.mxu0 0
      %4078 = vmatpush1.bf16.msra.mxu0 0
      %4079 = vmatprep.subr.bf16.mxu0 0
      %4080 = vmatpush1.bf16.msra.mxu0 0
      %4081 = vmatprep.subr.bf16.mxu0 0
      %4082 = vmatpush1.bf16.msra.mxu0 0
      %4083 = vmatprep.subr.bf16.mxu0 0
      %4084 = vmatpush1.bf16.msra.mxu0 0
      %4085 = vmatprep.mubr.bf16.mxu0 0
      %4086 = vmatmul.mubr.bf16.gmra.mrb[0].mxu0 %v3948
      %v4087 = vpop.f32.mrb[0].mxu0
      %v4088 = vadd.f32 0.0, %v4087
      %v4089 = vpop.f32.mrb[0].mxu0
      %v4090 = vadd.f32 0.0, %v4089
      %v4091 = vpop.f32.mrb[0].mxu0
      %v4092 = vpop.f32.mrb[0].mxu0
      %4093 = vdwg.mxu0
      %4094 = vmatprep.subr.bf16.mxu0 0
      %4095 = vmatpush1.bf16.msra.mxu0 %v3969
      %4096 = vmatprep.subr.bf16.mxu0 0
      %4097 = vmatpush1.bf16.msra.mxu0 0
      %4098 = vmatprep.subr.bf16.mxu0 0
      %4099 = vmatpush1.bf16.msra.mxu0 0
      %4100 = vmatprep.subr.bf16.mxu0 0
      %4101 = vmatpush1.bf16.msra.mxu0 0
      %4102 = vmatprep.subr.bf16.mxu0 0
      %4103 = vmatpush1.bf16.msra.mxu0 0
      %4104 = vmatprep.subr.bf16.mxu0 0
      %4105 = vmatpush1.bf16.msra.mxu0 0
      %4106 = vmatprep.subr.bf16.mxu0 0
      %4107 = vmatpush1.bf16.msra.mxu0 0
      %4108 = vmatprep.subr.bf16.mxu0 0
      %4109 = vmatpush1.bf16.msra.mxu0 0
      %4110 = vmatprep.subr.bf16.mxu0 0
      %4111 = vmatpush1.bf16.msra.mxu0 0
      %4112 = vmatprep.subr.bf16.mxu0 0
      %4113 = vmatpush1.bf16.msra.mxu0 0
      %4114 = vmatprep.subr.bf16.mxu0 0
      %4115 = vmatpush1.bf16.msra.mxu0 0
      %4116 = vmatprep.subr.bf16.mxu0 0
      %4117 = vmatpush1.bf16.msra.mxu0 0
      %4118 = vmatprep.subr.bf16.mxu0 0
      %4119 = vmatpush1.bf16.msra.mxu0 0
      %4120 = vmatprep.subr.bf16.mxu0 0
      %4121 = vmatpush1.bf16.msra.mxu0 0
      %4122 = vmatprep.subr.bf16.mxu0 0
      %4123 = vmatpush1.bf16.msra.mxu0 0
      %4124 = vmatprep.subr.bf16.mxu0 0
      %4125 = vmatpush1.bf16.msra.mxu0 0
      %4126 = vmatprep.mubr.bf16.mxu0 0
      %4127 = vmatmul.mubr.bf16.gmra.mrb[0].mxu0 %v3948
      %v4128 = vpop.f32.mrb[0].mxu0
      %v4129 = vadd.f32 0.0, %v4128
      %v4130 = vpop.f32.mrb[0].mxu0
      %v4131 = vpop.f32.mrb[0].mxu0
      %v4132 = vpop.f32.mrb[0].mxu0
      %4133 = vdwg.mxu0
      %v4134 = vadd.f32 %v3917, %v4006
      %v4135 = vadd.f32 %v3918, %v4008
      %v4136 = vadd.f32 %v3919, %v4047
      %v4137 = vadd.f32 %v3920, %v4049
      %v4138 = vadd.f32 %v3921, %v4088
      %v4139 = vadd.f32 %v3922, %v4090
      %v4140 = vadd.f32 %v3923, %v4129
      %4141 = vrot.lane.b32.xlu0 %v2421, 62
      %v4142 = vpop.permute.xlu0 %4141
      %4143 = vrot.lane.b32.xlu0 %v2422, 62
      %v4144 = vpop.permute.xlu0 %4143
      %4145 = vrot.lane.b32.xlu0 %v2423, 62
      %v4146 = vpop.permute.xlu0 %4145
      %4147 = vrot.lane.b32.xlu0 %v2424, 62
      %v4148 = vpop.permute.xlu0 %4147
      %4149 = vrot.lane.b32.xlu0 %v2425, 62
      %v4150 = vpop.permute.xlu0 %4149
      %4151 = vrot.lane.b32.xlu0 %v2426, 62
      %v4152 = vpop.permute.xlu0 %4151
      %4153 = vrot.lane.b32.xlu0 %v2427, 62
      %v4154 = vpop.permute.xlu0 %4153
      %4155 = vrot.lane.b32.xlu0 %v2428, 62
      %v4156 = vpop.permute.xlu0 %4155
      %v4157 = vsel %vm2192, %v4142, %v4144
      %v4158 = vsel %vm2192, %v4144, %v4146
      %v4159 = vsel %vm2192, %v4146, %v4148
      %v4160 = vsel %vm2192, %v4148, %v4150
      %v4161 = vsel %vm2192, %v4150, %v4152
      %v4162 = vsel %vm2192, %v4152, %v4154
      %v4163 = vsel %vm2192, %v4154, %v4156
      %v4165 = vsel %vm2465, %v2437, 0
      %v4168 = vsel %vm2469, %v4157, 0
      %v4171 = vsel %vm2469, %v4158, 0
      %v4174 = vsel %vm2469, %v4159, 0
      %v4177 = vsel %vm2469, %v4160, 0
      %v4180 = vsel %vm2469, %v4161, 0
      %v4183 = vsel %vm2469, %v4162, 0
      %v4186 = vsel %vm2469, %v4163, 0
      %4188 = vmatprep.subr.bf16.mxu0 %v4171
      %4189 = vmatpush1.bf16.msra.mxu0 %v4168
      %4190 = vmatprep.subr.bf16.mxu0 0
      %4191 = vmatpush1.bf16.msra.mxu0 0
      %4192 = vmatprep.subr.bf16.mxu0 0
      %4193 = vmatpush1.bf16.msra.mxu0 0
      %4194 = vmatprep.subr.bf16.mxu0 0
      %4195 = vmatpush1.bf16.msra.mxu0 0
      %4196 = vmatprep.subr.bf16.mxu0 0
      %4197 = vmatpush1.bf16.msra.mxu0 0
      %4198 = vmatprep.subr.bf16.mxu0 0
      %4199 = vmatpush1.bf16.msra.mxu0 0
      %4200 = vmatprep.subr.bf16.mxu0 0
      %4201 = vmatpush1.bf16.msra.mxu0 0
      %4202 = vmatprep.subr.bf16.mxu0 0
      %4203 = vmatpush1.bf16.msra.mxu0 0
      %4204 = vmatprep.subr.bf16.mxu0 0
      %4205 = vmatpush1.bf16.msra.mxu0 0
      %4206 = vmatprep.subr.bf16.mxu0 0
      %4207 = vmatpush1.bf16.msra.mxu0 0
      %4208 = vmatprep.subr.bf16.mxu0 0
      %4209 = vmatpush1.bf16.msra.mxu0 0
      %4210 = vmatprep.subr.bf16.mxu0 0
      %4211 = vmatpush1.bf16.msra.mxu0 0
      %4212 = vmatprep.subr.bf16.mxu0 0
      %4213 = vmatpush1.bf16.msra.mxu0 0
      %4214 = vmatprep.subr.bf16.mxu0 0
      %4215 = vmatpush1.bf16.msra.mxu0 0
      %4216 = vmatprep.subr.bf16.mxu0 0
      %4217 = vmatpush1.bf16.msra.mxu0 0
      %4218 = vmatprep.subr.bf16.mxu0 0
      %4219 = vmatpush1.bf16.msra.mxu0 0
      %4220 = vmatprep.mubr.bf16.mxu0 0
      %4221 = vmatmul.mubr.bf16.gmra.mrb[0].mxu0 %v4165
      %v4222 = vpop.f32.mrb[0].mxu0
      %v4223 = vadd.f32 0.0, %v4222
      %v4224 = vpop.f32.mrb[0].mxu0
      %v4225 = vadd.f32 0.0, %v4224
      %v4226 = vpop.f32.mrb[0].mxu0
      %v4227 = vpop.f32.mrb[0].mxu0
      %4228 = vdwg.mxu0
      %4229 = vmatprep.subr.bf16.mxu0 %v4177
      %4230 = vmatpush1.bf16.msra.mxu0 %v4174
      %4231 = vmatprep.subr.bf16.mxu0 0
      %4232 = vmatpush1.bf16.msra.mxu0 0
      %4233 = vmatprep.subr.bf16.mxu0 0
      %4234 = vmatpush1.bf16.msra.mxu0 0
      %4235 = vmatprep.subr.bf16.mxu0 0
      %4236 = vmatpush1.bf16.msra.mxu0 0
      %4237 = vmatprep.subr.bf16.mxu0 0
      %4238 = vmatpush1.bf16.msra.mxu0 0
      %4239 = vmatprep.subr.bf16.mxu0 0
      %4240 = vmatpush1.bf16.msra.mxu0 0
      %4241 = vmatprep.subr.bf16.mxu0 0
      %4242 = vmatpush1.bf16.msra.mxu0 0
      %4243 = vmatprep.subr.bf16.mxu0 0
      %4244 = vmatpush1.bf16.msra.mxu0 0
      %4245 = vmatprep.subr.bf16.mxu0 0
      %4246 = vmatpush1.bf16.msra.mxu0 0
      %4247 = vmatprep.subr.bf16.mxu0 0
      %4248 = vmatpush1.bf16.msra.mxu0 0
      %4249 = vmatprep.subr.bf16.mxu0 0
      %4250 = vmatpush1.bf16.msra.mxu0 0
      %4251 = vmatprep.subr.bf16.mxu0 0
      %4252 = vmatpush1.bf16.msra.mxu0 0
      %4253 = vmatprep.subr.bf16.mxu0 0
      %4254 = vmatpush1.bf16.msra.mxu0 0
      %4255 = vmatprep.subr.bf16.mxu0 0
      %4256 = vmatpush1.bf16.msra.mxu0 0
      %4257 = vmatprep.subr.bf16.mxu0 0
      %4258 = vmatpush1.bf16.msra.mxu0 0
      %4259 = vmatprep.subr.bf16.mxu0 0
      %4260 = vmatpush1.bf16.msra.mxu0 0
      %4261 = vmatprep.mubr.bf16.mxu0 0
      %4262 = vmatmul.mubr.bf16.gmra.mrb[0].mxu0 %v4165
      %v4263 = vpop.f32.mrb[0].mxu0
      %v4264 = vadd.f32 0.0, %v4263
      %v4265 = vpop.f32.mrb[0].mxu0
      %v4266 = vadd.f32 0.0, %v4265
      %v4267 = vpop.f32.mrb[0].mxu0
      %v4268 = vpop.f32.mrb[0].mxu0
      %4269 = vdwg.mxu0
      %4270 = vmatprep.subr.bf16.mxu0 %v4183
      %4271 = vmatpush1.bf16.msra.mxu0 %v4180
      %4272 = vmatprep.subr.bf16.mxu0 0
      %4273 = vmatpush1.bf16.msra.mxu0 0
      %4274 = vmatprep.subr.bf16.mxu0 0
      %4275 = vmatpush1.bf16.msra.mxu0 0
      %4276 = vmatprep.subr.bf16.mxu0 0
      %4277 = vmatpush1.bf16.msra.mxu0 0
      %4278 = vmatprep.subr.bf16.mxu0 0
      %4279 = vmatpush1.bf16.msra.mxu0 0
      %4280 = vmatprep.subr.bf16.mxu0 0
      %4281 = vmatpush1.bf16.msra.mxu0 0
      %4282 = vmatprep.subr.bf16.mxu0 0
      %4283 = vmatpush1.bf16.msra.mxu0 0
      %4284 = vmatprep.subr.bf16.mxu0 0
      %4285 = vmatpush1.bf16.msra.mxu0 0
      %4286 = vmatprep.subr.bf16.mxu0 0
      %4287 = vmatpush1.bf16.msra.mxu0 0
      %4288 = vmatprep.subr.bf16.mxu0 0
      %4289 = vmatpush1.bf16.msra.mxu0 0
      %4290 = vmatprep.subr.bf16.mxu0 0
      %4291 = vmatpush1.bf16.msra.mxu0 0
      %4292 = vmatprep.subr.bf16.mxu0 0
      %4293 = vmatpush1.bf16.msra.mxu0 0
      %4294 = vmatprep.subr.bf16.mxu0 0
      %4295 = vmatpush1.bf16.msra.mxu0 0
      %4296 = vmatprep.subr.bf16.mxu0 0
      %4297 = vmatpush1.bf16.msra.mxu0 0
      %4298 = vmatprep.subr.bf16.mxu0 0
      %4299 = vmatpush1.bf16.msra.mxu0 0
      %4300 = vmatprep.subr.bf16.mxu0 0
      %4301 = vmatpush1.bf16.msra.mxu0 0
      %4302 = vmatprep.mubr.bf16.mxu0 0
      %4303 = vmatmul.mubr.bf16.gmra.mrb[0].mxu0 %v4165
      %v4304 = vpop.f32.mrb[0].mxu0
      %v4305 = vadd.f32 0.0, %v4304
      %v4306 = vpop.f32.mrb[0].mxu0
      %v4307 = vadd.f32 0.0, %v4306
      %v4308 = vpop.f32.mrb[0].mxu0
      %v4309 = vpop.f32.mrb[0].mxu0
      %4310 = vdwg.mxu0
      %4311 = vmatprep.subr.bf16.mxu0 0
      %4312 = vmatpush1.bf16.msra.mxu0 %v4186
      %4313 = vmatprep.subr.bf16.mxu0 0
      %4314 = vmatpush1.bf16.msra.mxu0 0
      %4315 = vmatprep.subr.bf16.mxu0 0
      %4316 = vmatpush1.bf16.msra.mxu0 0
      %4317 = vmatprep.subr.bf16.mxu0 0
      %4318 = vmatpush1.bf16.msra.mxu0 0
      %4319 = vmatprep.subr.bf16.mxu0 0
      %4320 = vmatpush1.bf16.msra.mxu0 0
      %4321 = vmatprep.subr.bf16.mxu0 0
      %4322 = vmatpush1.bf16.msra.mxu0 0
      %4323 = vmatprep.subr.bf16.mxu0 0
      %4324 = vmatpush1.bf16.msra.mxu0 0
      %4325 = vmatprep.subr.bf16.mxu0 0
      %4326 = vmatpush1.bf16.msra.mxu0 0
      %4327 = vmatprep.subr.bf16.mxu0 0
      %4328 = vmatpush1.bf16.msra.mxu0 0
      %4329 = vmatprep.subr.bf16.mxu0 0
      %4330 = vmatpush1.bf16.msra.mxu0 0
      %4331 = vmatprep.subr.bf16.mxu0 0
      %4332 = vmatpush1.bf16.msra.mxu0 0
      %4333 = vmatprep.subr.bf16.mxu0 0
      %4334 = vmatpush1.bf16.msra.mxu0 0
      %4335 = vmatprep.subr.bf16.mxu0 0
      %4336 = vmatpush1.bf16.msra.mxu0 0
      %4337 = vmatprep.subr.bf16.mxu0 0
      %4338 = vmatpush1.bf16.msra.mxu0 0
      %4339 = vmatprep.subr.bf16.mxu0 0
      %4340 = vmatpush1.bf16.msra.mxu0 0
      %4341 = vmatprep.subr.bf16.mxu0 0
      %4342 = vmatpush1.bf16.msra.mxu0 0
      %4343 = vmatprep.mubr.bf16.mxu0 0
      %4344 = vmatmul.mubr.bf16.gmra.mrb[0].mxu0 %v4165
      %v4345 = vpop.f32.mrb[0].mxu0
      %v4346 = vadd.f32 0.0, %v4345
      %v4347 = vpop.f32.mrb[0].mxu0
      %v4348 = vpop.f32.mrb[0].mxu0
      %v4349 = vpop.f32.mrb[0].mxu0
      %4350 = vdwg.mxu0
      %v4351 = vadd.f32 %v4134, %v4223
      %v4352 = vadd.f32 %v4135, %v4225
      %v4353 = vadd.f32 %v4136, %v4264
      %v4354 = vadd.f32 %v4137, %v4266
      %v4355 = vadd.f32 %v4138, %v4305
      %v4356 = vadd.f32 %v4139, %v4307
      %v4357 = vadd.f32 %v4140, %v4346
      %v4358 = vld [vmem:[%s4] sm:$0xff]
      %4360 = vset.pattern.permute.xlu0 0
      %4361 = vperm.xlu0 %4360, %v4358
      %v4362 = vpop.permute.xlu0 %4361
      %v4364 = vadd.f32 %v4351, %v4362
      %v4365 = vadd.f32 %v4352, %v4362
      %v4366 = vadd.f32 %v4353, %v4362
      %v4367 = vadd.f32 %v4354, %v4362
      %v4368 = vadd.f32 %v4355, %v4362
      %v4369 = vadd.f32 %v4356, %v4362
      %v4370 = vadd.f32 %v4357, %v4362
      %v4371 = vmax.f32 %v4364, 0.0
      %v4372 = vmax.f32 %v4365, 0.0
      %v4373 = vmax.f32 %v4366, 0.0
      %v4374 = vmax.f32 %v4367, 0.0
      %v4375 = vmax.f32 %v4368, 0.0
      %v4376 = vmax.f32 %v4369, 0.0
      %v4377 = vmax.f32 %v4370, 0.0
      %4385 = vrot.lane.b32.xlu0 %v4371, 127
      %v4386 = vpop.permute.xlu0 %4385
      %4387 = vrot.lane.b32.xlu0 %v4372, 127
      %v4388 = vpop.permute.xlu0 %4387
      %4389 = vrot.lane.b32.xlu0 %v4373, 127
      %v4390 = vpop.permute.xlu0 %4389
      %4391 = vrot.lane.b32.xlu0 %v4374, 127
      %v4392 = vpop.permute.xlu0 %4391
      %4393 = vrot.lane.b32.xlu0 %v4375, 127
      %v4394 = vpop.permute.xlu0 %4393
      %4395 = vrot.lane.b32.xlu0 %v4376, 127
      %v4396 = vpop.permute.xlu0 %4395
      %4397 = vrot.lane.b32.xlu0 %v4377, 127
      %v4398 = vpop.permute.xlu0 %4397
      %vm4399 = vcmask 1039360
      %v4400 = vsel %vm4399, %v4386, %v4388
      %v4401 = vsel %vm4399, %v4388, %v4390
      %v4402 = vsel %vm4399, %v4390, %v4392
      %v4403 = vsel %vm4399, %v4392, %v4394
      %v4404 = vsel %vm4399, %v4394, %v4396
      %v4405 = vsel %vm4399, %v4396, %v4398
      %v4413 = vmax.f32 %v4371, %v4400
      %v4414 = vmax.f32 %v4372, %v4401
      %v4415 = vmax.f32 %v4373, %v4402
      %v4416 = vmax.f32 %v4374, %v4403
      %v4417 = vmax.f32 %v4375, %v4404
      %v4418 = vmax.f32 %v4376, %v4405
      %v4419 = vmax.f32 %v4377, %v4398
      %4427 = vrot.lane.b32.xlu0 %v4413, 96
      %v4428 = vpop.permute.xlu0 %4427
      %4429 = vrot.lane.b32.xlu0 %v4414, 96
      %v4430 = vpop.permute.xlu0 %4429
      %4431 = vrot.lane.b32.xlu0 %v4415, 96
      %v4432 = vpop.permute.xlu0 %4431
      %4433 = vrot.lane.b32.xlu0 %v4416, 96
      %v4434 = vpop.permute.xlu0 %4433
      %4435 = vrot.lane.b32.xlu0 %v4417, 96
      %v4436 = vpop.permute.xlu0 %4435
      %4437 = vrot.lane.b32.xlu0 %v4418, 96
      %v4438 = vpop.permute.xlu0 %4437
      %4439 = vrot.lane.b32.xlu0 %v4419, 96
      %v4440 = vpop.permute.xlu0 %4439
      %vm4441 = vcmask 785408
      %v4442 = vsel %vm4441, %v4428, %v4430
      %v4443 = vsel %vm4441, %v4430, %v4432
      %v4444 = vsel %vm4441, %v4432, %v4434
      %v4445 = vsel %vm4441, %v4434, %v4436
      %v4446 = vsel %vm4441, %v4436, %v4438
      %v4447 = vsel %vm4441, %v4438, %v4440
      %v4455 = vmax.f32 %v4413, %v4442
      %v4456 = vmax.f32 %v4414, %v4443
      %v4457 = vmax.f32 %v4415, %v4444
      %v4458 = vmax.f32 %v4416, %v4445
      %v4459 = vmax.f32 %v4417, %v4446
      %v4460 = vmax.f32 %v4418, %v4447
      %v4461 = vmax.f32 %v4419, %v4440
      %v4462 = vpack.c.bf16 %v4455, %v4455
      %v4463 = vpack.c.bf16 %v4456, %v4456
      %v4464 = vpack.c.bf16 %v4457, %v4457
      %v4465 = vpack.c.bf16 %v4458, %v4458
      %v4466 = vpack.c.bf16 %v4459, %v4459
      %v4467 = vpack.c.bf16 %v4460, %v4460
      %v4468 = vpack.c.bf16 %v4461, %v4461
      %v4469 = vld [vmem:[%s5] sm:$0xf]
      %v4470 = vld [vmem:[%s5 + $0x4] sm:$0xf]
      %v4471 = vld [vmem:[%s5 + $0x8] sm:$0xf]
      %v4472 = vld [vmem:[%s5 + $0xc] sm:$0xf]
      %v4473 = vld [vmem:[%s5 + $0x10] sm:$0xf]
      %v4474 = vld [vmem:[%s5 + $0x14] sm:$0xf]
      %v4475 = vld [vmem:[%s5 + $0x18] sm:$0xf]
      %v4476 = vld [vmem:[%s5 + $0x1c] sm:$0xf]
      %v4477 = vld [vmem:[%s5 + $0x20] sm:$0xf]
      %4484 = vrot.lane.b32.xlu0 %v4462, 126
      %v4485 = vpop.permute.xlu0 %4484
      %4486 = vrot.lane.b32.xlu0 %v4463, 126
      %v4487 = vpop.permute.xlu0 %4486
      %4488 = vrot.lane.b32.xlu0 %v4464, 126
      %v4489 = vpop.permute.xlu0 %4488
      %4490 = vrot.lane.b32.xlu0 %v4465, 126
      %v4491 = vpop.permute.xlu0 %4490
      %4492 = vrot.lane.b32.xlu0 %v4466, 126
      %v4493 = vpop.permute.xlu0 %4492
      %4494 = vrot.lane.b32.xlu0 %v4467, 126
      %v4495 = vpop.permute.xlu0 %4494
      %v4496 = vsel %vm854, %v4485, %v4487
      %v4497 = vsel %vm854, %v4487, %v4489
      %v4498 = vsel %vm854, %v4489, %v4491
      %v4499 = vsel %vm854, %v4491, %v4493
      %v4500 = vsel %vm854, %v4493, %v4495
      %v4502 = vsel %vm2465, %v4470, 0
      %v4505 = vsel %vm2469, %v4496, 0
      %v4508 = vsel %vm2469, %v4497, 0
      %v4511 = vsel %vm2469, %v4498, 0
      %v4514 = vsel %vm2469, %v4499, 0
      %v4517 = vsel %vm2469, %v4500, 0
      %v4520 = vsel %vm2469, %v4495, 0
      %4522 = vmatprep.subr.bf16.mxu0 %v4508
      %4523 = vmatpush1.bf16.msra.mxu0 %v4505
      %4524 = vmatprep.subr.bf16.mxu0 0
      %4525 = vmatpush1.bf16.msra.mxu0 0
      %4526 = vmatprep.subr.bf16.mxu0 0
      %4527 = vmatpush1.bf16.msra.mxu0 0
      %4528 = vmatprep.subr.bf16.mxu0 0
      %4529 = vmatpush1.bf16.msra.mxu0 0
      %4530 = vmatprep.subr.bf16.mxu0 0
      %4531 = vmatpush1.bf16.msra.mxu0 0
      %4532 = vmatprep.subr.bf16.mxu0 0
      %4533 = vmatpush1.bf16.msra.mxu0 0
      %4534 = vmatprep.subr.bf16.mxu0 0
      %4535 = vmatpush1.bf16.msra.mxu0 0
      %4536 = vmatprep.subr.bf16.mxu0 0
      %4537 = vmatpush1.bf16.msra.mxu0 0
      %4538 = vmatprep.subr.bf16.mxu0 0
      %4539 = vmatpush1.bf16.msra.mxu0 0
      %4540 = vmatprep.subr.bf16.mxu0 0
      %4541 = vmatpush1.bf16.msra.mxu0 0
      %4542 = vmatprep.subr.bf16.mxu0 0
      %4543 = vmatpush1.bf16.msra.mxu0 0
      %4544 = vmatprep.subr.bf16.mxu0 0
      %4545 = vmatpush1.bf16.msra.mxu0 0
      %4546 = vmatprep.subr.bf16.mxu0 0
      %4547 = vmatpush1.bf16.msra.mxu0 0
      %4548 = vmatprep.subr.bf16.mxu0 0
      %4549 = vmatpush1.bf16.msra.mxu0 0
      %4550 = vmatprep.subr.bf16.mxu0 0
      %4551 = vmatpush1.bf16.msra.mxu0 0
      %4552 = vmatprep.subr.bf16.mxu0 0
      %4553 = vmatpush1.bf16.msra.mxu0 0
      %4554 = vmatprep.mubr.bf16.mxu0 0
      %4555 = vmatmul.mubr.bf16.gmra.mrb[0].mxu0 %v4502
      %v4556 = vpop.f32.mrb[0].mxu0
      %v4557 = vadd.f32 0.0, %v4556
      %v4558 = vpop.f32.mrb[0].mxu0
      %v4559 = vadd.f32 0.0, %v4558
      %v4560 = vpop.f32.mrb[0].mxu0
      %v4561 = vpop.f32.mrb[0].mxu0
      %4562 = vdwg.mxu0
      %4563 = vmatprep.subr.bf16.mxu0 %v4514
      %4564 = vmatpush1.bf16.msra.mxu0 %v4511
      %4565 = vmatprep.subr.bf16.mxu0 0
      %4566 = vmatpush1.bf16.msra.mxu0 0
      %4567 = vmatprep.subr.bf16.mxu0 0
      %4568 = vmatpush1.bf16.msra.mxu0 0
      %4569 = vmatprep.subr.bf16.mxu0 0
      %4570 = vmatpush1.bf16.msra.mxu0 0
      %4571 = vmatprep.subr.bf16.mxu0 0
      %4572 = vmatpush1.bf16.msra.mxu0 0
      %4573 = vmatprep.subr.bf16.mxu0 0
      %4574 = vmatpush1.bf16.msra.mxu0 0
      %4575 = vmatprep.subr.bf16.mxu0 0
      %4576 = vmatpush1.bf16.msra.mxu0 0
      %4577 = vmatprep.subr.bf16.mxu0 0
      %4578 = vmatpush1.bf16.msra.mxu0 0
      %4579 = vmatprep.subr.bf16.mxu0 0
      %4580 = vmatpush1.bf16.msra.mxu0 0
      %4581 = vmatprep.subr.bf16.mxu0 0
      %4582 = vmatpush1.bf16.msra.mxu0 0
      %4583 = vmatprep.subr.bf16.mxu0 0
      %4584 = vmatpush1.bf16.msra.mxu0 0
      %4585 = vmatprep.subr.bf16.mxu0 0
      %4586 = vmatpush1.bf16.msra.mxu0 0
      %4587 = vmatprep.subr.bf16.mxu0 0
      %4588 = vmatpush1.bf16.msra.mxu0 0
      %4589 = vmatprep.subr.bf16.mxu0 0
      %4590 = vmatpush1.bf16.msra.mxu0 0
      %4591 = vmatprep.subr.bf16.mxu0 0
      %4592 = vmatpush1.bf16.msra.mxu0 0
      %4593 = vmatprep.subr.bf16.mxu0 0
      %4594 = vmatpush1.bf16.msra.mxu0 0
      %4595 = vmatprep.mubr.bf16.mxu0 0
      %4596 = vmatmul.mubr.bf16.gmra.mrb[0].mxu0 %v4502
      %v4597 = vpop.f32.mrb[0].mxu0
      %v4598 = vadd.f32 0.0, %v4597
      %v4599 = vpop.f32.mrb[0].mxu0
      %v4600 = vadd.f32 0.0, %v4599
      %v4601 = vpop.f32.mrb[0].mxu0
      %v4602 = vpop.f32.mrb[0].mxu0
      %4603 = vdwg.mxu0
      %4604 = vmatprep.subr.bf16.mxu0 %v4520
      %4605 = vmatpush1.bf16.msra.mxu0 %v4517
      %4606 = vmatprep.subr.bf16.mxu0 0
      %4607 = vmatpush1.bf16.msra.mxu0 0
      %4608 = vmatprep.subr.bf16.mxu0 0
      %4609 = vmatpush1.bf16.msra.mxu0 0
      %4610 = vmatprep.subr.bf16.mxu0 0
      %4611 = vmatpush1.bf16.msra.mxu0 0
      %4612 = vmatprep.subr.bf16.mxu0 0
      %4613 = vmatpush1.bf16.msra.mxu0 0
      %4614 = vmatprep.subr.bf16.mxu0 0
      %4615 = vmatpush1.bf16.msra.mxu0 0
      %4616 = vmatprep.subr.bf16.mxu0 0
      %4617 = vmatpush1.bf16.msra.mxu0 0
      %4618 = vmatprep.subr.bf16.mxu0 0
      %4619 = vmatpush1.bf16.msra.mxu0 0
      %4620 = vmatprep.subr.bf16.mxu0 0
      %4621 = vmatpush1.bf16.msra.mxu0 0
      %4622 = vmatprep.subr.bf16.mxu0 0
      %4623 = vmatpush1.bf16.msra.mxu0 0
      %4624 = vmatprep.subr.bf16.mxu0 0
      %4625 = vmatpush1.bf16.msra.mxu0 0
      %4626 = vmatprep.subr.bf16.mxu0 0
      %4627 = vmatpush1.bf16.msra.mxu0 0
      %4628 = vmatprep.subr.bf16.mxu0 0
      %4629 = vmatpush1.bf16.msra.mxu0 0
      %4630 = vmatprep.subr.bf16.mxu0 0
      %4631 = vmatpush1.bf16.msra.mxu0 0
      %4632 = vmatprep.subr.bf16.mxu0 0
      %4633 = vmatpush1.bf16.msra.mxu0 0
      %4634 = vmatprep.subr.bf16.mxu0 0
      %4635 = vmatpush1.bf16.msra.mxu0 0
      %4636 = vmatprep.mubr.bf16.mxu0 0
      %4637 = vmatmul.mubr.bf16.gmra.mrb[0].mxu0 %v4502
      %v4638 = vpop.f32.mrb[0].mxu0
      %v4639 = vadd.f32 0.0, %v4638
      %v4640 = vpop.f32.mrb[0].mxu0
      %v4641 = vadd.f32 0.0, %v4640
      %v4642 = vpop.f32.mrb[0].mxu0
      %v4643 = vpop.f32.mrb[0].mxu0
      %4644 = vdwg.mxu0
      %v4646 = vsel %vm2465, %v4469, 0
      %v4649 = vsel %vm2469, %v4462, 0
      %v4652 = vsel %vm2469, %v4463, 0
      %v4655 = vsel %vm2469, %v4464, 0
      %v4658 = vsel %vm2469, %v4465, 0
      %v4661 = vsel %vm2469, %v4466, 0
      %v4664 = vsel %vm2469, %v4467, 0
      %4666 = vmatprep.subr.bf16.mxu0 %v4652
      %4667 = vmatpush1.bf16.msra.mxu0 %v4649
      %4668 = vmatprep.subr.bf16.mxu0 0
      %4669 = vmatpush1.bf16.msra.mxu0 0
      %4670 = vmatprep.subr.bf16.mxu0 0
      %4671 = vmatpush1.bf16.msra.mxu0 0
      %4672 = vmatprep.subr.bf16.mxu0 0
      %4673 = vmatpush1.bf16.msra.mxu0 0
      %4674 = vmatprep.subr.bf16.mxu0 0
      %4675 = vmatpush1.bf16.msra.mxu0 0
      %4676 = vmatprep.subr.bf16.mxu0 0
      %4677 = vmatpush1.bf16.msra.mxu0 0
      %4678 = vmatprep.subr.bf16.mxu0 0
      %4679 = vmatpush1.bf16.msra.mxu0 0
      %4680 = vmatprep.subr.bf16.mxu0 0
      %4681 = vmatpush1.bf16.msra.mxu0 0
      %4682 = vmatprep.subr.bf16.mxu0 0
      %4683 = vmatpush1.bf16.msra.mxu0 0
      %4684 = vmatprep.subr.bf16.mxu0 0
      %4685 = vmatpush1.bf16.msra.mxu0 0
      %4686 = vmatprep.subr.bf16.mxu0 0
      %4687 = vmatpush1.bf16.msra.mxu0 0
      %4688 = vmatprep.subr.bf16.mxu0 0
      %4689 = vmatpush1.bf16.msra.mxu0 0
      %4690 = vmatprep.subr.bf16.mxu0 0
      %4691 = vmatpush1.bf16.msra.mxu0 0
      %4692 = vmatprep.subr.bf16.mxu0 0
      %4693 = vmatpush1.bf16.msra.mxu0 0
      %4694 = vmatprep.subr.bf16.mxu0 0
      %4695 = vmatpush1.bf16.msra.mxu0 0
      %4696 = vmatprep.subr.bf16.mxu0 0
      %4697 = vmatpush1.bf16.msra.mxu0 0
      %4698 = vmatprep.mubr.bf16.mxu0 0
      %4699 = vmatmul.mubr.bf16.gmra.mrb[0].mxu0 %v4646
      %v4700 = vpop.f32.mrb[0].mxu0
      %v4701 = vadd.f32 %v4557, %v4700
      %v4702 = vpop.f32.mrb[0].mxu0
      %v4703 = vadd.f32 %v4559, %v4702
      %v4704 = vpop.f32.mrb[0].mxu0
      %v4705 = vpop.f32.mrb[0].mxu0
      %4706 = vdwg.mxu0
      %4707 = vmatprep.subr.bf16.mxu0 %v4658
      %4708 = vmatpush1.bf16.msra.mxu0 %v4655
      %4709 = vmatprep.subr.bf16.mxu0 0
      %4710 = vmatpush1.bf16.msra.mxu0 0
      %4711 = vmatprep.subr.bf16.mxu0 0
      %4712 = vmatpush1.bf16.msra.mxu0 0
      %4713 = vmatprep.subr.bf16.mxu0 0
      %4714 = vmatpush1.bf16.msra.mxu0 0
      %4715 = vmatprep.subr.bf16.mxu0 0
      %4716 = vmatpush1.bf16.msra.mxu0 0
      %4717 = vmatprep.subr.bf16.mxu0 0
      %4718 = vmatpush1.bf16.msra.mxu0 0
      %4719 = vmatprep.subr.bf16.mxu0 0
      %4720 = vmatpush1.bf16.msra.mxu0 0
      %4721 = vmatprep.subr.bf16.mxu0 0
      %4722 = vmatpush1.bf16.msra.mxu0 0
      %4723 = vmatprep.subr.bf16.mxu0 0
      %4724 = vmatpush1.bf16.msra.mxu0 0
      %4725 = vmatprep.subr.bf16.mxu0 0
      %4726 = vmatpush1.bf16.msra.mxu0 0
      %4727 = vmatprep.subr.bf16.mxu0 0
      %4728 = vmatpush1.bf16.msra.mxu0 0
      %4729 = vmatprep.subr.bf16.mxu0 0
      %4730 = vmatpush1.bf16.msra.mxu0 0
      %4731 = vmatprep.subr.bf16.mxu0 0
      %4732 = vmatpush1.bf16.msra.mxu0 0
      %4733 = vmatprep.subr.bf16.mxu0 0
      %4734 = vmatpush1.bf16.msra.mxu0 0
      %4735 = vmatprep.subr.bf16.mxu0 0
      %4736 = vmatpush1.bf16.msra.mxu0 0
      %4737 = vmatprep.subr.bf16.mxu0 0
      %4738 = vmatpush1.bf16.msra.mxu0 0
      %4739 = vmatprep.mubr.bf16.mxu0 0
      %4740 = vmatmul.mubr.bf16.gmra.mrb[0].mxu0 %v4646
      %v4741 = vpop.f32.mrb[0].mxu0
      %v4742 = vadd.f32 %v4598, %v4741
      %v4743 = vpop.f32.mrb[0].mxu0
      %v4744 = vadd.f32 %v4600, %v4743
      %v4745 = vpop.f32.mrb[0].mxu0
      %v4746 = vpop.f32.mrb[0].mxu0
      %4747 = vdwg.mxu0
      %4748 = vmatprep.subr.bf16.mxu0 %v4664
      %4749 = vmatpush1.bf16.msra.mxu0 %v4661
      %4750 = vmatprep.subr.bf16.mxu0 0
      %4751 = vmatpush1.bf16.msra.mxu0 0
      %4752 = vmatprep.subr.bf16.mxu0 0
      %4753 = vmatpush1.bf16.msra.mxu0 0
      %4754 = vmatprep.subr.bf16.mxu0 0
      %4755 = vmatpush1.bf16.msra.mxu0 0
      %4756 = vmatprep.subr.bf16.mxu0 0
      %4757 = vmatpush1.bf16.msra.mxu0 0
      %4758 = vmatprep.subr.bf16.mxu0 0
      %4759 = vmatpush1.bf16.msra.mxu0 0
      %4760 = vmatprep.subr.bf16.mxu0 0
      %4761 = vmatpush1.bf16.msra.mxu0 0
      %4762 = vmatprep.subr.bf16.mxu0 0
      %4763 = vmatpush1.bf16.msra.mxu0 0
      %4764 = vmatprep.subr.bf16.mxu0 0
      %4765 = vmatpush1.bf16.msra.mxu0 0
      %4766 = vmatprep.subr.bf16.mxu0 0
      %4767 = vmatpush1.bf16.msra.mxu0 0
      %4768 = vmatprep.subr.bf16.mxu0 0
      %4769 = vmatpush1.bf16.msra.mxu0 0
      %4770 = vmatprep.subr.bf16.mxu0 0
      %4771 = vmatpush1.bf16.msra.mxu0 0
      %4772 = vmatprep.subr.bf16.mxu0 0
      %4773 = vmatpush1.bf16.msra.mxu0 0
      %4774 = vmatprep.subr.bf16.mxu0 0
      %4775 = vmatpush1.bf16.msra.mxu0 0
      %4776 = vmatprep.subr.bf16.mxu0 0
      %4777 = vmatpush1.bf16.msra.mxu0 0
      %4778 = vmatprep.subr.bf16.mxu0 0
      %4779 = vmatpush1.bf16.msra.mxu0 0
      %4780 = vmatprep.mubr.bf16.mxu0 0
      %4781 = vmatmul.mubr.bf16.gmra.mrb[0].mxu0 %v4646
      %v4782 = vpop.f32.mrb[0].mxu0
      %v4783 = vadd.f32 %v4639, %v4782
      %v4784 = vpop.f32.mrb[0].mxu0
      %v4785 = vadd.f32 %v4641, %v4784
      %v4786 = vpop.f32.mrb[0].mxu0
      %v4787 = vpop.f32.mrb[0].mxu0
      %4788 = vdwg.mxu0
      %4789 = vrot.lane.b32.xlu0 %v4462, 124
      %v4790 = vpop.permute.xlu0 %4789
      %4791 = vrot.lane.b32.xlu0 %v4463, 124
      %v4792 = vpop.permute.xlu0 %4791
      %4793 = vrot.lane.b32.xlu0 %v4464, 124
      %v4794 = vpop.permute.xlu0 %4793
      %4795 = vrot.lane.b32.xlu0 %v4465, 124
      %v4796 = vpop.permute.xlu0 %4795
      %4797 = vrot.lane.b32.xlu0 %v4466, 124
      %v4798 = vpop.permute.xlu0 %4797
      %4799 = vrot.lane.b32.xlu0 %v4467, 124
      %v4800 = vpop.permute.xlu0 %4799
      %vm4801 = vcmask 1014784
      %v4802 = vsel %vm4801, %v4790, %v4792
      %v4803 = vsel %vm4801, %v4792, %v4794
      %v4804 = vsel %vm4801, %v4794, %v4796
      %v4805 = vsel %vm4801, %v4796, %v4798
      %v4806 = vsel %vm4801, %v4798, %v4800
      %v4808 = vsel %vm2465, %v4471, 0
      %v4811 = vsel %vm2469, %v4802, 0
      %v4814 = vsel %vm2469, %v4803, 0
      %v4817 = vsel %vm2469, %v4804, 0
      %v4820 = vsel %vm2469, %v4805, 0
      %v4823 = vsel %vm2469, %v4806, 0
      %v4826 = vsel %vm2469, %v4800, 0
      %4828 = vmatprep.subr.bf16.mxu0 %v4814
      %4829 = vmatpush1.bf16.msra.mxu0 %v4811
      %4830 = vmatprep.subr.bf16.mxu0 0
      %4831 = vmatpush1.bf16.msra.mxu0 0
      %4832 = vmatprep.subr.bf16.mxu0 0
      %4833 = vmatpush1.bf16.msra.mxu0 0
      %4834 = vmatprep.subr.bf16.mxu0 0
      %4835 = vmatpush1.bf16.msra.mxu0 0
      %4836 = vmatprep.subr.bf16.mxu0 0
      %4837 = vmatpush1.bf16.msra.mxu0 0
      %4838 = vmatprep.subr.bf16.mxu0 0
      %4839 = vmatpush1.bf16.msra.mxu0 0
      %4840 = vmatprep.subr.bf16.mxu0 0
      %4841 = vmatpush1.bf16.msra.mxu0 0
      %4842 = vmatprep.subr.bf16.mxu0 0
      %4843 = vmatpush1.bf16.msra.mxu0 0
      %4844 = vmatprep.subr.bf16.mxu0 0
      %4845 = vmatpush1.bf16.msra.mxu0 0
      %4846 = vmatprep.subr.bf16.mxu0 0
      %4847 = vmatpush1.bf16.msra.mxu0 0
      %4848 = vmatprep.subr.bf16.mxu0 0
      %4849 = vmatpush1.bf16.msra.mxu0 0
      %4850 = vmatprep.subr.bf16.mxu0 0
      %4851 = vmatpush1.bf16.msra.mxu0 0
      %4852 = vmatprep.subr.bf16.mxu0 0
      %4853 = vmatpush1.bf16.msra.mxu0 0
      %4854 = vmatprep.subr.bf16.mxu0 0
      %4855 = vmatpush1.bf16.msra.mxu0 0
      %4856 = vmatprep.subr.bf16.mxu0 0
      %4857 = vmatpush1.bf16.msra.mxu0 0
      %4858 = vmatprep.subr.bf16.mxu0 0
      %4859 = vmatpush1.bf16.msra.mxu0 0
      %4860 = vmatprep.mubr.bf16.mxu0 0
      %4861 = vmatmul.mubr.bf16.gmra.mrb[0].mxu0 %v4808
      %v4862 = vpop.f32.mrb[0].mxu0
      %v4863 = vadd.f32 0.0, %v4862
      %v4864 = vpop.f32.mrb[0].mxu0
      %v4865 = vadd.f32 0.0, %v4864
      %v4866 = vpop.f32.mrb[0].mxu0
      %v4867 = vpop.f32.mrb[0].mxu0
      %4868 = vdwg.mxu0
      %4869 = vmatprep.subr.bf16.mxu0 %v4820
      %4870 = vmatpush1.bf16.msra.mxu0 %v4817
      %4871 = vmatprep.subr.bf16.mxu0 0
      %4872 = vmatpush1.bf16.msra.mxu0 0
      %4873 = vmatprep.subr.bf16.mxu0 0
      %4874 = vmatpush1.bf16.msra.mxu0 0
      %4875 = vmatprep.subr.bf16.mxu0 0
      %4876 = vmatpush1.bf16.msra.mxu0 0
      %4877 = vmatprep.subr.bf16.mxu0 0
      %4878 = vmatpush1.bf16.msra.mxu0 0
      %4879 = vmatprep.subr.bf16.mxu0 0
      %4880 = vmatpush1.bf16.msra.mxu0 0
      %4881 = vmatprep.subr.bf16.mxu0 0
      %4882 = vmatpush1.bf16.msra.mxu0 0
      %4883 = vmatprep.subr.bf16.mxu0 0
      %4884 = vmatpush1.bf16.msra.mxu0 0
      %4885 = vmatprep.subr.bf16.mxu0 0
      %4886 = vmatpush1.bf16.msra.mxu0 0
      %4887 = vmatprep.subr.bf16.mxu0 0
      %4888 = vmatpush1.bf16.msra.mxu0 0
      %4889 = vmatprep.subr.bf16.mxu0 0
      %4890 = vmatpush1.bf16.msra.mxu0 0
      %4891 = vmatprep.subr.bf16.mxu0 0
      %4892 = vmatpush1.bf16.msra.mxu0 0
      %4893 = vmatprep.subr.bf16.mxu0 0
      %4894 = vmatpush1.bf16.msra.mxu0 0
      %4895 = vmatprep.subr.bf16.mxu0 0
      %4896 = vmatpush1.bf16.msra.mxu0 0
      %4897 = vmatprep.subr.bf16.mxu0 0
      %4898 = vmatpush1.bf16.msra.mxu0 0
      %4899 = vmatprep.subr.bf16.mxu0 0
      %4900 = vmatpush1.bf16.msra.mxu0 0
      %4901 = vmatprep.mubr.bf16.mxu0 0
      %4902 = vmatmul.mubr.bf16.gmra.mrb[0].mxu0 %v4808
      %v4903 = vpop.f32.mrb[0].mxu0
      %v4904 = vadd.f32 0.0, %v4903
      %v4905 = vpop.f32.mrb[0].mxu0
      %v4906 = vadd.f32 0.0, %v4905
      %v4907 = vpop.f32.mrb[0].mxu0
      %v4908 = vpop.f32.mrb[0].mxu0
      %4909 = vdwg.mxu0
      %4910 = vmatprep.subr.bf16.mxu0 %v4826
      %4911 = vmatpush1.bf16.msra.mxu0 %v4823
      %4912 = vmatprep.subr.bf16.mxu0 0
      %4913 = vmatpush1.bf16.msra.mxu0 0
      %4914 = vmatprep.subr.bf16.mxu0 0
      %4915 = vmatpush1.bf16.msra.mxu0 0
      %4916 = vmatprep.subr.bf16.mxu0 0
      %4917 = vmatpush1.bf16.msra.mxu0 0
      %4918 = vmatprep.subr.bf16.mxu0 0
      %4919 = vmatpush1.bf16.msra.mxu0 0
      %4920 = vmatprep.subr.bf16.mxu0 0
      %4921 = vmatpush1.bf16.msra.mxu0 0
      %4922 = vmatprep.subr.bf16.mxu0 0
      %4923 = vmatpush1.bf16.msra.mxu0 0
      %4924 = vmatprep.subr.bf16.mxu0 0
      %4925 = vmatpush1.bf16.msra.mxu0 0
      %4926 = vmatprep.subr.bf16.mxu0 0
      %4927 = vmatpush1.bf16.msra.mxu0 0
      %4928 = vmatprep.subr.bf16.mxu0 0
      %4929 = vmatpush1.bf16.msra.mxu0 0
      %4930 = vmatprep.subr.bf16.mxu0 0
      %4931 = vmatpush1.bf16.msra.mxu0 0
      %4932 = vmatprep.subr.bf16.mxu0 0
      %4933 = vmatpush1.bf16.msra.mxu0 0
      %4934 = vmatprep.subr.bf16.mxu0 0
      %4935 = vmatpush1.bf16.msra.mxu0 0
      %4936 = vmatprep.subr.bf16.mxu0 0
      %4937 = vmatpush1.bf16.msra.mxu0 0
      %4938 = vmatprep.subr.bf16.mxu0 0
      %4939 = vmatpush1.bf16.msra.mxu0 0
      %4940 = vmatprep.subr.bf16.mxu0 0
      %4941 = vmatpush1.bf16.msra.mxu0 0
      %4942 = vmatprep.mubr.bf16.mxu0 0
      %4943 = vmatmul.mubr.bf16.gmra.mrb[0].mxu0 %v4808
      %v4944 = vpop.f32.mrb[0].mxu0
      %v4945 = vadd.f32 0.0, %v4944
      %v4946 = vpop.f32.mrb[0].mxu0
      %v4947 = vadd.f32 0.0, %v4946
      %v4948 = vpop.f32.mrb[0].mxu0
      %v4949 = vpop.f32.mrb[0].mxu0
      %4950 = vdwg.mxu0
      %v4951 = vadd.f32 %v4701, %v4863
      %v4952 = vadd.f32 %v4703, %v4865
      %v4953 = vadd.f32 %v4742, %v4904
      %v4954 = vadd.f32 %v4744, %v4906
      %v4955 = vadd.f32 %v4783, %v4945
      %v4956 = vadd.f32 %v4785, %v4947
      %4958 = vrot.lane.b32.xlu0 %v4462, 64
      %v4959 = vpop.permute.xlu0 %4958
      %4960 = vrot.lane.b32.xlu0 %v4463, 64
      %v4961 = vpop.permute.xlu0 %4960
      %4962 = vrot.lane.b32.xlu0 %v4464, 64
      %v4963 = vpop.permute.xlu0 %4962
      %4964 = vrot.lane.b32.xlu0 %v4465, 64
      %v4965 = vpop.permute.xlu0 %4964
      %4966 = vrot.lane.b32.xlu0 %v4466, 64
      %v4967 = vpop.permute.xlu0 %4966
      %4968 = vrot.lane.b32.xlu0 %v4467, 64
      %v4969 = vpop.permute.xlu0 %4968
      %4970 = vrot.lane.b32.xlu0 %v4468, 64
      %v4971 = vpop.permute.xlu0 %4970
      %v4972 = vsel %vm1746, %v4959, %v4961
      %v4973 = vsel %vm1746, %v4961, %v4963
      %v4974 = vsel %vm1746, %v4963, %v4965
      %v4975 = vsel %vm1746, %v4965, %v4967
      %v4976 = vsel %vm1746, %v4967, %v4969
      %v4977 = vsel %vm1746, %v4969, %v4971
      %v4979 = vsel %vm2465, %v4472, 0
      %v4982 = vsel %vm2469, %v4972, 0
      %v4985 = vsel %vm2469, %v4973, 0
      %v4988 = vsel %vm2469, %v4974, 0
      %v4991 = vsel %vm2469, %v4975, 0
      %v4994 = vsel %vm2469, %v4976, 0
      %v4997 = vsel %vm2469, %v4977, 0
      %4999 = vmatprep.subr.bf16.mxu0 %v4985
      %5000 = vmatpush1.bf16.msra.mxu0 %v4982
      %5001 = vmatprep.subr.bf16.mxu0 0
      %5002 = vmatpush1.bf16.msra.mxu0 0
      %5003 = vmatprep.subr.bf16.mxu0 0
      %5004 = vmatpush1.bf16.msra.mxu0 0
      %5005 = vmatprep.subr.bf16.mxu0 0
      %5006 = vmatpush1.bf16.msra.mxu0 0
      %5007 = vmatprep.subr.bf16.mxu0 0
      %5008 = vmatpush1.bf16.msra.mxu0 0
      %5009 = vmatprep.subr.bf16.mxu0 0
      %5010 = vmatpush1.bf16.msra.mxu0 0
      %5011 = vmatprep.subr.bf16.mxu0 0
      %5012 = vmatpush1.bf16.msra.mxu0 0
      %5013 = vmatprep.subr.bf16.mxu0 0
      %5014 = vmatpush1.bf16.msra.mxu0 0
      %5015 = vmatprep.subr.bf16.mxu0 0
      %5016 = vmatpush1.bf16.msra.mxu0 0
      %5017 = vmatprep.subr.bf16.mxu0 0
      %5018 = vmatpush1.bf16.msra.mxu0 0
      %5019 = vmatprep.subr.bf16.mxu0 0
      %5020 = vmatpush1.bf16.msra.mxu0 0
      %5021 = vmatprep.subr.bf16.mxu0 0
      %5022 = vmatpush1.bf16.msra.mxu0 0
      %5023 = vmatprep.subr.bf16.mxu0 0
      %5024 = vmatpush1.bf16.msra.mxu0 0
      %5025 = vmatprep.subr.bf16.mxu0 0
      %5026 = vmatpush1.bf16.msra.mxu0 0
      %5027 = vmatprep.subr.bf16.mxu0 0
      %5028 = vmatpush1.bf16.msra.mxu0 0
      %5029 = vmatprep.subr.bf16.mxu0 0
      %5030 = vmatpush1.bf16.msra.mxu0 0
      %5031 = vmatprep.mubr.bf16.mxu0 0
      %5032 = vmatmul.mubr.bf16.gmra.mrb[0].mxu0 %v4979
      %v5033 = vpop.f32.mrb[0].mxu0
      %v5034 = vadd.f32 0.0, %v5033
      %v5035 = vpop.f32.mrb[0].mxu0
      %v5036 = vadd.f32 0.0, %v5035
      %v5037 = vpop.f32.mrb[0].mxu0
      %v5038 = vpop.f32.mrb[0].mxu0
      %5039 = vdwg.mxu0
      %5040 = vmatprep.subr.bf16.mxu0 %v4991
      %5041 = vmatpush1.bf16.msra.mxu0 %v4988
      %5042 = vmatprep.subr.bf16.mxu0 0
      %5043 = vmatpush1.bf16.msra.mxu0 0
      %5044 = vmatprep.subr.bf16.mxu0 0
      %5045 = vmatpush1.bf16.msra.mxu0 0
      %5046 = vmatprep.subr.bf16.mxu0 0
      %5047 = vmatpush1.bf16.msra.mxu0 0
      %5048 = vmatprep.subr.bf16.mxu0 0
      %5049 = vmatpush1.bf16.msra.mxu0 0
      %5050 = vmatprep.subr.bf16.mxu0 0
      %5051 = vmatpush1.bf16.msra.mxu0 0
      %5052 = vmatprep.subr.bf16.mxu0 0
      %5053 = vmatpush1.bf16.msra.mxu0 0
      %5054 = vmatprep.subr.bf16.mxu0 0
      %5055 = vmatpush1.bf16.msra.mxu0 0
      %5056 = vmatprep.subr.bf16.mxu0 0
      %5057 = vmatpush1.bf16.msra.mxu0 0
      %5058 = vmatprep.subr.bf16.mxu0 0
      %5059 = vmatpush1.bf16.msra.mxu0 0
      %5060 = vmatprep.subr.bf16.mxu0 0
      %5061 = vmatpush1.bf16.msra.mxu0 0
      %5062 = vmatprep.subr.bf16.mxu0 0
      %5063 = vmatpush1.bf16.msra.mxu0 0
      %5064 = vmatprep.subr.bf16.mxu0 0
      %5065 = vmatpush1.bf16.msra.mxu0 0
      %5066 = vmatprep.subr.bf16.mxu0 0
      %5067 = vmatpush1.bf16.msra.mxu0 0
      %5068 = vmatprep.subr.bf16.mxu0 0
      %5069 = vmatpush1.bf16.msra.mxu0 0
      %5070 = vmatprep.subr.bf16.mxu0 0
      %5071 = vmatpush1.bf16.msra.mxu0 0
      %5072 = vmatprep.mubr.bf16.mxu0 0
      %5073 = vmatmul.mubr.bf16.gmra.mrb[0].mxu0 %v4979
      %v5074 = vpop.f32.mrb[0].mxu0
      %v5075 = vadd.f32 0.0, %v5074
      %v5076 = vpop.f32.mrb[0].mxu0
      %v5077 = vadd.f32 0.0, %v5076
      %v5078 = vpop.f32.mrb[0].mxu0
      %v5079 = vpop.f32.mrb[0].mxu0
      %5080 = vdwg.mxu0
      %5081 = vmatprep.subr.bf16.mxu0 %v4997
      %5082 = vmatpush1.bf16.msra.mxu0 %v4994
      %5083 = vmatprep.subr.bf16.mxu0 0
      %5084 = vmatpush1.bf16.msra.mxu0 0
      %5085 = vmatprep.subr.bf16.mxu0 0
      %5086 = vmatpush1.bf16.msra.mxu0 0
      %5087 = vmatprep.subr.bf16.mxu0 0
      %5088 = vmatpush1.bf16.msra.mxu0 0
      %5089 = vmatprep.subr.bf16.mxu0 0
      %5090 = vmatpush1.bf16.msra.mxu0 0
      %5091 = vmatprep.subr.bf16.mxu0 0
      %5092 = vmatpush1.bf16.msra.mxu0 0
      %5093 = vmatprep.subr.bf16.mxu0 0
      %5094 = vmatpush1.bf16.msra.mxu0 0
      %5095 = vmatprep.subr.bf16.mxu0 0
      %5096 = vmatpush1.bf16.msra.mxu0 0
      %5097 = vmatprep.subr.bf16.mxu0 0
      %5098 = vmatpush1.bf16.msra.mxu0 0
      %5099 = vmatprep.subr.bf16.mxu0 0
      %5100 = vmatpush1.bf16.msra.mxu0 0
      %5101 = vmatprep.subr.bf16.mxu0 0
      %5102 = vmatpush1.bf16.msra.mxu0 0
      %5103 = vmatprep.subr.bf16.mxu0 0
      %5104 = vmatpush1.bf16.msra.mxu0 0
      %5105 = vmatprep.subr.bf16.mxu0 0
      %5106 = vmatpush1.bf16.msra.mxu0 0
      %5107 = vmatprep.subr.bf16.mxu0 0
      %5108 = vmatpush1.bf16.msra.mxu0 0
      %5109 = vmatprep.subr.bf16.mxu0 0
      %5110 = vmatpush1.bf16.msra.mxu0 0
      %5111 = vmatprep.subr.bf16.mxu0 0
      %5112 = vmatpush1.bf16.msra.mxu0 0
      %5113 = vmatprep.mubr.bf16.mxu0 0
      %5114 = vmatmul.mubr.bf16.gmra.mrb[0].mxu0 %v4979
      %v5115 = vpop.f32.mrb[0].mxu0
      %v5116 = vadd.f32 0.0, %v5115
      %v5117 = vpop.f32.mrb[0].mxu0
      %v5118 = vadd.f32 0.0, %v5117
      %v5119 = vpop.f32.mrb[0].mxu0
      %v5120 = vpop.f32.mrb[0].mxu0
      %5121 = vdwg.mxu0
      %v5122 = vadd.f32 %v4951, %v5034
      %v5123 = vadd.f32 %v4952, %v5036
      %v5124 = vadd.f32 %v4953, %v5075
      %v5125 = vadd.f32 %v4954, %v5077
      %v5126 = vadd.f32 %v4955, %v5116
      %v5127 = vadd.f32 %v4956, %v5118
      %5128 = vrot.lane.b32.xlu0 %v4462, 62
      %v5129 = vpop.permute.xlu0 %5128
      %5130 = vrot.lane.b32.xlu0 %v4463, 62
      %v5131 = vpop.permute.xlu0 %5130
      %5132 = vrot.lane.b32.xlu0 %v4464, 62
      %v5133 = vpop.permute.xlu0 %5132
      %5134 = vrot.lane.b32.xlu0 %v4465, 62
      %v5135 = vpop.permute.xlu0 %5134
      %5136 = vrot.lane.b32.xlu0 %v4466, 62
      %v5137 = vpop.permute.xlu0 %5136
      %5138 = vrot.lane.b32.xlu0 %v4467, 62
      %v5139 = vpop.permute.xlu0 %5138
      %5140 = vrot.lane.b32.xlu0 %v4468, 62
      %v5141 = vpop.permute.xlu0 %5140
      %v5142 = vsel %vm2192, %v5129, %v5131
      %v5143 = vsel %vm2192, %v5131, %v5133
      %v5144 = vsel %vm2192, %v5133, %v5135
      %v5145 = vsel %vm2192, %v5135, %v5137
      %v5146 = vsel %vm2192, %v5137, %v5139
      %v5147 = vsel %vm2192, %v5139, %v5141
      %v5149 = vsel %vm2465, %v4473, 0
      %v5152 = vsel %vm2469, %v5142, 0
      %v5155 = vsel %vm2469, %v5143, 0
      %v5158 = vsel %vm2469, %v5144, 0
      %v5161 = vsel %vm2469, %v5145, 0
      %v5164 = vsel %vm2469, %v5146, 0
      %v5167 = vsel %vm2469, %v5147, 0
      %5169 = vmatprep.subr.bf16.mxu0 %v5155
      %5170 = vmatpush1.bf16.msra.mxu0 %v5152
      %5171 = vmatprep.subr.bf16.mxu0 0
      %5172 = vmatpush1.bf16.msra.mxu0 0
      %5173 = vmatprep.subr.bf16.mxu0 0
      %5174 = vmatpush1.bf16.msra.mxu0 0
      %5175 = vmatprep.subr.bf16.mxu0 0
      %5176 = vmatpush1.bf16.msra.mxu0 0
      %5177 = vmatprep.subr.bf16.mxu0 0
      %5178 = vmatpush1.bf16.msra.mxu0 0
      %5179 = vmatprep.subr.bf16.mxu0 0
      %5180 = vmatpush1.bf16.msra.mxu0 0
      %5181 = vmatprep.subr.bf16.mxu0 0
      %5182 = vmatpush1.bf16.msra.mxu0 0
      %5183 = vmatprep.subr.bf16.mxu0 0
      %5184 = vmatpush1.bf16.msra.mxu0 0
      %5185 = vmatprep.subr.bf16.mxu0 0
      %5186 = vmatpush1.bf16.msra.mxu0 0
      %5187 = vmatprep.subr.bf16.mxu0 0
      %5188 = vmatpush1.bf16.msra.mxu0 0
      %5189 = vmatprep.subr.bf16.mxu0 0
      %5190 = vmatpush1.bf16.msra.mxu0 0
      %5191 = vmatprep.subr.bf16.mxu0 0
      %5192 = vmatpush1.bf16.msra.mxu0 0
      %5193 = vmatprep.subr.bf16.mxu0 0
      %5194 = vmatpush1.bf16.msra.mxu0 0
      %5195 = vmatprep.subr.bf16.mxu0 0
      %5196 = vmatpush1.bf16.msra.mxu0 0
      %5197 = vmatprep.subr.bf16.mxu0 0
      %5198 = vmatpush1.bf16.msra.mxu0 0
      %5199 = vmatprep.subr.bf16.mxu0 0
      %5200 = vmatpush1.bf16.msra.mxu0 0
      %5201 = vmatprep.mubr.bf16.mxu0 0
      %5202 = vmatmul.mubr.bf16.gmra.mrb[0].mxu0 %v5149
      %v5203 = vpop.f32.mrb[0].mxu0
      %v5204 = vadd.f32 0.0, %v5203
      %v5205 = vpop.f32.mrb[0].mxu0
      %v5206 = vadd.f32 0.0, %v5205
      %v5207 = vpop.f32.mrb[0].mxu0
      %v5208 = vpop.f32.mrb[0].mxu0
      %5209 = vdwg.mxu0
      %5210 = vmatprep.subr.bf16.mxu0 %v5161
      %5211 = vmatpush1.bf16.msra.mxu0 %v5158
      %5212 = vmatprep.subr.bf16.mxu0 0
      %5213 = vmatpush1.bf16.msra.mxu0 0
      %5214 = vmatprep.subr.bf16.mxu0 0
      %5215 = vmatpush1.bf16.msra.mxu0 0
      %5216 = vmatprep.subr.bf16.mxu0 0
      %5217 = vmatpush1.bf16.msra.mxu0 0
      %5218 = vmatprep.subr.bf16.mxu0 0
      %5219 = vmatpush1.bf16.msra.mxu0 0
      %5220 = vmatprep.subr.bf16.mxu0 0
      %5221 = vmatpush1.bf16.msra.mxu0 0
      %5222 = vmatprep.subr.bf16.mxu0 0
      %5223 = vmatpush1.bf16.msra.mxu0 0
      %5224 = vmatprep.subr.bf16.mxu0 0
      %5225 = vmatpush1.bf16.msra.mxu0 0
      %5226 = vmatprep.subr.bf16.mxu0 0
      %5227 = vmatpush1.bf16.msra.mxu0 0
      %5228 = vmatprep.subr.bf16.mxu0 0
      %5229 = vmatpush1.bf16.msra.mxu0 0
      %5230 = vmatprep.subr.bf16.mxu0 0
      %5231 = vmatpush1.bf16.msra.mxu0 0
      %5232 = vmatprep.subr.bf16.mxu0 0
      %5233 = vmatpush1.bf16.msra.mxu0 0
      %5234 = vmatprep.subr.bf16.mxu0 0
      %5235 = vmatpush1.bf16.msra.mxu0 0
      %5236 = vmatprep.subr.bf16.mxu0 0
      %5237 = vmatpush1.bf16.msra.mxu0 0
      %5238 = vmatprep.subr.bf16.mxu0 0
      %5239 = vmatpush1.bf16.msra.mxu0 0
      %5240 = vmatprep.subr.bf16.mxu0 0
      %5241 = vmatpush1.bf16.msra.mxu0 0
      %5242 = vmatprep.mubr.bf16.mxu0 0
      %5243 = vmatmul.mubr.bf16.gmra.mrb[0].mxu0 %v5149
      %v5244 = vpop.f32.mrb[0].mxu0
      %v5245 = vadd.f32 0.0, %v5244
      %v5246 = vpop.f32.mrb[0].mxu0
      %v5247 = vadd.f32 0.0, %v5246
      %v5248 = vpop.f32.mrb[0].mxu0
      %v5249 = vpop.f32.mrb[0].mxu0
      %5250 = vdwg.mxu0
      %5251 = vmatprep.subr.bf16.mxu0 %v5167
      %5252 = vmatpush1.bf16.msra.mxu0 %v5164
      %5253 = vmatprep.subr.bf16.mxu0 0
      %5254 = vmatpush1.bf16.msra.mxu0 0
      %5255 = vmatprep.subr.bf16.mxu0 0
      %5256 = vmatpush1.bf16.msra.mxu0 0
      %5257 = vmatprep.subr.bf16.mxu0 0
      %5258 = vmatpush1.bf16.msra.mxu0 0
      %5259 = vmatprep.subr.bf16.mxu0 0
      %5260 = vmatpush1.bf16.msra.mxu0 0
      %5261 = vmatprep.subr.bf16.mxu0 0
      %5262 = vmatpush1.bf16.msra.mxu0 0
      %5263 = vmatprep.subr.bf16.mxu0 0
      %5264 = vmatpush1.bf16.msra.mxu0 0
      %5265 = vmatprep.subr.bf16.mxu0 0
      %5266 = vmatpush1.bf16.msra.mxu0 0
      %5267 = vmatprep.subr.bf16.mxu0 0
      %5268 = vmatpush1.bf16.msra.mxu0 0
      %5269 = vmatprep.subr.bf16.mxu0 0
      %5270 = vmatpush1.bf16.msra.mxu0 0
      %5271 = vmatprep.subr.bf16.mxu0 0
      %5272 = vmatpush1.bf16.msra.mxu0 0
      %5273 = vmatprep.subr.bf16.mxu0 0
      %5274 = vmatpush1.bf16.msra.mxu0 0
      %5275 = vmatprep.subr.bf16.mxu0 0
      %5276 = vmatpush1.bf16.msra.mxu0 0
      %5277 = vmatprep.subr.bf16.mxu0 0
      %5278 = vmatpush1.bf16.msra.mxu0 0
      %5279 = vmatprep.subr.bf16.mxu0 0
      %5280 = vmatpush1.bf16.msra.mxu0 0
      %5281 = vmatprep.subr.bf16.mxu0 0
      %5282 = vmatpush1.bf16.msra.mxu0 0
      %5283 = vmatprep.mubr.bf16.mxu0 0
      %5284 = vmatmul.mubr.bf16.gmra.mrb[0].mxu0 %v5149
      %v5285 = vpop.f32.mrb[0].mxu0
      %v5286 = vadd.f32 0.0, %v5285
      %v5287 = vpop.f32.mrb[0].mxu0
      %v5288 = vadd.f32 0.0, %v5287
      %v5289 = vpop.f32.mrb[0].mxu0
      %v5290 = vpop.f32.mrb[0].mxu0
      %5291 = vdwg.mxu0
      %v5292 = vadd.f32 %v5122, %v5204
      %v5293 = vadd.f32 %v5123, %v5206
      %v5294 = vadd.f32 %v5124, %v5245
      %v5295 = vadd.f32 %v5125, %v5247
      %v5296 = vadd.f32 %v5126, %v5286
      %v5297 = vadd.f32 %v5127, %v5288
      %5298 = vrot.lane.b32.xlu0 %v4462, 60
      %v5299 = vpop.permute.xlu0 %5298
      %5300 = vrot.lane.b32.xlu0 %v4463, 60
      %v5301 = vpop.permute.xlu0 %5300
      %5302 = vrot.lane.b32.xlu0 %v4464, 60
      %v5303 = vpop.permute.xlu0 %5302
      %5304 = vrot.lane.b32.xlu0 %v4465, 60
      %v5305 = vpop.permute.xlu0 %5304
      %5306 = vrot.lane.b32.xlu0 %v4466, 60
      %v5307 = vpop.permute.xlu0 %5306
      %5308 = vrot.lane.b32.xlu0 %v4467, 60
      %v5309 = vpop.permute.xlu0 %5308
      %5310 = vrot.lane.b32.xlu0 %v4468, 60
      %v5311 = vpop.permute.xlu0 %5310
      %vm5312 = vcmask 490496
      %v5313 = vsel %vm5312, %v5299, %v5301
      %v5314 = vsel %vm5312, %v5301, %v5303
      %v5315 = vsel %vm5312, %v5303, %v5305
      %v5316 = vsel %vm5312, %v5305, %v5307
      %v5317 = vsel %vm5312, %v5307, %v5309
      %v5318 = vsel %vm5312, %v5309, %v5311
      %v5320 = vsel %vm2465, %v4474, 0
      %v5323 = vsel %vm2469, %v5313, 0
      %v5326 = vsel %vm2469, %v5314, 0
      %v5329 = vsel %vm2469, %v5315, 0
      %v5332 = vsel %vm2469, %v5316, 0
      %v5335 = vsel %vm2469, %v5317, 0
      %v5338 = vsel %vm2469, %v5318, 0
      %5340 = vmatprep.subr.bf16.mxu0 %v5326
      %5341 = vmatpush1.bf16.msra.mxu0 %v5323
      %5342 = vmatprep.subr.bf16.mxu0 0
      %5343 = vmatpush1.bf16.msra.mxu0 0
      %5344 = vmatprep.subr.bf16.mxu0 0
      %5345 = vmatpush1.bf16.msra.mxu0 0
      %5346 = vmatprep.subr.bf16.mxu0 0
      %5347 = vmatpush1.bf16.msra.mxu0 0
      %5348 = vmatprep.subr.bf16.mxu0 0
      %5349 = vmatpush1.bf16.msra.mxu0 0
      %5350 = vmatprep.subr.bf16.mxu0 0
      %5351 = vmatpush1.bf16.msra.mxu0 0
      %5352 = vmatprep.subr.bf16.mxu0 0
      %5353 = vmatpush1.bf16.msra.mxu0 0
      %5354 = vmatprep.subr.bf16.mxu0 0
      %5355 = vmatpush1.bf16.msra.mxu0 0
      %5356 = vmatprep.subr.bf16.mxu0 0
      %5357 = vmatpush1.bf16.msra.mxu0 0
      %5358 = vmatprep.subr.bf16.mxu0 0
      %5359 = vmatpush1.bf16.msra.mxu0 0
      %5360 = vmatprep.subr.bf16.mxu0 0
      %5361 = vmatpush1.bf16.msra.mxu0 0
      %5362 = vmatprep.subr.bf16.mxu0 0
      %5363 = vmatpush1.bf16.msra.mxu0 0
      %5364 = vmatprep.subr.bf16.mxu0 0
      %5365 = vmatpush1.bf16.msra.mxu0 0
      %5366 = vmatprep.subr.bf16.mxu0 0
      %5367 = vmatpush1.bf16.msra.mxu0 0
      %5368 = vmatprep.subr.bf16.mxu0 0
      %5369 = vmatpush1.bf16.msra.mxu0 0
      %5370 = vmatprep.subr.bf16.mxu0 0
      %5371 = vmatpush1.bf16.msra.mxu0 0
      %5372 = vmatprep.mubr.bf16.mxu0 0
      %5373 = vmatmul.mubr.bf16.gmra.mrb[0].mxu0 %v5320
      %v5374 = vpop.f32.mrb[0].mxu0
      %v5375 = vadd.f32 0.0, %v5374
      %v5376 = vpop.f32.mrb[0].mxu0
      %v5377 = vadd.f32 0.0, %v5376
      %v5378 = vpop.f32.mrb[0].mxu0
      %v5379 = vpop.f32.mrb[0].mxu0
      %5380 = vdwg.mxu0
      %5381 = vmatprep.subr.bf16.mxu0 %v5332
      %5382 = vmatpush1.bf16.msra.mxu0 %v5329
      %5383 = vmatprep.subr.bf16.mxu0 0
      %5384 = vmatpush1.bf16.msra.mxu0 0
      %5385 = vmatprep.subr.bf16.mxu0 0
      %5386 = vmatpush1.bf16.msra.mxu0 0
      %5387 = vmatprep.subr.bf16.mxu0 0
      %5388 = vmatpush1.bf16.msra.mxu0 0
      %5389 = vmatprep.subr.bf16.mxu0 0
      %5390 = vmatpush1.bf16.msra.mxu0 0
      %5391 = vmatprep.subr.bf16.mxu0 0
      %5392 = vmatpush1.bf16.msra.mxu0 0
      %5393 = vmatprep.subr.bf16.mxu0 0
      %5394 = vmatpush1.bf16.msra.mxu0 0
      %5395 = vmatprep.subr.bf16.mxu0 0
      %5396 = vmatpush1.bf16.msra.mxu0 0
      %5397 = vmatprep.subr.bf16.mxu0 0
      %5398 = vmatpush1.bf16.msra.mxu0 0
      %5399 = vmatprep.subr.bf16.mxu0 0
      %5400 = vmatpush1.bf16.msra.mxu0 0
      %5401 = vmatprep.subr.bf16.mxu0 0
      %5402 = vmatpush1.bf16.msra.mxu0 0
      %5403 = vmatprep.subr.bf16.mxu0 0
      %5404 = vmatpush1.bf16.msra.mxu0 0
      %5405 = vmatprep.subr.bf16.mxu0 0
      %5406 = vmatpush1.bf16.msra.mxu0 0
      %5407 = vmatprep.subr.bf16.mxu0 0
      %5408 = vmatpush1.bf16.msra.mxu0 0
      %5409 = vmatprep.subr.bf16.mxu0 0
      %5410 = vmatpush1.bf16.msra.mxu0 0
      %5411 = vmatprep.subr.bf16.mxu0 0
      %5412 = vmatpush1.bf16.msra.mxu0 0
      %5413 = vmatprep.mubr.bf16.mxu0 0
      %5414 = vmatmul.mubr.bf16.gmra.mrb[0].mxu0 %v5320
      %v5415 = vpop.f32.mrb[0].mxu0
      %v5416 = vadd.f32 0.0, %v5415
      %v5417 = vpop.f32.mrb[0].mxu0
      %v5418 = vadd.f32 0.0, %v5417
      %v5419 = vpop.f32.mrb[0].mxu0
      %v5420 = vpop.f32.mrb[0].mxu0
      %5421 = vdwg.mxu0
      %5422 = vmatprep.subr.bf16.mxu0 %v5338
      %5423 = vmatpush1.bf16.msra.mxu0 %v5335
      %5424 = vmatprep.subr.bf16.mxu0 0
      %5425 = vmatpush1.bf16.msra.mxu0 0
      %5426 = vmatprep.subr.bf16.mxu0 0
      %5427 = vmatpush1.bf16.msra.mxu0 0
      %5428 = vmatprep.subr.bf16.mxu0 0
      %5429 = vmatpush1.bf16.msra.mxu0 0
      %5430 = vmatprep.subr.bf16.mxu0 0
      %5431 = vmatpush1.bf16.msra.mxu0 0
      %5432 = vmatprep.subr.bf16.mxu0 0
      %5433 = vmatpush1.bf16.msra.mxu0 0
      %5434 = vmatprep.subr.bf16.mxu0 0
      %5435 = vmatpush1.bf16.msra.mxu0 0
      %5436 = vmatprep.subr.bf16.mxu0 0
      %5437 = vmatpush1.bf16.msra.mxu0 0
      %5438 = vmatprep.subr.bf16.mxu0 0
      %5439 = vmatpush1.bf16.msra.mxu0 0
      %5440 = vmatprep.subr.bf16.mxu0 0
      %5441 = vmatpush1.bf16.msra.mxu0 0
      %5442 = vmatprep.subr.bf16.mxu0 0
      %5443 = vmatpush1.bf16.msra.mxu0 0
      %5444 = vmatprep.subr.bf16.mxu0 0
      %5445 = vmatpush1.bf16.msra.mxu0 0
      %5446 = vmatprep.subr.bf16.mxu0 0
      %5447 = vmatpush1.bf16.msra.mxu0 0
      %5448 = vmatprep.subr.bf16.mxu0 0
      %5449 = vmatpush1.bf16.msra.mxu0 0
      %5450 = vmatprep.subr.bf16.mxu0 0
      %5451 = vmatpush1.bf16.msra.mxu0 0
      %5452 = vmatprep.subr.bf16.mxu0 0
      %5453 = vmatpush1.bf16.msra.mxu0 0
      %5454 = vmatprep.mubr.bf16.mxu0 0
      %5455 = vmatmul.mubr.bf16.gmra.mrb[0].mxu0 %v5320
      %v5456 = vpop.f32.mrb[0].mxu0
      %v5457 = vadd.f32 0.0, %v5456
      %v5458 = vpop.f32.mrb[0].mxu0
      %v5459 = vadd.f32 0.0, %v5458
      %v5460 = vpop.f32.mrb[0].mxu0
      %v5461 = vpop.f32.mrb[0].mxu0
      %5462 = vdwg.mxu0
      %v5463 = vadd.f32 %v5292, %v5375
      %v5464 = vadd.f32 %v5293, %v5377
      %v5465 = vadd.f32 %v5294, %v5416
      %v5466 = vadd.f32 %v5295, %v5418
      %v5467 = vadd.f32 %v5296, %v5457
      %v5468 = vadd.f32 %v5297, %v5459
      %v5470 = vsel %vm2465, %v4475, 0
      %v5473 = vsel %vm2469, %v4468, 0
      %5475 = vmatprep.subr.bf16.mxu0 %v4655
      %5476 = vmatpush1.bf16.msra.mxu0 %v4652
      %5477 = vmatprep.subr.bf16.mxu0 0
      %5478 = vmatpush1.bf16.msra.mxu0 0
      %5479 = vmatprep.subr.bf16.mxu0 0
      %5480 = vmatpush1.bf16.msra.mxu0 0
      %5481 = vmatprep.subr.bf16.mxu0 0
      %5482 = vmatpush1.bf16.msra.mxu0 0
      %5483 = vmatprep.subr.bf16.mxu0 0
      %5484 = vmatpush1.bf16.msra.mxu0 0
      %5485 = vmatprep.subr.bf16.mxu0 0
      %5486 = vmatpush1.bf16.msra.mxu0 0
      %5487 = vmatprep.subr.bf16.mxu0 0
      %5488 = vmatpush1.bf16.msra.mxu0 0
      %5489 = vmatprep.subr.bf16.mxu0 0
      %5490 = vmatpush1.bf16.msra.mxu0 0
      %5491 = vmatprep.subr.bf16.mxu0 0
      %5492 = vmatpush1.bf16.msra.mxu0 0
      %5493 = vmatprep.subr.bf16.mxu0 0
      %5494 = vmatpush1.bf16.msra.mxu0 0
      %5495 = vmatprep.subr.bf16.mxu0 0
      %5496 = vmatpush1.bf16.msra.mxu0 0
      %5497 = vmatprep.subr.bf16.mxu0 0
      %5498 = vmatpush1.bf16.msra.mxu0 0
      %5499 = vmatprep.subr.bf16.mxu0 0
      %5500 = vmatpush1.bf16.msra.mxu0 0
      %5501 = vmatprep.subr.bf16.mxu0 0
      %5502 = vmatpush1.bf16.msra.mxu0 0
      %5503 = vmatprep.subr.bf16.mxu0 0
      %5504 = vmatpush1.bf16.msra.mxu0 0
      %5505 = vmatprep.subr.bf16.mxu0 0
      %5506 = vmatpush1.bf16.msra.mxu0 0
      %5507 = vmatprep.mubr.bf16.mxu0 0
      %5508 = vmatmul.mubr.bf16.gmra.mrb[0].mxu0 %v5470
      %v5509 = vpop.f32.mrb[0].mxu0
      %v5510 = vadd.f32 0.0, %v5509
      %v5511 = vpop.f32.mrb[0].mxu0
      %v5512 = vadd.f32 0.0, %v5511
      %v5513 = vpop.f32.mrb[0].mxu0
      %v5514 = vpop.f32.mrb[0].mxu0
      %5515 = vdwg.mxu0
      %5516 = vmatprep.subr.bf16.mxu0 %v4661
      %5517 = vmatpush1.bf16.msra.mxu0 %v4658
      %5518 = vmatprep.subr.bf16.mxu0 0
      %5519 = vmatpush1.bf16.msra.mxu0 0
      %5520 = vmatprep.subr.bf16.mxu0 0
      %5521 = vmatpush1.bf16.msra.mxu0 0
      %5522 = vmatprep.subr.bf16.mxu0 0
      %5523 = vmatpush1.bf16.msra.mxu0 0
      %5524 = vmatprep.subr.bf16.mxu0 0
      %5525 = vmatpush1.bf16.msra.mxu0 0
      %5526 = vmatprep.subr.bf16.mxu0 0
      %5527 = vmatpush1.bf16.msra.mxu0 0
      %5528 = vmatprep.subr.bf16.mxu0 0
      %5529 = vmatpush1.bf16.msra.mxu0 0
      %5530 = vmatprep.subr.bf16.mxu0 0
      %5531 = vmatpush1.bf16.msra.mxu0 0
      %5532 = vmatprep.subr.bf16.mxu0 0
      %5533 = vmatpush1.bf16.msra.mxu0 0
      %5534 = vmatprep.subr.bf16.mxu0 0
      %5535 = vmatpush1.bf16.msra.mxu0 0
      %5536 = vmatprep.subr.bf16.mxu0 0
      %5537 = vmatpush1.bf16.msra.mxu0 0
      %5538 = vmatprep.subr.bf16.mxu0 0
      %5539 = vmatpush1.bf16.msra.mxu0 0
      %5540 = vmatprep.subr.bf16.mxu0 0
      %5541 = vmatpush1.bf16.msra.mxu0 0
      %5542 = vmatprep.subr.bf16.mxu0 0
      %5543 = vmatpush1.bf16.msra.mxu0 0
      %5544 = vmatprep.subr.bf16.mxu0 0
      %5545 = vmatpush1.bf16.msra.mxu0 0
      %5546 = vmatprep.subr.bf16.mxu0 0
      %5547 = vmatpush1.bf16.msra.mxu0 0
      %5548 = vmatprep.mubr.bf16.mxu0 0
      %5549 = vmatmul.mubr.bf16.gmra.mrb[0].mxu0 %v5470
      %v5550 = vpop.f32.mrb[0].mxu0
      %v5551 = vadd.f32 0.0, %v5550
      %v5552 = vpop.f32.mrb[0].mxu0
      %v5553 = vadd.f32 0.0, %v5552
      %v5554 = vpop.f32.mrb[0].mxu0
      %v5555 = vpop.f32.mrb[0].mxu0
      %5556 = vdwg.mxu0
      %5557 = vmatprep.subr.bf16.mxu0 %v5473
      %5558 = vmatpush1.bf16.msra.mxu0 %v4664
      %5559 = vmatprep.subr.bf16.mxu0 0
      %5560 = vmatpush1.bf16.msra.mxu0 0
      %5561 = vmatprep.subr.bf16.mxu0 0
      %5562 = vmatpush1.bf16.msra.mxu0 0
      %5563 = vmatprep.subr.bf16.mxu0 0
      %5564 = vmatpush1.bf16.msra.mxu0 0
      %5565 = vmatprep.subr.bf16.mxu0 0
      %5566 = vmatpush1.bf16.msra.mxu0 0
      %5567 = vmatprep.subr.bf16.mxu0 0
      %5568 = vmatpush1.bf16.msra.mxu0 0
      %5569 = vmatprep.subr.bf16.mxu0 0
      %5570 = vmatpush1.bf16.msra.mxu0 0
      %5571 = vmatprep.subr.bf16.mxu0 0
      %5572 = vmatpush1.bf16.msra.mxu0 0
      %5573 = vmatprep.subr.bf16.mxu0 0
      %5574 = vmatpush1.bf16.msra.mxu0 0
      %5575 = vmatprep.subr.bf16.mxu0 0
      %5576 = vmatpush1.bf16.msra.mxu0 0
      %5577 = vmatprep.subr.bf16.mxu0 0
      %5578 = vmatpush1.bf16.msra.mxu0 0
      %5579 = vmatprep.subr.bf16.mxu0 0
      %5580 = vmatpush1.bf16.msra.mxu0 0
      %5581 = vmatprep.subr.bf16.mxu0 0
      %5582 = vmatpush1.bf16.msra.mxu0 0
      %5583 = vmatprep.subr.bf16.mxu0 0
      %5584 = vmatpush1.bf16.msra.mxu0 0
      %5585 = vmatprep.subr.bf16.mxu0 0
      %5586 = vmatpush1.bf16.msra.mxu0 0
      %5587 = vmatprep.subr.bf16.mxu0 0
      %5588 = vmatpush1.bf16.msra.mxu0 0
      %5589 = vmatprep.mubr.bf16.mxu0 0
      %5590 = vmatmul.mubr.bf16.gmra.mrb[0].mxu0 %v5470
      %v5591 = vpop.f32.mrb[0].mxu0
      %v5592 = vadd.f32 0.0, %v5591
      %v5593 = vpop.f32.mrb[0].mxu0
      %v5594 = vadd.f32 0.0, %v5593
      %v5595 = vpop.f32.mrb[0].mxu0
      %v5596 = vpop.f32.mrb[0].mxu0
      %5597 = vdwg.mxu0
      %v5598 = vadd.f32 %v5463, %v5510
      %v5599 = vadd.f32 %v5464, %v5512
      %v5600 = vadd.f32 %v5465, %v5551
      %v5601 = vadd.f32 %v5466, %v5553
      %v5602 = vadd.f32 %v5467, %v5592
      %v5603 = vadd.f32 %v5468, %v5594
      %5604 = vrot.lane.b32.xlu0 %v4468, 126
      %v5605 = vpop.permute.xlu0 %5604
      %v5606 = vsel %vm854, %v4495, %v5605
      %v5608 = vsel %vm2465, %v4476, 0
      %v5611 = vsel %vm2469, %v5606, 0
      %v5614 = vsel %vm2469, %v5605, 0
      %5616 = vmatprep.subr.bf16.mxu0 %v4511
      %5617 = vmatpush1.bf16.msra.mxu0 %v4508
      %5618 = vmatprep.subr.bf16.mxu0 0
      %5619 = vmatpush1.bf16.msra.mxu0 0
      %5620 = vmatprep.subr.bf16.mxu0 0
      %5621 = vmatpush1.bf16.msra.mxu0 0
      %5622 = vmatprep.subr.bf16.mxu0 0
      %5623 = vmatpush1.bf16.msra.mxu0 0
      %5624 = vmatprep.subr.bf16.mxu0 0
      %5625 = vmatpush1.bf16.msra.mxu0 0
      %5626 = vmatprep.subr.bf16.mxu0 0
      %5627 = vmatpush1.bf16.msra.mxu0 0
      %5628 = vmatprep.subr.bf16.mxu0 0
      %5629 = vmatpush1.bf16.msra.mxu0 0
      %5630 = vmatprep.subr.bf16.mxu0 0
      %5631 = vmatpush1.bf16.msra.mxu0 0
      %5632 = vmatprep.subr.bf16.mxu0 0
      %5633 = vmatpush1.bf16.msra.mxu0 0
      %5634 = vmatprep.subr.bf16.mxu0 0
      %5635 = vmatpush1.bf16.msra.mxu0 0
      %5636 = vmatprep.subr.bf16.mxu0 0
      %5637 = vmatpush1.bf16.msra.mxu0 0
      %5638 = vmatprep.subr.bf16.mxu0 0
      %5639 = vmatpush1.bf16.msra.mxu0 0
      %5640 = vmatprep.subr.bf16.mxu0 0
      %5641 = vmatpush1.bf16.msra.mxu0 0
      %5642 = vmatprep.subr.bf16.mxu0 0
      %5643 = vmatpush1.bf16.msra.mxu0 0
      %5644 = vmatprep.subr.bf16.mxu0 0
      %5645 = vmatpush1.bf16.msra.mxu0 0
      %5646 = vmatprep.subr.bf16.mxu0 0
      %5647 = vmatpush1.bf16.msra.mxu0 0
      %5648 = vmatprep.mubr.bf16.mxu0 0
      %5649 = vmatmul.mubr.bf16.gmra.mrb[0].mxu0 %v5608
      %v5650 = vpop.f32.mrb[0].mxu0
      %v5651 = vadd.f32 0.0, %v5650
      %v5652 = vpop.f32.mrb[0].mxu0
      %v5653 = vadd.f32 0.0, %v5652
      %v5654 = vpop.f32.mrb[0].mxu0
      %v5655 = vpop.f32.mrb[0].mxu0
      %5656 = vdwg.mxu0
      %5657 = vmatprep.subr.bf16.mxu0 %v4517
      %5658 = vmatpush1.bf16.msra.mxu0 %v4514
      %5659 = vmatprep.subr.bf16.mxu0 0
      %5660 = vmatpush1.bf16.msra.mxu0 0
      %5661 = vmatprep.subr.bf16.mxu0 0
      %5662 = vmatpush1.bf16.msra.mxu0 0
      %5663 = vmatprep.subr.bf16.mxu0 0
      %5664 = vmatpush1.bf16.msra.mxu0 0
      %5665 = vmatprep.subr.bf16.mxu0 0
      %5666 = vmatpush1.bf16.msra.mxu0 0
      %5667 = vmatprep.subr.bf16.mxu0 0
      %5668 = vmatpush1.bf16.msra.mxu0 0
      %5669 = vmatprep.subr.bf16.mxu0 0
      %5670 = vmatpush1.bf16.msra.mxu0 0
      %5671 = vmatprep.subr.bf16.mxu0 0
      %5672 = vmatpush1.bf16.msra.mxu0 0
      %5673 = vmatprep.subr.bf16.mxu0 0
      %5674 = vmatpush1.bf16.msra.mxu0 0
      %5675 = vmatprep.subr.bf16.mxu0 0
      %5676 = vmatpush1.bf16.msra.mxu0 0
      %5677 = vmatprep.subr.bf16.mxu0 0
      %5678 = vmatpush1.bf16.msra.mxu0 0
      %5679 = vmatprep.subr.bf16.mxu0 0
      %5680 = vmatpush1.bf16.msra.mxu0 0
      %5681 = vmatprep.subr.bf16.mxu0 0
      %5682 = vmatpush1.bf16.msra.mxu0 0
      %5683 = vmatprep.subr.bf16.mxu0 0
      %5684 = vmatpush1.bf16.msra.mxu0 0
      %5685 = vmatprep.subr.bf16.mxu0 0
      %5686 = vmatpush1.bf16.msra.mxu0 0
      %5687 = vmatprep.subr.bf16.mxu0 0
      %5688 = vmatpush1.bf16.msra.mxu0 0
      %5689 = vmatprep.mubr.bf16.mxu0 0
      %5690 = vmatmul.mubr.bf16.gmra.mrb[0].mxu0 %v5608
      %v5691 = vpop.f32.mrb[0].mxu0
      %v5692 = vadd.f32 0.0, %v5691
      %v5693 = vpop.f32.mrb[0].mxu0
      %v5694 = vadd.f32 0.0, %v5693
      %v5695 = vpop.f32.mrb[0].mxu0
      %v5696 = vpop.f32.mrb[0].mxu0
      %5697 = vdwg.mxu0
      %5698 = vmatprep.subr.bf16.mxu0 %v5614
      %5699 = vmatpush1.bf16.msra.mxu0 %v5611
      %5700 = vmatprep.subr.bf16.mxu0 0
      %5701 = vmatpush1.bf16.msra.mxu0 0
      %5702 = vmatprep.subr.bf16.mxu0 0
      %5703 = vmatpush1.bf16.msra.mxu0 0
      %5704 = vmatprep.subr.bf16.mxu0 0
      %5705 = vmatpush1.bf16.msra.mxu0 0
      %5706 = vmatprep.subr.bf16.mxu0 0
      %5707 = vmatpush1.bf16.msra.mxu0 0
      %5708 = vmatprep.subr.bf16.mxu0 0
      %5709 = vmatpush1.bf16.msra.mxu0 0
      %5710 = vmatprep.subr.bf16.mxu0 0
      %5711 = vmatpush1.bf16.msra.mxu0 0
      %5712 = vmatprep.subr.bf16.mxu0 0
      %5713 = vmatpush1.bf16.msra.mxu0 0
      %5714 = vmatprep.subr.bf16.mxu0 0
      %5715 = vmatpush1.bf16.msra.mxu0 0
      %5716 = vmatprep.subr.bf16.mxu0 0
      %5717 = vmatpush1.bf16.msra.mxu0 0
      %5718 = vmatprep.subr.bf16.mxu0 0
      %5719 = vmatpush1.bf16.msra.mxu0 0
      %5720 = vmatprep.subr.bf16.mxu0 0
      %5721 = vmatpush1.bf16.msra.mxu0 0
      %5722 = vmatprep.subr.bf16.mxu0 0
      %5723 = vmatpush1.bf16.msra.mxu0 0
      %5724 = vmatprep.subr.bf16.mxu0 0
      %5725 = vmatpush1.bf16.msra.mxu0 0
      %5726 = vmatprep.subr.bf16.mxu0 0
      %5727 = vmatpush1.bf16.msra.mxu0 0
      %5728 = vmatprep.subr.bf16.mxu0 0
      %5729 = vmatpush1.bf16.msra.mxu0 0
      %5730 = vmatprep.mubr.bf16.mxu0 0
      %5731 = vmatmul.mubr.bf16.gmra.mrb[0].mxu0 %v5608
      %v5732 = vpop.f32.mrb[0].mxu0
      %v5733 = vadd.f32 0.0, %v5732
      %v5734 = vpop.f32.mrb[0].mxu0
      %v5735 = vadd.f32 0.0, %v5734
      %v5736 = vpop.f32.mrb[0].mxu0
      %v5737 = vpop.f32.mrb[0].mxu0
      %5738 = vdwg.mxu0
      %v5739 = vadd.f32 %v5598, %v5651
      %v5740 = vadd.f32 %v5599, %v5653
      %v5741 = vadd.f32 %v5600, %v5692
      %v5742 = vadd.f32 %v5601, %v5694
      %v5743 = vadd.f32 %v5602, %v5733
      %v5744 = vadd.f32 %v5603, %v5735
      %5745 = vrot.lane.b32.xlu0 %v4468, 124
      %v5746 = vpop.permute.xlu0 %5745
      %v5747 = vsel %vm4801, %v4800, %v5746
      %v5749 = vsel %vm2465, %v4477, 0
      %v5752 = vsel %vm2469, %v5747, 0
      %v5755 = vsel %vm2469, %v5746, 0
      %5757 = vmatprep.subr.bf16.mxu0 %v4817
      %5758 = vmatpush1.bf16.msra.mxu0 %v4814
      %5759 = vmatprep.subr.bf16.mxu0 0
      %5760 = vmatpush1.bf16.msra.mxu0 0
      %5761 = vmatprep.subr.bf16.mxu0 0
      %5762 = vmatpush1.bf16.msra.mxu0 0
      %5763 = vmatprep.subr.bf16.mxu0 0
      %5764 = vmatpush1.bf16.msra.mxu0 0
      %5765 = vmatprep.subr.bf16.mxu0 0
      %5766 = vmatpush1.bf16.msra.mxu0 0
      %5767 = vmatprep.subr.bf16.mxu0 0
      %5768 = vmatpush1.bf16.msra.mxu0 0
      %5769 = vmatprep.subr.bf16.mxu0 0
      %5770 = vmatpush1.bf16.msra.mxu0 0
      %5771 = vmatprep.subr.bf16.mxu0 0
      %5772 = vmatpush1.bf16.msra.mxu0 0
      %5773 = vmatprep.subr.bf16.mxu0 0
      %5774 = vmatpush1.bf16.msra.mxu0 0
      %5775 = vmatprep.subr.bf16.mxu0 0
      %5776 = vmatpush1.bf16.msra.mxu0 0
      %5777 = vmatprep.subr.bf16.mxu0 0
      %5778 = vmatpush1.bf16.msra.mxu0 0
      %5779 = vmatprep.subr.bf16.mxu0 0
      %5780 = vmatpush1.bf16.msra.mxu0 0
      %5781 = vmatprep.subr.bf16.mxu0 0
      %5782 = vmatpush1.bf16.msra.mxu0 0
      %5783 = vmatprep.subr.bf16.mxu0 0
      %5784 = vmatpush1.bf16.msra.mxu0 0
      %5785 = vmatprep.subr.bf16.mxu0 0
      %5786 = vmatpush1.bf16.msra.mxu0 0
      %5787 = vmatprep.subr.bf16.mxu0 0
      %5788 = vmatpush1.bf16.msra.mxu0 0
      %5789 = vmatprep.mubr.bf16.mxu0 0
      %5790 = vmatmul.mubr.bf16.gmra.mrb[0].mxu0 %v5749
      %v5791 = vpop.f32.mrb[0].mxu0
      %v5792 = vadd.f32 0.0, %v5791
      %v5793 = vpop.f32.mrb[0].mxu0
      %v5794 = vadd.f32 0.0, %v5793
      %v5795 = vpop.f32.mrb[0].mxu0
      %v5796 = vpop.f32.mrb[0].mxu0
      %5797 = vdwg.mxu0
      %5798 = vmatprep.subr.bf16.mxu0 %v4823
      %5799 = vmatpush1.bf16.msra.mxu0 %v4820
      %5800 = vmatprep.subr.bf16.mxu0 0
      %5801 = vmatpush1.bf16.msra.mxu0 0
      %5802 = vmatprep.subr.bf16.mxu0 0
      %5803 = vmatpush1.bf16.msra.mxu0 0
      %5804 = vmatprep.subr.bf16.mxu0 0
      %5805 = vmatpush1.bf16.msra.mxu0 0
      %5806 = vmatprep.subr.bf16.mxu0 0
      %5807 = vmatpush1.bf16.msra.mxu0 0
      %5808 = vmatprep.subr.bf16.mxu0 0
      %5809 = vmatpush1.bf16.msra.mxu0 0
      %5810 = vmatprep.subr.bf16.mxu0 0
      %5811 = vmatpush1.bf16.msra.mxu0 0
      %5812 = vmatprep.subr.bf16.mxu0 0
      %5813 = vmatpush1.bf16.msra.mxu0 0
      %5814 = vmatprep.subr.bf16.mxu0 0
      %5815 = vmatpush1.bf16.msra.mxu0 0
      %5816 = vmatprep.subr.bf16.mxu0 0
      %5817 = vmatpush1.bf16.msra.mxu0 0
      %5818 = vmatprep.subr.bf16.mxu0 0
      %5819 = vmatpush1.bf16.msra.mxu0 0
      %5820 = vmatprep.subr.bf16.mxu0 0
      %5821 = vmatpush1.bf16.msra.mxu0 0
      %5822 = vmatprep.subr.bf16.mxu0 0
      %5823 = vmatpush1.bf16.msra.mxu0 0
      %5824 = vmatprep.subr.bf16.mxu0 0
      %5825 = vmatpush1.bf16.msra.mxu0 0
      %5826 = vmatprep.subr.bf16.mxu0 0
      %5827 = vmatpush1.bf16.msra.mxu0 0
      %5828 = vmatprep.subr.bf16.mxu0 0
      %5829 = vmatpush1.bf16.msra.mxu0 0
      %5830 = vmatprep.mubr.bf16.mxu0 0
      %5831 = vmatmul.mubr.bf16.gmra.mrb[0].mxu0 %v5749
      %v5832 = vpop.f32.mrb[0].mxu0
      %v5833 = vadd.f32 0.0, %v5832
      %v5834 = vpop.f32.mrb[0].mxu0
      %v5835 = vadd.f32 0.0, %v5834
      %v5836 = vpop.f32.mrb[0].mxu0
      %v5837 = vpop.f32.mrb[0].mxu0
      %5838 = vdwg.mxu0
      %5839 = vmatprep.subr.bf16.mxu0 %v5755
      %5840 = vmatpush1.bf16.msra.mxu0 %v5752
      %5841 = vmatprep.subr.bf16.mxu0 0
      %5842 = vmatpush1.bf16.msra.mxu0 0
      %5843 = vmatprep.subr.bf16.mxu0 0
      %5844 = vmatpush1.bf16.msra.mxu0 0
      %5845 = vmatprep.subr.bf16.mxu0 0
      %5846 = vmatpush1.bf16.msra.mxu0 0
      %5847 = vmatprep.subr.bf16.mxu0 0
      %5848 = vmatpush1.bf16.msra.mxu0 0
      %5849 = vmatprep.subr.bf16.mxu0 0
      %5850 = vmatpush1.bf16.msra.mxu0 0
      %5851 = vmatprep.subr.bf16.mxu0 0
      %5852 = vmatpush1.bf16.msra.mxu0 0
      %5853 = vmatprep.subr.bf16.mxu0 0
      %5854 = vmatpush1.bf16.msra.mxu0 0
      %5855 = vmatprep.subr.bf16.mxu0 0
      %5856 = vmatpush1.bf16.msra.mxu0 0
      %5857 = vmatprep.subr.bf16.mxu0 0
      %5858 = vmatpush1.bf16.msra.mxu0 0
      %5859 = vmatprep.subr.bf16.mxu0 0
      %5860 = vmatpush1.bf16.msra.mxu0 0
      %5861 = vmatprep.subr.bf16.mxu0 0
      %5862 = vmatpush1.bf16.msra.mxu0 0
      %5863 = vmatprep.subr.bf16.mxu0 0
      %5864 = vmatpush1.bf16.msra.mxu0 0
      %5865 = vmatprep.subr.bf16.mxu0 0
      %5866 = vmatpush1.bf16.msra.mxu0 0
      %5867 = vmatprep.subr.bf16.mxu0 0
      %5868 = vmatpush1.bf16.msra.mxu0 0
      %5869 = vmatprep.subr.bf16.mxu0 0
      %5870 = vmatpush1.bf16.msra.mxu0 0
      %5871 = vmatprep.mubr.bf16.mxu0 0
      %5872 = vmatmul.mubr.bf16.gmra.mrb[0].mxu0 %v5749
      %v5873 = vpop.f32.mrb[0].mxu0
      %v5874 = vadd.f32 0.0, %v5873
      %v5875 = vpop.f32.mrb[0].mxu0
      %v5876 = vadd.f32 0.0, %v5875
      %v5877 = vpop.f32.mrb[0].mxu0
      %v5878 = vpop.f32.mrb[0].mxu0
      %5879 = vdwg.mxu0
      %v5880 = vadd.f32 %v5739, %v5792
      %v5881 = vadd.f32 %v5740, %v5794
      %v5882 = vadd.f32 %v5741, %v5833
      %v5883 = vadd.f32 %v5742, %v5835
      %v5884 = vadd.f32 %v5743, %v5874
      %v5885 = vadd.f32 %v5744, %v5876
      %v5886 = vld [vmem:[%s6] sm:$0xff]
      %5888 = vset.pattern.permute.xlu0 0
      %5889 = vperm.xlu0 %5888, %v5886
      %v5890 = vpop.permute.xlu0 %5889
      %v5892 = vadd.f32 %v5880, %v5890
      %v5893 = vadd.f32 %v5881, %v5890
      %v5894 = vadd.f32 %v5882, %v5890
      %v5895 = vadd.f32 %v5883, %v5890
      %v5896 = vadd.f32 %v5884, %v5890
      %v5897 = vadd.f32 %v5885, %v5890
      %v5898 = vmax.f32 %v5892, 0.0
      %v5899 = vmax.f32 %v5893, 0.0
      %v5900 = vmax.f32 %v5894, 0.0
      %v5901 = vmax.f32 %v5895, 0.0
      %v5902 = vmax.f32 %v5896, 0.0
      %v5903 = vmax.f32 %v5897, 0.0
      %v5904 = vpack.c.bf16 %v5898, %v5898
      %v5905 = vpack.c.bf16 %v5899, %v5899
      %v5906 = vpack.c.bf16 %v5900, %v5900
      %v5907 = vpack.c.bf16 %v5901, %v5901
      %v5908 = vpack.c.bf16 %v5902, %v5902
      %v5909 = vpack.c.bf16 %v5903, %v5903
      %v5910 = vld [vmem:[%s7] sm:$0xf]
      %v5911 = vld [vmem:[%s7 + $0x4] sm:$0xf]
      %v5912 = vld [vmem:[%s7 + $0x8] sm:$0xf]
      %v5913 = vld [vmem:[%s7 + $0xc] sm:$0xf]
      %v5914 = vld [vmem:[%s7 + $0x10] sm:$0xf]
      %v5915 = vld [vmem:[%s7 + $0x14] sm:$0xf]
      %v5916 = vld [vmem:[%s7 + $0x18] sm:$0xf]
      %v5917 = vld [vmem:[%s7 + $0x1c] sm:$0xf]
      %v5918 = vld [vmem:[%s7 + $0x20] sm:$0xf]
      %5924 = vrot.lane.b32.xlu0 %v5904, 126
      %v5925 = vpop.permute.xlu0 %5924
      %5926 = vrot.lane.b32.xlu0 %v5905, 126
      %v5927 = vpop.permute.xlu0 %5926
      %5928 = vrot.lane.b32.xlu0 %v5906, 126
      %v5929 = vpop.permute.xlu0 %5928
      %5930 = vrot.lane.b32.xlu0 %v5907, 126
      %v5931 = vpop.permute.xlu0 %5930
      %5932 = vrot.lane.b32.xlu0 %v5908, 126
      %v5933 = vpop.permute.xlu0 %5932
      %v5934 = vsel %vm854, %v5925, %v5927
      %v5935 = vsel %vm854, %v5927, %v5929
      %v5936 = vsel %vm854, %v5929, %v5931
      %v5937 = vsel %vm854, %v5931, %v5933
      %v5939 = vsel %vm2465, %v5911, 0
      %v5942 = vsel %vm2469, %v5934, 0
      %v5945 = vsel %vm2469, %v5935, 0
      %v5948 = vsel %vm2469, %v5936, 0
      %v5951 = vsel %vm2469, %v5937, 0
      %v5954 = vsel %vm2469, %v5933, 0
      %5956 = vmatprep.subr.bf16.mxu0 %v5945
      %5957 = vmatpush1.bf16.msra.mxu0 %v5942
      %5958 = vmatprep.subr.bf16.mxu0 0
      %5959 = vmatpush1.bf16.msra.mxu0 0
      %5960 = vmatprep.subr.bf16.mxu0 0
      %5961 = vmatpush1.bf16.msra.mxu0 0
      %5962 = vmatprep.subr.bf16.mxu0 0
      %5963 = vmatpush1.bf16.msra.mxu0 0
      %5964 = vmatprep.subr.bf16.mxu0 0
      %5965 = vmatpush1.bf16.msra.mxu0 0
      %5966 = vmatprep.subr.bf16.mxu0 0
      %5967 = vmatpush1.bf16.msra.mxu0 0
      %5968 = vmatprep.subr.bf16.mxu0 0
      %5969 = vmatpush1.bf16.msra.mxu0 0
      %5970 = vmatprep.subr.bf16.mxu0 0
      %5971 = vmatpush1.bf16.msra.mxu0 0
      %5972 = vmatprep.subr.bf16.mxu0 0
      %5973 = vmatpush1.bf16.msra.mxu0 0
      %5974 = vmatprep.subr.bf16.mxu0 0
      %5975 = vmatpush1.bf16.msra.mxu0 0
      %5976 = vmatprep.subr.bf16.mxu0 0
      %5977 = vmatpush1.bf16.msra.mxu0 0
      %5978 = vmatprep.subr.bf16.mxu0 0
      %5979 = vmatpush1.bf16.msra.mxu0 0
      %5980 = vmatprep.subr.bf16.mxu0 0
      %5981 = vmatpush1.bf16.msra.mxu0 0
      %5982 = vmatprep.subr.bf16.mxu0 0
      %5983 = vmatpush1.bf16.msra.mxu0 0
      %5984 = vmatprep.subr.bf16.mxu0 0
      %5985 = vmatpush1.bf16.msra.mxu0 0
      %5986 = vmatprep.subr.bf16.mxu0 0
      %5987 = vmatpush1.bf16.msra.mxu0 0
      %5988 = vmatprep.mubr.bf16.mxu0 0
      %5989 = vmatmul.mubr.bf16.gmra.mrb[0].mxu0 %v5939
      %v5990 = vpop.f32.mrb[0].mxu0
      %v5991 = vadd.f32 0.0, %v5990
      %v5992 = vpop.f32.mrb[0].mxu0
      %v5993 = vadd.f32 0.0, %v5992
      %v5994 = vpop.f32.mrb[0].mxu0
      %v5995 = vpop.f32.mrb[0].mxu0
      %5996 = vdwg.mxu0
      %5997 = vmatprep.subr.bf16.mxu0 %v5951
      %5998 = vmatpush1.bf16.msra.mxu0 %v5948
      %5999 = vmatprep.subr.bf16.mxu0 0
      %6000 = vmatpush1.bf16.msra.mxu0 0
      %6001 = vmatprep.subr.bf16.mxu0 0
      %6002 = vmatpush1.bf16.msra.mxu0 0
      %6003 = vmatprep.subr.bf16.mxu0 0
      %6004 = vmatpush1.bf16.msra.mxu0 0
      %6005 = vmatprep.subr.bf16.mxu0 0
      %6006 = vmatpush1.bf16.msra.mxu0 0
      %6007 = vmatprep.subr.bf16.mxu0 0
      %6008 = vmatpush1.bf16.msra.mxu0 0
      %6009 = vmatprep.subr.bf16.mxu0 0
      %6010 = vmatpush1.bf16.msra.mxu0 0
      %6011 = vmatprep.subr.bf16.mxu0 0
      %6012 = vmatpush1.bf16.msra.mxu0 0
      %6013 = vmatprep.subr.bf16.mxu0 0
      %6014 = vmatpush1.bf16.msra.mxu0 0
      %6015 = vmatprep.subr.bf16.mxu0 0
      %6016 = vmatpush1.bf16.msra.mxu0 0
      %6017 = vmatprep.subr.bf16.mxu0 0
      %6018 = vmatpush1.bf16.msra.mxu0 0
      %6019 = vmatprep.subr.bf16.mxu0 0
      %6020 = vmatpush1.bf16.msra.mxu0 0
      %6021 = vmatprep.subr.bf16.mxu0 0
      %6022 = vmatpush1.bf16.msra.mxu0 0
      %6023 = vmatprep.subr.bf16.mxu0 0
      %6024 = vmatpush1.bf16.msra.mxu0 0
      %6025 = vmatprep.subr.bf16.mxu0 0
      %6026 = vmatpush1.bf16.msra.mxu0 0
      %6027 = vmatprep.subr.bf16.mxu0 0
      %6028 = vmatpush1.bf16.msra.mxu0 0
      %6029 = vmatprep.mubr.bf16.mxu0 0
      %6030 = vmatmul.mubr.bf16.gmra.mrb[0].mxu0 %v5939
      %v6031 = vpop.f32.mrb[0].mxu0
      %v6032 = vadd.f32 0.0, %v6031
      %v6033 = vpop.f32.mrb[0].mxu0
      %v6034 = vadd.f32 0.0, %v6033
      %v6035 = vpop.f32.mrb[0].mxu0
      %v6036 = vpop.f32.mrb[0].mxu0
      %6037 = vdwg.mxu0
      %6038 = vmatprep.subr.bf16.mxu0 0
      %6039 = vmatpush1.bf16.msra.mxu0 %v5954
      %6040 = vmatprep.subr.bf16.mxu0 0
      %6041 = vmatpush1.bf16.msra.mxu0 0
      %6042 = vmatprep.subr.bf16.mxu0 0
      %6043 = vmatpush1.bf16.msra.mxu0 0
      %6044 = vmatprep.subr.bf16.mxu0 0
      %6045 = vmatpush1.bf16.msra.mxu0 0
      %6046 = vmatprep.subr.bf16.mxu0 0
      %6047 = vmatpush1.bf16.msra.mxu0 0
      %6048 = vmatprep.subr.bf16.mxu0 0
      %6049 = vmatpush1.bf16.msra.mxu0 0
      %6050 = vmatprep.subr.bf16.mxu0 0
      %6051 = vmatpush1.bf16.msra.mxu0 0
      %6052 = vmatprep.subr.bf16.mxu0 0
      %6053 = vmatpush1.bf16.msra.mxu0 0
      %6054 = vmatprep.subr.bf16.mxu0 0
      %6055 = vmatpush1.bf16.msra.mxu0 0
      %6056 = vmatprep.subr.bf16.mxu0 0
      %6057 = vmatpush1.bf16.msra.mxu0 0
      %6058 = vmatprep.subr.bf16.mxu0 0
      %6059 = vmatpush1.bf16.msra.mxu0 0
      %6060 = vmatprep.subr.bf16.mxu0 0
      %6061 = vmatpush1.bf16.msra.mxu0 0
      %6062 = vmatprep.subr.bf16.mxu0 0
      %6063 = vmatpush1.bf16.msra.mxu0 0
      %6064 = vmatprep.subr.bf16.mxu0 0
      %6065 = vmatpush1.bf16.msra.mxu0 0
      %6066 = vmatprep.subr.bf16.mxu0 0
      %6067 = vmatpush1.bf16.msra.mxu0 0
      %6068 = vmatprep.subr.bf16.mxu0 0
      %6069 = vmatpush1.bf16.msra.mxu0 0
      %6070 = vmatprep.mubr.bf16.mxu0 0
      %6071 = vmatmul.mubr.bf16.gmra.mrb[0].mxu0 %v5939
      %v6072 = vpop.f32.mrb[0].mxu0
      %v6073 = vadd.f32 0.0, %v6072
      %v6074 = vpop.f32.mrb[0].mxu0
      %v6075 = vpop.f32.mrb[0].mxu0
      %v6076 = vpop.f32.mrb[0].mxu0
      %6077 = vdwg.mxu0
      %v6079 = vsel %vm2465, %v5910, 0
      %v6082 = vsel %vm2469, %v5904, 0
      %v6085 = vsel %vm2469, %v5905, 0
      %v6088 = vsel %vm2469, %v5906, 0
      %v6091 = vsel %vm2469, %v5907, 0
      %v6094 = vsel %vm2469, %v5908, 0
      %6096 = vmatprep.subr.bf16.mxu0 %v6085
      %6097 = vmatpush1.bf16.msra.mxu0 %v6082
      %6098 = vmatprep.subr.bf16.mxu0 0
      %6099 = vmatpush1.bf16.msra.mxu0 0
      %6100 = vmatprep.subr.bf16.mxu0 0
      %6101 = vmatpush1.bf16.msra.mxu0 0
      %6102 = vmatprep.subr.bf16.mxu0 0
      %6103 = vmatpush1.bf16.msra.mxu0 0
      %6104 = vmatprep.subr.bf16.mxu0 0
      %6105 = vmatpush1.bf16.msra.mxu0 0
      %6106 = vmatprep.subr.bf16.mxu0 0
      %6107 = vmatpush1.bf16.msra.mxu0 0
      %6108 = vmatprep.subr.bf16.mxu0 0
      %6109 = vmatpush1.bf16.msra.mxu0 0
      %6110 = vmatprep.subr.bf16.mxu0 0
      %6111 = vmatpush1.bf16.msra.mxu0 0
      %6112 = vmatprep.subr.bf16.mxu0 0
      %6113 = vmatpush1.bf16.msra.mxu0 0
      %6114 = vmatprep.subr.bf16.mxu0 0
      %6115 = vmatpush1.bf16.msra.mxu0 0
      %6116 = vmatprep.subr.bf16.mxu0 0
      %6117 = vmatpush1.bf16.msra.mxu0 0
      %6118 = vmatprep.subr.bf16.mxu0 0
      %6119 = vmatpush1.bf16.msra.mxu0 0
      %6120 = vmatprep.subr.bf16.mxu0 0
      %6121 = vmatpush1.bf16.msra.mxu0 0
      %6122 = vmatprep.subr.bf16.mxu0 0
      %6123 = vmatpush1.bf16.msra.mxu0 0
      %6124 = vmatprep.subr.bf16.mxu0 0
      %6125 = vmatpush1.bf16.msra.mxu0 0
      %6126 = vmatprep.subr.bf16.mxu0 0
      %6127 = vmatpush1.bf16.msra.mxu0 0
      %6128 = vmatprep.mubr.bf16.mxu0 0
      %6129 = vmatmul.mubr.bf16.gmra.mrb[0].mxu0 %v6079
      %v6130 = vpop.f32.mrb[0].mxu0
      %v6131 = vadd.f32 %v5991, %v6130
      %v6132 = vpop.f32.mrb[0].mxu0
      %v6133 = vadd.f32 %v5993, %v6132
      %v6134 = vpop.f32.mrb[0].mxu0
      %v6135 = vpop.f32.mrb[0].mxu0
      %6136 = vdwg.mxu0
      %6137 = vmatprep.subr.bf16.mxu0 %v6091
      %6138 = vmatpush1.bf16.msra.mxu0 %v6088
      %6139 = vmatprep.subr.bf16.mxu0 0
      %6140 = vmatpush1.bf16.msra.mxu0 0
      %6141 = vmatprep.subr.bf16.mxu0 0
      %6142 = vmatpush1.bf16.msra.mxu0 0
      %6143 = vmatprep.subr.bf16.mxu0 0
      %6144 = vmatpush1.bf16.msra.mxu0 0
      %6145 = vmatprep.subr.bf16.mxu0 0
      %6146 = vmatpush1.bf16.msra.mxu0 0
      %6147 = vmatprep.subr.bf16.mxu0 0
      %6148 = vmatpush1.bf16.msra.mxu0 0
      %6149 = vmatprep.subr.bf16.mxu0 0
      %6150 = vmatpush1.bf16.msra.mxu0 0
      %6151 = vmatprep.subr.bf16.mxu0 0
      %6152 = vmatpush1.bf16.msra.mxu0 0
      %6153 = vmatprep.subr.bf16.mxu0 0
      %6154 = vmatpush1.bf16.msra.mxu0 0
      %6155 = vmatprep.subr.bf16.mxu0 0
      %6156 = vmatpush1.bf16.msra.mxu0 0
      %6157 = vmatprep.subr.bf16.mxu0 0
      %6158 = vmatpush1.bf16.msra.mxu0 0
      %6159 = vmatprep.subr.bf16.mxu0 0
      %6160 = vmatpush1.bf16.msra.mxu0 0
      %6161 = vmatprep.subr.bf16.mxu0 0
      %6162 = vmatpush1.bf16.msra.mxu0 0
      %6163 = vmatprep.subr.bf16.mxu0 0
      %6164 = vmatpush1.bf16.msra.mxu0 0
      %6165 = vmatprep.subr.bf16.mxu0 0
      %6166 = vmatpush1.bf16.msra.mxu0 0
      %6167 = vmatprep.subr.bf16.mxu0 0
      %6168 = vmatpush1.bf16.msra.mxu0 0
      %6169 = vmatprep.mubr.bf16.mxu0 0
      %6170 = vmatmul.mubr.bf16.gmra.mrb[0].mxu0 %v6079
      %v6171 = vpop.f32.mrb[0].mxu0
      %v6172 = vadd.f32 %v6032, %v6171
      %v6173 = vpop.f32.mrb[0].mxu0
      %v6174 = vadd.f32 %v6034, %v6173
      %v6175 = vpop.f32.mrb[0].mxu0
      %v6176 = vpop.f32.mrb[0].mxu0
      %6177 = vdwg.mxu0
      %6178 = vmatprep.subr.bf16.mxu0 0
      %6179 = vmatpush1.bf16.msra.mxu0 %v6094
      %6180 = vmatprep.subr.bf16.mxu0 0
      %6181 = vmatpush1.bf16.msra.mxu0 0
      %6182 = vmatprep.subr.bf16.mxu0 0
      %6183 = vmatpush1.bf16.msra.mxu0 0
      %6184 = vmatprep.subr.bf16.mxu0 0
      %6185 = vmatpush1.bf16.msra.mxu0 0
      %6186 = vmatprep.subr.bf16.mxu0 0
      %6187 = vmatpush1.bf16.msra.mxu0 0
      %6188 = vmatprep.subr.bf16.mxu0 0
      %6189 = vmatpush1.bf16.msra.mxu0 0
      %6190 = vmatprep.subr.bf16.mxu0 0
      %6191 = vmatpush1.bf16.msra.mxu0 0
      %6192 = vmatprep.subr.bf16.mxu0 0
      %6193 = vmatpush1.bf16.msra.mxu0 0
      %6194 = vmatprep.subr.bf16.mxu0 0
      %6195 = vmatpush1.bf16.msra.mxu0 0
      %6196 = vmatprep.subr.bf16.mxu0 0
      %6197 = vmatpush1.bf16.msra.mxu0 0
      %6198 = vmatprep.subr.bf16.mxu0 0
      %6199 = vmatpush1.bf16.msra.mxu0 0
      %6200 = vmatprep.subr.bf16.mxu0 0
      %6201 = vmatpush1.bf16.msra.mxu0 0
      %6202 = vmatprep.subr.bf16.mxu0 0
      %6203 = vmatpush1.bf16.msra.mxu0 0
      %6204 = vmatprep.subr.bf16.mxu0 0
      %6205 = vmatpush1.bf16.msra.mxu0 0
      %6206 = vmatprep.subr.bf16.mxu0 0
      %6207 = vmatpush1.bf16.msra.mxu0 0
      %6208 = vmatprep.subr.bf16.mxu0 0
      %6209 = vmatpush1.bf16.msra.mxu0 0
      %6210 = vmatprep.mubr.bf16.mxu0 0
      %6211 = vmatmul.mubr.bf16.gmra.mrb[0].mxu0 %v6079
      %v6212 = vpop.f32.mrb[0].mxu0
      %v6213 = vadd.f32 %v6073, %v6212
      %v6214 = vpop.f32.mrb[0].mxu0
      %v6215 = vpop.f32.mrb[0].mxu0
      %v6216 = vpop.f32.mrb[0].mxu0
      %6217 = vdwg.mxu0
      %6218 = vrot.lane.b32.xlu0 %v5904, 124
      %v6219 = vpop.permute.xlu0 %6218
      %6220 = vrot.lane.b32.xlu0 %v5905, 124
      %v6221 = vpop.permute.xlu0 %6220
      %6222 = vrot.lane.b32.xlu0 %v5906, 124
      %v6223 = vpop.permute.xlu0 %6222
      %6224 = vrot.lane.b32.xlu0 %v5907, 124
      %v6225 = vpop.permute.xlu0 %6224
      %6226 = vrot.lane.b32.xlu0 %v5908, 124
      %v6227 = vpop.permute.xlu0 %6226
      %v6228 = vsel %vm4801, %v6219, %v6221
      %v6229 = vsel %vm4801, %v6221, %v6223
      %v6230 = vsel %vm4801, %v6223, %v6225
      %v6231 = vsel %vm4801, %v6225, %v6227
      %v6233 = vsel %vm2465, %v5912, 0
      %v6236 = vsel %vm2469, %v6228, 0
      %v6239 = vsel %vm2469, %v6229, 0
      %v6242 = vsel %vm2469, %v6230, 0
      %v6245 = vsel %vm2469, %v6231, 0
      %v6248 = vsel %vm2469, %v6227, 0
      %6250 = vmatprep.subr.bf16.mxu0 %v6239
      %6251 = vmatpush1.bf16.msra.mxu0 %v6236
      %6252 = vmatprep.subr.bf16.mxu0 0
      %6253 = vmatpush1.bf16.msra.mxu0 0
      %6254 = vmatprep.subr.bf16.mxu0 0
      %6255 = vmatpush1.bf16.msra.mxu0 0
      %6256 = vmatprep.subr.bf16.mxu0 0
      %6257 = vmatpush1.bf16.msra.mxu0 0
      %6258 = vmatprep.subr.bf16.mxu0 0
      %6259 = vmatpush1.bf16.msra.mxu0 0
      %6260 = vmatprep.subr.bf16.mxu0 0
      %6261 = vmatpush1.bf16.msra.mxu0 0
      %6262 = vmatprep.subr.bf16.mxu0 0
      %6263 = vmatpush1.bf16.msra.mxu0 0
      %6264 = vmatprep.subr.bf16.mxu0 0
      %6265 = vmatpush1.bf16.msra.mxu0 0
      %6266 = vmatprep.subr.bf16.mxu0 0
      %6267 = vmatpush1.bf16.msra.mxu0 0
      %6268 = vmatprep.subr.bf16.mxu0 0
      %6269 = vmatpush1.bf16.msra.mxu0 0
      %6270 = vmatprep.subr.bf16.mxu0 0
      %6271 = vmatpush1.bf16.msra.mxu0 0
      %6272 = vmatprep.subr.bf16.mxu0 0
      %6273 = vmatpush1.bf16.msra.mxu0 0
      %6274 = vmatprep.subr.bf16.mxu0 0
      %6275 = vmatpush1.bf16.msra.mxu0 0
      %6276 = vmatprep.subr.bf16.mxu0 0
      %6277 = vmatpush1.bf16.msra.mxu0 0
      %6278 = vmatprep.subr.bf16.mxu0 0
      %6279 = vmatpush1.bf16.msra.mxu0 0
      %6280 = vmatprep.subr.bf16.mxu0 0
      %6281 = vmatpush1.bf16.msra.mxu0 0
      %6282 = vmatprep.mubr.bf16.mxu0 0
      %6283 = vmatmul.mubr.bf16.gmra.mrb[0].mxu0 %v6233
      %v6284 = vpop.f32.mrb[0].mxu0
      %v6285 = vadd.f32 0.0, %v6284
      %v6286 = vpop.f32.mrb[0].mxu0
      %v6287 = vadd.f32 0.0, %v6286
      %v6288 = vpop.f32.mrb[0].mxu0
      %v6289 = vpop.f32.mrb[0].mxu0
      %6290 = vdwg.mxu0
      %6291 = vmatprep.subr.bf16.mxu0 %v6245
      %6292 = vmatpush1.bf16.msra.mxu0 %v6242
      %6293 = vmatprep.subr.bf16.mxu0 0
      %6294 = vmatpush1.bf16.msra.mxu0 0
      %6295 = vmatprep.subr.bf16.mxu0 0
      %6296 = vmatpush1.bf16.msra.mxu0 0
      %6297 = vmatprep.subr.bf16.mxu0 0
      %6298 = vmatpush1.bf16.msra.mxu0 0
      %6299 = vmatprep.subr.bf16.mxu0 0
      %6300 = vmatpush1.bf16.msra.mxu0 0
      %6301 = vmatprep.subr.bf16.mxu0 0
      %6302 = vmatpush1.bf16.msra.mxu0 0
      %6303 = vmatprep.subr.bf16.mxu0 0
      %6304 = vmatpush1.bf16.msra.mxu0 0
      %6305 = vmatprep.subr.bf16.mxu0 0
      %6306 = vmatpush1.bf16.msra.mxu0 0
      %6307 = vmatprep.subr.bf16.mxu0 0
      %6308 = vmatpush1.bf16.msra.mxu0 0
      %6309 = vmatprep.subr.bf16.mxu0 0
      %6310 = vmatpush1.bf16.msra.mxu0 0
      %6311 = vmatprep.subr.bf16.mxu0 0
      %6312 = vmatpush1.bf16.msra.mxu0 0
      %6313 = vmatprep.subr.bf16.mxu0 0
      %6314 = vmatpush1.bf16.msra.mxu0 0
      %6315 = vmatprep.subr.bf16.mxu0 0
      %6316 = vmatpush1.bf16.msra.mxu0 0
      %6317 = vmatprep.subr.bf16.mxu0 0
      %6318 = vmatpush1.bf16.msra.mxu0 0
      %6319 = vmatprep.subr.bf16.mxu0 0
      %6320 = vmatpush1.bf16.msra.mxu0 0
      %6321 = vmatprep.subr.bf16.mxu0 0
      %6322 = vmatpush1.bf16.msra.mxu0 0
      %6323 = vmatprep.mubr.bf16.mxu0 0
      %6324 = vmatmul.mubr.bf16.gmra.mrb[0].mxu0 %v6233
      %v6325 = vpop.f32.mrb[0].mxu0
      %v6326 = vadd.f32 0.0, %v6325
      %v6327 = vpop.f32.mrb[0].mxu0
      %v6328 = vadd.f32 0.0, %v6327
      %v6329 = vpop.f32.mrb[0].mxu0
      %v6330 = vpop.f32.mrb[0].mxu0
      %6331 = vdwg.mxu0
      %6332 = vmatprep.subr.bf16.mxu0 0
      %6333 = vmatpush1.bf16.msra.mxu0 %v6248
      %6334 = vmatprep.subr.bf16.mxu0 0
      %6335 = vmatpush1.bf16.msra.mxu0 0
      %6336 = vmatprep.subr.bf16.mxu0 0
      %6337 = vmatpush1.bf16.msra.mxu0 0
      %6338 = vmatprep.subr.bf16.mxu0 0
      %6339 = vmatpush1.bf16.msra.mxu0 0
      %6340 = vmatprep.subr.bf16.mxu0 0
      %6341 = vmatpush1.bf16.msra.mxu0 0
      %6342 = vmatprep.subr.bf16.mxu0 0
      %6343 = vmatpush1.bf16.msra.mxu0 0
      %6344 = vmatprep.subr.bf16.mxu0 0
      %6345 = vmatpush1.bf16.msra.mxu0 0
      %6346 = vmatprep.subr.bf16.mxu0 0
      %6347 = vmatpush1.bf16.msra.mxu0 0
      %6348 = vmatprep.subr.bf16.mxu0 0
      %6349 = vmatpush1.bf16.msra.mxu0 0
      %6350 = vmatprep.subr.bf16.mxu0 0
      %6351 = vmatpush1.bf16.msra.mxu0 0
      %6352 = vmatprep.subr.bf16.mxu0 0
      %6353 = vmatpush1.bf16.msra.mxu0 0
      %6354 = vmatprep.subr.bf16.mxu0 0
      %6355 = vmatpush1.bf16.msra.mxu0 0
      %6356 = vmatprep.subr.bf16.mxu0 0
      %6357 = vmatpush1.bf16.msra.mxu0 0
      %6358 = vmatprep.subr.bf16.mxu0 0
      %6359 = vmatpush1.bf16.msra.mxu0 0
      %6360 = vmatprep.subr.bf16.mxu0 0
      %6361 = vmatpush1.bf16.msra.mxu0 0
      %6362 = vmatprep.subr.bf16.mxu0 0
      %6363 = vmatpush1.bf16.msra.mxu0 0
      %6364 = vmatprep.mubr.bf16.mxu0 0
      %6365 = vmatmul.mubr.bf16.gmra.mrb[0].mxu0 %v6233
      %v6366 = vpop.f32.mrb[0].mxu0
      %v6367 = vadd.f32 0.0, %v6366
      %v6368 = vpop.f32.mrb[0].mxu0
      %v6369 = vpop.f32.mrb[0].mxu0
      %v6370 = vpop.f32.mrb[0].mxu0
      %6371 = vdwg.mxu0
      %v6372 = vadd.f32 %v6131, %v6285
      %v6373 = vadd.f32 %v6133, %v6287
      %v6374 = vadd.f32 %v6172, %v6326
      %v6375 = vadd.f32 %v6174, %v6328
      %v6376 = vadd.f32 %v6213, %v6367
      %6378 = vrot.lane.b32.xlu0 %v5904, 64
      %v6379 = vpop.permute.xlu0 %6378
      %6380 = vrot.lane.b32.xlu0 %v5905, 64
      %v6381 = vpop.permute.xlu0 %6380
      %6382 = vrot.lane.b32.xlu0 %v5906, 64
      %v6383 = vpop.permute.xlu0 %6382
      %6384 = vrot.lane.b32.xlu0 %v5907, 64
      %v6385 = vpop.permute.xlu0 %6384
      %6386 = vrot.lane.b32.xlu0 %v5908, 64
      %v6387 = vpop.permute.xlu0 %6386
      %6388 = vrot.lane.b32.xlu0 %v5909, 64
      %v6389 = vpop.permute.xlu0 %6388
      %v6390 = vsel %vm1746, %v6379, %v6381
      %v6391 = vsel %vm1746, %v6381, %v6383
      %v6392 = vsel %vm1746, %v6383, %v6385
      %v6393 = vsel %vm1746, %v6385, %v6387
      %v6394 = vsel %vm1746, %v6387, %v6389
      %v6396 = vsel %vm2465, %v5913, 0
      %v6399 = vsel %vm2469, %v6390, 0
      %v6402 = vsel %vm2469, %v6391, 0
      %v6405 = vsel %vm2469, %v6392, 0
      %v6408 = vsel %vm2469, %v6393, 0
      %v6411 = vsel %vm2469, %v6394, 0
      %6413 = vmatprep.subr.bf16.mxu0 %v6402
      %6414 = vmatpush1.bf16.msra.mxu0 %v6399
      %6415 = vmatprep.subr.bf16.mxu0 0
      %6416 = vmatpush1.bf16.msra.mxu0 0
      %6417 = vmatprep.subr.bf16.mxu0 0
      %6418 = vmatpush1.bf16.msra.mxu0 0
      %6419 = vmatprep.subr.bf16.mxu0 0
      %6420 = vmatpush1.bf16.msra.mxu0 0
      %6421 = vmatprep.subr.bf16.mxu0 0
      %6422 = vmatpush1.bf16.msra.mxu0 0
      %6423 = vmatprep.subr.bf16.mxu0 0
      %6424 = vmatpush1.bf16.msra.mxu0 0
      %6425 = vmatprep.subr.bf16.mxu0 0
      %6426 = vmatpush1.bf16.msra.mxu0 0
      %6427 = vmatprep.subr.bf16.mxu0 0
      %6428 = vmatpush1.bf16.msra.mxu0 0
      %6429 = vmatprep.subr.bf16.mxu0 0
      %6430 = vmatpush1.bf16.msra.mxu0 0
      %6431 = vmatprep.subr.bf16.mxu0 0
      %6432 = vmatpush1.bf16.msra.mxu0 0
      %6433 = vmatprep.subr.bf16.mxu0 0
      %6434 = vmatpush1.bf16.msra.mxu0 0
      %6435 = vmatprep.subr.bf16.mxu0 0
      %6436 = vmatpush1.bf16.msra.mxu0 0
      %6437 = vmatprep.subr.bf16.mxu0 0
      %6438 = vmatpush1.bf16.msra.mxu0 0
      %6439 = vmatprep.subr.bf16.mxu0 0
      %6440 = vmatpush1.bf16.msra.mxu0 0
      %6441 = vmatprep.subr.bf16.mxu0 0
      %6442 = vmatpush1.bf16.msra.mxu0 0
      %6443 = vmatprep.subr.bf16.mxu0 0
      %6444 = vmatpush1.bf16.msra.mxu0 0
      %6445 = vmatprep.mubr.bf16.mxu0 0
      %6446 = vmatmul.mubr.bf16.gmra.mrb[0].mxu0 %v6396
      %v6447 = vpop.f32.mrb[0].mxu0
      %v6448 = vadd.f32 0.0, %v6447
      %v6449 = vpop.f32.mrb[0].mxu0
      %v6450 = vadd.f32 0.0, %v6449
      %v6451 = vpop.f32.mrb[0].mxu0
      %v6452 = vpop.f32.mrb[0].mxu0
      %6453 = vdwg.mxu0
      %6454 = vmatprep.subr.bf16.mxu0 %v6408
      %6455 = vmatpush1.bf16.msra.mxu0 %v6405
      %6456 = vmatprep.subr.bf16.mxu0 0
      %6457 = vmatpush1.bf16.msra.mxu0 0
      %6458 = vmatprep.subr.bf16.mxu0 0
      %6459 = vmatpush1.bf16.msra.mxu0 0
      %6460 = vmatprep.subr.bf16.mxu0 0
      %6461 = vmatpush1.bf16.msra.mxu0 0
      %6462 = vmatprep.subr.bf16.mxu0 0
      %6463 = vmatpush1.bf16.msra.mxu0 0
      %6464 = vmatprep.subr.bf16.mxu0 0
      %6465 = vmatpush1.bf16.msra.mxu0 0
      %6466 = vmatprep.subr.bf16.mxu0 0
      %6467 = vmatpush1.bf16.msra.mxu0 0
      %6468 = vmatprep.subr.bf16.mxu0 0
      %6469 = vmatpush1.bf16.msra.mxu0 0
      %6470 = vmatprep.subr.bf16.mxu0 0
      %6471 = vmatpush1.bf16.msra.mxu0 0
      %6472 = vmatprep.subr.bf16.mxu0 0
      %6473 = vmatpush1.bf16.msra.mxu0 0
      %6474 = vmatprep.subr.bf16.mxu0 0
      %6475 = vmatpush1.bf16.msra.mxu0 0
      %6476 = vmatprep.subr.bf16.mxu0 0
      %6477 = vmatpush1.bf16.msra.mxu0 0
      %6478 = vmatprep.subr.bf16.mxu0 0
      %6479 = vmatpush1.bf16.msra.mxu0 0
      %6480 = vmatprep.subr.bf16.mxu0 0
      %6481 = vmatpush1.bf16.msra.mxu0 0
      %6482 = vmatprep.subr.bf16.mxu0 0
      %6483 = vmatpush1.bf16.msra.mxu0 0
      %6484 = vmatprep.subr.bf16.mxu0 0
      %6485 = vmatpush1.bf16.msra.mxu0 0
      %6486 = vmatprep.mubr.bf16.mxu0 0
      %6487 = vmatmul.mubr.bf16.gmra.mrb[0].mxu0 %v6396
      %v6488 = vpop.f32.mrb[0].mxu0
      %v6489 = vadd.f32 0.0, %v6488
      %v6490 = vpop.f32.mrb[0].mxu0
      %v6491 = vadd.f32 0.0, %v6490
      %v6492 = vpop.f32.mrb[0].mxu0
      %v6493 = vpop.f32.mrb[0].mxu0
      %6494 = vdwg.mxu0
      %6495 = vmatprep.subr.bf16.mxu0 0
      %6496 = vmatpush1.bf16.msra.mxu0 %v6411
      %6497 = vmatprep.subr.bf16.mxu0 0
      %6498 = vmatpush1.bf16.msra.mxu0 0
      %6499 = vmatprep.subr.bf16.mxu0 0
      %6500 = vmatpush1.bf16.msra.mxu0 0
      %6501 = vmatprep.subr.bf16.mxu0 0
      %6502 = vmatpush1.bf16.msra.mxu0 0
      %6503 = vmatprep.subr.bf16.mxu0 0
      %6504 = vmatpush1.bf16.msra.mxu0 0
      %6505 = vmatprep.subr.bf16.mxu0 0
      %6506 = vmatpush1.bf16.msra.mxu0 0
      %6507 = vmatprep.subr.bf16.mxu0 0
      %6508 = vmatpush1.bf16.msra.mxu0 0
      %6509 = vmatprep.subr.bf16.mxu0 0
      %6510 = vmatpush1.bf16.msra.mxu0 0
      %6511 = vmatprep.subr.bf16.mxu0 0
      %6512 = vmatpush1.bf16.msra.mxu0 0
      %6513 = vmatprep.subr.bf16.mxu0 0
      %6514 = vmatpush1.bf16.msra.mxu0 0
      %6515 = vmatprep.subr.bf16.mxu0 0
      %6516 = vmatpush1.bf16.msra.mxu0 0
      %6517 = vmatprep.subr.bf16.mxu0 0
      %6518 = vmatpush1.bf16.msra.mxu0 0
      %6519 = vmatprep.subr.bf16.mxu0 0
      %6520 = vmatpush1.bf16.msra.mxu0 0
      %6521 = vmatprep.subr.bf16.mxu0 0
      %6522 = vmatpush1.bf16.msra.mxu0 0
      %6523 = vmatprep.subr.bf16.mxu0 0
      %6524 = vmatpush1.bf16.msra.mxu0 0
      %6525 = vmatprep.subr.bf16.mxu0 0
      %6526 = vmatpush1.bf16.msra.mxu0 0
      %6527 = vmatprep.mubr.bf16.mxu0 0
      %6528 = vmatmul.mubr.bf16.gmra.mrb[0].mxu0 %v6396
      %v6529 = vpop.f32.mrb[0].mxu0
      %v6530 = vadd.f32 0.0, %v6529
      %v6531 = vpop.f32.mrb[0].mxu0
      %v6532 = vpop.f32.mrb[0].mxu0
      %v6533 = vpop.f32.mrb[0].mxu0
      %6534 = vdwg.mxu0
      %v6535 = vadd.f32 %v6372, %v6448
      %v6536 = vadd.f32 %v6373, %v6450
      %v6537 = vadd.f32 %v6374, %v6489
      %v6538 = vadd.f32 %v6375, %v6491
      %v6539 = vadd.f32 %v6376, %v6530
      %6540 = vrot.lane.b32.xlu0 %v5904, 62
      %v6541 = vpop.permute.xlu0 %6540
      %6542 = vrot.lane.b32.xlu0 %v5905, 62
      %v6543 = vpop.permute.xlu0 %6542
      %6544 = vrot.lane.b32.xlu0 %v5906, 62
      %v6545 = vpop.permute.xlu0 %6544
      %6546 = vrot.lane.b32.xlu0 %v5907, 62
      %v6547 = vpop.permute.xlu0 %6546
      %6548 = vrot.lane.b32.xlu0 %v5908, 62
      %v6549 = vpop.permute.xlu0 %6548
      %6550 = vrot.lane.b32.xlu0 %v5909, 62
      %v6551 = vpop.permute.xlu0 %6550
      %v6552 = vsel %vm2192, %v6541, %v6543
      %v6553 = vsel %vm2192, %v6543, %v6545
      %v6554 = vsel %vm2192, %v6545, %v6547
      %v6555 = vsel %vm2192, %v6547, %v6549
      %v6556 = vsel %vm2192, %v6549, %v6551
      %v6558 = vsel %vm2465, %v5914, 0
      %v6561 = vsel %vm2469, %v6552, 0
      %v6564 = vsel %vm2469, %v6553, 0
      %v6567 = vsel %vm2469, %v6554, 0
      %v6570 = vsel %vm2469, %v6555, 0
      %v6573 = vsel %vm2469, %v6556, 0
      %6575 = vmatprep.subr.bf16.mxu0 %v6564
      %6576 = vmatpush1.bf16.msra.mxu0 %v6561
      %6577 = vmatprep.subr.bf16.mxu0 0
      %6578 = vmatpush1.bf16.msra.mxu0 0
      %6579 = vmatprep.subr.bf16.mxu0 0
      %6580 = vmatpush1.bf16.msra.mxu0 0
      %6581 = vmatprep.subr.bf16.mxu0 0
      %6582 = vmatpush1.bf16.msra.mxu0 0
      %6583 = vmatprep.subr.bf16.mxu0 0
      %6584 = vmatpush1.bf16.msra.mxu0 0
      %6585 = vmatprep.subr.bf16.mxu0 0
      %6586 = vmatpush1.bf16.msra.mxu0 0
      %6587 = vmatprep.subr.bf16.mxu0 0
      %6588 = vmatpush1.bf16.msra.mxu0 0
      %6589 = vmatprep.subr.bf16.mxu0 0
      %6590 = vmatpush1.bf16.msra.mxu0 0
      %6591 = vmatprep.subr.bf16.mxu0 0
      %6592 = vmatpush1.bf16.msra.mxu0 0
      %6593 = vmatprep.subr.bf16.mxu0 0
      %6594 = vmatpush1.bf16.msra.mxu0 0
      %6595 = vmatprep.subr.bf16.mxu0 0
      %6596 = vmatpush1.bf16.msra.mxu0 0
      %6597 = vmatprep.subr.bf16.mxu0 0
      %6598 = vmatpush1.bf16.msra.mxu0 0
      %6599 = vmatprep.subr.bf16.mxu0 0
      %6600 = vmatpush1.bf16.msra.mxu0 0
      %6601 = vmatprep.subr.bf16.mxu0 0
      %6602 = vmatpush1.bf16.msra.mxu0 0
      %6603 = vmatprep.subr.bf16.mxu0 0
      %6604 = vmatpush1.bf16.msra.mxu0 0
      %6605 = vmatprep.subr.bf16.mxu0 0
      %6606 = vmatpush1.bf16.msra.mxu0 0
      %6607 = vmatprep.mubr.bf16.mxu0 0
      %6608 = vmatmul.mubr.bf16.gmra.mrb[0].mxu0 %v6558
      %v6609 = vpop.f32.mrb[0].mxu0
      %v6610 = vadd.f32 0.0, %v6609
      %v6611 = vpop.f32.mrb[0].mxu0
      %v6612 = vadd.f32 0.0, %v6611
      %v6613 = vpop.f32.mrb[0].mxu0
      %v6614 = vpop.f32.mrb[0].mxu0
      %6615 = vdwg.mxu0
      %6616 = vmatprep.subr.bf16.mxu0 %v6570
      %6617 = vmatpush1.bf16.msra.mxu0 %v6567
      %6618 = vmatprep.subr.bf16.mxu0 0
      %6619 = vmatpush1.bf16.msra.mxu0 0
      %6620 = vmatprep.subr.bf16.mxu0 0
      %6621 = vmatpush1.bf16.msra.mxu0 0
      %6622 = vmatprep.subr.bf16.mxu0 0
      %6623 = vmatpush1.bf16.msra.mxu0 0
      %6624 = vmatprep.subr.bf16.mxu0 0
      %6625 = vmatpush1.bf16.msra.mxu0 0
      %6626 = vmatprep.subr.bf16.mxu0 0
      %6627 = vmatpush1.bf16.msra.mxu0 0
      %6628 = vmatprep.subr.bf16.mxu0 0
      %6629 = vmatpush1.bf16.msra.mxu0 0
      %6630 = vmatprep.subr.bf16.mxu0 0
      %6631 = vmatpush1.bf16.msra.mxu0 0
      %6632 = vmatprep.subr.bf16.mxu0 0
      %6633 = vmatpush1.bf16.msra.mxu0 0
      %6634 = vmatprep.subr.bf16.mxu0 0
      %6635 = vmatpush1.bf16.msra.mxu0 0
      %6636 = vmatprep.subr.bf16.mxu0 0
      %6637 = vmatpush1.bf16.msra.mxu0 0
      %6638 = vmatprep.subr.bf16.mxu0 0
      %6639 = vmatpush1.bf16.msra.mxu0 0
      %6640 = vmatprep.subr.bf16.mxu0 0
      %6641 = vmatpush1.bf16.msra.mxu0 0
      %6642 = vmatprep.subr.bf16.mxu0 0
      %6643 = vmatpush1.bf16.msra.mxu0 0
      %6644 = vmatprep.subr.bf16.mxu0 0
      %6645 = vmatpush1.bf16.msra.mxu0 0
      %6646 = vmatprep.subr.bf16.mxu0 0
      %6647 = vmatpush1.bf16.msra.mxu0 0
      %6648 = vmatprep.mubr.bf16.mxu0 0
      %6649 = vmatmul.mubr.bf16.gmra.mrb[0].mxu0 %v6558
      %v6650 = vpop.f32.mrb[0].mxu0
      %v6651 = vadd.f32 0.0, %v6650
      %v6652 = vpop.f32.mrb[0].mxu0
      %v6653 = vadd.f32 0.0, %v6652
      %v6654 = vpop.f32.mrb[0].mxu0
      %v6655 = vpop.f32.mrb[0].mxu0
      %6656 = vdwg.mxu0
      %6657 = vmatprep.subr.bf16.mxu0 0
      %6658 = vmatpush1.bf16.msra.mxu0 %v6573
      %6659 = vmatprep.subr.bf16.mxu0 0
      %6660 = vmatpush1.bf16.msra.mxu0 0
      %6661 = vmatprep.subr.bf16.mxu0 0
      %6662 = vmatpush1.bf16.msra.mxu0 0
      %6663 = vmatprep.subr.bf16.mxu0 0
      %6664 = vmatpush1.bf16.msra.mxu0 0
      %6665 = vmatprep.subr.bf16.mxu0 0
      %6666 = vmatpush1.bf16.msra.mxu0 0
      %6667 = vmatprep.subr.bf16.mxu0 0
      %6668 = vmatpush1.bf16.msra.mxu0 0
      %6669 = vmatprep.subr.bf16.mxu0 0
      %6670 = vmatpush1.bf16.msra.mxu0 0
      %6671 = vmatprep.subr.bf16.mxu0 0
      %6672 = vmatpush1.bf16.msra.mxu0 0
      %6673 = vmatprep.subr.bf16.mxu0 0
      %6674 = vmatpush1.bf16.msra.mxu0 0
      %6675 = vmatprep.subr.bf16.mxu0 0
      %6676 = vmatpush1.bf16.msra.mxu0 0
      %6677 = vmatprep.subr.bf16.mxu0 0
      %6678 = vmatpush1.bf16.msra.mxu0 0
      %6679 = vmatprep.subr.bf16.mxu0 0
      %6680 = vmatpush1.bf16.msra.mxu0 0
      %6681 = vmatprep.subr.bf16.mxu0 0
      %6682 = vmatpush1.bf16.msra.mxu0 0
      %6683 = vmatprep.subr.bf16.mxu0 0
      %6684 = vmatpush1.bf16.msra.mxu0 0
      %6685 = vmatprep.subr.bf16.mxu0 0
      %6686 = vmatpush1.bf16.msra.mxu0 0
      %6687 = vmatprep.subr.bf16.mxu0 0
      %6688 = vmatpush1.bf16.msra.mxu0 0
      %6689 = vmatprep.mubr.bf16.mxu0 0
      %6690 = vmatmul.mubr.bf16.gmra.mrb[0].mxu0 %v6558
      %v6691 = vpop.f32.mrb[0].mxu0
      %v6692 = vadd.f32 0.0, %v6691
      %v6693 = vpop.f32.mrb[0].mxu0
      %v6694 = vpop.f32.mrb[0].mxu0
      %v6695 = vpop.f32.mrb[0].mxu0
      %6696 = vdwg.mxu0
      %v6697 = vadd.f32 %v6535, %v6610
      %v6698 = vadd.f32 %v6536, %v6612
      %v6699 = vadd.f32 %v6537, %v6651
      %v6700 = vadd.f32 %v6538, %v6653
      %v6701 = vadd.f32 %v6539, %v6692
      %6702 = vrot.lane.b32.xlu0 %v5904, 60
      %v6703 = vpop.permute.xlu0 %6702
      %6704 = vrot.lane.b32.xlu0 %v5905, 60
      %v6705 = vpop.permute.xlu0 %6704
      %6706 = vrot.lane.b32.xlu0 %v5906, 60
      %v6707 = vpop.permute.xlu0 %6706
      %6708 = vrot.lane.b32.xlu0 %v5907, 60
      %v6709 = vpop.permute.xlu0 %6708
      %6710 = vrot.lane.b32.xlu0 %v5908, 60
      %v6711 = vpop.permute.xlu0 %6710
      %6712 = vrot.lane.b32.xlu0 %v5909, 60
      %v6713 = vpop.permute.xlu0 %6712
      %v6714 = vsel %vm5312, %v6703, %v6705
      %v6715 = vsel %vm5312, %v6705, %v6707
      %v6716 = vsel %vm5312, %v6707, %v6709
      %v6717 = vsel %vm5312, %v6709, %v6711
      %v6718 = vsel %vm5312, %v6711, %v6713
      %v6720 = vsel %vm2465, %v5915, 0
      %v6723 = vsel %vm2469, %v6714, 0
      %v6726 = vsel %vm2469, %v6715, 0
      %v6729 = vsel %vm2469, %v6716, 0
      %v6732 = vsel %vm2469, %v6717, 0
      %v6735 = vsel %vm2469, %v6718, 0
      %6737 = vmatprep.subr.bf16.mxu0 %v6726
      %6738 = vmatpush1.bf16.msra.mxu0 %v6723
      %6739 = vmatprep.subr.bf16.mxu0 0
      %6740 = vmatpush1.bf16.msra.mxu0 0
      %6741 = vmatprep.subr.bf16.mxu0 0
      %6742 = vmatpush1.bf16.msra.mxu0 0
      %6743 = vmatprep.subr.bf16.mxu0 0
      %6744 = vmatpush1.bf16.msra.mxu0 0
      %6745 = vmatprep.subr.bf16.mxu0 0
      %6746 = vmatpush1.bf16.msra.mxu0 0
      %6747 = vmatprep.subr.bf16.mxu0 0
      %6748 = vmatpush1.bf16.msra.mxu0 0
      %6749 = vmatprep.subr.bf16.mxu0 0
      %6750 = vmatpush1.bf16.msra.mxu0 0
      %6751 = vmatprep.subr.bf16.mxu0 0
      %6752 = vmatpush1.bf16.msra.mxu0 0
      %6753 = vmatprep.subr.bf16.mxu0 0
      %6754 = vmatpush1.bf16.msra.mxu0 0
      %6755 = vmatprep.subr.bf16.mxu0 0
      %6756 = vmatpush1.bf16.msra.mxu0 0
      %6757 = vmatprep.subr.bf16.mxu0 0
      %6758 = vmatpush1.bf16.msra.mxu0 0
      %6759 = vmatprep.subr.bf16.mxu0 0
      %6760 = vmatpush1.bf16.msra.mxu0 0
      %6761 = vmatprep.subr.bf16.mxu0 0
      %6762 = vmatpush1.bf16.msra.mxu0 0
      %6763 = vmatprep.subr.bf16.mxu0 0
      %6764 = vmatpush1.bf16.msra.mxu0 0
      %6765 = vmatprep.subr.bf16.mxu0 0
      %6766 = vmatpush1.bf16.msra.mxu0 0
      %6767 = vmatprep.subr.bf16.mxu0 0
      %6768 = vmatpush1.bf16.msra.mxu0 0
      %6769 = vmatprep.mubr.bf16.mxu0 0
      %6770 = vmatmul.mubr.bf16.gmra.mrb[0].mxu0 %v6720
      %v6771 = vpop.f32.mrb[0].mxu0
      %v6772 = vadd.f32 0.0, %v6771
      %v6773 = vpop.f32.mrb[0].mxu0
      %v6774 = vadd.f32 0.0, %v6773
      %v6775 = vpop.f32.mrb[0].mxu0
      %v6776 = vpop.f32.mrb[0].mxu0
      %6777 = vdwg.mxu0
      %6778 = vmatprep.subr.bf16.mxu0 %v6732
      %6779 = vmatpush1.bf16.msra.mxu0 %v6729
      %6780 = vmatprep.subr.bf16.mxu0 0
      %6781 = vmatpush1.bf16.msra.mxu0 0
      %6782 = vmatprep.subr.bf16.mxu0 0
      %6783 = vmatpush1.bf16.msra.mxu0 0
      %6784 = vmatprep.subr.bf16.mxu0 0
      %6785 = vmatpush1.bf16.msra.mxu0 0
      %6786 = vmatprep.subr.bf16.mxu0 0
      %6787 = vmatpush1.bf16.msra.mxu0 0
      %6788 = vmatprep.subr.bf16.mxu0 0
      %6789 = vmatpush1.bf16.msra.mxu0 0
      %6790 = vmatprep.subr.bf16.mxu0 0
      %6791 = vmatpush1.bf16.msra.mxu0 0
      %6792 = vmatprep.subr.bf16.mxu0 0
      %6793 = vmatpush1.bf16.msra.mxu0 0
      %6794 = vmatprep.subr.bf16.mxu0 0
      %6795 = vmatpush1.bf16.msra.mxu0 0
      %6796 = vmatprep.subr.bf16.mxu0 0
      %6797 = vmatpush1.bf16.msra.mxu0 0
      %6798 = vmatprep.subr.bf16.mxu0 0
      %6799 = vmatpush1.bf16.msra.mxu0 0
      %6800 = vmatprep.subr.bf16.mxu0 0
      %6801 = vmatpush1.bf16.msra.mxu0 0
      %6802 = vmatprep.subr.bf16.mxu0 0
      %6803 = vmatpush1.bf16.msra.mxu0 0
      %6804 = vmatprep.subr.bf16.mxu0 0
      %6805 = vmatpush1.bf16.msra.mxu0 0
      %6806 = vmatprep.subr.bf16.mxu0 0
      %6807 = vmatpush1.bf16.msra.mxu0 0
      %6808 = vmatprep.subr.bf16.mxu0 0
      %6809 = vmatpush1.bf16.msra.mxu0 0
      %6810 = vmatprep.mubr.bf16.mxu0 0
      %6811 = vmatmul.mubr.bf16.gmra.mrb[0].mxu0 %v6720
      %v6812 = vpop.f32.mrb[0].mxu0
      %v6813 = vadd.f32 0.0, %v6812
      %v6814 = vpop.f32.mrb[0].mxu0
      %v6815 = vadd.f32 0.0, %v6814
      %v6816 = vpop.f32.mrb[0].mxu0
      %v6817 = vpop.f32.mrb[0].mxu0
      %6818 = vdwg.mxu0
      %6819 = vmatprep.subr.bf16.mxu0 0
      %6820 = vmatpush1.bf16.msra.mxu0 %v6735
      %6821 = vmatprep.subr.bf16.mxu0 0
      %6822 = vmatpush1.bf16.msra.mxu0 0
      %6823 = vmatprep.subr.bf16.mxu0 0
      %6824 = vmatpush1.bf16.msra.mxu0 0
      %6825 = vmatprep.subr.bf16.mxu0 0
      %6826 = vmatpush1.bf16.msra.mxu0 0
      %6827 = vmatprep.subr.bf16.mxu0 0
      %6828 = vmatpush1.bf16.msra.mxu0 0
      %6829 = vmatprep.subr.bf16.mxu0 0
      %6830 = vmatpush1.bf16.msra.mxu0 0
      %6831 = vmatprep.subr.bf16.mxu0 0
      %6832 = vmatpush1.bf16.msra.mxu0 0
      %6833 = vmatprep.subr.bf16.mxu0 0
      %6834 = vmatpush1.bf16.msra.mxu0 0
      %6835 = vmatprep.subr.bf16.mxu0 0
      %6836 = vmatpush1.bf16.msra.mxu0 0
      %6837 = vmatprep.subr.bf16.mxu0 0
      %6838 = vmatpush1.bf16.msra.mxu0 0
      %6839 = vmatprep.subr.bf16.mxu0 0
      %6840 = vmatpush1.bf16.msra.mxu0 0
      %6841 = vmatprep.subr.bf16.mxu0 0
      %6842 = vmatpush1.bf16.msra.mxu0 0
      %6843 = vmatprep.subr.bf16.mxu0 0
      %6844 = vmatpush1.bf16.msra.mxu0 0
      %6845 = vmatprep.subr.bf16.mxu0 0
      %6846 = vmatpush1.bf16.msra.mxu0 0
      %6847 = vmatprep.subr.bf16.mxu0 0
      %6848 = vmatpush1.bf16.msra.mxu0 0
      %6849 = vmatprep.subr.bf16.mxu0 0
      %6850 = vmatpush1.bf16.msra.mxu0 0
      %6851 = vmatprep.mubr.bf16.mxu0 0
      %6852 = vmatmul.mubr.bf16.gmra.mrb[0].mxu0 %v6720
      %v6853 = vpop.f32.mrb[0].mxu0
      %v6854 = vadd.f32 0.0, %v6853
      %v6855 = vpop.f32.mrb[0].mxu0
      %v6856 = vpop.f32.mrb[0].mxu0
      %v6857 = vpop.f32.mrb[0].mxu0
      %6858 = vdwg.mxu0
      %v6859 = vadd.f32 %v6697, %v6772
      %v6860 = vadd.f32 %v6698, %v6774
      %v6861 = vadd.f32 %v6699, %v6813
      %v6862 = vadd.f32 %v6700, %v6815
      %v6863 = vadd.f32 %v6701, %v6854
      %v6865 = vsel %vm2465, %v5916, 0
      %v6868 = vsel %vm2469, %v5909, 0
      %6870 = vmatprep.subr.bf16.mxu0 %v6088
      %6871 = vmatpush1.bf16.msra.mxu0 %v6085
      %6872 = vmatprep.subr.bf16.mxu0 0
      %6873 = vmatpush1.bf16.msra.mxu0 0
      %6874 = vmatprep.subr.bf16.mxu0 0
      %6875 = vmatpush1.bf16.msra.mxu0 0
      %6876 = vmatprep.subr.bf16.mxu0 0
      %6877 = vmatpush1.bf16.msra.mxu0 0
      %6878 = vmatprep.subr.bf16.mxu0 0
      %6879 = vmatpush1.bf16.msra.mxu0 0
      %6880 = vmatprep.subr.bf16.mxu0 0
      %6881 = vmatpush1.bf16.msra.mxu0 0
      %6882 = vmatprep.subr.bf16.mxu0 0
      %6883 = vmatpush1.bf16.msra.mxu0 0
      %6884 = vmatprep.subr.bf16.mxu0 0
      %6885 = vmatpush1.bf16.msra.mxu0 0
      %6886 = vmatprep.subr.bf16.mxu0 0
      %6887 = vmatpush1.bf16.msra.mxu0 0
      %6888 = vmatprep.subr.bf16.mxu0 0
      %6889 = vmatpush1.bf16.msra.mxu0 0
      %6890 = vmatprep.subr.bf16.mxu0 0
      %6891 = vmatpush1.bf16.msra.mxu0 0
      %6892 = vmatprep.subr.bf16.mxu0 0
      %6893 = vmatpush1.bf16.msra.mxu0 0
      %6894 = vmatprep.subr.bf16.mxu0 0
      %6895 = vmatpush1.bf16.msra.mxu0 0
      %6896 = vmatprep.subr.bf16.mxu0 0
      %6897 = vmatpush1.bf16.msra.mxu0 0
      %6898 = vmatprep.subr.bf16.mxu0 0
      %6899 = vmatpush1.bf16.msra.mxu0 0
      %6900 = vmatprep.subr.bf16.mxu0 0
      %6901 = vmatpush1.bf16.msra.mxu0 0
      %6902 = vmatprep.mubr.bf16.mxu0 0
      %6903 = vmatmul.mubr.bf16.gmra.mrb[0].mxu0 %v6865
      %v6904 = vpop.f32.mrb[0].mxu0
      %v6905 = vadd.f32 0.0, %v6904
      %v6906 = vpop.f32.mrb[0].mxu0
      %v6907 = vadd.f32 0.0, %v6906
      %v6908 = vpop.f32.mrb[0].mxu0
      %v6909 = vpop.f32.mrb[0].mxu0
      %6910 = vdwg.mxu0
      %6911 = vmatprep.subr.bf16.mxu0 %v6094
      %6912 = vmatpush1.bf16.msra.mxu0 %v6091
      %6913 = vmatprep.subr.bf16.mxu0 0
      %6914 = vmatpush1.bf16.msra.mxu0 0
      %6915 = vmatprep.subr.bf16.mxu0 0
      %6916 = vmatpush1.bf16.msra.mxu0 0
      %6917 = vmatprep.subr.bf16.mxu0 0
      %6918 = vmatpush1.bf16.msra.mxu0 0
      %6919 = vmatprep.subr.bf16.mxu0 0
      %6920 = vmatpush1.bf16.msra.mxu0 0
      %6921 = vmatprep.subr.bf16.mxu0 0
      %6922 = vmatpush1.bf16.msra.mxu0 0
      %6923 = vmatprep.subr.bf16.mxu0 0
      %6924 = vmatpush1.bf16.msra.mxu0 0
      %6925 = vmatprep.subr.bf16.mxu0 0
      %6926 = vmatpush1.bf16.msra.mxu0 0
      %6927 = vmatprep.subr.bf16.mxu0 0
      %6928 = vmatpush1.bf16.msra.mxu0 0
      %6929 = vmatprep.subr.bf16.mxu0 0
      %6930 = vmatpush1.bf16.msra.mxu0 0
      %6931 = vmatprep.subr.bf16.mxu0 0
      %6932 = vmatpush1.bf16.msra.mxu0 0
      %6933 = vmatprep.subr.bf16.mxu0 0
      %6934 = vmatpush1.bf16.msra.mxu0 0
      %6935 = vmatprep.subr.bf16.mxu0 0
      %6936 = vmatpush1.bf16.msra.mxu0 0
      %6937 = vmatprep.subr.bf16.mxu0 0
      %6938 = vmatpush1.bf16.msra.mxu0 0
      %6939 = vmatprep.subr.bf16.mxu0 0
      %6940 = vmatpush1.bf16.msra.mxu0 0
      %6941 = vmatprep.subr.bf16.mxu0 0
      %6942 = vmatpush1.bf16.msra.mxu0 0
      %6943 = vmatprep.mubr.bf16.mxu0 0
      %6944 = vmatmul.mubr.bf16.gmra.mrb[0].mxu0 %v6865
      %v6945 = vpop.f32.mrb[0].mxu0
      %v6946 = vadd.f32 0.0, %v6945
      %v6947 = vpop.f32.mrb[0].mxu0
      %v6948 = vadd.f32 0.0, %v6947
      %v6949 = vpop.f32.mrb[0].mxu0
      %v6950 = vpop.f32.mrb[0].mxu0
      %6951 = vdwg.mxu0
      %6952 = vmatprep.subr.bf16.mxu0 0
      %6953 = vmatpush1.bf16.msra.mxu0 %v6868
      %6954 = vmatprep.subr.bf16.mxu0 0
      %6955 = vmatpush1.bf16.msra.mxu0 0
      %6956 = vmatprep.subr.bf16.mxu0 0
      %6957 = vmatpush1.bf16.msra.mxu0 0
      %6958 = vmatprep.subr.bf16.mxu0 0
      %6959 = vmatpush1.bf16.msra.mxu0 0
      %6960 = vmatprep.subr.bf16.mxu0 0
      %6961 = vmatpush1.bf16.msra.mxu0 0
      %6962 = vmatprep.subr.bf16.mxu0 0
      %6963 = vmatpush1.bf16.msra.mxu0 0
      %6964 = vmatprep.subr.bf16.mxu0 0
      %6965 = vmatpush1.bf16.msra.mxu0 0
      %6966 = vmatprep.subr.bf16.mxu0 0
      %6967 = vmatpush1.bf16.msra.mxu0 0
      %6968 = vmatprep.subr.bf16.mxu0 0
      %6969 = vmatpush1.bf16.msra.mxu0 0
      %6970 = vmatprep.subr.bf16.mxu0 0
      %6971 = vmatpush1.bf16.msra.mxu0 0
      %6972 = vmatprep.subr.bf16.mxu0 0
      %6973 = vmatpush1.bf16.msra.mxu0 0
      %6974 = vmatprep.subr.bf16.mxu0 0
      %6975 = vmatpush1.bf16.msra.mxu0 0
      %6976 = vmatprep.subr.bf16.mxu0 0
      %6977 = vmatpush1.bf16.msra.mxu0 0
      %6978 = vmatprep.subr.bf16.mxu0 0
      %6979 = vmatpush1.bf16.msra.mxu0 0
      %6980 = vmatprep.subr.bf16.mxu0 0
      %6981 = vmatpush1.bf16.msra.mxu0 0
      %6982 = vmatprep.subr.bf16.mxu0 0
      %6983 = vmatpush1.bf16.msra.mxu0 0
      %6984 = vmatprep.mubr.bf16.mxu0 0
      %6985 = vmatmul.mubr.bf16.gmra.mrb[0].mxu0 %v6865
      %v6986 = vpop.f32.mrb[0].mxu0
      %v6987 = vadd.f32 0.0, %v6986
      %v6988 = vpop.f32.mrb[0].mxu0
      %v6989 = vpop.f32.mrb[0].mxu0
      %v6990 = vpop.f32.mrb[0].mxu0
      %6991 = vdwg.mxu0
      %v6992 = vadd.f32 %v6859, %v6905
      %v6993 = vadd.f32 %v6860, %v6907
      %v6994 = vadd.f32 %v6861, %v6946
      %v6995 = vadd.f32 %v6862, %v6948
      %v6996 = vadd.f32 %v6863, %v6987
      %6997 = vrot.lane.b32.xlu0 %v5909, 126
      %v6998 = vpop.permute.xlu0 %6997
      %v6999 = vsel %vm854, %v5933, %v6998
      %v7001 = vsel %vm2465, %v5917, 0
      %v7004 = vsel %vm2469, %v6999, 0
      %v7007 = vsel %vm2469, %v6998, 0
      %7009 = vmatprep.subr.bf16.mxu0 %v5948
      %7010 = vmatpush1.bf16.msra.mxu0 %v5945
      %7011 = vmatprep.subr.bf16.mxu0 0
      %7012 = vmatpush1.bf16.msra.mxu0 0
      %7013 = vmatprep.subr.bf16.mxu0 0
      %7014 = vmatpush1.bf16.msra.mxu0 0
      %7015 = vmatprep.subr.bf16.mxu0 0
      %7016 = vmatpush1.bf16.msra.mxu0 0
      %7017 = vmatprep.subr.bf16.mxu0 0
      %7018 = vmatpush1.bf16.msra.mxu0 0
      %7019 = vmatprep.subr.bf16.mxu0 0
      %7020 = vmatpush1.bf16.msra.mxu0 0
      %7021 = vmatprep.subr.bf16.mxu0 0
      %7022 = vmatpush1.bf16.msra.mxu0 0
      %7023 = vmatprep.subr.bf16.mxu0 0
      %7024 = vmatpush1.bf16.msra.mxu0 0
      %7025 = vmatprep.subr.bf16.mxu0 0
      %7026 = vmatpush1.bf16.msra.mxu0 0
      %7027 = vmatprep.subr.bf16.mxu0 0
      %7028 = vmatpush1.bf16.msra.mxu0 0
      %7029 = vmatprep.subr.bf16.mxu0 0
      %7030 = vmatpush1.bf16.msra.mxu0 0
      %7031 = vmatprep.subr.bf16.mxu0 0
      %7032 = vmatpush1.bf16.msra.mxu0 0
      %7033 = vmatprep.subr.bf16.mxu0 0
      %7034 = vmatpush1.bf16.msra.mxu0 0
      %7035 = vmatprep.subr.bf16.mxu0 0
      %7036 = vmatpush1.bf16.msra.mxu0 0
      %7037 = vmatprep.subr.bf16.mxu0 0
      %7038 = vmatpush1.bf16.msra.mxu0 0
      %7039 = vmatprep.subr.bf16.mxu0 0
      %7040 = vmatpush1.bf16.msra.mxu0 0
      %7041 = vmatprep.mubr.bf16.mxu0 0
      %7042 = vmatmul.mubr.bf16.gmra.mrb[0].mxu0 %v7001
      %v7043 = vpop.f32.mrb[0].mxu0
      %v7044 = vadd.f32 0.0, %v7043
      %v7045 = vpop.f32.mrb[0].mxu0
      %v7046 = vadd.f32 0.0, %v7045
      %v7047 = vpop.f32.mrb[0].mxu0
      %v7048 = vpop.f32.mrb[0].mxu0
      %7049 = vdwg.mxu0
      %7050 = vmatprep.subr.bf16.mxu0 %v7004
      %7051 = vmatpush1.bf16.msra.mxu0 %v5951
      %7052 = vmatprep.subr.bf16.mxu0 0
      %7053 = vmatpush1.bf16.msra.mxu0 0
      %7054 = vmatprep.subr.bf16.mxu0 0
      %7055 = vmatpush1.bf16.msra.mxu0 0
      %7056 = vmatprep.subr.bf16.mxu0 0
      %7057 = vmatpush1.bf16.msra.mxu0 0
      %7058 = vmatprep.subr.bf16.mxu0 0
      %7059 = vmatpush1.bf16.msra.mxu0 0
      %7060 = vmatprep.subr.bf16.mxu0 0
      %7061 = vmatpush1.bf16.msra.mxu0 0
      %7062 = vmatprep.subr.bf16.mxu0 0
      %7063 = vmatpush1.bf16.msra.mxu0 0
      %7064 = vmatprep.subr.bf16.mxu0 0
      %7065 = vmatpush1.bf16.msra.mxu0 0
      %7066 = vmatprep.subr.bf16.mxu0 0
      %7067 = vmatpush1.bf16.msra.mxu0 0
      %7068 = vmatprep.subr.bf16.mxu0 0
      %7069 = vmatpush1.bf16.msra.mxu0 0
      %7070 = vmatprep.subr.bf16.mxu0 0
      %7071 = vmatpush1.bf16.msra.mxu0 0
      %7072 = vmatprep.subr.bf16.mxu0 0
      %7073 = vmatpush1.bf16.msra.mxu0 0
      %7074 = vmatprep.subr.bf16.mxu0 0
      %7075 = vmatpush1.bf16.msra.mxu0 0
      %7076 = vmatprep.subr.bf16.mxu0 0
      %7077 = vmatpush1.bf16.msra.mxu0 0
      %7078 = vmatprep.subr.bf16.mxu0 0
      %7079 = vmatpush1.bf16.msra.mxu0 0
      %7080 = vmatprep.subr.bf16.mxu0 0
      %7081 = vmatpush1.bf16.msra.mxu0 0
      %7082 = vmatprep.mubr.bf16.mxu0 0
      %7083 = vmatmul.mubr.bf16.gmra.mrb[0].mxu0 %v7001
      %v7084 = vpop.f32.mrb[0].mxu0
      %v7085 = vadd.f32 0.0, %v7084
      %v7086 = vpop.f32.mrb[0].mxu0
      %v7087 = vadd.f32 0.0, %v7086
      %v7088 = vpop.f32.mrb[0].mxu0
      %v7089 = vpop.f32.mrb[0].mxu0
      %7090 = vdwg.mxu0
      %7091 = vmatprep.subr.bf16.mxu0 0
      %7092 = vmatpush1.bf16.msra.mxu0 %v7007
      %7093 = vmatprep.subr.bf16.mxu0 0
      %7094 = vmatpush1.bf16.msra.mxu0 0
      %7095 = vmatprep.subr.bf16.mxu0 0
      %7096 = vmatpush1.bf16.msra.mxu0 0
      %7097 = vmatprep.subr.bf16.mxu0 0
      %7098 = vmatpush1.bf16.msra.mxu0 0
      %7099 = vmatprep.subr.bf16.mxu0 0
      %7100 = vmatpush1.bf16.msra.mxu0 0
      %7101 = vmatprep.subr.bf16.mxu0 0
      %7102 = vmatpush1.bf16.msra.mxu0 0
      %7103 = vmatprep.subr.bf16.mxu0 0
      %7104 = vmatpush1.bf16.msra.mxu0 0
      %7105 = vmatprep.subr.bf16.mxu0 0
      %7106 = vmatpush1.bf16.msra.mxu0 0
      %7107 = vmatprep.subr.bf16.mxu0 0
      %7108 = vmatpush1.bf16.msra.mxu0 0
      %7109 = vmatprep.subr.bf16.mxu0 0
      %7110 = vmatpush1.bf16.msra.mxu0 0
      %7111 = vmatprep.subr.bf16.mxu0 0
      %7112 = vmatpush1.bf16.msra.mxu0 0
      %7113 = vmatprep.subr.bf16.mxu0 0
      %7114 = vmatpush1.bf16.msra.mxu0 0
      %7115 = vmatprep.subr.bf16.mxu0 0
      %7116 = vmatpush1.bf16.msra.mxu0 0
      %7117 = vmatprep.subr.bf16.mxu0 0
      %7118 = vmatpush1.bf16.msra.mxu0 0
      %7119 = vmatprep.subr.bf16.mxu0 0
      %7120 = vmatpush1.bf16.msra.mxu0 0
      %7121 = vmatprep.subr.bf16.mxu0 0
      %7122 = vmatpush1.bf16.msra.mxu0 0
      %7123 = vmatprep.mubr.bf16.mxu0 0
      %7124 = vmatmul.mubr.bf16.gmra.mrb[0].mxu0 %v7001
      %v7125 = vpop.f32.mrb[0].mxu0
      %v7126 = vadd.f32 0.0, %v7125
      %v7127 = vpop.f32.mrb[0].mxu0
      %v7128 = vpop.f32.mrb[0].mxu0
      %v7129 = vpop.f32.mrb[0].mxu0
      %7130 = vdwg.mxu0
      %v7131 = vadd.f32 %v6992, %v7044
      %v7132 = vadd.f32 %v6993, %v7046
      %v7133 = vadd.f32 %v6994, %v7085
      %v7134 = vadd.f32 %v6995, %v7087
      %v7135 = vadd.f32 %v6996, %v7126
      %7136 = vrot.lane.b32.xlu0 %v5909, 124
      %v7137 = vpop.permute.xlu0 %7136
      %v7138 = vsel %vm4801, %v6227, %v7137
      %v7140 = vsel %vm2465, %v5918, 0
      %v7143 = vsel %vm2469, %v7138, 0
      %v7146 = vsel %vm2469, %v7137, 0
      %7148 = vmatprep.subr.bf16.mxu0 %v6242
      %7149 = vmatpush1.bf16.msra.mxu0 %v6239
      %7150 = vmatprep.subr.bf16.mxu0 0
      %7151 = vmatpush1.bf16.msra.mxu0 0
      %7152 = vmatprep.subr.bf16.mxu0 0
      %7153 = vmatpush1.bf16.msra.mxu0 0
      %7154 = vmatprep.subr.bf16.mxu0 0
      %7155 = vmatpush1.bf16.msra.mxu0 0
      %7156 = vmatprep.subr.bf16.mxu0 0
      %7157 = vmatpush1.bf16.msra.mxu0 0
      %7158 = vmatprep.subr.bf16.mxu0 0
      %7159 = vmatpush1.bf16.msra.mxu0 0
      %7160 = vmatprep.subr.bf16.mxu0 0
      %7161 = vmatpush1.bf16.msra.mxu0 0
      %7162 = vmatprep.subr.bf16.mxu0 0
      %7163 = vmatpush1.bf16.msra.mxu0 0
      %7164 = vmatprep.subr.bf16.mxu0 0
      %7165 = vmatpush1.bf16.msra.mxu0 0
      %7166 = vmatprep.subr.bf16.mxu0 0
      %7167 = vmatpush1.bf16.msra.mxu0 0
      %7168 = vmatprep.subr.bf16.mxu0 0
      %7169 = vmatpush1.bf16.msra.mxu0 0
      %7170 = vmatprep.subr.bf16.mxu0 0
      %7171 = vmatpush1.bf16.msra.mxu0 0
      %7172 = vmatprep.subr.bf16.mxu0 0
      %7173 = vmatpush1.bf16.msra.mxu0 0
      %7174 = vmatprep.subr.bf16.mxu0 0
      %7175 = vmatpush1.bf16.msra.mxu0 0
      %7176 = vmatprep.subr.bf16.mxu0 0
      %7177 = vmatpush1.bf16.msra.mxu0 0
      %7178 = vmatprep.subr.bf16.mxu0 0
      %7179 = vmatpush1.bf16.msra.mxu0 0
      %7180 = vmatprep.mubr.bf16.mxu0 0
      %7181 = vmatmul.mubr.bf16.gmra.mrb[0].mxu0 %v7140
      %v7182 = vpop.f32.mrb[0].mxu0
      %v7183 = vadd.f32 0.0, %v7182
      %v7184 = vpop.f32.mrb[0].mxu0
      %v7185 = vadd.f32 0.0, %v7184
      %v7186 = vpop.f32.mrb[0].mxu0
      %v7187 = vpop.f32.mrb[0].mxu0
      %7188 = vdwg.mxu0
      %7189 = vmatprep.subr.bf16.mxu0 %v7143
      %7190 = vmatpush1.bf16.msra.mxu0 %v6245
      %7191 = vmatprep.subr.bf16.mxu0 0
      %7192 = vmatpush1.bf16.msra.mxu0 0
      %7193 = vmatprep.subr.bf16.mxu0 0
      %7194 = vmatpush1.bf16.msra.mxu0 0
      %7195 = vmatprep.subr.bf16.mxu0 0
      %7196 = vmatpush1.bf16.msra.mxu0 0
      %7197 = vmatprep.subr.bf16.mxu0 0
      %7198 = vmatpush1.bf16.msra.mxu0 0
      %7199 = vmatprep.subr.bf16.mxu0 0
      %7200 = vmatpush1.bf16.msra.mxu0 0
      %7201 = vmatprep.subr.bf16.mxu0 0
      %7202 = vmatpush1.bf16.msra.mxu0 0
      %7203 = vmatprep.subr.bf16.mxu0 0
      %7204 = vmatpush1.bf16.msra.mxu0 0
      %7205 = vmatprep.subr.bf16.mxu0 0
      %7206 = vmatpush1.bf16.msra.mxu0 0
      %7207 = vmatprep.subr.bf16.mxu0 0
      %7208 = vmatpush1.bf16.msra.mxu0 0
      %7209 = vmatprep.subr.bf16.mxu0 0
      %7210 = vmatpush1.bf16.msra.mxu0 0
      %7211 = vmatprep.subr.bf16.mxu0 0
      %7212 = vmatpush1.bf16.msra.mxu0 0
      %7213 = vmatprep.subr.bf16.mxu0 0
      %7214 = vmatpush1.bf16.msra.mxu0 0
      %7215 = vmatprep.subr.bf16.mxu0 0
      %7216 = vmatpush1.bf16.msra.mxu0 0
      %7217 = vmatprep.subr.bf16.mxu0 0
      %7218 = vmatpush1.bf16.msra.mxu0 0
      %7219 = vmatprep.subr.bf16.mxu0 0
      %7220 = vmatpush1.bf16.msra.mxu0 0
      %7221 = vmatprep.mubr.bf16.mxu0 0
      %7222 = vmatmul.mubr.bf16.gmra.mrb[0].mxu0 %v7140
      %v7223 = vpop.f32.mrb[0].mxu0
      %v7224 = vadd.f32 0.0, %v7223
      %v7225 = vpop.f32.mrb[0].mxu0
      %v7226 = vadd.f32 0.0, %v7225
      %v7227 = vpop.f32.mrb[0].mxu0
      %v7228 = vpop.f32.mrb[0].mxu0
      %7229 = vdwg.mxu0
      %7230 = vmatprep.subr.bf16.mxu0 0
      %7231 = vmatpush1.bf16.msra.mxu0 %v7146
      %7232 = vmatprep.subr.bf16.mxu0 0
      %7233 = vmatpush1.bf16.msra.mxu0 0
      %7234 = vmatprep.subr.bf16.mxu0 0
      %7235 = vmatpush1.bf16.msra.mxu0 0
      %7236 = vmatprep.subr.bf16.mxu0 0
      %7237 = vmatpush1.bf16.msra.mxu0 0
      %7238 = vmatprep.subr.bf16.mxu0 0
      %7239 = vmatpush1.bf16.msra.mxu0 0
      %7240 = vmatprep.subr.bf16.mxu0 0
      %7241 = vmatpush1.bf16.msra.mxu0 0
      %7242 = vmatprep.subr.bf16.mxu0 0
      %7243 = vmatpush1.bf16.msra.mxu0 0
      %7244 = vmatprep.subr.bf16.mxu0 0
      %7245 = vmatpush1.bf16.msra.mxu0 0
      %7246 = vmatprep.subr.bf16.mxu0 0
      %7247 = vmatpush1.bf16.msra.mxu0 0
      %7248 = vmatprep.subr.bf16.mxu0 0
      %7249 = vmatpush1.bf16.msra.mxu0 0
      %7250 = vmatprep.subr.bf16.mxu0 0
      %7251 = vmatpush1.bf16.msra.mxu0 0
      %7252 = vmatprep.subr.bf16.mxu0 0
      %7253 = vmatpush1.bf16.msra.mxu0 0
      %7254 = vmatprep.subr.bf16.mxu0 0
      %7255 = vmatpush1.bf16.msra.mxu0 0
      %7256 = vmatprep.subr.bf16.mxu0 0
      %7257 = vmatpush1.bf16.msra.mxu0 0
      %7258 = vmatprep.subr.bf16.mxu0 0
      %7259 = vmatpush1.bf16.msra.mxu0 0
      %7260 = vmatprep.subr.bf16.mxu0 0
      %7261 = vmatpush1.bf16.msra.mxu0 0
      %7262 = vmatprep.mubr.bf16.mxu0 0
      %7263 = vmatmul.mubr.bf16.gmra.mrb[0].mxu0 %v7140
      %v7264 = vpop.f32.mrb[0].mxu0
      %v7265 = vadd.f32 0.0, %v7264
      %v7266 = vpop.f32.mrb[0].mxu0
      %v7267 = vpop.f32.mrb[0].mxu0
      %v7268 = vpop.f32.mrb[0].mxu0
      %7269 = vdwg.mxu0
      %v7270 = vadd.f32 %v7131, %v7183
      %v7271 = vadd.f32 %v7132, %v7185
      %v7272 = vadd.f32 %v7133, %v7224
      %v7273 = vadd.f32 %v7134, %v7226
      %v7274 = vadd.f32 %v7135, %v7265
      %v7275 = vld [vmem:[%s8] sm:$0xff]
      %7277 = vset.pattern.permute.xlu0 0
      %7278 = vperm.xlu0 %7277, %v7275
      %v7279 = vpop.permute.xlu0 %7278
      %v7281 = vadd.f32 %v7270, %v7279
      %v7282 = vadd.f32 %v7271, %v7279
      %v7283 = vadd.f32 %v7272, %v7279
      %v7284 = vadd.f32 %v7273, %v7279
      %v7285 = vadd.f32 %v7274, %v7279
      %v7286 = vmax.f32 %v7281, 0.0
      %v7287 = vmax.f32 %v7282, 0.0
      %v7288 = vmax.f32 %v7283, 0.0
      %v7289 = vmax.f32 %v7284, 0.0
      %v7290 = vmax.f32 %v7285, 0.0
      %7296 = vrot.lane.b32.xlu0 %v7286, 126
      %v7297 = vpop.permute.xlu0 %7296
      %7298 = vrot.lane.b32.xlu0 %v7287, 126
      %v7299 = vpop.permute.xlu0 %7298
      %7300 = vrot.lane.b32.xlu0 %v7288, 126
      %v7301 = vpop.permute.xlu0 %7300
      %7302 = vrot.lane.b32.xlu0 %v7289, 126
      %v7303 = vpop.permute.xlu0 %7302
      %7304 = vrot.lane.b32.xlu0 %v7290, 126
      %v7305 = vpop.permute.xlu0 %7304
      %vm7306 = vcmask 1031168
      %v7307 = vsel %vm7306, %v7297, %v7299
      %v7308 = vsel %vm7306, %v7299, %v7301
      %v7309 = vsel %vm7306, %v7301, %v7303
      %v7310 = vsel %vm7306, %v7303, %v7305
      %v7316 = vmax.f32 %v7286, %v7307
      %v7317 = vmax.f32 %v7287, %v7308
      %v7318 = vmax.f32 %v7288, %v7309
      %v7319 = vmax.f32 %v7289, %v7310
      %v7320 = vmax.f32 %v7290, %v7305
      %7326 = vrot.lane.b32.xlu0 %v7316, 64
      %v7327 = vpop.permute.xlu0 %7326
      %7328 = vrot.lane.b32.xlu0 %v7317, 64
      %v7329 = vpop.permute.xlu0 %7328
      %7330 = vrot.lane.b32.xlu0 %v7318, 64
      %v7331 = vpop.permute.xlu0 %7330
      %7332 = vrot.lane.b32.xlu0 %v7319, 64
      %v7333 = vpop.permute.xlu0 %7332
      %7334 = vrot.lane.b32.xlu0 %v7320, 64
      %v7335 = vpop.permute.xlu0 %7334
      %vm7336 = vcmask 523264
      %v7337 = vsel %vm7336, %v7327, %v7329
      %v7338 = vsel %vm7336, %v7329, %v7331
      %v7339 = vsel %vm7336, %v7331, %v7333
      %v7340 = vsel %vm7336, %v7333, %v7335
      %v7346 = vmax.f32 %v7316, %v7337
      %v7347 = vmax.f32 %v7317, %v7338
      %v7348 = vmax.f32 %v7318, %v7339
      %v7349 = vmax.f32 %v7319, %v7340
      %v7350 = vmax.f32 %v7320, %v7335
      %v7351 = vld [vmem:[%s9] sm:$0x77]
      %v7352 = vld [vmem:[%s9 + $0x8] sm:$0x77]
      %v7353 = vld [vmem:[%s9 + $0x10] sm:$0x7]
      %v7354 = vld [vmem:[%s9 + $0x14] sm:$0x77]
      %v7355 = vld [vmem:[%s9 + $0x1c] sm:$0x77]
      %v7356 = vld [vmem:[%s9 + $0x24] sm:$0x7]
      %v7357 = vld [vmem:[%s9 + $0x28] sm:$0x77]
      %v7358 = vld [vmem:[%s9 + $0x30] sm:$0x77]
      %v7359 = vld [vmem:[%s9 + $0x38] sm:$0x7]
      %v7360 = vld [vmem:[%s9 + $0x3c] sm:$0x77]
      %v7361 = vld [vmem:[%s9 + $0x44] sm:$0x77]
      %v7362 = vld [vmem:[%s9 + $0x4c] sm:$0x7]
      %v7363 = vld [vmem:[%s9 + $0x50] sm:$0x77]
      %v7364 = vld [vmem:[%s9 + $0x58] sm:$0x77]
      %v7365 = vld [vmem:[%s9 + $0x60] sm:$0x7]
      %v7366 = vld [vmem:[%s9 + $0x64] sm:$0x77]
      %v7367 = vld [vmem:[%s9 + $0x6c] sm:$0x77]
      %v7368 = vld [vmem:[%s9 + $0x74] sm:$0x7]
      %v7369 = vld [vmem:[%s9 + $0x78] sm:$0x77]
      %v7370 = vld [vmem:[%s9 + $0x80] sm:$0x77]
      %v7371 = vld [vmem:[%s9 + $0x88] sm:$0x7]
      %v7372 = vld [vmem:[%s9 + $0x8c] sm:$0x77]
      %v7373 = vld [vmem:[%s9 + $0x94] sm:$0x77]
      %v7374 = vld [vmem:[%s9 + $0x9c] sm:$0x7]
      %v7375 = vlaneseq
      %v7376 = vshrl.u32 %v7375, 7
      %v7377 = vsub.s32 0, %v7376
      %v7378 = vrot.slane %v7346, %v7377
      %v7379 = vlaneseq
      %v7380 = vshrl.u32 %v7379, 7
      %v7381 = vsub.s32 0, %v7380
      %v7382 = vrot.slane %v7347, %v7381
      %v7383 = vlaneseq
      %v7384 = vshrl.u32 %v7383, 7
      %v7385 = vsub.s32 0, %v7384
      %v7386 = vrot.slane %v7348, %v7385
      %v7387 = vlaneseq
      %v7388 = vshrl.u32 %v7387, 7
      %v7389 = vsub.s32 0, %v7388
      %v7390 = vrot.slane %v7349, %v7389
      %v7391 = vlaneseq
      %v7392 = vshrl.u32 %v7391, 7
      %v7393 = vsub.s32 0, %v7392
      %v7394 = vrot.slane %v7350, %v7393
      %v7397 = vcombine.high %v7351, %v7351
      %v7398 = vcombine.high %v7352, %v7352
      %v7401 = vmul.f32 %v7378, %v7351
      %v7402 = vmul.f32 %v7382, %v7397
      %v7403 = vmul.f32 %v7386, %v7352
      %v7404 = vmul.f32 %v7390, %v7398
      %v7405 = vmul.f32 %v7394, %v7353
      %v7406 = vlaneseq
      %v7407 = vshrl.u32 %v7406, 7
      %v7408 = vsub.s32 1, %v7407
      %v7409 = vrot.slane %v7346, %v7408
      %v7410 = vlaneseq
      %v7411 = vshrl.u32 %v7410, 7
      %v7412 = vsub.s32 1, %v7411
      %v7413 = vrot.slane %v7347, %v7412
      %v7414 = vlaneseq
      %v7415 = vshrl.u32 %v7414, 7
      %v7416 = vsub.s32 1, %v7415
      %v7417 = vrot.slane %v7348, %v7416
      %v7418 = vlaneseq
      %v7419 = vshrl.u32 %v7418, 7
      %v7420 = vsub.s32 1, %v7419
      %v7421 = vrot.slane %v7349, %v7420
      %v7422 = vlaneseq
      %v7423 = vshrl.u32 %v7422, 7
      %v7424 = vsub.s32 1, %v7423
      %v7425 = vrot.slane %v7350, %v7424
      %v7428 = vcombine.high %v7354, %v7354
      %v7429 = vcombine.high %v7355, %v7355
      %v7432 = vmul.f32 %v7409, %v7354
      %v7433 = vmul.f32 %v7413, %v7428
      %v7434 = vmul.f32 %v7417, %v7355
      %v7435 = vmul.f32 %v7421, %v7429
      %v7436 = vmul.f32 %v7425, %v7356
      %v7437 = vadd.f32 %v7401, %v7432
      %v7438 = vadd.f32 %v7402, %v7433
      %v7439 = vadd.f32 %v7403, %v7434
      %v7440 = vadd.f32 %v7404, %v7435
      %v7441 = vadd.f32 %v7405, %v7436
      %v7442 = vlaneseq
      %v7443 = vshrl.u32 %v7442, 7
      %v7444 = vsub.s32 2, %v7443
      %v7445 = vrot.slane %v7346, %v7444
      %v7446 = vlaneseq
      %v7447 = vshrl.u32 %v7446, 7
      %v7448 = vsub.s32 2, %v7447
      %v7449 = vrot.slane %v7347, %v7448
      %v7450 = vlaneseq
      %v7451 = vshrl.u32 %v7450, 7
      %v7452 = vsub.s32 2, %v7451
      %v7453 = vrot.slane %v7348, %v7452
      %v7454 = vlaneseq
      %v7455 = vshrl.u32 %v7454, 7
      %v7456 = vsub.s32 2, %v7455
      %v7457 = vrot.slane %v7349, %v7456
      %v7458 = vlaneseq
      %v7459 = vshrl.u32 %v7458, 7
      %v7460 = vsub.s32 2, %v7459
      %v7461 = vrot.slane %v7350, %v7460
      %v7464 = vcombine.high %v7357, %v7357
      %v7465 = vcombine.high %v7358, %v7358
      %v7468 = vmul.f32 %v7445, %v7357
      %v7469 = vmul.f32 %v7449, %v7464
      %v7470 = vmul.f32 %v7453, %v7358
      %v7471 = vmul.f32 %v7457, %v7465
      %v7472 = vmul.f32 %v7461, %v7359
      %v7473 = vadd.f32 %v7437, %v7468
      %v7474 = vadd.f32 %v7438, %v7469
      %v7475 = vadd.f32 %v7439, %v7470
      %v7476 = vadd.f32 %v7440, %v7471
      %v7477 = vadd.f32 %v7441, %v7472
      %v7478 = vlaneseq
      %v7479 = vshrl.u32 %v7478, 7
      %v7480 = vsub.s32 3, %v7479
      %v7481 = vrot.slane %v7346, %v7480
      %v7482 = vlaneseq
      %v7483 = vshrl.u32 %v7482, 7
      %v7484 = vsub.s32 3, %v7483
      %v7485 = vrot.slane %v7347, %v7484
      %v7486 = vlaneseq
      %v7487 = vshrl.u32 %v7486, 7
      %v7488 = vsub.s32 3, %v7487
      %v7489 = vrot.slane %v7348, %v7488
      %v7490 = vlaneseq
      %v7491 = vshrl.u32 %v7490, 7
      %v7492 = vsub.s32 3, %v7491
      %v7493 = vrot.slane %v7349, %v7492
      %v7494 = vlaneseq
      %v7495 = vshrl.u32 %v7494, 7
      %v7496 = vsub.s32 3, %v7495
      %v7497 = vrot.slane %v7350, %v7496
      %v7500 = vcombine.high %v7360, %v7360
      %v7501 = vcombine.high %v7361, %v7361
      %v7504 = vmul.f32 %v7481, %v7360
      %v7505 = vmul.f32 %v7485, %v7500
      %v7506 = vmul.f32 %v7489, %v7361
      %v7507 = vmul.f32 %v7493, %v7501
      %v7508 = vmul.f32 %v7497, %v7362
      %v7509 = vadd.f32 %v7473, %v7504
      %v7510 = vadd.f32 %v7474, %v7505
      %v7511 = vadd.f32 %v7475, %v7506
      %v7512 = vadd.f32 %v7476, %v7507
      %v7513 = vadd.f32 %v7477, %v7508
      %v7514 = vlaneseq
      %v7515 = vshrl.u32 %v7514, 7
      %v7516 = vsub.s32 4, %v7515
      %v7517 = vrot.slane %v7346, %v7516
      %v7518 = vlaneseq
      %v7519 = vshrl.u32 %v7518, 7
      %v7520 = vsub.s32 4, %v7519
      %v7521 = vrot.slane %v7347, %v7520
      %v7522 = vlaneseq
      %v7523 = vshrl.u32 %v7522, 7
      %v7524 = vsub.s32 4, %v7523
      %v7525 = vrot.slane %v7348, %v7524
      %v7526 = vlaneseq
      %v7527 = vshrl.u32 %v7526, 7
      %v7528 = vsub.s32 4, %v7527
      %v7529 = vrot.slane %v7349, %v7528
      %v7530 = vlaneseq
      %v7531 = vshrl.u32 %v7530, 7
      %v7532 = vsub.s32 4, %v7531
      %v7533 = vrot.slane %v7350, %v7532
      %v7536 = vcombine.high %v7363, %v7363
      %v7537 = vcombine.high %v7364, %v7364
      %v7540 = vmul.f32 %v7517, %v7363
      %v7541 = vmul.f32 %v7521, %v7536
      %v7542 = vmul.f32 %v7525, %v7364
      %v7543 = vmul.f32 %v7529, %v7537
      %v7544 = vmul.f32 %v7533, %v7365
      %v7545 = vadd.f32 %v7509, %v7540
      %v7546 = vadd.f32 %v7510, %v7541
      %v7547 = vadd.f32 %v7511, %v7542
      %v7548 = vadd.f32 %v7512, %v7543
      %v7549 = vadd.f32 %v7513, %v7544
      %v7550 = vlaneseq
      %v7551 = vshrl.u32 %v7550, 7
      %v7552 = vsub.s32 5, %v7551
      %v7553 = vrot.slane %v7346, %v7552
      %v7554 = vlaneseq
      %v7555 = vshrl.u32 %v7554, 7
      %v7556 = vsub.s32 5, %v7555
      %v7557 = vrot.slane %v7347, %v7556
      %v7558 = vlaneseq
      %v7559 = vshrl.u32 %v7558, 7
      %v7560 = vsub.s32 5, %v7559
      %v7561 = vrot.slane %v7348, %v7560
      %v7562 = vlaneseq
      %v7563 = vshrl.u32 %v7562, 7
      %v7564 = vsub.s32 5, %v7563
      %v7565 = vrot.slane %v7349, %v7564
      %v7566 = vlaneseq
      %v7567 = vshrl.u32 %v7566, 7
      %v7568 = vsub.s32 5, %v7567
      %v7569 = vrot.slane %v7350, %v7568
      %v7572 = vcombine.high %v7366, %v7366
      %v7573 = vcombine.high %v7367, %v7367
      %v7576 = vmul.f32 %v7553, %v7366
      %v7577 = vmul.f32 %v7557, %v7572
      %v7578 = vmul.f32 %v7561, %v7367
      %v7579 = vmul.f32 %v7565, %v7573
      %v7580 = vmul.f32 %v7569, %v7368
      %v7581 = vadd.f32 %v7545, %v7576
      %v7582 = vadd.f32 %v7546, %v7577
      %v7583 = vadd.f32 %v7547, %v7578
      %v7584 = vadd.f32 %v7548, %v7579
      %v7585 = vadd.f32 %v7549, %v7580
      %v7586 = vlaneseq
      %v7587 = vshrl.u32 %v7586, 7
      %v7588 = vsub.s32 6, %v7587
      %v7589 = vrot.slane %v7346, %v7588
      %v7590 = vlaneseq
      %v7591 = vshrl.u32 %v7590, 7
      %v7592 = vsub.s32 6, %v7591
      %v7593 = vrot.slane %v7347, %v7592
      %v7594 = vlaneseq
      %v7595 = vshrl.u32 %v7594, 7
      %v7596 = vsub.s32 6, %v7595
      %v7597 = vrot.slane %v7348, %v7596
      %v7598 = vlaneseq
      %v7599 = vshrl.u32 %v7598, 7
      %v7600 = vsub.s32 6, %v7599
      %v7601 = vrot.slane %v7349, %v7600
      %v7602 = vlaneseq
      %v7603 = vshrl.u32 %v7602, 7
      %v7604 = vsub.s32 6, %v7603
      %v7605 = vrot.slane %v7350, %v7604
      %v7608 = vcombine.high %v7369, %v7369
      %v7609 = vcombine.high %v7370, %v7370
      %v7612 = vmul.f32 %v7589, %v7369
      %v7613 = vmul.f32 %v7593, %v7608
      %v7614 = vmul.f32 %v7597, %v7370
      %v7615 = vmul.f32 %v7601, %v7609
      %v7616 = vmul.f32 %v7605, %v7371
      %v7617 = vadd.f32 %v7581, %v7612
      %v7618 = vadd.f32 %v7582, %v7613
      %v7619 = vadd.f32 %v7583, %v7614
      %v7620 = vadd.f32 %v7584, %v7615
      %v7621 = vadd.f32 %v7585, %v7616
      %v7622 = vlaneseq
      %v7623 = vshrl.u32 %v7622, 7
      %v7624 = vsub.s32 7, %v7623
      %v7625 = vrot.slane %v7346, %v7624
      %v7626 = vlaneseq
      %v7627 = vshrl.u32 %v7626, 7
      %v7628 = vsub.s32 7, %v7627
      %v7629 = vrot.slane %v7347, %v7628
      %v7630 = vlaneseq
      %v7631 = vshrl.u32 %v7630, 7
      %v7632 = vsub.s32 7, %v7631
      %v7633 = vrot.slane %v7348, %v7632
      %v7634 = vlaneseq
      %v7635 = vshrl.u32 %v7634, 7
      %v7636 = vsub.s32 7, %v7635
      %v7637 = vrot.slane %v7349, %v7636
      %v7638 = vlaneseq
      %v7639 = vshrl.u32 %v7638, 7
      %v7640 = vsub.s32 7, %v7639
      %v7641 = vrot.slane %v7350, %v7640
      %v7644 = vcombine.high %v7372, %v7372
      %v7645 = vcombine.high %v7373, %v7373
      %v7648 = vmul.f32 %v7625, %v7372
      %v7649 = vmul.f32 %v7629, %v7644
      %v7650 = vmul.f32 %v7633, %v7373
      %v7651 = vmul.f32 %v7637, %v7645
      %v7652 = vmul.f32 %v7641, %v7374
      %v7653 = vadd.f32 %v7617, %v7648
      %v7654 = vadd.f32 %v7618, %v7649
      %v7655 = vadd.f32 %v7619, %v7650
      %v7656 = vadd.f32 %v7620, %v7651
      %v7657 = vadd.f32 %v7621, %v7652
      %vm7658 = vcmask 1042432
      %v7659 = vsel %vm7658, %v7653, 0.0
      %v7660 = vsel %vm7658, %v7654, 0.0
      %v7661 = vadd.f32 %v7659, %v7660
      %v7662 = vsel %vm7658, %v7655, 0.0
      %v7663 = vadd.f32 %v7661, %v7662
      %v7664 = vsel %vm7658, %v7656, 0.0
      %v7665 = vadd.f32 %v7663, %v7664
      %vm7666 = vcmask 133120
      %v7667 = vsel %vm7666, %v7657, 0.0
      %v7668 = vadd.f32 %v7665, %v7667
      %7669 = vadd.xlane.f32.xlu0 %v7668
      %v7670 = vpop.xlane.xlu0 %7669
      %v7671 = vld [vmem:[%s10] sm:$0x7]
      %v7672 = vadd.f32 %v7670, %v7671
      %vm7673 = vcmask 2048
      %7674 = vst.msk [vmem:[%s384] sm:$0x7] %vm7673, %v7672
      %p7675 = scmp.lt.s32.totalorder %s22, 1
      %s7676 = scalar_select %p7675, %s22, 1
      %s7677 = smul.addr %s7676, 4
      %s7678 = scalar_lea.vmem %s11, %s7677
      // Predicated region
      $region65: #{tinyvgg_forward.1} parent=63 // pred_check
        %p7679 = pneg %p276
      $region66: #{tinyvgg_forward.1} parent=63 // pred_check_branch
        %7681 = sbr.rel (%p7679) target = $region68
      $region67: #{tinyvgg_forward.1} parent=63 // pred_region
        _
      $region68: #{tinyvgg_forward.1} parent=63 // pred_fallthru
        _
    $region64: #{tinyvgg_forward.1} parent=5 // pred_fallthru
      _
    %p7682 = scmp.le.s32.totalorder 2, %s17
    // Predicated region
    $region69: #{tinyvgg_forward.1} parent=5 // pred_check
      %p7683 = pneg %p7682
    $region70: #{tinyvgg_forward.1} parent=5 // pred_check_branch
      %7685 = sbr.rel (%p7683) target = $region72
    $region71: #{tinyvgg_forward.1} parent=5 // pred_region
      %s7686 = ssub.s32 %s17, 2
      // Predicated region
      $region73: #{tinyvgg_forward.1} parent=71 // pred_check
        %p7687 = pneg %p282
      $region74: #{tinyvgg_forward.1} parent=71 // pred_check_branch
        %7689 = sbr.rel (%p7687) target = $region76
      $region75: #{tinyvgg_forward.1} parent=71 // pred_region
        %p7690 = scmp.lt.s32.totalorder %s23, 1
        %s7691 = scalar_select %p7690, %s23, 1
        %s7692 = smul.addr %s7691, 4
        %s7693 = scalar_lea.vmem %s11, %s7692
      $region76: #{tinyvgg_forward.1} parent=71 // pred_fallthru
        _
    $region72: #{tinyvgg_forward.1} parent=5 // pred_fallthru
      _
  $region6: #{tinyvgg_forward.1} parent=0 // loop_footer
    %s21 = sadd.s32 1, %s17
  $region7: #{tinyvgg_forward.1} parent=0 // loop_footer_branch
    %16 = sbr.rel target = $region3
  $region8: #{tinyvgg_forward.1} parent=0 // loop_exit
    _

</llo_original>
